<compile_context>
chip_gen: v5e
topology: v5e:2x2
jax: 0.10.0
libtpu: 0.0.40
codegen_flags: <defaults>
</compile_context>

<pallas_src>
import functools

import jax
import jax.numpy as jnp
from jax.experimental import pallas as pl
from jax.experimental.pallas import tpu as pltpu

BN_EPS = 1e-3


def _round_up(x, m):
    return ((x + m - 1) // m) * m


# ----------------------------- Pallas kernels -----------------------------

def _conv_kernel(x_ref, w_ref, b_ref, o_ref, *, taps, m):
    # x_ref: (1, P, FLATP, Cin)  bf16 — P = stride*stride phase planes, flattened spatial
    # w_ref: (KK, Cin, Coutp)    bf16 — BN scale pre-folded, zero-padded to lane-dense Coutp
    # b_ref: (1, Coutp)          f32  — folded BN bias
    # o_ref: (1, m, Coutp)
    acc = None
    for t, (phase, shift) in enumerate(taps):          # static unroll over k*k taps
        a = x_ref[0, phase, shift:shift + m, :]        # contiguous slice, no strided access
        d = jnp.dot(a, w_ref[t], preferred_element_type=jnp.float32)
        acc = d if acc is None else acc + d
    o_ref[0] = jnp.maximum(acc + b_ref[...], 0.0).astype(o_ref.dtype)


def _conv_pool_kernel(x_ref, w_ref, b_ref, co_ref, po_ref, *, taps, m):
    # Fused branch3x3 conv(+BN+ReLU) and 3x3 max-pool: both read the exact same taps.
    acc = None
    mx = None
    for t, (phase, shift) in enumerate(taps):
        a = x_ref[0, phase, shift:shift + m, :]
        d = jnp.dot(a, w_ref[t], preferred_element_type=jnp.float32)
        acc = d if acc is None else acc + d
        mx = a if mx is None else jnp.maximum(mx, a)   # VPU work, overlaps with MXU
    co_ref[0] = jnp.maximum(acc + b_ref[...], 0.0).astype(co_ref.dtype)
    po_ref[0] = mx.astype(po_ref.dtype)


# ----------------------------- Pallas wrappers -----------------------------

def _conv_call(xflat, w, b, taps, geom, out_dtype, with_pool=False):
    """xflat: (N, P, FLATP, Cin) bf16, w: (KK, Cin, Coutp) bf16, b: (1, Coutp) f32."""
    N, P, FLATP, Cin = xflat.shape
    KK, _, Coutp = w.shape
    m = geom["Mp"]
    in_specs = [
        pl.BlockSpec((1, P, FLATP, Cin), lambda n: (n, 0, 0, 0)),
        # Grid-invariant operands: block index is constant, so Pallas elides re-DMA across steps.
        pl.BlockSpec((KK, Cin, Coutp), lambda n: (0, 0, 0)),
        pl.BlockSpec((1, Coutp), lambda n: (0, 0)),
    ]
    if with_pool:
        kernel = functools.partial(_conv_pool_kernel, taps=taps, m=m)
        out_shape = (jax.ShapeDtypeStruct((N, m, Coutp), out_dtype),
                     jax.ShapeDtypeStruct((N, m, Cin), jnp.float32))
        out_specs = [pl.BlockSpec((1, m, Coutp), lambda n: (n, 0, 0)),
                     pl.BlockSpec((1, m, Cin), lambda n: (n, 0, 0))]
    else:
        kernel = functools.partial(_conv_kernel, taps=taps, m=m)
        out_shape = jax.ShapeDtypeStruct((N, m, Coutp), out_dtype)
        out_specs = pl.BlockSpec((1, m, Coutp), lambda n: (n, 0, 0))
    return pl.pallas_call(
        kernel,
        out_shape=out_shape,
        grid_spec=pltpu.PrefetchScalarGridSpec(
            num_scalar_prefetch=0,
            grid=(N,),
            in_specs=in_specs,
            out_specs=out_specs,
        ),
        compiler_params=pltpu.CompilerParams(dimension_semantics=("parallel",)),
    )(xflat, w, b)


# ----------------------------- glue (plain JAX, single-pass relayouts) -----------------------------

def _flat_phase_input(x_nhwc, k, stride, pad, dilation):
    """Zero-pad, split into stride*stride phase planes, flatten spatial dims.

    Returns (xflat, taps, geom):
      xflat: (N, stride*stride, FLATP, C) bf16
      taps[t] = (phase_index, row_shift) so that tap t for flat output row m is xflat[:, phase, m+shift, :]
      geom:  OH, OW, Ws, Mp — output row m = oh*Ws + ow; columns ow >= OW and rows m >= OH*Ws are junk.
    """
    N, H, W, C = x_nhwc.shape
    s, d = stride, dilation
    Hp, Wp = H + 2 * pad, W + 2 * pad
    OH = (Hp - d * (k - 1) - 1) // s + 1
    OW = (Wp - d * (k - 1) - 1) // s + 1
    Hs, Ws = -(-Hp // s), -(-Wp // s)
    xp = jnp.pad(x_nhwc.astype(jnp.bfloat16),
                 ((0, 0), (pad, Hs * s - H - pad), (pad, Ws * s - W - pad), (0, 0)))
    xph = xp.reshape(N, Hs, s, Ws, s, C).transpose(0, 2, 4, 1, 3, 5)   # (N, s, s, Hs, Ws, C)
    xflat = xph.reshape(N, s * s, Hs * Ws, C)

    taps, max_shift = [], 0
    for i in range(k):
        for j in range(k):
            ri, rj = i * d, j * d
            phase = (ri % s) * s + (rj % s)
            shift = (ri // s) * Ws + (rj // s)
            taps.append((phase, shift))
            max_shift = max(max_shift, shift)
    Mp = _round_up(OH * Ws, 8)
    FLATP = _round_up(max(Hs * Ws, Mp + max_shift), 8)
    if FLATP > Hs * Ws:
        xflat = jnp.pad(xflat, ((0, 0), (0, 0), (0, FLATP - Hs * Ws), (0, 0)))
    return xflat, taps, dict(OH=OH, OW=OW, Ws=Ws, Mp=Mp)


def _unflatten(flat, geom, cout):
    """(N, Mp, Cp) flat layout -> (N, OH, OW, cout), dropping junk rows/cols and channel padding."""
    N = flat.shape[0]
    OH, OW, Ws = geom["OH"], geom["OW"], geom["Ws"]
    return flat[:, :OH * Ws, :cout].reshape(N, OH, Ws, cout)[:, :, :OW, :]


def _fold_bn(p):
    """Fold eval-mode BN (eps=1e-3) into the conv weight. Returns (bf16 OIHW weight, f32 bias)."""
    scale = p["gamma"] / jnp.sqrt(p["var"] + BN_EPS)
    w = (p["w"] * scale[:, None, None, None]).astype(jnp.bfloat16)
    bias = p["beta"] - p["mean"] * scale
    return w, bias


def _pack_conv(p, cin_pad, cout_pad):
    """Kernel-layout weights (k*k, cin_pad, cout_pad) bf16 + (1, cout_pad) f32 bias (zero padded)."""
    wf, bias = _fold_bn(p)
    cout, cin, kh, kw = wf.shape
    wk = jnp.transpose(wf, (2, 3, 1, 0)).reshape(kh * kw, cin, cout)
    wk = jnp.pad(wk, ((0, 0), (0, cin_pad - cin), (0, cout_pad - cout)))
    bk = jnp.pad(bias, (0, cout_pad - cout)).reshape(1, cout_pad)
    return wk, bk


def inception_b_forward(x_nchw, params, stride=2):
    dilation = 4 ** (2 - stride)
    N, Cin, H, W = x_nchw.shape
    x = jnp.transpose(x_nchw, (0, 2, 3, 1))                     # NCHW -> NHWC

    # ---- branch3x3 + max-pool branch: identical taps => one fused kernel ----
    w3, b3 = _pack_conv(params["branch3x3"], Cin, 384)
    xf, taps, geom = _flat_phase_input(x, 3, stride, dilation, dilation)
    b3_flat, pool_flat = _conv_call(xf, w3, b3, taps, geom, jnp.float32, with_pool=True)

    # ---- double-3x3 branch: 128-channel lane-dense bf16 intermediates ----
    # TODO(synk): dbl_1 (1x1) could be fused into dbl_2's tap assembly to drop one HBM round-trip,
    #             but the post-BN zero-pad ring makes that fusion non-trivial; kept as its own matmul.
    wd1, bd1 = _pack_conv(params["branch3x3dbl_1"], Cin, 128)
    x1f, t1, g1 = _flat_phase_input(x, 1, 1, 0, 1)
    h1 = _conv_call(x1f, wd1, bd1, t1, g1, jnp.bfloat16)
    h1 = _unflatten(h1, g1, 128)                                # (N, H, W, 128) bf16, 64 real ch

    wd2, bd2 = _pack_conv(params["branch3x3dbl_2"], 128, 128)
    x2f, t2, g2 = _flat_phase_input(h1, 3, 1, 1, 1)
    h2 = _conv_call(x2f, wd2, bd2, t2, g2, jnp.bfloat16)
    h2 = _unflatten(h2, g2, 128)                                # (N, H, W, 128) bf16, 96 real ch

    wd3, bd3 = _pack_conv(params["branch3x3dbl_3"], 128, 128)
    x3f, t3, g3 = _flat_phase_input(h2, 3, stride, dilation, dilation)
    hd = _conv_call(x3f, wd3, bd3, t3, g3, jnp.float32)

    # ---- assemble NCHW output ----
    out = jnp.concatenate([_unflatten(b3_flat, geom, 384),
                           _unflatten(hd, g3, 96),
                           _unflatten(pool_flat, geom, Cin)], axis=-1)
    return jnp.transpose(out, (0, 3, 1, 2))


# ----------------------------- reference (pure XLA, same bf16/f32 numerics) -----------------------------

def _conv_bn_relu_ref(x_nchw, p, stride, pad, dil):
    wf, bias = _fold_bn(p)                                      # identical folded bf16 weights
    y = jax.lax.conv_general_dilated(
        x_nchw.astype(jnp.bfloat16), wf, window_strides=(stride, stride),
        padding=[(pad, pad)] * 2, rhs_dilation=(dil, dil),
        dimension_numbers=("NCHW", "OIHW", "NCHW"),
        preferred_element_type=jnp.float32)
    return jnp.maximum(y + bias.reshape(1, -1, 1, 1), 0.0)


def inception_b_ref(x_nchw, params, stride=2):
    dilation = 4 ** (2 - stride)
    b1 = _conv_bn_relu_ref(x_nchw, params["branch3x3"], stride, dilation, dilation)
    h = _conv_bn_relu_ref(x_nchw, params["branch3x3dbl_1"], 1, 0, 1).astype(jnp.bfloat16)
    h = _conv_bn_relu_ref(h, params["branch3x3dbl_2"], 1, 1, 1).astype(jnp.bfloat16)
    b2 = _conv_bn_relu_ref(h, params["branch3x3dbl_3"], stride, dilation, dilation)
    xb = x_nchw.astype(jnp.bfloat16).astype(jnp.float32)        # kernel pools bf16-rounded x
    xp = jnp.pad(xb, ((0, 0), (0, 0), (dilation, dilation), (dilation, dilation)))
    bp = jax.lax.reduce_window(xp, -jnp.inf, jax.lax.max,
                               (1, 1, 3, 3), (1, 1, stride, stride),
                               "VALID", window_dilation=(1, 1, dilation, dilation))
    return jnp.concatenate([b1, b2, bp], axis=1)


# ----------------------------- parameter init -----------------------------

def make_conv_params(key, cin, cout, k):
    k1, k2, k3, k4, k5 = jax.random.split(key, 5)
    return dict(
        w=0.1 * jax.random.normal(k1, (cout, cin, k, k), jnp.float32),
        gamma=1.0 + 0.1 * jax.random.normal(k2, (cout,), jnp.float32),
        beta=0.1 * jax.random.normal(k3, (cout,), jnp.float32),
        mean=0.1 * jax.random.normal(k4, (cout,), jnp.float32),
        var=1.0 + jnp.abs(jax.random.normal(k5, (cout,), jnp.float32)),
    )


def make_inception_b_params(key, in_channels):
    k1, k2, k3, k4 = jax.random.split(key, 4)
    return dict(
        branch3x3=make_conv_params(k1, in_channels, 384, 3),
        branch3x3dbl_1=make_conv_params(k2, in_channels, 64, 1),
        branch3x3dbl_2=make_conv_params(k3, 64, 96, 3),
        branch3x3dbl_3=make_conv_params(k4, 96, 96, 3),
    )


# ----------------------------- main -----------------------------

if __name__ == "__main__":
    key = jax.random.PRNGKey(0)
    kx, kp = jax.random.split(key)
    N, C, H, W = 2, 4, 16, 16
    x = jax.random.normal(kx, (N, C, H, W), jnp.float32)
    params = make_inception_b_params(kp, C)

    fwd = jax.jit(functools.partial(inception_b_forward, stride=2))
    out = jax.block_until_ready(fwd(x, params))
    assert out.shape == (N, 384 + 96 + C, H // 2, W // 2), out.shape

    ref = jax.block_until_ready(jax.jit(functools.partial(inception_b_ref, stride=2))(x, params))
    max_err = float(jnp.max(jnp.abs(out - ref)))
    # Tightened from 5e-2: both paths use identical bf16 folded weights / bf16 activations with f32
    # accumulation; residual slack covers bf16 re-quantization of near-equal intermediates.
    assert jnp.allclose(out, ref, atol=2e-3, rtol=2e-3), max_err

    print("KERNEL_OK")
</pallas_src>

<mosaic_0001>
module attributes {stable_mosaic.version = 11 : i64} {
  func.func @_conv_kernel(%arg0: i32, %arg1: memref<1x1x256x4xbf16, #tpu.memory_space<vmem>>, %arg2: memref<1x4x128xbf16, #tpu.memory_space<vmem>>, %arg3: memref<1x128xf32, #tpu.memory_space<vmem>>, %arg4: memref<1x256x128xbf16, #tpu.memory_space<vmem>>) attributes {dimension_semantics = [#tpu.dimension_semantics<parallel>], iteration_bounds = array<i64: 2>, scalar_prefetch = 0 : i64, scratch_operands = 0 : i64, tpu.core_type = #tpu.core_type<tc>, window_params = [{transform_indices = @transform_0, window_bounds = array<i64: 1, 1, 256, 4>}, {pipeline_mode = #tpu.pipeline_mode<synchronous>, transform_indices = @transform_1, window_bounds = array<i64: 1, 4, 128>}, {pipeline_mode = #tpu.pipeline_mode<synchronous>, transform_indices = @transform_2, window_bounds = array<i64: 1, 128>}, {transform_indices = @transform_3, window_bounds = array<i64: 1, 256, 128>}]} {
    %c0 = arith.constant 0 : index
    %c0_0 = arith.constant 0 : index
    %c0_1 = arith.constant 0 : index
    %c0_2 = arith.constant 0 : index
    %0 = vector.load %arg1[%c0, %c0_0, %c0_1, %c0_2] : memref<1x1x256x4xbf16, #tpu.memory_space<vmem>>, vector<1x1x256x4xbf16>
    %1 = vector.shape_cast %0 : vector<1x1x256x4xbf16> to vector<256x4xbf16>
    %c0_3 = arith.constant 0 : index
    %c0_4 = arith.constant 0 : index
    %c0_5 = arith.constant 0 : index
    %2 = vector.load %arg2[%c0_3, %c0_4, %c0_5] : memref<1x4x128xbf16, #tpu.memory_space<vmem>>, vector<1x4x128xbf16>
    %3 = vector.shape_cast %2 : vector<1x4x128xbf16> to vector<4x128xbf16>
    %cst = arith.constant dense<0.000000e+00> : vector<256x128xf32>
    %4 = tpu.matmul %1, %3, %cst {dimension_numbers = #tpu.dot_dimension_numbers<[1], [0], [0], [1], [0, 0, 1, 1], [], []>} : vector<256x4xbf16>, vector<4x128xbf16>, vector<256x128xf32> -> vector<256x128xf32>
    %c0_6 = arith.constant 0 : index
    %c0_7 = arith.constant 0 : index
    %5 = vector.load %arg3[%c0_6, %c0_7] : memref<1x128xf32, #tpu.memory_space<vmem>>, vector<1x128xf32>
    %6 = vector.broadcast %5 : vector<1x128xf32> to vector<256x128xf32>
    %7 = arith.addf %4, %6 : vector<256x128xf32>
    %cst_8 = arith.constant 0.000000e+00 : f32
    %8 = vector.broadcast %cst_8 : f32 to vector<256x128xf32>
    %9 = arith.maximumf %7, %8 : vector<256x128xf32>
    %10 = arith.truncf %9 : vector<256x128xf32> to vector<256x128xbf16>
    %c0_9 = arith.constant 0 : index
    %c0_10 = arith.constant 0 : index
    %c0_11 = arith.constant 0 : index
    %11 = vector.load %arg4[%c0_9, %c0_10, %c0_11] : memref<1x256x128xbf16, #tpu.memory_space<vmem>>, vector<1x256x128xbf16>
    %12 = vector.shape_cast %11 : vector<1x256x128xbf16> to vector<256x128xbf16>
    %13 = vector.shape_cast %10 : vector<256x128xbf16> to vector<1x256x128xbf16>
    tpu.vector_store %arg4[%c0_9, %c0_10, %c0_11], %13 {strides = array<i32>} : memref<1x256x128xbf16, #tpu.memory_space<vmem>>, vector<1x256x128xbf16>,
    return
  }
  func.func @transform_0(%arg0: i32) -> (i32, i32, i32, i32) {
    %c0_i32 = arith.constant 0 : i32
    %c0_i32_0 = arith.constant 0 : i32
    %c0_i32_1 = arith.constant 0 : i32
    %c0_i32_2 = arith.constant 0 : i32
    return %arg0, %c0_i32, %c0_i32_0, %c0_i32_1 : i32, i32, i32, i32
  }
  func.func @transform_1(%arg0: i32) -> (i32, i32, i32) {
    %c0_i32 = arith.constant 0 : i32
    %c0_i32_0 = arith.constant 0 : i32
    %c0_i32_1 = arith.constant 0 : i32
    %c0_i32_2 = arith.constant 0 : i32
    return %c0_i32, %c0_i32_0, %c0_i32_1 : i32, i32, i32
  }
  func.func @transform_2(%arg0: i32) -> (i32, i32) {
    %c0_i32 = arith.constant 0 : i32
    %c0_i32_0 = arith.constant 0 : i32
    %c0_i32_1 = arith.constant 0 : i32
    return %c0_i32, %c0_i32_0 : i32, i32
  }
  func.func @transform_3(%arg0: i32) -> (i32, i32, i32) {
    %c0_i32 = arith.constant 0 : i32
    %c0_i32_0 = arith.constant 0 : i32
    %c0_i32_1 = arith.constant 0 : i32
    return %arg0, %c0_i32, %c0_i32_0 : i32, i32, i32
  }
}

module attributes {stable_mosaic.version = 11 : i64} {
  func.func @_conv_kernel(%arg0: i32, %arg1: memref<1x1x328x128xbf16, #tpu.memory_space<vmem>>, %arg2: memref<9x128x128xbf16, #tpu.memory_space<vmem>>, %arg3: memref<1x128xf32, #tpu.memory_space<vmem>>, %arg4: memref<1x288x128xbf16, #tpu.memory_space<vmem>>) attributes {dimension_semantics = [#tpu.dimension_semantics<parallel>], iteration_bounds = array<i64: 2>, scalar_prefetch = 0 : i64, scratch_operands = 0 : i64, tpu.core_type = #tpu.core_type<tc>, window_params = [{transform_indices = @transform_0, window_bounds = array<i64: 1, 1, 328, 128>}, {pipeline_mode = #tpu.pipeline_mode<synchronous>, transform_indices = @transform_1, window_bounds = array<i64: 9, 128, 128>}, {pipeline_mode = #tpu.pipeline_mode<synchronous>, transform_indices = @transform_2, window_bounds = array<i64: 1, 128>}, {transform_indices = @transform_3, window_bounds = array<i64: 1, 288, 128>}]} {
    %c0 = arith.constant 0 : index
    %c0_0 = arith.constant 0 : index
    %c0_1 = arith.constant 0 : index
    %c0_2 = arith.constant 0 : index
    %0 = vector.load %arg1[%c0, %c0_0, %c0_1, %c0_2] : memref<1x1x328x128xbf16, #tpu.memory_space<vmem>>, vector<1x1x288x128xbf16>
    %1 = vector.shape_cast %0 : vector<1x1x288x128xbf16> to vector<288x128xbf16>
    %c0_3 = arith.constant 0 : index
    %c0_4 = arith.constant 0 : index
    %c0_5 = arith.constant 0 : index
    %2 = vector.load %arg2[%c0_3, %c0_4, %c0_5] : memref<9x128x128xbf16, #tpu.memory_space<vmem>>, vector<1x128x128xbf16>
    %3 = vector.shape_cast %2 : vector<1x128x128xbf16> to vector<128x128xbf16>
    %cst = arith.constant dense<0.000000e+00> : vector<288x128xf32>
    %4 = tpu.matmul %1, %3, %cst {dimension_numbers = #tpu.dot_dimension_numbers<[1], [0], [0], [1], [0, 0, 1, 1], [], []>} : vector<288x128xbf16>, vector<128x128xbf16>, vector<288x128xf32> -> vector<288x128xf32>
    %c0_6 = arith.constant 0 : index
    %c0_7 = arith.constant 0 : index
    %c1 = arith.constant 1 : index
    %c0_8 = arith.constant 0 : index
    %5 = vector.load %arg1[%c0_6, %c0_7, %c1, %c0_8] : memref<1x1x328x128xbf16, #tpu.memory_space<vmem>>, vector<1x1x288x128xbf16>
    %6 = vector.shape_cast %5 : vector<1x1x288x128xbf16> to vector<288x128xbf16>
    %c1_9 = arith.constant 1 : index
    %c0_10 = arith.constant 0 : index
    %c0_11 = arith.constant 0 : index
    %7 = vector.load %arg2[%c1_9, %c0_10, %c0_11] : memref<9x128x128xbf16, #tpu.memory_space<vmem>>, vector<1x128x128xbf16>
    %8 = vector.shape_cast %7 : vector<1x128x128xbf16> to vector<128x128xbf16>
    %cst_12 = arith.constant dense<0.000000e+00> : vector<288x128xf32>
    %9 = tpu.matmul %6, %8, %cst_12 {dimension_numbers = #tpu.dot_dimension_numbers<[1], [0], [0], [1], [0, 0, 1, 1], [], []>} : vector<288x128xbf16>, vector<128x128xbf16>, vector<288x128xf32> -> vector<288x128xf32>
    %10 = arith.addf %4, %9 : vector<288x128xf32>
    %c0_13 = arith.constant 0 : index
    %c0_14 = arith.constant 0 : index
    %c2 = arith.constant 2 : index
    %c0_15 = arith.constant 0 : index
    %11 = vector.load %arg1[%c0_13, %c0_14, %c2, %c0_15] : memref<1x1x328x128xbf16, #tpu.memory_space<vmem>>, vector<1x1x288x128xbf16>
    %12 = vector.shape_cast %11 : vector<1x1x288x128xbf16> to vector<288x128xbf16>
    %c2_16 = arith.constant 2 : index
    %c0_17 = arith.constant 0 : index
    %c0_18 = arith.constant 0 : index
    %13 = vector.load %arg2[%c2_16, %c0_17, %c0_18] : memref<9x128x128xbf16, #tpu.memory_space<vmem>>, vector<1x128x128xbf16>
    %14 = vector.shape_cast %13 : vector<1x128x128xbf16> to vector<128x128xbf16>
    %cst_19 = arith.constant dense<0.000000e+00> : vector<288x128xf32>
    %15 = tpu.matmul %12, %14, %cst_19 {dimension_numbers = #tpu.dot_dimension_numbers<[1], [0], [0], [1], [0, 0, 1, 1], [], []>} : vector<288x128xbf16>, vector<128x128xbf16>, vector<288x128xf32> -> vector<288x128xf32>
    %16 = arith.addf %10, %15 : vector<288x128xf32>
    %c0_20 = arith.constant 0 : index
    %c0_21 = arith.constant 0 : index
    %c18 = arith.constant 18 : index
    %c0_22 = arith.constant 0 : index
    %17 = vector.load %arg1[%c0_20, %c0_21, %c18, %c0_22] : memref<1x1x328x128xbf16, #tpu.memory_space<vmem>>, vector<1x1x288x128xbf16>
    %18 = vector.shape_cast %17 : vector<1x1x288x128xbf16> to vector<288x128xbf16>
    %c3 = arith.constant 3 : index
    %c0_23 = arith.constant 0 : index
    %c0_24 = arith.constant 0 : index
    %19 = vector.load %arg2[%c3, %c0_23, %c0_24] : memref<9x128x128xbf16, #tpu.memory_space<vmem>>, vector<1x128x128xbf16>
    %20 = vector.shape_cast %19 : vector<1x128x128xbf16> to vector<128x128xbf16>
    %cst_25 = arith.constant dense<0.000000e+00> : vector<288x128xf32>
    %21 = tpu.matmul %18, %20, %cst_25 {dimension_numbers = #tpu.dot_dimension_numbers<[1], [0], [0], [1], [0, 0, 1, 1], [], []>} : vector<288x128xbf16>, vector<128x128xbf16>, vector<288x128xf32> -> vector<288x128xf32>
    %22 = arith.addf %16, %21 : vector<288x128xf32>
    %c0_26 = arith.constant 0 : index
    %c0_27 = arith.constant 0 : index
    %c19 = arith.constant 19 : index
    %c0_28 = arith.constant 0 : index
    %23 = vector.load %arg1[%c0_26, %c0_27, %c19, %c0_28] : memref<1x1x328x128xbf16, #tpu.memory_space<vmem>>, vector<1x1x288x128xbf16>
    %24 = vector.shape_cast %23 : vector<1x1x288x128xbf16> to vector<288x128xbf16>
    %c4 = arith.constant 4 : index
    %c0_29 = arith.constant 0 : index
    %c0_30 = arith.constant 0 : index
    %25 = vector.load %arg2[%c4, %c0_29, %c0_30] : memref<9x128x128xbf16, #tpu.memory_space<vmem>>, vector<1x128x128xbf16>
    %26 = vector.shape_cast %25 : vector<1x128x128xbf16> to vector<128x128xbf16>
    %cst_31 = arith.constant dense<0.000000e+00> : vector<288x128xf32>
    %27 = tpu.matmul %24, %26, %cst_31 {dimension_numbers = #tpu.dot_dimension_numbers<[1], [0], [0], [1], [0, 0, 1, 1], [], []>} : vector<288x128xbf16>, vector<128x128xbf16>, vector<288x128xf32> -> vector<288x128xf32>
    %28 = arith.addf %22, %27 : vector<288x128xf32>
    %c0_32 = arith.constant 0 : index
    %c0_33 = arith.constant 0 : index
    %c20 = arith.constant 20 : index
    %c0_34 = arith.constant 0 : index
    %29 = vector.load %arg1[%c0_32, %c0_33, %c20, %c0_34] : memref<1x1x328x128xbf16, #tpu.memory_space<vmem>>, vector<1x1x288x128xbf16>
    %30 = vector.shape_cast %29 : vector<1x1x288x128xbf16> to vector<288x128xbf16>
    %c5 = arith.constant 5 : index
    %c0_35 = arith.constant 0 : index
    %c0_36 = arith.constant 0 : index
    %31 = vector.load %arg2[%c5, %c0_35, %c0_36] : memref<9x128x128xbf16, #tpu.memory_space<vmem>>, vector<1x128x128xbf16>
    %32 = vector.shape_cast %31 : vector<1x128x128xbf16> to vector<128x128xbf16>
    %cst_37 = arith.constant dense<0.000000e+00> : vector<288x128xf32>
    %33 = tpu.matmul %30, %32, %cst_37 {dimension_numbers = #tpu.dot_dimension_numbers<[1], [0], [0], [1], [0, 0, 1, 1], [], []>} : vector<288x128xbf16>, vector<128x128xbf16>, vector<288x128xf32> -> vector<288x128xf32>
    %34 = arith.addf %28, %33 : vector<288x128xf32>
    %c0_38 = arith.constant 0 : index
    %c0_39 = arith.constant 0 : index
    %c36 = arith.constant 36 : index
    %c0_40 = arith.constant 0 : index
    %35 = vector.load %arg1[%c0_38, %c0_39, %c36, %c0_40] : memref<1x1x328x128xbf16, #tpu.memory_space<vmem>>, vector<1x1x288x128xbf16>
    %36 = vector.shape_cast %35 : vector<1x1x288x128xbf16> to vector<288x128xbf16>
    %c6 = arith.constant 6 : index
    %c0_41 = arith.constant 0 : index
    %c0_42 = arith.constant 0 : index
    %37 = vector.load %arg2[%c6, %c0_41, %c0_42] : memref<9x128x128xbf16, #tpu.memory_space<vmem>>, vector<1x128x128xbf16>
    %38 = vector.shape_cast %37 : vector<1x128x128xbf16> to vector<128x128xbf16>
    %cst_43 = arith.constant dense<0.000000e+00> : vector<288x128xf32>
    %39 = tpu.matmul %36, %38, %cst_43 {dimension_numbers = #tpu.dot_dimension_numbers<[1], [0], [0], [1], [0, 0, 1, 1], [], []>} : vector<288x128xbf16>, vector<128x128xbf16>, vector<288x128xf32> -> vector<288x128xf32>
    %40 = arith.addf %34, %39 : vector<288x128xf32>
    %c0_44 = arith.constant 0 : index
    %c0_45 = arith.constant 0 : index
    %c37 = arith.constant 37 : index
    %c0_46 = arith.constant 0 : index
    %41 = vector.load %arg1[%c0_44, %c0_45, %c37, %c0_46] : memref<1x1x328x128xbf16, #tpu.memory_space<vmem>>, vector<1x1x288x128xbf16>
    %42 = vector.shape_cast %41 : vector<1x1x288x128xbf16> to vector<288x128xbf16>
    %c7 = arith.constant 7 : index
    %c0_47 = arith.constant 0 : index
    %c0_48 = arith.constant 0 : index
    %43 = vector.load %arg2[%c7, %c0_47, %c0_48] : memref<9x128x128xbf16, #tpu.memory_space<vmem>>, vector<1x128x128xbf16>
    %44 = vector.shape_cast %43 : vector<1x128x128xbf16> to vector<128x128xbf16>
    %cst_49 = arith.constant dense<0.000000e+00> : vector<288x128xf32>
    %45 = tpu.matmul %42, %44, %cst_49 {dimension_numbers = #tpu.dot_dimension_numbers<[1], [0], [0], [1], [0, 0, 1, 1], [], []>} : vector<288x128xbf16>, vector<128x128xbf16>, vector<288x128xf32> -> vector<288x128xf32>
    %46 = arith.addf %40, %45 : vector<288x128xf32>
    %c0_50 = arith.constant 0 : index
    %c0_51 = arith.constant 0 : index
    %c38 = arith.constant 38 : index
    %c0_52 = arith.constant 0 : index
    %47 = vector.load %arg1[%c0_50, %c0_51, %c38, %c0_52] : memref<1x1x328x128xbf16, #tpu.memory_space<vmem>>, vector<1x1x288x128xbf16>
    %48 = vector.shape_cast %47 : vector<1x1x288x128xbf16> to vector<288x128xbf16>
    %c8 = arith.constant 8 : index
    %c0_53 = arith.constant 0 : index
    %c0_54 = arith.constant 0 : index
    %49 = vector.load %arg2[%c8, %c0_53, %c0_54] : memref<9x128x128xbf16, #tpu.memory_space<vmem>>, vector<1x128x128xbf16>
    %50 = vector.shape_cast %49 : vector<1x128x128xbf16> to vector<128x128xbf16>
    %cst_55 = arith.constant dense<0.000000e+00> : vector<288x128xf32>
    %51 = tpu.matmul %48, %50, %cst_55 {dimension_numbers = #tpu.dot_dimension_numbers<[1], [0], [0], [1], [0, 0, 1, 1], [], []>} : vector<288x128xbf16>, vector<128x128xbf16>, vector<288x128xf32> -> vector<288x128xf32>
    %52 = arith.addf %46, %51 : vector<288x128xf32>
    %c0_56 = arith.constant 0 : index
    %c0_57 = arith.constant 0 : index
    %53 = vector.load %arg3[%c0_56, %c0_57] : memref<1x128xf32, #tpu.memory_space<vmem>>, vector<1x128xf32>
    %54 = vector.broadcast %53 : vector<1x128xf32> to vector<288x128xf32>
    %55 = arith.addf %52, %54 : vector<288x128xf32>
    %cst_58 = arith.constant 0.000000e+00 : f32
    %56 = vector.broadcast %cst_58 : f32 to vector<288x128xf32>
    %57 = arith.maximumf %55, %56 : vector<288x128xf32>
    %58 = arith.truncf %57 : vector<288x128xf32> to vector<288x128xbf16>
    %c0_59 = arith.constant 0 : index
    %c0_60 = arith.constant 0 : index
    %c0_61 = arith.constant 0 : index
    %59 = vector.load %arg4[%c0_59, %c0_60, %c0_61] : memref<1x288x128xbf16, #tpu.memory_space<vmem>>, vector<1x288x128xbf16>
    %60 = vector.shape_cast %59 : vector<1x288x128xbf16> to vector<288x128xbf16>
    %61 = vector.shape_cast %58 : vector<288x128xbf16> to vector<1x288x128xbf16>
    tpu.vector_store %arg4[%c0_59, %c0_60, %c0_61], %61 {strides = array<i32>} : memref<1x288x128xbf16, #tpu.memory_space<vmem>>, vector<1x288x128xbf16>,
    return
  }
  func.func @transform_0(%arg0: i32) -> (i32, i32, i32, i32) {
    %c0_i32 = arith.constant 0 : i32
    %c0_i32_0 = arith.constant 0 : i32
    %c0_i32_1 = arith.constant 0 : i32
    %c0_i32_2 = arith.constant 0 : i32
    return %arg0, %c0_i32, %c0_i32_0, %c0_i32_1 : i32, i32, i32, i32
  }
  func.func @transform_1(%arg0: i32) -> (i32, i32, i32) {
    %c0_i32 = arith.constant 0 : i32
    %c0_i32_0 = arith.constant 0 : i32
    %c0_i32_1 = arith.constant 0 : i32
    %c0_i32_2 = arith.constant 0 : i32
    return %c0_i32, %c0_i32_0, %c0_i32_1 : i32, i32, i32
  }
  func.func @transform_2(%arg0: i32) -> (i32, i32) {
    %c0_i32 = arith.constant 0 : i32
    %c0_i32_0 = arith.constant 0 : i32
    %c0_i32_1 = arith.constant 0 : i32
    return %c0_i32, %c0_i32_0 : i32, i32
  }
  func.func @transform_3(%arg0: i32) -> (i32, i32, i32) {
    %c0_i32 = arith.constant 0 : i32
    %c0_i32_0 = arith.constant 0 : i32
    %c0_i32_1 = arith.constant 0 : i32
    return %arg0, %c0_i32, %c0_i32_0 : i32, i32, i32
  }
}

module attributes {stable_mosaic.version = 11 : i64} {
  func.func @_conv_kernel(%arg0: i32, %arg1: memref<1x4x88x128xbf16, #tpu.memory_space<vmem>>, %arg2: memref<9x128x128xbf16, #tpu.memory_space<vmem>>, %arg3: memref<1x128xf32, #tpu.memory_space<vmem>>, %arg4: memref<1x72x128xf32, #tpu.memory_space<vmem>>) attributes {dimension_semantics = [#tpu.dimension_semantics<parallel>], iteration_bounds = array<i64: 2>, scalar_prefetch = 0 : i64, scratch_operands = 0 : i64, tpu.core_type = #tpu.core_type<tc>, window_params = [{transform_indices = @transform_0, window_bounds = array<i64: 1, 4, 88, 128>}, {pipeline_mode = #tpu.pipeline_mode<synchronous>, transform_indices = @transform_1, window_bounds = array<i64: 9, 128, 128>}, {pipeline_mode = #tpu.pipeline_mode<synchronous>, transform_indices = @transform_2, window_bounds = array<i64: 1, 128>}, {transform_indices = @transform_3, window_bounds = array<i64: 1, 72, 128>}]} {
    %c0 = arith.constant 0 : index
    %c0_0 = arith.constant 0 : index
    %c0_1 = arith.constant 0 : index
    %c0_2 = arith.constant 0 : index
    %0 = vector.load %arg1[%c0, %c0_0, %c0_1, %c0_2] : memref<1x4x88x128xbf16, #tpu.memory_space<vmem>>, vector<1x1x72x128xbf16>
    %1 = vector.shape_cast %0 : vector<1x1x72x128xbf16> to vector<72x128xbf16>
    %c0_3 = arith.constant 0 : index
    %c0_4 = arith.constant 0 : index
    %c0_5 = arith.constant 0 : index
    %2 = vector.load %arg2[%c0_3, %c0_4, %c0_5] : memref<9x128x128xbf16, #tpu.memory_space<vmem>>, vector<1x128x128xbf16>
    %3 = vector.shape_cast %2 : vector<1x128x128xbf16> to vector<128x128xbf16>
    %cst = arith.constant dense<0.000000e+00> : vector<72x128xf32>
    %4 = tpu.matmul %1, %3, %cst {dimension_numbers = #tpu.dot_dimension_numbers<[1], [0], [0], [1], [0, 0, 1, 1], [], []>} : vector<72x128xbf16>, vector<128x128xbf16>, vector<72x128xf32> -> vector<72x128xf32>
    %c0_6 = arith.constant 0 : index
    %c1 = arith.constant 1 : index
    %c0_7 = arith.constant 0 : index
    %c0_8 = arith.constant 0 : index
    %5 = vector.load %arg1[%c0_6, %c1, %c0_7, %c0_8] : memref<1x4x88x128xbf16, #tpu.memory_space<vmem>>, vector<1x1x72x128xbf16>
    %6 = vector.shape_cast %5 : vector<1x1x72x128xbf16> to vector<72x128xbf16>
    %c1_9 = arith.constant 1 : index
    %c0_10 = arith.constant 0 : index
    %c0_11 = arith.constant 0 : index
    %7 = vector.load %arg2[%c1_9, %c0_10, %c0_11] : memref<9x128x128xbf16, #tpu.memory_space<vmem>>, vector<1x128x128xbf16>
    %8 = vector.shape_cast %7 : vector<1x128x128xbf16> to vector<128x128xbf16>
    %cst_12 = arith.constant dense<0.000000e+00> : vector<72x128xf32>
    %9 = tpu.matmul %6, %8, %cst_12 {dimension_numbers = #tpu.dot_dimension_numbers<[1], [0], [0], [1], [0, 0, 1, 1], [], []>} : vector<72x128xbf16>, vector<128x128xbf16>, vector<72x128xf32> -> vector<72x128xf32>
    %10 = arith.addf %4, %9 : vector<72x128xf32>
    %c0_13 = arith.constant 0 : index
    %c0_14 = arith.constant 0 : index
    %c1_15 = arith.constant 1 : index
    %c0_16 = arith.constant 0 : index
    %11 = vector.load %arg1[%c0_13, %c0_14, %c1_15, %c0_16] : memref<1x4x88x128xbf16, #tpu.memory_space<vmem>>, vector<1x1x72x128xbf16>
    %12 = vector.shape_cast %11 : vector<1x1x72x128xbf16> to vector<72x128xbf16>
    %c2 = arith.constant 2 : index
    %c0_17 = arith.constant 0 : index
    %c0_18 = arith.constant 0 : index
    %13 = vector.load %arg2[%c2, %c0_17, %c0_18] : memref<9x128x128xbf16, #tpu.memory_space<vmem>>, vector<1x128x128xbf16>
    %14 = vector.shape_cast %13 : vector<1x128x128xbf16> to vector<128x128xbf16>
    %cst_19 = arith.constant dense<0.000000e+00> : vector<72x128xf32>
    %15 = tpu.matmul %12, %14, %cst_19 {dimension_numbers = #tpu.dot_dimension_numbers<[1], [0], [0], [1], [0, 0, 1, 1], [], []>} : vector<72x128xbf16>, vector<128x128xbf16>, vector<72x128xf32> -> vector<72x128xf32>
    %16 = arith.addf %10, %15 : vector<72x128xf32>
    %c0_20 = arith.constant 0 : index
    %c2_21 = arith.constant 2 : index
    %c0_22 = arith.constant 0 : index
    %c0_23 = arith.constant 0 : index
    %17 = vector.load %arg1[%c0_20, %c2_21, %c0_22, %c0_23] : memref<1x4x88x128xbf16, #tpu.memory_space<vmem>>, vector<1x1x72x128xbf16>
    %18 = vector.shape_cast %17 : vector<1x1x72x128xbf16> to vector<72x128xbf16>
    %c3 = arith.constant 3 : index
    %c0_24 = arith.constant 0 : index
    %c0_25 = arith.constant 0 : index
    %19 = vector.load %arg2[%c3, %c0_24, %c0_25] : memref<9x128x128xbf16, #tpu.memory_space<vmem>>, vector<1x128x128xbf16>
    %20 = vector.shape_cast %19 : vector<1x128x128xbf16> to vector<128x128xbf16>
    %cst_26 = arith.constant dense<0.000000e+00> : vector<72x128xf32>
    %21 = tpu.matmul %18, %20, %cst_26 {dimension_numbers = #tpu.dot_dimension_numbers<[1], [0], [0], [1], [0, 0, 1, 1], [], []>} : vector<72x128xbf16>, vector<128x128xbf16>, vector<72x128xf32> -> vector<72x128xf32>
    %22 = arith.addf %16, %21 : vector<72x128xf32>
    %c0_27 = arith.constant 0 : index
    %c3_28 = arith.constant 3 : index
    %c0_29 = arith.constant 0 : index
    %c0_30 = arith.constant 0 : index
    %23 = vector.load %arg1[%c0_27, %c3_28, %c0_29, %c0_30] : memref<1x4x88x128xbf16, #tpu.memory_space<vmem>>, vector<1x1x72x128xbf16>
    %24 = vector.shape_cast %23 : vector<1x1x72x128xbf16> to vector<72x128xbf16>
    %c4 = arith.constant 4 : index
    %c0_31 = arith.constant 0 : index
    %c0_32 = arith.constant 0 : index
    %25 = vector.load %arg2[%c4, %c0_31, %c0_32] : memref<9x128x128xbf16, #tpu.memory_space<vmem>>, vector<1x128x128xbf16>
    %26 = vector.shape_cast %25 : vector<1x128x128xbf16> to vector<128x128xbf16>
    %cst_33 = arith.constant dense<0.000000e+00> : vector<72x128xf32>
    %27 = tpu.matmul %24, %26, %cst_33 {dimension_numbers = #tpu.dot_dimension_numbers<[1], [0], [0], [1], [0, 0, 1, 1], [], []>} : vector<72x128xbf16>, vector<128x128xbf16>, vector<72x128xf32> -> vector<72x128xf32>
    %28 = arith.addf %22, %27 : vector<72x128xf32>
    %c0_34 = arith.constant 0 : index
    %c2_35 = arith.constant 2 : index
    %c1_36 = arith.constant 1 : index
    %c0_37 = arith.constant 0 : index
    %29 = vector.load %arg1[%c0_34, %c2_35, %c1_36, %c0_37] : memref<1x4x88x128xbf16, #tpu.memory_space<vmem>>, vector<1x1x72x128xbf16>
    %30 = vector.shape_cast %29 : vector<1x1x72x128xbf16> to vector<72x128xbf16>
    %c5 = arith.constant 5 : index
    %c0_38 = arith.constant 0 : index
    %c0_39 = arith.constant 0 : index
    %31 = vector.load %arg2[%c5, %c0_38, %c0_39] : memref<9x128x128xbf16, #tpu.memory_space<vmem>>, vector<1x128x128xbf16>
    %32 = vector.shape_cast %31 : vector<1x128x128xbf16> to vector<128x128xbf16>
    %cst_40 = arith.constant dense<0.000000e+00> : vector<72x128xf32>
    %33 = tpu.matmul %30, %32, %cst_40 {dimension_numbers = #tpu.dot_dimension_numbers<[1], [0], [0], [1], [0, 0, 1, 1], [], []>} : vector<72x128xbf16>, vector<128x128xbf16>, vector<72x128xf32> -> vector<72x128xf32>
    %34 = arith.addf %28, %33 : vector<72x128xf32>
    %c0_41 = arith.constant 0 : index
    %c0_42 = arith.constant 0 : index
    %c9 = arith.constant 9 : index
    %c0_43 = arith.constant 0 : index
    %35 = vector.load %arg1[%c0_41, %c0_42, %c9, %c0_43] : memref<1x4x88x128xbf16, #tpu.memory_space<vmem>>, vector<1x1x72x128xbf16>
    %36 = vector.shape_cast %35 : vector<1x1x72x128xbf16> to vector<72x128xbf16>
    %c6 = arith.constant 6 : index
    %c0_44 = arith.constant 0 : index
    %c0_45 = arith.constant 0 : index
    %37 = vector.load %arg2[%c6, %c0_44, %c0_45] : memref<9x128x128xbf16, #tpu.memory_space<vmem>>, vector<1x128x128xbf16>
    %38 = vector.shape_cast %37 : vector<1x128x128xbf16> to vector<128x128xbf16>
    %cst_46 = arith.constant dense<0.000000e+00> : vector<72x128xf32>
    %39 = tpu.matmul %36, %38, %cst_46 {dimension_numbers = #tpu.dot_dimension_numbers<[1], [0], [0], [1], [0, 0, 1, 1], [], []>} : vector<72x128xbf16>, vector<128x128xbf16>, vector<72x128xf32> -> vector<72x128xf32>
    %40 = arith.addf %34, %39 : vector<72x128xf32>
    %c0_47 = arith.constant 0 : index
    %c1_48 = arith.constant 1 : index
    %c9_49 = arith.constant 9 : index
    %c0_50 = arith.constant 0 : index
    %41 = vector.load %arg1[%c0_47, %c1_48, %c9_49, %c0_50] : memref<1x4x88x128xbf16, #tpu.memory_space<vmem>>, vector<1x1x72x128xbf16>
    %42 = vector.shape_cast %41 : vector<1x1x72x128xbf16> to vector<72x128xbf16>
    %c7 = arith.constant 7 : index
    %c0_51 = arith.constant 0 : index
    %c0_52 = arith.constant 0 : index
    %43 = vector.load %arg2[%c7, %c0_51, %c0_52] : memref<9x128x128xbf16, #tpu.memory_space<vmem>>, vector<1x128x128xbf16>
    %44 = vector.shape_cast %43 : vector<1x128x128xbf16> to vector<128x128xbf16>
    %cst_53 = arith.constant dense<0.000000e+00> : vector<72x128xf32>
    %45 = tpu.matmul %42, %44, %cst_53 {dimension_numbers = #tpu.dot_dimension_numbers<[1], [0], [0], [1], [0, 0, 1, 1], [], []>} : vector<72x128xbf16>, vector<128x128xbf16>, vector<72x128xf32> -> vector<72x128xf32>
    %46 = arith.addf %40, %45 : vector<72x128xf32>
    %c0_54 = arith.constant 0 : index
    %c0_55 = arith.constant 0 : index
    %c10 = arith.constant 10 : index
    %c0_56 = arith.constant 0 : index
    %47 = vector.load %arg1[%c0_54, %c0_55, %c10, %c0_56] : memref<1x4x88x128xbf16, #tpu.memory_space<vmem>>, vector<1x1x72x128xbf16>
    %48 = vector.shape_cast %47 : vector<1x1x72x128xbf16> to vector<72x128xbf16>
    %c8 = arith.constant 8 : index
    %c0_57 = arith.constant 0 : index
    %c0_58 = arith.constant 0 : index
    %49 = vector.load %arg2[%c8, %c0_57, %c0_58] : memref<9x128x128xbf16, #tpu.memory_space<vmem>>, vector<1x128x128xbf16>
    %50 = vector.shape_cast %49 : vector<1x128x128xbf16> to vector<128x128xbf16>
    %cst_59 = arith.constant dense<0.000000e+00> : vector<72x128xf32>
    %51 = tpu.matmul %48, %50, %cst_59 {dimension_numbers = #tpu.dot_dimension_numbers<[1], [0], [0], [1], [0, 0, 1, 1], [], []>} : vector<72x128xbf16>, vector<128x128xbf16>, vector<72x128xf32> -> vector<72x128xf32>
    %52 = arith.addf %46, %51 : vector<72x128xf32>
    %c0_60 = arith.constant 0 : index
    %c0_61 = arith.constant 0 : index
    %53 = vector.load %arg3[%c0_60, %c0_61] : memref<1x128xf32, #tpu.memory_space<vmem>>, vector<1x128xf32>
    %54 = vector.broadcast %53 : vector<1x128xf32> to vector<72x128xf32>
    %55 = arith.addf %52, %54 : vector<72x128xf32>
    %cst_62 = arith.constant 0.000000e+00 : f32
    %56 = vector.broadcast %cst_62 : f32 to vector<72x128xf32>
    %57 = arith.maximumf %55, %56 : vector<72x128xf32>
    %c0_63 = arith.constant 0 : index
    %c0_64 = arith.constant 0 : index
    %c0_65 = arith.constant 0 : index
    %58 = vector.load %arg4[%c0_63, %c0_64, %c0_65] : memref<1x72x128xf32, #tpu.memory_space<vmem>>, vector<1x72x128xf32>
    %59 = vector.shape_cast %58 : vector<1x72x128xf32> to vector<72x128xf32>
    %60 = vector.shape_cast %57 : vector<72x128xf32> to vector<1x72x128xf32>
    tpu.vector_store %arg4[%c0_63, %c0_64, %c0_65], %60 {strides = array<i32>} : memref<1x72x128xf32, #tpu.memory_space<vmem>>, vector<1x72x128xf32>,
    return
  }
  func.func @transform_0(%arg0: i32) -> (i32, i32, i32, i32) {
    %c0_i32 = arith.constant 0 : i32
    %c0_i32_0 = arith.constant 0 : i32
    %c0_i32_1 = arith.constant 0 : i32
    %c0_i32_2 = arith.constant 0 : i32
    return %arg0, %c0_i32, %c0_i32_0, %c0_i32_1 : i32, i32, i32, i32
  }
  func.func @transform_1(%arg0: i32) -> (i32, i32, i32) {
    %c0_i32 = arith.constant 0 : i32
    %c0_i32_0 = arith.constant 0 : i32
    %c0_i32_1 = arith.constant 0 : i32
    %c0_i32_2 = arith.constant 0 : i32
    return %c0_i32, %c0_i32_0, %c0_i32_1 : i32, i32, i32
  }
  func.func @transform_2(%arg0: i32) -> (i32, i32) {
    %c0_i32 = arith.constant 0 : i32
    %c0_i32_0 = arith.constant 0 : i32
    %c0_i32_1 = arith.constant 0 : i32
    return %c0_i32, %c0_i32_0 : i32, i32
  }
  func.func @transform_3(%arg0: i32) -> (i32, i32, i32) {
    %c0_i32 = arith.constant 0 : i32
    %c0_i32_0 = arith.constant 0 : i32
    %c0_i32_1 = arith.constant 0 : i32
    return %arg0, %c0_i32, %c0_i32_0 : i32, i32, i32
  }
}

module attributes {stable_mosaic.version = 11 : i64} {
  func.func @_conv_pool_kernel(%arg0: i32, %arg1: memref<1x4x88x4xbf16, #tpu.memory_space<vmem>>, %arg2: memref<9x4x384xbf16, #tpu.memory_space<vmem>>, %arg3: memref<1x384xf32, #tpu.memory_space<vmem>>, %arg4: memref<1x72x384xf32, #tpu.memory_space<vmem>>, %arg5: memref<1x72x4xf32, #tpu.memory_space<vmem>>) attributes {dimension_semantics = [#tpu.dimension_semantics<parallel>], iteration_bounds = array<i64: 2>, scalar_prefetch = 0 : i64, scratch_operands = 0 : i64, tpu.core_type = #tpu.core_type<tc>, window_params = [{transform_indices = @transform_0, window_bounds = array<i64: 1, 4, 88, 4>}, {pipeline_mode = #tpu.pipeline_mode<synchronous>, transform_indices = @transform_1, window_bounds = array<i64: 9, 4, 384>}, {pipeline_mode = #tpu.pipeline_mode<synchronous>, transform_indices = @transform_2, window_bounds = array<i64: 1, 384>}, {transform_indices = @transform_3, window_bounds = array<i64: 1, 72, 384>}, {transform_indices = @transform_4, window_bounds = array<i64: 1, 72, 4>}]} {
    %c0 = arith.constant 0 : index
    %c0_0 = arith.constant 0 : index
    %c0_1 = arith.constant 0 : index
    %c0_2 = arith.constant 0 : index
    %0 = vector.load %arg1[%c0, %c0_0, %c0_1, %c0_2] : memref<1x4x88x4xbf16, #tpu.memory_space<vmem>>, vector<1x1x72x4xbf16>
    %1 = vector.shape_cast %0 : vector<1x1x72x4xbf16> to vector<72x4xbf16>
    %c0_3 = arith.constant 0 : index
    %c0_4 = arith.constant 0 : index
    %c0_5 = arith.constant 0 : index
    %2 = vector.load %arg2[%c0_3, %c0_4, %c0_5] : memref<9x4x384xbf16, #tpu.memory_space<vmem>>, vector<1x4x384xbf16>
    %3 = vector.shape_cast %2 : vector<1x4x384xbf16> to vector<4x384xbf16>
    %cst = arith.constant dense<0.000000e+00> : vector<72x384xf32>
    %4 = tpu.matmul %1, %3, %cst {dimension_numbers = #tpu.dot_dimension_numbers<[1], [0], [0], [1], [0, 0, 1, 1], [], []>} : vector<72x4xbf16>, vector<4x384xbf16>, vector<72x384xf32> -> vector<72x384xf32>
    %c0_6 = arith.constant 0 : index
    %c1 = arith.constant 1 : index
    %c0_7 = arith.constant 0 : index
    %c0_8 = arith.constant 0 : index
    %5 = vector.load %arg1[%c0_6, %c1, %c0_7, %c0_8] : memref<1x4x88x4xbf16, #tpu.memory_space<vmem>>, vector<1x1x72x4xbf16>
    %6 = vector.shape_cast %5 : vector<1x1x72x4xbf16> to vector<72x4xbf16>
    %c1_9 = arith.constant 1 : index
    %c0_10 = arith.constant 0 : index
    %c0_11 = arith.constant 0 : index
    %7 = vector.load %arg2[%c1_9, %c0_10, %c0_11] : memref<9x4x384xbf16, #tpu.memory_space<vmem>>, vector<1x4x384xbf16>
    %8 = vector.shape_cast %7 : vector<1x4x384xbf16> to vector<4x384xbf16>
    %cst_12 = arith.constant dense<0.000000e+00> : vector<72x384xf32>
    %9 = tpu.matmul %6, %8, %cst_12 {dimension_numbers = #tpu.dot_dimension_numbers<[1], [0], [0], [1], [0, 0, 1, 1], [], []>} : vector<72x4xbf16>, vector<4x384xbf16>, vector<72x384xf32> -> vector<72x384xf32>
    %10 = arith.addf %4, %9 : vector<72x384xf32>
    %11 = arith.maximumf %1, %6 : vector<72x4xbf16>
    %c0_13 = arith.constant 0 : index
    %c0_14 = arith.constant 0 : index
    %c1_15 = arith.constant 1 : index
    %c0_16 = arith.constant 0 : index
    %12 = vector.load %arg1[%c0_13, %c0_14, %c1_15, %c0_16] : memref<1x4x88x4xbf16, #tpu.memory_space<vmem>>, vector<1x1x72x4xbf16>
    %13 = vector.shape_cast %12 : vector<1x1x72x4xbf16> to vector<72x4xbf16>
    %c2 = arith.constant 2 : index
    %c0_17 = arith.constant 0 : index
    %c0_18 = arith.constant 0 : index
    %14 = vector.load %arg2[%c2, %c0_17, %c0_18] : memref<9x4x384xbf16, #tpu.memory_space<vmem>>, vector<1x4x384xbf16>
    %15 = vector.shape_cast %14 : vector<1x4x384xbf16> to vector<4x384xbf16>
    %cst_19 = arith.constant dense<0.000000e+00> : vector<72x384xf32>
    %16 = tpu.matmul %13, %15, %cst_19 {dimension_numbers = #tpu.dot_dimension_numbers<[1], [0], [0], [1], [0, 0, 1, 1], [], []>} : vector<72x4xbf16>, vector<4x384xbf16>, vector<72x384xf32> -> vector<72x384xf32>
    %17 = arith.addf %10, %16 : vector<72x384xf32>
    %18 = arith.maximumf %11, %13 : vector<72x4xbf16>
    %c0_20 = arith.constant 0 : index
    %c2_21 = arith.constant 2 : index
    %c0_22 = arith.constant 0 : index
    %c0_23 = arith.constant 0 : index
    %19 = vector.load %arg1[%c0_20, %c2_21, %c0_22, %c0_23] : memref<1x4x88x4xbf16, #tpu.memory_space<vmem>>, vector<1x1x72x4xbf16>
    %20 = vector.shape_cast %19 : vector<1x1x72x4xbf16> to vector<72x4xbf16>
    %c3 = arith.constant 3 : index
    %c0_24 = arith.constant 0 : index
    %c0_25 = arith.constant 0 : index
    %21 = vector.load %arg2[%c3, %c0_24, %c0_25] : memref<9x4x384xbf16, #tpu.memory_space<vmem>>, vector<1x4x384xbf16>
    %22 = vector.shape_cast %21 : vector<1x4x384xbf16> to vector<4x384xbf16>
    %cst_26 = arith.constant dense<0.000000e+00> : vector<72x384xf32>
    %23 = tpu.matmul %20, %22, %cst_26 {dimension_numbers = #tpu.dot_dimension_numbers<[1], [0], [0], [1], [0, 0, 1, 1], [], []>} : vector<72x4xbf16>, vector<4x384xbf16>, vector<72x384xf32> -> vector<72x384xf32>
    %24 = arith.addf %17, %23 : vector<72x384xf32>
    %25 = arith.maximumf %18, %20 : vector<72x4xbf16>
    %c0_27 = arith.constant 0 : index
    %c3_28 = arith.constant 3 : index
    %c0_29 = arith.constant 0 : index
    %c0_30 = arith.constant 0 : index
    %26 = vector.load %arg1[%c0_27, %c3_28, %c0_29, %c0_30] : memref<1x4x88x4xbf16, #tpu.memory_space<vmem>>, vector<1x1x72x4xbf16>
    %27 = vector.shape_cast %26 : vector<1x1x72x4xbf16> to vector<72x4xbf16>
    %c4 = arith.constant 4 : index
    %c0_31 = arith.constant 0 : index
    %c0_32 = arith.constant 0 : index
    %28 = vector.load %arg2[%c4, %c0_31, %c0_32] : memref<9x4x384xbf16, #tpu.memory_space<vmem>>, vector<1x4x384xbf16>
    %29 = vector.shape_cast %28 : vector<1x4x384xbf16> to vector<4x384xbf16>
    %cst_33 = arith.constant dense<0.000000e+00> : vector<72x384xf32>
    %30 = tpu.matmul %27, %29, %cst_33 {dimension_numbers = #tpu.dot_dimension_numbers<[1], [0], [0], [1], [0, 0, 1, 1], [], []>} : vector<72x4xbf16>, vector<4x384xbf16>, vector<72x384xf32> -> vector<72x384xf32>
    %31 = arith.addf %24, %30 : vector<72x384xf32>
    %32 = arith.maximumf %25, %27 : vector<72x4xbf16>
    %c0_34 = arith.constant 0 : index
    %c2_35 = arith.constant 2 : index
    %c1_36 = arith.constant 1 : index
    %c0_37 = arith.constant 0 : index
    %33 = vector.load %arg1[%c0_34, %c2_35, %c1_36, %c0_37] : memref<1x4x88x4xbf16, #tpu.memory_space<vmem>>, vector<1x1x72x4xbf16>
    %34 = vector.shape_cast %33 : vector<1x1x72x4xbf16> to vector<72x4xbf16>
    %c5 = arith.constant 5 : index
    %c0_38 = arith.constant 0 : index
    %c0_39 = arith.constant 0 : index
    %35 = vector.load %arg2[%c5, %c0_38, %c0_39] : memref<9x4x384xbf16, #tpu.memory_space<vmem>>, vector<1x4x384xbf16>
    %36 = vector.shape_cast %35 : vector<1x4x384xbf16> to vector<4x384xbf16>
    %cst_40 = arith.constant dense<0.000000e+00> : vector<72x384xf32>
    %37 = tpu.matmul %34, %36, %cst_40 {dimension_numbers = #tpu.dot_dimension_numbers<[1], [0], [0], [1], [0, 0, 1, 1], [], []>} : vector<72x4xbf16>, vector<4x384xbf16>, vector<72x384xf32> -> vector<72x384xf32>
    %38 = arith.addf %31, %37 : vector<72x384xf32>
    %39 = arith.maximumf %32, %34 : vector<72x4xbf16>
    %c0_41 = arith.constant 0 : index
    %c0_42 = arith.constant 0 : index
    %c9 = arith.constant 9 : index
    %c0_43 = arith.constant 0 : index
    %40 = vector.load %arg1[%c0_41, %c0_42, %c9, %c0_43] : memref<1x4x88x4xbf16, #tpu.memory_space<vmem>>, vector<1x1x72x4xbf16>
    %41 = vector.shape_cast %40 : vector<1x1x72x4xbf16> to vector<72x4xbf16>
    %c6 = arith.constant 6 : index
    %c0_44 = arith.constant 0 : index
    %c0_45 = arith.constant 0 : index
    %42 = vector.load %arg2[%c6, %c0_44, %c0_45] : memref<9x4x384xbf16, #tpu.memory_space<vmem>>, vector<1x4x384xbf16>
    %43 = vector.shape_cast %42 : vector<1x4x384xbf16> to vector<4x384xbf16>
    %cst_46 = arith.constant dense<0.000000e+00> : vector<72x384xf32>
    %44 = tpu.matmul %41, %43, %cst_46 {dimension_numbers = #tpu.dot_dimension_numbers<[1], [0], [0], [1], [0, 0, 1, 1], [], []>} : vector<72x4xbf16>, vector<4x384xbf16>, vector<72x384xf32> -> vector<72x384xf32>
    %45 = arith.addf %38, %44 : vector<72x384xf32>
    %46 = arith.maximumf %39, %41 : vector<72x4xbf16>
    %c0_47 = arith.constant 0 : index
    %c1_48 = arith.constant 1 : index
    %c9_49 = arith.constant 9 : index
    %c0_50 = arith.constant 0 : index
    %47 = vector.load %arg1[%c0_47, %c1_48, %c9_49, %c0_50] : memref<1x4x88x4xbf16, #tpu.memory_space<vmem>>, vector<1x1x72x4xbf16>
    %48 = vector.shape_cast %47 : vector<1x1x72x4xbf16> to vector<72x4xbf16>
    %c7 = arith.constant 7 : index
    %c0_51 = arith.constant 0 : index
    %c0_52 = arith.constant 0 : index
    %49 = vector.load %arg2[%c7, %c0_51, %c0_52] : memref<9x4x384xbf16, #tpu.memory_space<vmem>>, vector<1x4x384xbf16>
    %50 = vector.shape_cast %49 : vector<1x4x384xbf16> to vector<4x384xbf16>
    %cst_53 = arith.constant dense<0.000000e+00> : vector<72x384xf32>
    %51 = tpu.matmul %48, %50, %cst_53 {dimension_numbers = #tpu.dot_dimension_numbers<[1], [0], [0], [1], [0, 0, 1, 1], [], []>} : vector<72x4xbf16>, vector<4x384xbf16>, vector<72x384xf32> -> vector<72x384xf32>
    %52 = arith.addf %45, %51 : vector<72x384xf32>
    %53 = arith.maximumf %46, %48 : vector<72x4xbf16>
    %c0_54 = arith.constant 0 : index
    %c0_55 = arith.constant 0 : index
    %c10 = arith.constant 10 : index
    %c0_56 = arith.constant 0 : index
    %54 = vector.load %arg1[%c0_54, %c0_55, %c10, %c0_56] : memref<1x4x88x4xbf16, #tpu.memory_space<vmem>>, vector<1x1x72x4xbf16>
    %55 = vector.shape_cast %54 : vector<1x1x72x4xbf16> to vector<72x4xbf16>
    %c8 = arith.constant 8 : index
    %c0_57 = arith.constant 0 : index
    %c0_58 = arith.constant 0 : index
    %56 = vector.load %arg2[%c8, %c0_57, %c0_58] : memref<9x4x384xbf16, #tpu.memory_space<vmem>>, vector<1x4x384xbf16>
    %57 = vector.shape_cast %56 : vector<1x4x384xbf16> to vector<4x384xbf16>
    %cst_59 = arith.constant dense<0.000000e+00> : vector<72x384xf32>
    %58 = tpu.matmul %55, %57, %cst_59 {dimension_numbers = #tpu.dot_dimension_numbers<[1], [0], [0], [1], [0, 0, 1, 1], [], []>} : vector<72x4xbf16>, vector<4x384xbf16>, vector<72x384xf32> -> vector<72x384xf32>
    %59 = arith.addf %52, %58 : vector<72x384xf32>
    %60 = arith.maximumf %53, %55 : vector<72x4xbf16>
    %c0_60 = arith.constant 0 : index
    %c0_61 = arith.constant 0 : index
    %61 = vector.load %arg3[%c0_60, %c0_61] : memref<1x384xf32, #tpu.memory_space<vmem>>, vector<1x384xf32>
    %62 = vector.broadcast %61 : vector<1x384xf32> to vector<72x384xf32>
    %63 = arith.addf %59, %62 : vector<72x384xf32>
    %cst_62 = arith.constant 0.000000e+00 : f32
    %64 = vector.broadcast %cst_62 : f32 to vector<72x384xf32>
    %65 = arith.maximumf %63, %64 : vector<72x384xf32>
    %c0_63 = arith.constant 0 : index
    %c0_64 = arith.constant 0 : index
    %c0_65 = arith.constant 0 : index
    %66 = vector.load %arg4[%c0_63, %c0_64, %c0_65] : memref<1x72x384xf32, #tpu.memory_space<vmem>>, vector<1x72x384xf32>
    %67 = vector.shape_cast %66 : vector<1x72x384xf32> to vector<72x384xf32>
    %68 = vector.shape_cast %65 : vector<72x384xf32> to vector<1x72x384xf32>
    tpu.vector_store %arg4[%c0_63, %c0_64, %c0_65], %68 {strides = array<i32>} : memref<1x72x384xf32, #tpu.memory_space<vmem>>, vector<1x72x384xf32>,
    %69 = arith.extf %60 : vector<72x4xbf16> to vector<72x4xf32>
    %c0_66 = arith.constant 0 : index
    %c0_67 = arith.constant 0 : index
    %c0_68 = arith.constant 0 : index
    %70 = vector.load %arg5[%c0_66, %c0_67, %c0_68] : memref<1x72x4xf32, #tpu.memory_space<vmem>>, vector<1x72x4xf32>
    %71 = vector.shape_cast %70 : vector<1x72x4xf32> to vector<72x4xf32>
    %72 = vector.shape_cast %69 : vector<72x4xf32> to vector<1x72x4xf32>
    tpu.vector_store %arg5[%c0_66, %c0_67, %c0_68], %72 {strides = array<i32>} : memref<1x72x4xf32, #tpu.memory_space<vmem>>, vector<1x72x4xf32>,
    return
  }
  func.func @transform_0(%arg0: i32) -> (i32, i32, i32, i32) {
    %c0_i32 = arith.constant 0 : i32
    %c0_i32_0 = arith.constant 0 : i32
    %c0_i32_1 = arith.constant 0 : i32
    %c0_i32_2 = arith.constant 0 : i32
    return %arg0, %c0_i32, %c0_i32_0, %c0_i32_1 : i32, i32, i32, i32
  }
  func.func @transform_1(%arg0: i32) -> (i32, i32, i32) {
    %c0_i32 = arith.constant 0 : i32
    %c0_i32_0 = arith.constant 0 : i32
    %c0_i32_1 = arith.constant 0 : i32
    %c0_i32_2 = arith.constant 0 : i32
    return %c0_i32, %c0_i32_0, %c0_i32_1 : i32, i32, i32
  }
  func.func @transform_2(%arg0: i32) -> (i32, i32) {
    %c0_i32 = arith.constant 0 : i32
    %c0_i32_0 = arith.constant 0 : i32
    %c0_i32_1 = arith.constant 0 : i32
    return %c0_i32, %c0_i32_0 : i32, i32
  }
  func.func @transform_3(%arg0: i32) -> (i32, i32, i32) {
    %c0_i32 = arith.constant 0 : i32
    %c0_i32_0 = arith.constant 0 : i32
    %c0_i32_1 = arith.constant 0 : i32
    return %arg0, %c0_i32, %c0_i32_0 : i32, i32, i32
  }
  func.func @transform_4(%arg0: i32) -> (i32, i32, i32) {
    %c0_i32 = arith.constant 0 : i32
    %c0_i32_0 = arith.constant 0 : i32
    %c0_i32_1 = arith.constant 0 : i32
    return %arg0, %c0_i32, %c0_i32_0 : i32, i32, i32
  }
}

</mosaic_0001>

<llo_original>
// kernel: inception_b_forward.5
$region0: #{inception_b_forward.5}
  #allocation0 [shape = 'u32[]', space=smem, size = 0x4, offset = 0x4, fixed_abs, tag = 'smem constant byte address 0x4 - core index']
  #allocation1 [shape = 'u32[72,128]{1,0:T(1,128)}', space=vmem, size = 0x9000, scoped, tag = 'internal scratch']
  %s0 = inlined_call_operand.vmem [shape: bf16[2,1,256,4], index: 0, kind: input, shape index: {}]
  %s1 = inlined_call_operand.vmem [shape: bf16[1,4,128], index: 1, kind: input, shape index: {}]
  %s2 = inlined_call_operand.vmem [shape: f32[1,128], index: 2, kind: input, shape index: {}]
  %s3 = inlined_call_operand.vmem [shape: bf16[2,256,128], index: 3, kind: output, shape index: {}]
  %s4 = sld [smem:[#allocation0]]
  $region45: #{inception_b_forward.5} parent=0
    _
  %s6 = ssub.s32 1, %s4
  %s7 = scalar_select 0, %s6, %s4
  loop: start=0, step=1, limit=4
  $region2: #{inception_b_forward.5} parent=0 // loop_pre_header
    _
  $region3: #{inception_b_forward.5} parent=0 // loop_header
    %s9 = sphi 0, %s13
    %p10 = scmp.ge.s32.totalorder %s9, 4
    %s19 = sphi 0, %s21
    %s22 = sphi 0, %s19
    %s23 = sphi 0, %s22
    %s39 = sphi 0, %s23
    %s43 = sphi 0, %s43
    %s45 = sphi 0, %s43
    %s46 = sphi 0, %s45
    %s60 = sphi 0, %s46
    %s64 = sphi 0, %s64
    %s66 = sphi 0, %s64
    %s67 = sphi 0, %s66
    %s81 = sphi 0, %s67
    %s87 = sphi 0, %s89
    %s90 = sphi 0, %s87
    %s91 = sphi 0, %s90
    %s107 = sphi 0, %s91
  $region4: #{inception_b_forward.5} parent=0 // loop_header_branch
    %12 = sbr.rel (%p10) target = $region8
  $region5: #{inception_b_forward.5} parent=0 // loop_body
    %s14 = ssub.s32 %s9, 1
    %s15 = ssub.s32 %s9, 2
    %s16 = sadd.s32 %s9, 1
    %s17 = ssub.s32 %s9, %s16
    %p18 = scmp.eq.s32.totalorder %s17, 0
    %s20 = sadd.s32 %s19, 1
    %s21 = scalar_select %p18, %s19, %s20
    %p24 = pneg %p18
    %p25 = scmp.eq.s32.totalorder %s9, 1
    %p26 = por %p24, %p25
    %p27 = scmp.ne.s32.totalorder %s19, %s22
    %p28 = scmp.eq.s32.totalorder %s9, 0
    %p29 = por %p27, %p28
    %p30 = scmp.ne.s32.totalorder %s19, %s22
    %p31 = scmp.eq.s32.totalorder %s14, 1
    %p32 = por %p30, %p31
    %p33 = scmp.ne.s32.totalorder %s22, %s23
    %p34 = scmp.eq.s32.totalorder %s14, 0
    %p35 = por %p33, %p34
    %p36 = scmp.ne.s32.totalorder %s22, %s23
    %p37 = scmp.eq.s32.totalorder %s15, 1
    %p38 = por %p36, %p37
    %p40 = scmp.ne.s32.totalorder %s23, %s39
    %p41 = scmp.eq.s32.totalorder %s15, 0
    %p42 = por %p40, %p41
    %s44 = sadd.s32 %s43, 1
    %p47 = scmp.eq.s32.totalorder %s9, 1
    %p48 = scmp.ne.s32.totalorder %s43, %s45
    %p49 = scmp.eq.s32.totalorder %s9, 0
    %p50 = por %p48, %p49
    %p51 = scmp.ne.s32.totalorder %s43, %s45
    %p52 = scmp.eq.s32.totalorder %s14, 1
    %p53 = por %p51, %p52
    %p54 = scmp.ne.s32.totalorder %s45, %s46
    %p55 = scmp.eq.s32.totalorder %s14, 0
    %p56 = por %p54, %p55
    %p57 = scmp.ne.s32.totalorder %s45, %s46
    %p58 = scmp.eq.s32.totalorder %s15, 1
    %p59 = por %p57, %p58
    %p61 = scmp.ne.s32.totalorder %s46, %s60
    %p62 = scmp.eq.s32.totalorder %s15, 0
    %p63 = por %p61, %p62
    %s65 = sadd.s32 %s64, 1
    %p68 = scmp.eq.s32.totalorder %s9, 1
    %p69 = scmp.ne.s32.totalorder %s64, %s66
    %p70 = scmp.eq.s32.totalorder %s9, 0
    %p71 = por %p69, %p70
    %p72 = scmp.ne.s32.totalorder %s64, %s66
    %p73 = scmp.eq.s32.totalorder %s14, 1
    %p74 = por %p72, %p73
    %p75 = scmp.ne.s32.totalorder %s66, %s67
    %p76 = scmp.eq.s32.totalorder %s14, 0
    %p77 = por %p75, %p76
    %p78 = scmp.ne.s32.totalorder %s66, %s67
    %p79 = scmp.eq.s32.totalorder %s15, 1
    %p80 = por %p78, %p79
    %p82 = scmp.ne.s32.totalorder %s67, %s81
    %p83 = scmp.eq.s32.totalorder %s15, 0
    %p84 = por %p82, %p83
    %s85 = ssub.s32 %s9, %s16
    %p86 = scmp.eq.s32.totalorder %s85, 0
    %s88 = sadd.s32 %s87, 1
    %s89 = scalar_select %p86, %s87, %s88
    %p92 = pneg %p86
    %p93 = scmp.eq.s32.totalorder %s9, 1
    %p94 = por %p92, %p93
    %p95 = scmp.ne.s32.totalorder %s87, %s90
    %p96 = scmp.eq.s32.totalorder %s9, 0
    %p97 = por %p95, %p96
    %p98 = scmp.ne.s32.totalorder %s87, %s90
    %p99 = scmp.eq.s32.totalorder %s14, 1
    %p100 = por %p98, %p99
    %p101 = scmp.ne.s32.totalorder %s90, %s91
    %p102 = scmp.eq.s32.totalorder %s14, 0
    %p103 = por %p101, %p102
    %p104 = scmp.ne.s32.totalorder %s90, %s91
    %p105 = scmp.eq.s32.totalorder %s15, 1
    %p106 = por %p104, %p105
    %p108 = scmp.ne.s32.totalorder %s91, %s107
    %p109 = scmp.eq.s32.totalorder %s15, 0
    %p110 = por %p108, %p109
    %p111 = scmp.le.s32.totalorder 1, %s9
    %p112 = scmp.lt.s32.totalorder %s9, 3
    %p113 = pnand %p111, %p112
    %p114 = pneg %p113
    // Predicated region
    $region9: #{inception_b_forward.5} parent=5 // pred_check
      _
    $region10: #{inception_b_forward.5} parent=5 // pred_check_branch
      %116 = sbr.rel (%p113) target = $region12
    $region11: #{inception_b_forward.5} parent=5 // pred_region
      %s117 = ssub.s32 %s9, 1
      // Predicated region
      $region13: #{inception_b_forward.5} parent=11 // pred_check
        %p118 = pneg %p56
      $region14: #{inception_b_forward.5} parent=11 // pred_check_branch
        %120 = sbr.rel (%p118) target = $region16
      $region15: #{inception_b_forward.5} parent=11 // pred_region
        _
      $region16: #{inception_b_forward.5} parent=11 // pred_fallthru
        _
      // Predicated region
      $region17: #{inception_b_forward.5} parent=11 // pred_check
        %p121 = pneg %p77
      $region18: #{inception_b_forward.5} parent=11 // pred_check_branch
        %123 = sbr.rel (%p121) target = $region20
      $region19: #{inception_b_forward.5} parent=11 // pred_region
        _
      $region20: #{inception_b_forward.5} parent=11 // pred_fallthru
        _
    $region12: #{inception_b_forward.5} parent=5 // pred_fallthru
      _
    %p124 = scmp.lt.s32.totalorder %s9, 2
    // Predicated region
    $region21: #{inception_b_forward.5} parent=5 // pred_check
      %p125 = pneg %p124
    $region22: #{inception_b_forward.5} parent=5 // pred_check_branch
      %127 = sbr.rel (%p125) target = $region24
    $region23: #{inception_b_forward.5} parent=5 // pred_region
      // Predicated region
      $region25: #{inception_b_forward.5} parent=23 // pred_check
        %p128 = pneg %p29
      $region26: #{inception_b_forward.5} parent=23 // pred_check_branch
        %130 = sbr.rel (%p128) target = $region28
      $region27: #{inception_b_forward.5} parent=23 // pred_region
        %p131 = scmp.lt.s32.totalorder %s9, 1
        %s132 = scalar_select %p131, %s9, 1
        %s133 = smul.addr %s132, 32
        %s134 = smul.addr %s133, 4
        %s135 = scalar_lea.vmem %s0, %s134
      $region28: #{inception_b_forward.5} parent=23 // pred_fallthru
        _
    $region24: #{inception_b_forward.5} parent=5 // pred_fallthru
      _
    %p136 = scmp.le.s32.totalorder 1, %s9
    %p137 = scmp.lt.s32.totalorder %s9, 3
    %p138 = pnand %p136, %p137
    %p139 = pneg %p138
    // Predicated region
    $region29: #{inception_b_forward.5} parent=5 // pred_check
      _
    $region30: #{inception_b_forward.5} parent=5 // pred_check_branch
      %141 = sbr.rel (%p138) target = $region32
    $region31: #{inception_b_forward.5} parent=5 // pred_region
      %s142 = ssub.s32 %s9, 1
      %p143 = scmp.lt.s32.totalorder %s14, 1
      %s144 = scalar_select %p143, %s14, 1
      %s145 = smul.addr %s144, 32
      %s146 = smul.addr %s145, 4
      %s147 = scalar_lea.vmem %s0, %s146
      %p148 = pneg %p35
      %p149 = pneg %p32
      %p150 = pneg %p56
      %p151 = pneg %p53
      %p152 = pneg %p77
      %p153 = pneg %p74
      %p154 = pneg %p103
      %p155 = pneg %p100
      %p156 = scmp.lt.s32.totalorder %s14, 1
      %s157 = scalar_select %p156, %s14, 1
      %s158 = smul.addr %s157, 32
      %s159 = smul.addr %s158, 4
      %s160 = scalar_lea.vmem %s3, %s159
      %p161 = scmp.lt.s32.totalorder %s14, 1
      %s162 = scalar_select %p161, %s14, 1
      %s163 = smul.addr %s162, 32
      %s164 = smul.addr %s163, 4
      %s165 = scalar_lea.vmem %s0, %s164
      %p166 = scmp.lt.s32.totalorder %s14, 1
      %s167 = scalar_select %p166, %s14, 1
      %s168 = smul.addr %s167, 32
      %s169 = smul.addr %s168, 4
      %s170 = scalar_lea.vmem %s3, %s169
      %v172 = vld [vmem:[%s165] sm:$0xf]
      %v173 = vld [vmem:[%s165 + $0x4] sm:$0xf]
      %v174 = vld [vmem:[%s165 + $0x8] sm:$0xf]
      %v175 = vld [vmem:[%s165 + $0xc] sm:$0xf]
      %v176 = vld [vmem:[%s165 + $0x10] sm:$0xf]
      %v177 = vld [vmem:[%s165 + $0x14] sm:$0xf]
      %v178 = vld [vmem:[%s165 + $0x18] sm:$0xf]
      %v179 = vld [vmem:[%s165 + $0x1c] sm:$0xf]
      %v180 = vld [vmem:[%s165 + $0x20] sm:$0xf]
      %v181 = vld [vmem:[%s165 + $0x24] sm:$0xf]
      %v182 = vld [vmem:[%s165 + $0x28] sm:$0xf]
      %v183 = vld [vmem:[%s165 + $0x2c] sm:$0xf]
      %v184 = vld [vmem:[%s165 + $0x30] sm:$0xf]
      %v185 = vld [vmem:[%s165 + $0x34] sm:$0xf]
      %v186 = vld [vmem:[%s165 + $0x38] sm:$0xf]
      %v187 = vld [vmem:[%s165 + $0x3c] sm:$0xf]
      %v188 = vld [vmem:[%s165 + $0x40] sm:$0xf]
      %v189 = vld [vmem:[%s165 + $0x44] sm:$0xf]
      %v190 = vld [vmem:[%s165 + $0x48] sm:$0xf]
      %v191 = vld [vmem:[%s165 + $0x4c] sm:$0xf]
      %v192 = vld [vmem:[%s165 + $0x50] sm:$0xf]
      %v193 = vld [vmem:[%s165 + $0x54] sm:$0xf]
      %v194 = vld [vmem:[%s165 + $0x58] sm:$0xf]
      %v195 = vld [vmem:[%s165 + $0x5c] sm:$0xf]
      %v196 = vld [vmem:[%s165 + $0x60] sm:$0xf]
      %v197 = vld [vmem:[%s165 + $0x64] sm:$0xf]
      %v198 = vld [vmem:[%s165 + $0x68] sm:$0xf]
      %v199 = vld [vmem:[%s165 + $0x6c] sm:$0xf]
      %v200 = vld [vmem:[%s165 + $0x70] sm:$0xf]
      %v201 = vld [vmem:[%s165 + $0x74] sm:$0xf]
      %v202 = vld [vmem:[%s165 + $0x78] sm:$0xf]
      %v203 = vld [vmem:[%s165 + $0x7c] sm:$0xf]
      %v204 = vld [vmem:[%s1] sm:$0x3]
      %v205 = vld [vmem:[%s2] sm:$0x1]
      %v207 = vperm.slane %v205, 0
      %v241 = vunpack.c.l.b16 %v172
      %v242 = vunpack.c.l.b16 %v173
      %v243 = vunpack.c.l.b16 %v174
      %v244 = vunpack.c.l.b16 %v175
      %v245 = vunpack.c.l.b16 %v176
      %v246 = vunpack.c.l.b16 %v177
      %v247 = vunpack.c.l.b16 %v178
      %v248 = vunpack.c.l.b16 %v179
      %v249 = vunpack.c.l.b16 %v180
      %v250 = vunpack.c.l.b16 %v181
      %v251 = vunpack.c.l.b16 %v182
      %v252 = vunpack.c.l.b16 %v183
      %v253 = vunpack.c.l.b16 %v184
      %v254 = vunpack.c.l.b16 %v185
      %v255 = vunpack.c.l.b16 %v186
      %v256 = vunpack.c.l.b16 %v187
      %v257 = vunpack.c.l.b16 %v188
      %v258 = vunpack.c.l.b16 %v189
      %v259 = vunpack.c.l.b16 %v190
      %v260 = vunpack.c.l.b16 %v191
      %v261 = vunpack.c.l.b16 %v192
      %v262 = vunpack.c.l.b16 %v193
      %v263 = vunpack.c.l.b16 %v194
      %v264 = vunpack.c.l.b16 %v195
      %v265 = vunpack.c.l.b16 %v196
      %v266 = vunpack.c.l.b16 %v197
      %v267 = vunpack.c.l.b16 %v198
      %v268 = vunpack.c.l.b16 %v199
      %v269 = vunpack.c.l.b16 %v200
      %v270 = vunpack.c.l.b16 %v201
      %v271 = vunpack.c.l.b16 %v202
      %v272 = vunpack.c.l.b16 %v203
      %v273 = vpack.c.b16 %v242, %v241
      %v274 = vpack.c.b16 %v244, %v243
      %v275 = vpack.c.b16 %v246, %v245
      %v276 = vpack.c.b16 %v248, %v247
      %v277 = vpack.c.b16 %v250, %v249
      %v278 = vpack.c.b16 %v252, %v251
      %v279 = vpack.c.b16 %v254, %v253
      %v280 = vpack.c.b16 %v256, %v255
      %v281 = vpack.c.b16 %v258, %v257
      %v282 = vpack.c.b16 %v260, %v259
      %v283 = vpack.c.b16 %v262, %v261
      %v284 = vpack.c.b16 %v264, %v263
      %v285 = vpack.c.b16 %v266, %v265
      %v286 = vpack.c.b16 %v268, %v267
      %v287 = vpack.c.b16 %v270, %v269
      %v288 = vpack.c.b16 %v272, %v271
      %vm289 = vcmask 31744
      %v291 = vsel %vm289, %v273, 0
      %v294 = vsel %vm289, %v274, 0
      %v297 = vsel %vm289, %v275, 0
      %v300 = vsel %vm289, %v276, 0
      %v303 = vsel %vm289, %v277, 0
      %v306 = vsel %vm289, %v278, 0
      %v309 = vsel %vm289, %v279, 0
      %v312 = vsel %vm289, %v280, 0
      %v315 = vsel %vm289, %v281, 0
      %v318 = vsel %vm289, %v282, 0
      %v321 = vsel %vm289, %v283, 0
      %v324 = vsel %vm289, %v284, 0
      %v327 = vsel %vm289, %v285, 0
      %v330 = vsel %vm289, %v286, 0
      %v333 = vsel %vm289, %v287, 0
      %v336 = vsel %vm289, %v288, 0
      %vm338 = vcmask 1041408
      %v340 = vsel %vm338, %v204, 0
      %342 = vmatpush.bf16.msra.mxu0 0
      %343 = vmatpush.bf16.msra.mxu0 0
      %344 = vmatpush.bf16.msra.mxu0 0
      %345 = vmatpush.bf16.msra.mxu0 0
      %346 = vmatpush.bf16.msra.mxu0 0
      %347 = vmatpush.bf16.msra.mxu0 0
      %348 = vmatpush.bf16.msra.mxu0 0
      %349 = vmatpush.bf16.msra.mxu0 %v340
      %350 = vmatmul.bf16.gmra.mxu0 %v291
      %v351 = vpop.f32.mrf.mxu0
      %v352 = vadd.f32 %v207, %v351
      %v353 = vpop.f32.mrf.mxu0
      %v354 = vadd.f32 %v207, %v353
      %355 = vmatmul.bf16.gmra.mxu0 %v294
      %v356 = vpop.f32.mrf.mxu0
      %v357 = vadd.f32 %v207, %v356
      %v358 = vpop.f32.mrf.mxu0
      %v359 = vadd.f32 %v207, %v358
      %360 = vmatmul.bf16.gmra.mxu0 %v297
      %v361 = vpop.f32.mrf.mxu0
      %v362 = vadd.f32 %v207, %v361
      %v363 = vpop.f32.mrf.mxu0
      %v364 = vadd.f32 %v207, %v363
      %365 = vmatmul.bf16.gmra.mxu0 %v300
      %v366 = vpop.f32.mrf.mxu0
      %v367 = vadd.f32 %v207, %v366
      %v368 = vpop.f32.mrf.mxu0
      %v369 = vadd.f32 %v207, %v368
      %370 = vmatmul.bf16.gmra.mxu0 %v303
      %v371 = vpop.f32.mrf.mxu0
      %v372 = vadd.f32 %v207, %v371
      %v373 = vpop.f32.mrf.mxu0
      %v374 = vadd.f32 %v207, %v373
      %375 = vmatmul.bf16.gmra.mxu0 %v306
      %v376 = vpop.f32.mrf.mxu0
      %v377 = vadd.f32 %v207, %v376
      %v378 = vpop.f32.mrf.mxu0
      %v379 = vadd.f32 %v207, %v378
      %380 = vmatmul.bf16.gmra.mxu0 %v309
      %v381 = vpop.f32.mrf.mxu0
      %v382 = vadd.f32 %v207, %v381
      %v383 = vpop.f32.mrf.mxu0
      %v384 = vadd.f32 %v207, %v383
      %385 = vmatmul.bf16.gmra.mxu0 %v312
      %v386 = vpop.f32.mrf.mxu0
      %v387 = vadd.f32 %v207, %v386
      %v388 = vpop.f32.mrf.mxu0
      %v389 = vadd.f32 %v207, %v388
      %390 = vmatmul.bf16.gmra.mxu0 %v315
      %v391 = vpop.f32.mrf.mxu0
      %v392 = vadd.f32 %v207, %v391
      %v393 = vpop.f32.mrf.mxu0
      %v394 = vadd.f32 %v207, %v393
      %395 = vmatmul.bf16.gmra.mxu0 %v318
      %v396 = vpop.f32.mrf.mxu0
      %v397 = vadd.f32 %v207, %v396
      %v398 = vpop.f32.mrf.mxu0
      %v399 = vadd.f32 %v207, %v398
      %400 = vmatmul.bf16.gmra.mxu0 %v321
      %v401 = vpop.f32.mrf.mxu0
      %v402 = vadd.f32 %v207, %v401
      %v403 = vpop.f32.mrf.mxu0
      %v404 = vadd.f32 %v207, %v403
      %405 = vmatmul.bf16.gmra.mxu0 %v324
      %v406 = vpop.f32.mrf.mxu0
      %v407 = vadd.f32 %v207, %v406
      %v408 = vpop.f32.mrf.mxu0
      %v409 = vadd.f32 %v207, %v408
      %410 = vmatmul.bf16.gmra.mxu0 %v327
      %v411 = vpop.f32.mrf.mxu0
      %v412 = vadd.f32 %v207, %v411
      %v413 = vpop.f32.mrf.mxu0
      %v414 = vadd.f32 %v207, %v413
      %415 = vmatmul.bf16.gmra.mxu0 %v330
      %v416 = vpop.f32.mrf.mxu0
      %v417 = vadd.f32 %v207, %v416
      %v418 = vpop.f32.mrf.mxu0
      %v419 = vadd.f32 %v207, %v418
      %420 = vmatmul.bf16.gmra.mxu0 %v333
      %v421 = vpop.f32.mrf.mxu0
      %v422 = vadd.f32 %v207, %v421
      %v423 = vpop.f32.mrf.mxu0
      %v424 = vadd.f32 %v207, %v423
      %425 = vmatmul.bf16.gmra.mxu0 %v336
      %v426 = vpop.f32.mrf.mxu0
      %v427 = vadd.f32 %v207, %v426
      %v428 = vpop.f32.mrf.mxu0
      %v429 = vadd.f32 %v207, %v428
      %430 = vdwg.mxu0
      %v431 = vmax.f32 %v352, 0.0
      %v432 = vmax.f32 %v354, 0.0
      %v433 = vmax.f32 %v357, 0.0
      %v434 = vmax.f32 %v359, 0.0
      %v435 = vmax.f32 %v362, 0.0
      %v436 = vmax.f32 %v364, 0.0
      %v437 = vmax.f32 %v367, 0.0
      %v438 = vmax.f32 %v369, 0.0
      %v439 = vmax.f32 %v372, 0.0
      %v440 = vmax.f32 %v374, 0.0
      %v441 = vmax.f32 %v377, 0.0
      %v442 = vmax.f32 %v379, 0.0
      %v443 = vmax.f32 %v382, 0.0
      %v444 = vmax.f32 %v384, 0.0
      %v445 = vmax.f32 %v387, 0.0
      %v446 = vmax.f32 %v389, 0.0
      %v447 = vmax.f32 %v392, 0.0
      %v448 = vmax.f32 %v394, 0.0
      %v449 = vmax.f32 %v397, 0.0
      %v450 = vmax.f32 %v399, 0.0
      %v451 = vmax.f32 %v402, 0.0
      %v452 = vmax.f32 %v404, 0.0
      %v453 = vmax.f32 %v407, 0.0
      %v454 = vmax.f32 %v409, 0.0
      %v455 = vmax.f32 %v412, 0.0
      %v456 = vmax.f32 %v414, 0.0
      %v457 = vmax.f32 %v417, 0.0
      %v458 = vmax.f32 %v419, 0.0
      %v459 = vmax.f32 %v422, 0.0
      %v460 = vmax.f32 %v424, 0.0
      %v461 = vmax.f32 %v427, 0.0
      %v462 = vmax.f32 %v429, 0.0
      %v463 = vpack.c.bf16 %v431, %v431
      %v464 = vpack.c.bf16 %v432, %v432
      %v465 = vpack.c.bf16 %v433, %v433
      %v466 = vpack.c.bf16 %v434, %v434
      %v467 = vpack.c.bf16 %v435, %v435
      %v468 = vpack.c.bf16 %v436, %v436
      %v469 = vpack.c.bf16 %v437, %v437
      %v470 = vpack.c.bf16 %v438, %v438
      %v471 = vpack.c.bf16 %v439, %v439
      %v472 = vpack.c.bf16 %v440, %v440
      %v473 = vpack.c.bf16 %v441, %v441
      %v474 = vpack.c.bf16 %v442, %v442
      %v475 = vpack.c.bf16 %v443, %v443
      %v476 = vpack.c.bf16 %v444, %v444
      %v477 = vpack.c.bf16 %v445, %v445
      %v478 = vpack.c.bf16 %v446, %v446
      %v479 = vpack.c.bf16 %v447, %v447
      %v480 = vpack.c.bf16 %v448, %v448
      %v481 = vpack.c.bf16 %v449, %v449
      %v482 = vpack.c.bf16 %v450, %v450
      %v483 = vpack.c.bf16 %v451, %v451
      %v484 = vpack.c.bf16 %v452, %v452
      %v485 = vpack.c.bf16 %v453, %v453
      %v486 = vpack.c.bf16 %v454, %v454
      %v487 = vpack.c.bf16 %v455, %v455
      %v488 = vpack.c.bf16 %v456, %v456
      %v489 = vpack.c.bf16 %v457, %v457
      %v490 = vpack.c.bf16 %v458, %v458
      %v491 = vpack.c.bf16 %v459, %v459
      %v492 = vpack.c.bf16 %v460, %v460
      %v493 = vpack.c.bf16 %v461, %v461
      %v494 = vpack.c.bf16 %v462, %v462
      %495 = vst [vmem:[%s170] sm:$0xf] %v463
      %496 = vst [vmem:[%s170 + $0x4] sm:$0xf] %v464
      %497 = vst [vmem:[%s170 + $0x8] sm:$0xf] %v465
      %498 = vst [vmem:[%s170 + $0xc] sm:$0xf] %v466
      %499 = vst [vmem:[%s170 + $0x10] sm:$0xf] %v467
      %500 = vst [vmem:[%s170 + $0x14] sm:$0xf] %v468
      %501 = vst [vmem:[%s170 + $0x18] sm:$0xf] %v469
      %502 = vst [vmem:[%s170 + $0x1c] sm:$0xf] %v470
      %503 = vst [vmem:[%s170 + $0x20] sm:$0xf] %v471
      %504 = vst [vmem:[%s170 + $0x24] sm:$0xf] %v472
      %505 = vst [vmem:[%s170 + $0x28] sm:$0xf] %v473
      %506 = vst [vmem:[%s170 + $0x2c] sm:$0xf] %v474
      %507 = vst [vmem:[%s170 + $0x30] sm:$0xf] %v475
      %508 = vst [vmem:[%s170 + $0x34] sm:$0xf] %v476
      %509 = vst [vmem:[%s170 + $0x38] sm:$0xf] %v477
      %510 = vst [vmem:[%s170 + $0x3c] sm:$0xf] %v478
      %511 = vst [vmem:[%s170 + $0x40] sm:$0xf] %v479
      %512 = vst [vmem:[%s170 + $0x44] sm:$0xf] %v480
      %513 = vst [vmem:[%s170 + $0x48] sm:$0xf] %v481
      %514 = vst [vmem:[%s170 + $0x4c] sm:$0xf] %v482
      %515 = vst [vmem:[%s170 + $0x50] sm:$0xf] %v483
      %516 = vst [vmem:[%s170 + $0x54] sm:$0xf] %v484
      %517 = vst [vmem:[%s170 + $0x58] sm:$0xf] %v485
      %518 = vst [vmem:[%s170 + $0x5c] sm:$0xf] %v486
      %519 = vst [vmem:[%s170 + $0x60] sm:$0xf] %v487
      %520 = vst [vmem:[%s170 + $0x64] sm:$0xf] %v488
      %521 = vst [vmem:[%s170 + $0x68] sm:$0xf] %v489
      %522 = vst [vmem:[%s170 + $0x6c] sm:$0xf] %v490
      %523 = vst [vmem:[%s170 + $0x70] sm:$0xf] %v491
      %524 = vst [vmem:[%s170 + $0x74] sm:$0xf] %v492
      %525 = vst [vmem:[%s170 + $0x78] sm:$0xf] %v493
      %526 = vst [vmem:[%s170 + $0x7c] sm:$0xf] %v494
      %p527 = scmp.lt.s32.totalorder %s14, 1
      %s528 = scalar_select %p527, %s14, 1
      %s529 = smul.addr %s528, 32
      %s530 = smul.addr %s529, 4
      %s531 = scalar_lea.vmem %s3, %s530
      // Predicated region
      $region33: #{inception_b_forward.5} parent=31 // pred_check
        %p532 = pneg %p100
      $region34: #{inception_b_forward.5} parent=31 // pred_check_branch
        %534 = sbr.rel (%p532) target = $region36
      $region35: #{inception_b_forward.5} parent=31 // pred_region
        _
      $region36: #{inception_b_forward.5} parent=31 // pred_fallthru
        _
    $region32: #{inception_b_forward.5} parent=5 // pred_fallthru
      _
    %p535 = scmp.le.s32.totalorder 2, %s9
    // Predicated region
    $region37: #{inception_b_forward.5} parent=5 // pred_check
      %p536 = pneg %p535
    $region38: #{inception_b_forward.5} parent=5 // pred_check_branch
      %538 = sbr.rel (%p536) target = $region40
    $region39: #{inception_b_forward.5} parent=5 // pred_region
      %s539 = ssub.s32 %s9, 2
      // Predicated region
      $region41: #{inception_b_forward.5} parent=39 // pred_check
        %p540 = pneg %p106
      $region42: #{inception_b_forward.5} parent=39 // pred_check_branch
        %542 = sbr.rel (%p540) target = $region44
      $region43: #{inception_b_forward.5} parent=39 // pred_region
        %p543 = scmp.lt.s32.totalorder %s15, 1
        %s544 = scalar_select %p543, %s15, 1
        %s545 = smul.addr %s544, 32
        %s546 = smul.addr %s545, 4
        %s547 = scalar_lea.vmem %s3, %s546
      $region44: #{inception_b_forward.5} parent=39 // pred_fallthru
        _
    $region40: #{inception_b_forward.5} parent=5 // pred_fallthru
      _
  $region6: #{inception_b_forward.5} parent=0 // loop_footer
    %s13 = sadd.s32 1, %s9
  $region7: #{inception_b_forward.5} parent=0 // loop_footer_branch
    %8 = sbr.rel target = $region3
  $region8: #{inception_b_forward.5} parent=0 // loop_exit
    _

// kernel: inception_b_forward.6
$region0: #{inception_b_forward.6}
  #allocation0 [shape = 'u32[]', space=smem, size = 0x4, offset = 0x4, fixed_abs, tag = 'smem constant byte address 0x4 - core index']
  #allocation1 [shape = 'u32[72,128]{1,0:T(1,128)}', space=vmem, size = 0x9000, scoped, tag = 'internal scratch']
  %s0 = inlined_call_operand.vmem [shape: bf16[2,1,328,128], index: 0, kind: input, shape index: {}]
  %s1 = inlined_call_operand.vmem [shape: bf16[9,128,128], index: 1, kind: input, shape index: {}]
  %s2 = inlined_call_operand.vmem [shape: f32[1,128], index: 2, kind: input, shape index: {}]
  %s3 = inlined_call_operand.vmem [shape: bf16[2,288,128], index: 3, kind: output, shape index: {}]
  %s4 = sld [smem:[#allocation0]]
  $region45: #{inception_b_forward.6} parent=0
    _
  %s6 = ssub.s32 1, %s4
  %s7 = scalar_select 0, %s6, %s4
  loop: start=0, step=1, limit=4
  $region2: #{inception_b_forward.6} parent=0 // loop_pre_header
    _
  $region3: #{inception_b_forward.6} parent=0 // loop_header
    %s9 = sphi 0, %s13
    %p10 = scmp.ge.s32.totalorder %s9, 4
    %s19 = sphi 0, %s21
    %s22 = sphi 0, %s19
    %s23 = sphi 0, %s22
    %s39 = sphi 0, %s23
    %s43 = sphi 0, %s43
    %s45 = sphi 0, %s43
    %s46 = sphi 0, %s45
    %s60 = sphi 0, %s46
    %s64 = sphi 0, %s64
    %s66 = sphi 0, %s64
    %s67 = sphi 0, %s66
    %s81 = sphi 0, %s67
    %s87 = sphi 0, %s89
    %s90 = sphi 0, %s87
    %s91 = sphi 0, %s90
    %s107 = sphi 0, %s91
  $region4: #{inception_b_forward.6} parent=0 // loop_header_branch
    %12 = sbr.rel (%p10) target = $region8
  $region5: #{inception_b_forward.6} parent=0 // loop_body
    %s14 = ssub.s32 %s9, 1
    %s15 = ssub.s32 %s9, 2
    %s16 = sadd.s32 %s9, 1
    %s17 = ssub.s32 %s9, %s16
    %p18 = scmp.eq.s32.totalorder %s17, 0
    %s20 = sadd.s32 %s19, 1
    %s21 = scalar_select %p18, %s19, %s20
    %p24 = pneg %p18
    %p25 = scmp.eq.s32.totalorder %s9, 1
    %p26 = por %p24, %p25
    %p27 = scmp.ne.s32.totalorder %s19, %s22
    %p28 = scmp.eq.s32.totalorder %s9, 0
    %p29 = por %p27, %p28
    %p30 = scmp.ne.s32.totalorder %s19, %s22
    %p31 = scmp.eq.s32.totalorder %s14, 1
    %p32 = por %p30, %p31
    %p33 = scmp.ne.s32.totalorder %s22, %s23
    %p34 = scmp.eq.s32.totalorder %s14, 0
    %p35 = por %p33, %p34
    %p36 = scmp.ne.s32.totalorder %s22, %s23
    %p37 = scmp.eq.s32.totalorder %s15, 1
    %p38 = por %p36, %p37
    %p40 = scmp.ne.s32.totalorder %s23, %s39
    %p41 = scmp.eq.s32.totalorder %s15, 0
    %p42 = por %p40, %p41
    %s44 = sadd.s32 %s43, 1
    %p47 = scmp.eq.s32.totalorder %s9, 1
    %p48 = scmp.ne.s32.totalorder %s43, %s45
    %p49 = scmp.eq.s32.totalorder %s9, 0
    %p50 = por %p48, %p49
    %p51 = scmp.ne.s32.totalorder %s43, %s45
    %p52 = scmp.eq.s32.totalorder %s14, 1
    %p53 = por %p51, %p52
    %p54 = scmp.ne.s32.totalorder %s45, %s46
    %p55 = scmp.eq.s32.totalorder %s14, 0
    %p56 = por %p54, %p55
    %p57 = scmp.ne.s32.totalorder %s45, %s46
    %p58 = scmp.eq.s32.totalorder %s15, 1
    %p59 = por %p57, %p58
    %p61 = scmp.ne.s32.totalorder %s46, %s60
    %p62 = scmp.eq.s32.totalorder %s15, 0
    %p63 = por %p61, %p62
    %s65 = sadd.s32 %s64, 1
    %p68 = scmp.eq.s32.totalorder %s9, 1
    %p69 = scmp.ne.s32.totalorder %s64, %s66
    %p70 = scmp.eq.s32.totalorder %s9, 0
    %p71 = por %p69, %p70
    %p72 = scmp.ne.s32.totalorder %s64, %s66
    %p73 = scmp.eq.s32.totalorder %s14, 1
    %p74 = por %p72, %p73
    %p75 = scmp.ne.s32.totalorder %s66, %s67
    %p76 = scmp.eq.s32.totalorder %s14, 0
    %p77 = por %p75, %p76
    %p78 = scmp.ne.s32.totalorder %s66, %s67
    %p79 = scmp.eq.s32.totalorder %s15, 1
    %p80 = por %p78, %p79
    %p82 = scmp.ne.s32.totalorder %s67, %s81
    %p83 = scmp.eq.s32.totalorder %s15, 0
    %p84 = por %p82, %p83
    %s85 = ssub.s32 %s9, %s16
    %p86 = scmp.eq.s32.totalorder %s85, 0
    %s88 = sadd.s32 %s87, 1
    %s89 = scalar_select %p86, %s87, %s88
    %p92 = pneg %p86
    %p93 = scmp.eq.s32.totalorder %s9, 1
    %p94 = por %p92, %p93
    %p95 = scmp.ne.s32.totalorder %s87, %s90
    %p96 = scmp.eq.s32.totalorder %s9, 0
    %p97 = por %p95, %p96
    %p98 = scmp.ne.s32.totalorder %s87, %s90
    %p99 = scmp.eq.s32.totalorder %s14, 1
    %p100 = por %p98, %p99
    %p101 = scmp.ne.s32.totalorder %s90, %s91
    %p102 = scmp.eq.s32.totalorder %s14, 0
    %p103 = por %p101, %p102
    %p104 = scmp.ne.s32.totalorder %s90, %s91
    %p105 = scmp.eq.s32.totalorder %s15, 1
    %p106 = por %p104, %p105
    %p108 = scmp.ne.s32.totalorder %s91, %s107
    %p109 = scmp.eq.s32.totalorder %s15, 0
    %p110 = por %p108, %p109
    %p111 = scmp.le.s32.totalorder 1, %s9
    %p112 = scmp.lt.s32.totalorder %s9, 3
    %p113 = pnand %p111, %p112
    %p114 = pneg %p113
    // Predicated region
    $region9: #{inception_b_forward.6} parent=5 // pred_check
      _
    $region10: #{inception_b_forward.6} parent=5 // pred_check_branch
      %116 = sbr.rel (%p113) target = $region12
    $region11: #{inception_b_forward.6} parent=5 // pred_region
      %s117 = ssub.s32 %s9, 1
      // Predicated region
      $region13: #{inception_b_forward.6} parent=11 // pred_check
        %p118 = pneg %p56
      $region14: #{inception_b_forward.6} parent=11 // pred_check_branch
        %120 = sbr.rel (%p118) target = $region16
      $region15: #{inception_b_forward.6} parent=11 // pred_region
        _
      $region16: #{inception_b_forward.6} parent=11 // pred_fallthru
        _
      // Predicated region
      $region17: #{inception_b_forward.6} parent=11 // pred_check
        %p121 = pneg %p77
      $region18: #{inception_b_forward.6} parent=11 // pred_check_branch
        %123 = sbr.rel (%p121) target = $region20
      $region19: #{inception_b_forward.6} parent=11 // pred_region
        _
      $region20: #{inception_b_forward.6} parent=11 // pred_fallthru
        _
    $region12: #{inception_b_forward.6} parent=5 // pred_fallthru
      _
    %p124 = scmp.lt.s32.totalorder %s9, 2
    // Predicated region
    $region21: #{inception_b_forward.6} parent=5 // pred_check
      %p125 = pneg %p124
    $region22: #{inception_b_forward.6} parent=5 // pred_check_branch
      %127 = sbr.rel (%p125) target = $region24
    $region23: #{inception_b_forward.6} parent=5 // pred_region
      // Predicated region
      $region25: #{inception_b_forward.6} parent=23 // pred_check
        %p128 = pneg %p29
      $region26: #{inception_b_forward.6} parent=23 // pred_check_branch
        %130 = sbr.rel (%p128) target = $region28
      $region27: #{inception_b_forward.6} parent=23 // pred_region
        %p131 = scmp.lt.s32.totalorder %s9, 1
        %s132 = scalar_select %p131, %s9, 1
        %s133 = smul.addr %s132, 41
        %s134 = smul.addr %s133, 4
        %s135 = scalar_lea.vmem %s0, %s134
      $region28: #{inception_b_forward.6} parent=23 // pred_fallthru
        _
    $region24: #{inception_b_forward.6} parent=5 // pred_fallthru
      _
    %p136 = scmp.le.s32.totalorder 1, %s9
    %p137 = scmp.lt.s32.totalorder %s9, 3
    %p138 = pnand %p136, %p137
    %p139 = pneg %p138
    // Predicated region
    $region29: #{inception_b_forward.6} parent=5 // pred_check
      _
    $region30: #{inception_b_forward.6} parent=5 // pred_check_branch
      %141 = sbr.rel (%p138) target = $region32
    $region31: #{inception_b_forward.6} parent=5 // pred_region
      %s142 = ssub.s32 %s9, 1
      %p143 = scmp.lt.s32.totalorder %s14, 1
      %s144 = scalar_select %p143, %s14, 1
      %s145 = smul.addr %s144, 41
      %s146 = smul.addr %s145, 4
      %s147 = scalar_lea.vmem %s0, %s146
      %p148 = pneg %p35
      %p149 = pneg %p32
      %p150 = pneg %p56
      %p151 = pneg %p53
      %p152 = pneg %p77
      %p153 = pneg %p74
      %p154 = pneg %p103
      %p155 = pneg %p100
      %p156 = scmp.lt.s32.totalorder %s14, 1
      %s157 = scalar_select %p156, %s14, 1
      %s158 = smul.addr %s157, 36
      %s159 = smul.addr %s158, 4
      %s160 = scalar_lea.vmem %s3, %s159
      %p161 = scmp.lt.s32.totalorder %s14, 1
      %s162 = scalar_select %p161, %s14, 1
      %s163 = smul.addr %s162, 41
      %s164 = smul.addr %s163, 4
      %s165 = scalar_lea.vmem %s0, %s164
      %p166 = scmp.lt.s32.totalorder %s14, 1
      %s167 = scalar_select %p166, %s14, 1
      %s168 = smul.addr %s167, 36
      %s169 = smul.addr %s168, 4
      %s170 = scalar_lea.vmem %s3, %s169
      %v171 = vld [vmem:[%s165] sm:$0xf]
      %v172 = vld [vmem:[%s165 + $0x4] sm:$0xf]
      %v173 = vld [vmem:[%s165 + $0x8] sm:$0xf]
      %v174 = vld [vmem:[%s165 + $0xc] sm:$0xf]
      %v175 = vld [vmem:[%s165 + $0x10] sm:$0xf]
      %v176 = vld [vmem:[%s165 + $0x14] sm:$0xf]
      %v177 = vld [vmem:[%s165 + $0x18] sm:$0xf]
      %v178 = vld [vmem:[%s165 + $0x1c] sm:$0xf]
      %v179 = vld [vmem:[%s165 + $0x20] sm:$0xf]
      %v180 = vld [vmem:[%s165 + $0x24] sm:$0xf]
      %v181 = vld [vmem:[%s165 + $0x28] sm:$0xf]
      %v182 = vld [vmem:[%s165 + $0x2c] sm:$0xf]
      %v183 = vld [vmem:[%s165 + $0x30] sm:$0xf]
      %v184 = vld [vmem:[%s165 + $0x34] sm:$0xf]
      %v185 = vld [vmem:[%s165 + $0x38] sm:$0xf]
      %v186 = vld [vmem:[%s165 + $0x3c] sm:$0xf]
      %v187 = vld [vmem:[%s165 + $0x40] sm:$0xf]
      %v188 = vld [vmem:[%s165 + $0x44] sm:$0xf]
      %v189 = vld [vmem:[%s165 + $0x48] sm:$0xf]
      %v190 = vld [vmem:[%s165 + $0x4c] sm:$0xf]
      %v191 = vld [vmem:[%s165 + $0x50] sm:$0xf]
      %v192 = vld [vmem:[%s165 + $0x54] sm:$0xf]
      %v193 = vld [vmem:[%s165 + $0x58] sm:$0xf]
      %v194 = vld [vmem:[%s165 + $0x5c] sm:$0xf]
      %v195 = vld [vmem:[%s165 + $0x60] sm:$0xf]
      %v196 = vld [vmem:[%s165 + $0x64] sm:$0xf]
      %v197 = vld [vmem:[%s165 + $0x68] sm:$0xf]
      %v198 = vld [vmem:[%s165 + $0x6c] sm:$0xf]
      %v199 = vld [vmem:[%s165 + $0x70] sm:$0xf]
      %v200 = vld [vmem:[%s165 + $0x74] sm:$0xf]
      %v201 = vld [vmem:[%s165 + $0x78] sm:$0xf]
      %v202 = vld [vmem:[%s165 + $0x7c] sm:$0xf]
      %v203 = vld [vmem:[%s165 + $0x80] sm:$0xf]
      %v204 = vld [vmem:[%s165 + $0x84] sm:$0xf]
      %v205 = vld [vmem:[%s165 + $0x88] sm:$0xf]
      %v206 = vld [vmem:[%s165 + $0x8c] sm:$0xf]
      %v207 = vld [vmem:[%s1] sm:$0xf]
      %v208 = vld [vmem:[%s1 + $0x4] sm:$0xf]
      %v209 = vld [vmem:[%s1 + $0x8] sm:$0xf]
      %v210 = vld [vmem:[%s1 + $0xc] sm:$0xf]
      %v211 = vld [vmem:[%s1 + $0x10] sm:$0xf]
      %v212 = vld [vmem:[%s1 + $0x14] sm:$0xf]
      %v213 = vld [vmem:[%s1 + $0x18] sm:$0xf]
      %v214 = vld [vmem:[%s1 + $0x1c] sm:$0xf]
      %v215 = vld [vmem:[%s1 + $0x20] sm:$0xf]
      %v216 = vld [vmem:[%s1 + $0x24] sm:$0xf]
      %v217 = vld [vmem:[%s1 + $0x28] sm:$0xf]
      %v218 = vld [vmem:[%s1 + $0x2c] sm:$0xf]
      %v219 = vld [vmem:[%s1 + $0x30] sm:$0xf]
      %v220 = vld [vmem:[%s1 + $0x34] sm:$0xf]
      %v221 = vld [vmem:[%s1 + $0x38] sm:$0xf]
      %v222 = vld [vmem:[%s1 + $0x3c] sm:$0xf]
      %v223 = vld [vmem:[%s165 + $0x90] sm:$0x1]
      %s224 = scalar_lea.vmem %s1, 64
      %v225 = vld [vmem:[%s224] sm:$0xf]
      %v226 = vld [vmem:[%s224 + $0x4] sm:$0xf]
      %v227 = vld [vmem:[%s224 + $0x8] sm:$0xf]
      %v228 = vld [vmem:[%s224 + $0xc] sm:$0xf]
      %v229 = vld [vmem:[%s224 + $0x10] sm:$0xf]
      %v230 = vld [vmem:[%s224 + $0x14] sm:$0xf]
      %v231 = vld [vmem:[%s224 + $0x18] sm:$0xf]
      %v232 = vld [vmem:[%s224 + $0x1c] sm:$0xf]
      %v233 = vld [vmem:[%s224 + $0x20] sm:$0xf]
      %v234 = vld [vmem:[%s224 + $0x24] sm:$0xf]
      %v235 = vld [vmem:[%s224 + $0x28] sm:$0xf]
      %v236 = vld [vmem:[%s224 + $0x2c] sm:$0xf]
      %v237 = vld [vmem:[%s224 + $0x30] sm:$0xf]
      %v238 = vld [vmem:[%s224 + $0x34] sm:$0xf]
      %v239 = vld [vmem:[%s224 + $0x38] sm:$0xf]
      %v240 = vld [vmem:[%s224 + $0x3c] sm:$0xf]
      %v278 = vunpack.c.l.b16 %v171
      %v279 = vunpack.c.l.b16 %v172
      %v280 = vunpack.c.l.b16 %v173
      %v281 = vunpack.c.l.b16 %v174
      %v282 = vunpack.c.l.b16 %v175
      %v283 = vunpack.c.l.b16 %v176
      %v284 = vunpack.c.l.b16 %v177
      %v285 = vunpack.c.l.b16 %v178
      %v286 = vunpack.c.l.b16 %v179
      %v287 = vunpack.c.l.b16 %v180
      %v288 = vunpack.c.l.b16 %v181
      %v289 = vunpack.c.l.b16 %v182
      %v290 = vunpack.c.l.b16 %v183
      %v291 = vunpack.c.l.b16 %v184
      %v292 = vunpack.c.l.b16 %v185
      %v293 = vunpack.c.l.b16 %v186
      %v294 = vunpack.c.l.b16 %v187
      %v295 = vunpack.c.l.b16 %v188
      %v296 = vunpack.c.l.b16 %v189
      %v297 = vunpack.c.l.b16 %v190
      %v298 = vunpack.c.l.b16 %v191
      %v299 = vunpack.c.l.b16 %v192
      %v300 = vunpack.c.l.b16 %v193
      %v301 = vunpack.c.l.b16 %v194
      %v302 = vunpack.c.l.b16 %v195
      %v303 = vunpack.c.l.b16 %v196
      %v304 = vunpack.c.l.b16 %v197
      %v305 = vunpack.c.l.b16 %v198
      %v306 = vunpack.c.l.b16 %v199
      %v307 = vunpack.c.l.b16 %v200
      %v308 = vunpack.c.l.b16 %v201
      %v309 = vunpack.c.l.b16 %v202
      %v310 = vunpack.c.l.b16 %v203
      %v311 = vunpack.c.l.b16 %v204
      %v312 = vunpack.c.l.b16 %v205
      %v313 = vunpack.c.l.b16 %v206
      %v314 = vunpack.c.l.b16 %v223
      %v315 = vpack.c.b16 %v279, %v278
      %v316 = vpack.c.b16 %v281, %v280
      %v317 = vpack.c.b16 %v283, %v282
      %v318 = vpack.c.b16 %v285, %v284
      %v319 = vpack.c.b16 %v287, %v286
      %v320 = vpack.c.b16 %v289, %v288
      %v321 = vpack.c.b16 %v291, %v290
      %v322 = vpack.c.b16 %v293, %v292
      %v323 = vpack.c.b16 %v295, %v294
      %v324 = vpack.c.b16 %v297, %v296
      %v325 = vpack.c.b16 %v299, %v298
      %v326 = vpack.c.b16 %v301, %v300
      %v327 = vpack.c.b16 %v303, %v302
      %v328 = vpack.c.b16 %v305, %v304
      %v329 = vpack.c.b16 %v307, %v306
      %v330 = vpack.c.b16 %v309, %v308
      %v331 = vpack.c.b16 %v311, %v310
      %v332 = vpack.c.b16 %v313, %v312
      %v333 = vpack.c.b16 %v314, %v314
      %vm334 = vsmask.f32 7424
      %v336 = vshrl.u32 %v315, 16
      %v338 = vshll.u32 %v315, 16
      %v340 = vrot.slane %v338, 1
      %v341 = vor.u32 %v336, %v340
      %v343 = vshll.u32 %v316, 16
      %v345 = vrot.slane %v343, 1
      %v346 = vsel %vm334, %v341, %v345
      %v347 = vshrl.u32 %v316, 16
      %v349 = vor.u32 %v347, %v345
      %v351 = vshll.u32 %v317, 16
      %v353 = vrot.slane %v351, 1
      %v354 = vsel %vm334, %v349, %v353
      %v355 = vshrl.u32 %v317, 16
      %v357 = vor.u32 %v355, %v353
      %v359 = vshll.u32 %v318, 16
      %v361 = vrot.slane %v359, 1
      %v362 = vsel %vm334, %v357, %v361
      %v363 = vshrl.u32 %v318, 16
      %v365 = vor.u32 %v363, %v361
      %v367 = vshll.u32 %v319, 16
      %v369 = vrot.slane %v367, 1
      %v370 = vsel %vm334, %v365, %v369
      %v371 = vshrl.u32 %v319, 16
      %v373 = vor.u32 %v371, %v369
      %v375 = vshll.u32 %v320, 16
      %v377 = vrot.slane %v375, 1
      %v378 = vsel %vm334, %v373, %v377
      %v379 = vshrl.u32 %v320, 16
      %v381 = vor.u32 %v379, %v377
      %v383 = vshll.u32 %v321, 16
      %v385 = vrot.slane %v383, 1
      %v386 = vsel %vm334, %v381, %v385
      %v387 = vshrl.u32 %v321, 16
      %v389 = vor.u32 %v387, %v385
      %v391 = vshll.u32 %v322, 16
      %v393 = vrot.slane %v391, 1
      %v394 = vsel %vm334, %v389, %v393
      %v395 = vshrl.u32 %v322, 16
      %v397 = vor.u32 %v395, %v393
      %v399 = vshll.u32 %v323, 16
      %v401 = vrot.slane %v399, 1
      %v402 = vsel %vm334, %v397, %v401
      %v403 = vshrl.u32 %v323, 16
      %v405 = vor.u32 %v403, %v401
      %v407 = vshll.u32 %v324, 16
      %v409 = vrot.slane %v407, 1
      %v410 = vsel %vm334, %v405, %v409
      %v411 = vshrl.u32 %v324, 16
      %v413 = vor.u32 %v411, %v409
      %v415 = vshll.u32 %v325, 16
      %v417 = vrot.slane %v415, 1
      %v418 = vsel %vm334, %v413, %v417
      %v419 = vshrl.u32 %v325, 16
      %v421 = vor.u32 %v419, %v417
      %v423 = vshll.u32 %v326, 16
      %v425 = vrot.slane %v423, 1
      %v426 = vsel %vm334, %v421, %v425
      %v427 = vshrl.u32 %v326, 16
      %v429 = vor.u32 %v427, %v425
      %v431 = vshll.u32 %v327, 16
      %v433 = vrot.slane %v431, 1
      %v434 = vsel %vm334, %v429, %v433
      %v435 = vshrl.u32 %v327, 16
      %v437 = vor.u32 %v435, %v433
      %v439 = vshll.u32 %v328, 16
      %v441 = vrot.slane %v439, 1
      %v442 = vsel %vm334, %v437, %v441
      %v443 = vshrl.u32 %v328, 16
      %v445 = vor.u32 %v443, %v441
      %v447 = vshll.u32 %v329, 16
      %v449 = vrot.slane %v447, 1
      %v450 = vsel %vm334, %v445, %v449
      %v451 = vshrl.u32 %v329, 16
      %v453 = vor.u32 %v451, %v449
      %v455 = vshll.u32 %v330, 16
      %v457 = vrot.slane %v455, 1
      %v458 = vsel %vm334, %v453, %v457
      %v459 = vshrl.u32 %v330, 16
      %v461 = vor.u32 %v459, %v457
      %v463 = vshll.u32 %v331, 16
      %v465 = vrot.slane %v463, 1
      %v466 = vsel %vm334, %v461, %v465
      %v467 = vshrl.u32 %v331, 16
      %v469 = vor.u32 %v467, %v465
      %v471 = vshll.u32 %v332, 16
      %v473 = vrot.slane %v471, 1
      %v474 = vsel %vm334, %v469, %v473
      %v475 = vshrl.u32 %v332, 16
      %v477 = vor.u32 %v475, %v473
      %v479 = vshll.u32 %v333, 16
      %v481 = vrot.slane %v479, 1
      %v482 = vsel %vm334, %v477, %v481
      %v517 = vunpack.c.l.b16 %v225
      %v518 = vunpack.c.l.b16 %v226
      %v519 = vunpack.c.l.b16 %v227
      %v520 = vunpack.c.l.b16 %v228
      %v521 = vunpack.c.l.b16 %v229
      %v522 = vunpack.c.l.b16 %v230
      %v523 = vunpack.c.l.b16 %v231
      %v524 = vunpack.c.l.b16 %v232
      %v525 = vunpack.c.l.b16 %v233
      %v526 = vunpack.c.l.b16 %v234
      %v527 = vunpack.c.l.b16 %v235
      %v528 = vunpack.c.l.b16 %v236
      %v529 = vunpack.c.l.b16 %v237
      %v530 = vunpack.c.l.b16 %v238
      %v531 = vunpack.c.l.b16 %v239
      %v532 = vunpack.c.l.b16 %v240
      %v533 = vpack.c.b16 %v518, %v517
      %v534 = vpack.c.b16 %v520, %v519
      %v535 = vpack.c.b16 %v522, %v521
      %v536 = vpack.c.b16 %v524, %v523
      %v537 = vpack.c.b16 %v526, %v525
      %v538 = vpack.c.b16 %v528, %v527
      %v539 = vpack.c.b16 %v530, %v529
      %v540 = vpack.c.b16 %v532, %v531
      %549 = vmatpush.bf16.msra.mxu0 %v540
      %550 = vmatpush.bf16.msra.mxu0 %v539
      %551 = vmatpush.bf16.msra.mxu0 %v538
      %552 = vmatpush.bf16.msra.mxu0 %v537
      %553 = vmatpush.bf16.msra.mxu0 %v536
      %554 = vmatpush.bf16.msra.mxu0 %v535
      %555 = vmatpush.bf16.msra.mxu0 %v534
      %556 = vmatpush.bf16.msra.mxu0 %v533
      %557 = vmatmul.bf16.gmra.mxu0 %v346
      %v558 = vpop.f32.mrf.mxu0
      %v559 = vadd.f32 0.0, %v558
      %v560 = vpop.f32.mrf.mxu0
      %v561 = vadd.f32 0.0, %v560
      %562 = vmatmul.bf16.gmra.mxu0 %v354
      %v563 = vpop.f32.mrf.mxu0
      %v564 = vadd.f32 0.0, %v563
      %v565 = vpop.f32.mrf.mxu0
      %v566 = vadd.f32 0.0, %v565
      %567 = vmatmul.bf16.gmra.mxu0 %v362
      %v568 = vpop.f32.mrf.mxu0
      %v569 = vadd.f32 0.0, %v568
      %v570 = vpop.f32.mrf.mxu0
      %v571 = vadd.f32 0.0, %v570
      %572 = vmatmul.bf16.gmra.mxu0 %v370
      %v573 = vpop.f32.mrf.mxu0
      %v574 = vadd.f32 0.0, %v573
      %v575 = vpop.f32.mrf.mxu0
      %v576 = vadd.f32 0.0, %v575
      %577 = vmatmul.bf16.gmra.mxu0 %v378
      %v578 = vpop.f32.mrf.mxu0
      %v579 = vadd.f32 0.0, %v578
      %v580 = vpop.f32.mrf.mxu0
      %v581 = vadd.f32 0.0, %v580
      %582 = vmatmul.bf16.gmra.mxu0 %v386
      %v583 = vpop.f32.mrf.mxu0
      %v584 = vadd.f32 0.0, %v583
      %v585 = vpop.f32.mrf.mxu0
      %v586 = vadd.f32 0.0, %v585
      %587 = vmatmul.bf16.gmra.mxu0 %v394
      %v588 = vpop.f32.mrf.mxu0
      %v589 = vadd.f32 0.0, %v588
      %v590 = vpop.f32.mrf.mxu0
      %v591 = vadd.f32 0.0, %v590
      %592 = vmatmul.bf16.gmra.mxu0 %v402
      %v593 = vpop.f32.mrf.mxu0
      %v594 = vadd.f32 0.0, %v593
      %v595 = vpop.f32.mrf.mxu0
      %v596 = vadd.f32 0.0, %v595
      %597 = vmatmul.bf16.gmra.mxu0 %v410
      %v598 = vpop.f32.mrf.mxu0
      %v599 = vadd.f32 0.0, %v598
      %v600 = vpop.f32.mrf.mxu0
      %v601 = vadd.f32 0.0, %v600
      %602 = vmatmul.bf16.gmra.mxu0 %v418
      %v603 = vpop.f32.mrf.mxu0
      %v604 = vadd.f32 0.0, %v603
      %v605 = vpop.f32.mrf.mxu0
      %v606 = vadd.f32 0.0, %v605
      %607 = vmatmul.bf16.gmra.mxu0 %v426
      %v608 = vpop.f32.mrf.mxu0
      %v609 = vadd.f32 0.0, %v608
      %v610 = vpop.f32.mrf.mxu0
      %v611 = vadd.f32 0.0, %v610
      %612 = vmatmul.bf16.gmra.mxu0 %v434
      %v613 = vpop.f32.mrf.mxu0
      %v614 = vadd.f32 0.0, %v613
      %v615 = vpop.f32.mrf.mxu0
      %v616 = vadd.f32 0.0, %v615
      %617 = vmatmul.bf16.gmra.mxu0 %v442
      %v618 = vpop.f32.mrf.mxu0
      %v619 = vadd.f32 0.0, %v618
      %v620 = vpop.f32.mrf.mxu0
      %v621 = vadd.f32 0.0, %v620
      %622 = vmatmul.bf16.gmra.mxu0 %v450
      %v623 = vpop.f32.mrf.mxu0
      %v624 = vadd.f32 0.0, %v623
      %v625 = vpop.f32.mrf.mxu0
      %v626 = vadd.f32 0.0, %v625
      %627 = vmatmul.bf16.gmra.mxu0 %v458
      %v628 = vpop.f32.mrf.mxu0
      %v629 = vadd.f32 0.0, %v628
      %v630 = vpop.f32.mrf.mxu0
      %v631 = vadd.f32 0.0, %v630
      %632 = vmatmul.bf16.gmra.mxu0 %v466
      %v633 = vpop.f32.mrf.mxu0
      %v634 = vadd.f32 0.0, %v633
      %v635 = vpop.f32.mrf.mxu0
      %v636 = vadd.f32 0.0, %v635
      %637 = vmatmul.bf16.gmra.mxu0 %v474
      %v638 = vpop.f32.mrf.mxu0
      %v639 = vadd.f32 0.0, %v638
      %v640 = vpop.f32.mrf.mxu0
      %v641 = vadd.f32 0.0, %v640
      %642 = vmatmul.bf16.gmra.mxu0 %v482
      %v643 = vpop.f32.mrf.mxu0
      %v644 = vadd.f32 0.0, %v643
      %v645 = vpop.f32.mrf.mxu0
      %v646 = vadd.f32 0.0, %v645
      %647 = vdwg.mxu0
      %v682 = vunpack.c.l.b16 %v207
      %v683 = vunpack.c.l.b16 %v208
      %v684 = vunpack.c.l.b16 %v209
      %v685 = vunpack.c.l.b16 %v210
      %v686 = vunpack.c.l.b16 %v211
      %v687 = vunpack.c.l.b16 %v212
      %v688 = vunpack.c.l.b16 %v213
      %v689 = vunpack.c.l.b16 %v214
      %v690 = vunpack.c.l.b16 %v215
      %v691 = vunpack.c.l.b16 %v216
      %v692 = vunpack.c.l.b16 %v217
      %v693 = vunpack.c.l.b16 %v218
      %v694 = vunpack.c.l.b16 %v219
      %v695 = vunpack.c.l.b16 %v220
      %v696 = vunpack.c.l.b16 %v221
      %v697 = vunpack.c.l.b16 %v222
      %v698 = vpack.c.b16 %v683, %v682
      %v699 = vpack.c.b16 %v685, %v684
      %v700 = vpack.c.b16 %v687, %v686
      %v701 = vpack.c.b16 %v689, %v688
      %v702 = vpack.c.b16 %v691, %v690
      %v703 = vpack.c.b16 %v693, %v692
      %v704 = vpack.c.b16 %v695, %v694
      %v705 = vpack.c.b16 %v697, %v696
      %714 = vmatpush.bf16.msra.mxu0 %v705
      %715 = vmatpush.bf16.msra.mxu0 %v704
      %716 = vmatpush.bf16.msra.mxu0 %v703
      %717 = vmatpush.bf16.msra.mxu0 %v702
      %718 = vmatpush.bf16.msra.mxu0 %v701
      %719 = vmatpush.bf16.msra.mxu0 %v700
      %720 = vmatpush.bf16.msra.mxu0 %v699
      %721 = vmatpush.bf16.msra.mxu0 %v698
      %722 = vmatmul.bf16.gmra.mxu0 %v315
      %v723 = vpop.f32.mrf.mxu0
      %v724 = vadd.f32 %v559, %v723
      %v725 = vpop.f32.mrf.mxu0
      %v726 = vadd.f32 %v561, %v725
      %727 = vmatmul.bf16.gmra.mxu0 %v316
      %v728 = vpop.f32.mrf.mxu0
      %v729 = vadd.f32 %v564, %v728
      %v730 = vpop.f32.mrf.mxu0
      %v731 = vadd.f32 %v566, %v730
      %732 = vmatmul.bf16.gmra.mxu0 %v317
      %v733 = vpop.f32.mrf.mxu0
      %v734 = vadd.f32 %v569, %v733
      %v735 = vpop.f32.mrf.mxu0
      %v736 = vadd.f32 %v571, %v735
      %737 = vmatmul.bf16.gmra.mxu0 %v318
      %v738 = vpop.f32.mrf.mxu0
      %v739 = vadd.f32 %v574, %v738
      %v740 = vpop.f32.mrf.mxu0
      %v741 = vadd.f32 %v576, %v740
      %742 = vmatmul.bf16.gmra.mxu0 %v319
      %v743 = vpop.f32.mrf.mxu0
      %v744 = vadd.f32 %v579, %v743
      %v745 = vpop.f32.mrf.mxu0
      %v746 = vadd.f32 %v581, %v745
      %747 = vmatmul.bf16.gmra.mxu0 %v320
      %v748 = vpop.f32.mrf.mxu0
      %v749 = vadd.f32 %v584, %v748
      %v750 = vpop.f32.mrf.mxu0
      %v751 = vadd.f32 %v586, %v750
      %752 = vmatmul.bf16.gmra.mxu0 %v321
      %v753 = vpop.f32.mrf.mxu0
      %v754 = vadd.f32 %v589, %v753
      %v755 = vpop.f32.mrf.mxu0
      %v756 = vadd.f32 %v591, %v755
      %757 = vmatmul.bf16.gmra.mxu0 %v322
      %v758 = vpop.f32.mrf.mxu0
      %v759 = vadd.f32 %v594, %v758
      %v760 = vpop.f32.mrf.mxu0
      %v761 = vadd.f32 %v596, %v760
      %762 = vmatmul.bf16.gmra.mxu0 %v323
      %v763 = vpop.f32.mrf.mxu0
      %v764 = vadd.f32 %v599, %v763
      %v765 = vpop.f32.mrf.mxu0
      %v766 = vadd.f32 %v601, %v765
      %767 = vmatmul.bf16.gmra.mxu0 %v324
      %v768 = vpop.f32.mrf.mxu0
      %v769 = vadd.f32 %v604, %v768
      %v770 = vpop.f32.mrf.mxu0
      %v771 = vadd.f32 %v606, %v770
      %772 = vmatmul.bf16.gmra.mxu0 %v325
      %v773 = vpop.f32.mrf.mxu0
      %v774 = vadd.f32 %v609, %v773
      %v775 = vpop.f32.mrf.mxu0
      %v776 = vadd.f32 %v611, %v775
      %777 = vmatmul.bf16.gmra.mxu0 %v326
      %v778 = vpop.f32.mrf.mxu0
      %v779 = vadd.f32 %v614, %v778
      %v780 = vpop.f32.mrf.mxu0
      %v781 = vadd.f32 %v616, %v780
      %782 = vmatmul.bf16.gmra.mxu0 %v327
      %v783 = vpop.f32.mrf.mxu0
      %v784 = vadd.f32 %v619, %v783
      %v785 = vpop.f32.mrf.mxu0
      %v786 = vadd.f32 %v621, %v785
      %787 = vmatmul.bf16.gmra.mxu0 %v328
      %v788 = vpop.f32.mrf.mxu0
      %v789 = vadd.f32 %v624, %v788
      %v790 = vpop.f32.mrf.mxu0
      %v791 = vadd.f32 %v626, %v790
      %792 = vmatmul.bf16.gmra.mxu0 %v329
      %v793 = vpop.f32.mrf.mxu0
      %v794 = vadd.f32 %v629, %v793
      %v795 = vpop.f32.mrf.mxu0
      %v796 = vadd.f32 %v631, %v795
      %797 = vmatmul.bf16.gmra.mxu0 %v330
      %v798 = vpop.f32.mrf.mxu0
      %v799 = vadd.f32 %v634, %v798
      %v800 = vpop.f32.mrf.mxu0
      %v801 = vadd.f32 %v636, %v800
      %802 = vmatmul.bf16.gmra.mxu0 %v331
      %v803 = vpop.f32.mrf.mxu0
      %v804 = vadd.f32 %v639, %v803
      %v805 = vpop.f32.mrf.mxu0
      %v806 = vadd.f32 %v641, %v805
      %807 = vmatmul.bf16.gmra.mxu0 %v332
      %v808 = vpop.f32.mrf.mxu0
      %v809 = vadd.f32 %v644, %v808
      %v810 = vpop.f32.mrf.mxu0
      %v811 = vadd.f32 %v646, %v810
      %812 = vdwg.mxu0
      %v813 = vld [vmem:[%s165] sm:$0xe]
      %s814 = scalar_lea.vmem %s1, 128
      %v815 = vld [vmem:[%s814] sm:$0xf]
      %v816 = vld [vmem:[%s814 + $0x4] sm:$0xf]
      %v817 = vld [vmem:[%s814 + $0x8] sm:$0xf]
      %v818 = vld [vmem:[%s814 + $0xc] sm:$0xf]
      %v819 = vld [vmem:[%s814 + $0x10] sm:$0xf]
      %v820 = vld [vmem:[%s814 + $0x14] sm:$0xf]
      %v821 = vld [vmem:[%s814 + $0x18] sm:$0xf]
      %v822 = vld [vmem:[%s814 + $0x1c] sm:$0xf]
      %v823 = vld [vmem:[%s814 + $0x20] sm:$0xf]
      %v824 = vld [vmem:[%s814 + $0x24] sm:$0xf]
      %v825 = vld [vmem:[%s814 + $0x28] sm:$0xf]
      %v826 = vld [vmem:[%s814 + $0x2c] sm:$0xf]
      %v827 = vld [vmem:[%s814 + $0x30] sm:$0xf]
      %v828 = vld [vmem:[%s814 + $0x34] sm:$0xf]
      %v829 = vld [vmem:[%s814 + $0x38] sm:$0xf]
      %v830 = vld [vmem:[%s814 + $0x3c] sm:$0xf]
      %v832 = vunpack.c.l.b16 %v813
      %v833 = vpack.c.b16 %v279, %v832
      %vm834 = vcmask 1046528
      %v835 = vrot.slane %v833, 1
      %v836 = vrot.slane %v316, 1
      %v837 = vsel %vm834, %v835, %v836
      %v838 = vrot.slane %v317, 1
      %v839 = vsel %vm834, %v836, %v838
      %v840 = vrot.slane %v318, 1
      %v841 = vsel %vm834, %v838, %v840
      %v842 = vrot.slane %v319, 1
      %v843 = vsel %vm834, %v840, %v842
      %v844 = vrot.slane %v320, 1
      %v845 = vsel %vm834, %v842, %v844
      %v846 = vrot.slane %v321, 1
      %v847 = vsel %vm834, %v844, %v846
      %v848 = vrot.slane %v322, 1
      %v849 = vsel %vm834, %v846, %v848
      %v850 = vrot.slane %v323, 1
      %v851 = vsel %vm834, %v848, %v850
      %v852 = vrot.slane %v324, 1
      %v853 = vsel %vm834, %v850, %v852
      %v854 = vrot.slane %v325, 1
      %v855 = vsel %vm834, %v852, %v854
      %v856 = vrot.slane %v326, 1
      %v857 = vsel %vm834, %v854, %v856
      %v858 = vrot.slane %v327, 1
      %v859 = vsel %vm834, %v856, %v858
      %v860 = vrot.slane %v328, 1
      %v861 = vsel %vm834, %v858, %v860
      %v862 = vrot.slane %v329, 1
      %v863 = vsel %vm834, %v860, %v862
      %v864 = vrot.slane %v330, 1
      %v865 = vsel %vm834, %v862, %v864
      %v866 = vrot.slane %v331, 1
      %v867 = vsel %vm834, %v864, %v866
      %v868 = vrot.slane %v332, 1
      %v869 = vsel %vm834, %v866, %v868
      %v870 = vrot.slane %v333, 1
      %v871 = vsel %vm834, %v868, %v870
      %v906 = vunpack.c.l.b16 %v815
      %v907 = vunpack.c.l.b16 %v816
      %v908 = vunpack.c.l.b16 %v817
      %v909 = vunpack.c.l.b16 %v818
      %v910 = vunpack.c.l.b16 %v819
      %v911 = vunpack.c.l.b16 %v820
      %v912 = vunpack.c.l.b16 %v821
      %v913 = vunpack.c.l.b16 %v822
      %v914 = vunpack.c.l.b16 %v823
      %v915 = vunpack.c.l.b16 %v824
      %v916 = vunpack.c.l.b16 %v825
      %v917 = vunpack.c.l.b16 %v826
      %v918 = vunpack.c.l.b16 %v827
      %v919 = vunpack.c.l.b16 %v828
      %v920 = vunpack.c.l.b16 %v829
      %v921 = vunpack.c.l.b16 %v830
      %v922 = vpack.c.b16 %v907, %v906
      %v923 = vpack.c.b16 %v909, %v908
      %v924 = vpack.c.b16 %v911, %v910
      %v925 = vpack.c.b16 %v913, %v912
      %v926 = vpack.c.b16 %v915, %v914
      %v927 = vpack.c.b16 %v917, %v916
      %v928 = vpack.c.b16 %v919, %v918
      %v929 = vpack.c.b16 %v921, %v920
      %938 = vmatpush.bf16.msra.mxu0 %v929
      %939 = vmatpush.bf16.msra.mxu0 %v928
      %940 = vmatpush.bf16.msra.mxu0 %v927
      %941 = vmatpush.bf16.msra.mxu0 %v926
      %942 = vmatpush.bf16.msra.mxu0 %v925
      %943 = vmatpush.bf16.msra.mxu0 %v924
      %944 = vmatpush.bf16.msra.mxu0 %v923
      %945 = vmatpush.bf16.msra.mxu0 %v922
      %946 = vmatmul.bf16.gmra.mxu0 %v837
      %v947 = vpop.f32.mrf.mxu0
      %v948 = vadd.f32 0.0, %v947
      %v949 = vpop.f32.mrf.mxu0
      %v950 = vadd.f32 0.0, %v949
      %951 = vmatmul.bf16.gmra.mxu0 %v839
      %v952 = vpop.f32.mrf.mxu0
      %v953 = vadd.f32 0.0, %v952
      %v954 = vpop.f32.mrf.mxu0
      %v955 = vadd.f32 0.0, %v954
      %956 = vmatmul.bf16.gmra.mxu0 %v841
      %v957 = vpop.f32.mrf.mxu0
      %v958 = vadd.f32 0.0, %v957
      %v959 = vpop.f32.mrf.mxu0
      %v960 = vadd.f32 0.0, %v959
      %961 = vmatmul.bf16.gmra.mxu0 %v843
      %v962 = vpop.f32.mrf.mxu0
      %v963 = vadd.f32 0.0, %v962
      %v964 = vpop.f32.mrf.mxu0
      %v965 = vadd.f32 0.0, %v964
      %966 = vmatmul.bf16.gmra.mxu0 %v845
      %v967 = vpop.f32.mrf.mxu0
      %v968 = vadd.f32 0.0, %v967
      %v969 = vpop.f32.mrf.mxu0
      %v970 = vadd.f32 0.0, %v969
      %971 = vmatmul.bf16.gmra.mxu0 %v847
      %v972 = vpop.f32.mrf.mxu0
      %v973 = vadd.f32 0.0, %v972
      %v974 = vpop.f32.mrf.mxu0
      %v975 = vadd.f32 0.0, %v974
      %976 = vmatmul.bf16.gmra.mxu0 %v849
      %v977 = vpop.f32.mrf.mxu0
      %v978 = vadd.f32 0.0, %v977
      %v979 = vpop.f32.mrf.mxu0
      %v980 = vadd.f32 0.0, %v979
      %981 = vmatmul.bf16.gmra.mxu0 %v851
      %v982 = vpop.f32.mrf.mxu0
      %v983 = vadd.f32 0.0, %v982
      %v984 = vpop.f32.mrf.mxu0
      %v985 = vadd.f32 0.0, %v984
      %986 = vmatmul.bf16.gmra.mxu0 %v853
      %v987 = vpop.f32.mrf.mxu0
      %v988 = vadd.f32 0.0, %v987
      %v989 = vpop.f32.mrf.mxu0
      %v990 = vadd.f32 0.0, %v989
      %991 = vmatmul.bf16.gmra.mxu0 %v855
      %v992 = vpop.f32.mrf.mxu0
      %v993 = vadd.f32 0.0, %v992
      %v994 = vpop.f32.mrf.mxu0
      %v995 = vadd.f32 0.0, %v994
      %996 = vmatmul.bf16.gmra.mxu0 %v857
      %v997 = vpop.f32.mrf.mxu0
      %v998 = vadd.f32 0.0, %v997
      %v999 = vpop.f32.mrf.mxu0
      %v1000 = vadd.f32 0.0, %v999
      %1001 = vmatmul.bf16.gmra.mxu0 %v859
      %v1002 = vpop.f32.mrf.mxu0
      %v1003 = vadd.f32 0.0, %v1002
      %v1004 = vpop.f32.mrf.mxu0
      %v1005 = vadd.f32 0.0, %v1004
      %1006 = vmatmul.bf16.gmra.mxu0 %v861
      %v1007 = vpop.f32.mrf.mxu0
      %v1008 = vadd.f32 0.0, %v1007
      %v1009 = vpop.f32.mrf.mxu0
      %v1010 = vadd.f32 0.0, %v1009
      %1011 = vmatmul.bf16.gmra.mxu0 %v863
      %v1012 = vpop.f32.mrf.mxu0
      %v1013 = vadd.f32 0.0, %v1012
      %v1014 = vpop.f32.mrf.mxu0
      %v1015 = vadd.f32 0.0, %v1014
      %1016 = vmatmul.bf16.gmra.mxu0 %v865
      %v1017 = vpop.f32.mrf.mxu0
      %v1018 = vadd.f32 0.0, %v1017
      %v1019 = vpop.f32.mrf.mxu0
      %v1020 = vadd.f32 0.0, %v1019
      %1021 = vmatmul.bf16.gmra.mxu0 %v867
      %v1022 = vpop.f32.mrf.mxu0
      %v1023 = vadd.f32 0.0, %v1022
      %v1024 = vpop.f32.mrf.mxu0
      %v1025 = vadd.f32 0.0, %v1024
      %1026 = vmatmul.bf16.gmra.mxu0 %v869
      %v1027 = vpop.f32.mrf.mxu0
      %v1028 = vadd.f32 0.0, %v1027
      %v1029 = vpop.f32.mrf.mxu0
      %v1030 = vadd.f32 0.0, %v1029
      %1031 = vmatmul.bf16.gmra.mxu0 %v871
      %v1032 = vpop.f32.mrf.mxu0
      %v1033 = vadd.f32 0.0, %v1032
      %v1034 = vpop.f32.mrf.mxu0
      %v1035 = vadd.f32 0.0, %v1034
      %1036 = vdwg.mxu0
      %v1037 = vadd.f32 %v724, %v948
      %v1038 = vadd.f32 %v726, %v950
      %v1039 = vadd.f32 %v729, %v953
      %v1040 = vadd.f32 %v731, %v955
      %v1041 = vadd.f32 %v734, %v958
      %v1042 = vadd.f32 %v736, %v960
      %v1043 = vadd.f32 %v739, %v963
      %v1044 = vadd.f32 %v741, %v965
      %v1045 = vadd.f32 %v744, %v968
      %v1046 = vadd.f32 %v746, %v970
      %v1047 = vadd.f32 %v749, %v973
      %v1048 = vadd.f32 %v751, %v975
      %v1049 = vadd.f32 %v754, %v978
      %v1050 = vadd.f32 %v756, %v980
      %v1051 = vadd.f32 %v759, %v983
      %v1052 = vadd.f32 %v761, %v985
      %v1053 = vadd.f32 %v764, %v988
      %v1054 = vadd.f32 %v766, %v990
      %v1055 = vadd.f32 %v769, %v993
      %v1056 = vadd.f32 %v771, %v995
      %v1057 = vadd.f32 %v774, %v998
      %v1058 = vadd.f32 %v776, %v1000
      %v1059 = vadd.f32 %v779, %v1003
      %v1060 = vadd.f32 %v781, %v1005
      %v1061 = vadd.f32 %v784, %v1008
      %v1062 = vadd.f32 %v786, %v1010
      %v1063 = vadd.f32 %v789, %v1013
      %v1064 = vadd.f32 %v791, %v1015
      %v1065 = vadd.f32 %v794, %v1018
      %v1066 = vadd.f32 %v796, %v1020
      %v1067 = vadd.f32 %v799, %v1023
      %v1068 = vadd.f32 %v801, %v1025
      %v1069 = vadd.f32 %v804, %v1028
      %v1070 = vadd.f32 %v806, %v1030
      %v1071 = vadd.f32 %v809, %v1033
      %v1072 = vadd.f32 %v811, %v1035
      %v1073 = vld [vmem:[%s165 + $0x8] sm:$0xe]
      %v1074 = vld [vmem:[%s165 + $0xc] sm:$0xf]
      %v1075 = vld [vmem:[%s165 + $0x10] sm:$0xf]
      %v1076 = vld [vmem:[%s165 + $0x14] sm:$0xf]
      %v1077 = vld [vmem:[%s165 + $0x18] sm:$0xf]
      %v1078 = vld [vmem:[%s165 + $0x1c] sm:$0xf]
      %v1079 = vld [vmem:[%s165 + $0x20] sm:$0xf]
      %v1080 = vld [vmem:[%s165 + $0x24] sm:$0xf]
      %v1081 = vld [vmem:[%s165 + $0x28] sm:$0xf]
      %v1082 = vld [vmem:[%s165 + $0x2c] sm:$0xf]
      %v1083 = vld [vmem:[%s165 + $0x30] sm:$0xf]
      %v1084 = vld [vmem:[%s165 + $0x34] sm:$0xf]
      %v1085 = vld [vmem:[%s165 + $0x38] sm:$0xf]
      %v1086 = vld [vmem:[%s165 + $0x3c] sm:$0xf]
      %v1087 = vld [vmem:[%s165 + $0x40] sm:$0xf]
      %v1088 = vld [vmem:[%s165 + $0x44] sm:$0xf]
      %v1089 = vld [vmem:[%s165 + $0x48] sm:$0xf]
      %v1090 = vld [vmem:[%s165 + $0x4c] sm:$0xf]
      %v1091 = vld [vmem:[%s165 + $0x50] sm:$0xf]
      %v1092 = vld [vmem:[%s165 + $0x54] sm:$0xf]
      %v1093 = vld [vmem:[%s165 + $0x58] sm:$0xf]
      %v1094 = vld [vmem:[%s165 + $0x5c] sm:$0xf]
      %v1095 = vld [vmem:[%s165 + $0x60] sm:$0xf]
      %v1096 = vld [vmem:[%s165 + $0x64] sm:$0xf]
      %v1097 = vld [vmem:[%s165 + $0x68] sm:$0xf]
      %v1098 = vld [vmem:[%s165 + $0x6c] sm:$0xf]
      %v1099 = vld [vmem:[%s165 + $0x70] sm:$0xf]
      %v1100 = vld [vmem:[%s165 + $0x74] sm:$0xf]
      %v1101 = vld [vmem:[%s165 + $0x78] sm:$0xf]
      %v1102 = vld [vmem:[%s165 + $0x7c] sm:$0xf]
      %v1103 = vld [vmem:[%s165 + $0x80] sm:$0xf]
      %v1104 = vld [vmem:[%s165 + $0x84] sm:$0xf]
      %v1105 = vld [vmem:[%s165 + $0x88] sm:$0xf]
      %v1106 = vld [vmem:[%s165 + $0x8c] sm:$0xf]
      %v1107 = vld [vmem:[%s165 + $0x90] sm:$0xf]
      %v1108 = vld [vmem:[%s165 + $0x94] sm:$0xf]
      %v1109 = vld [vmem:[%s165 + $0x98] sm:$0x1]
      %s1110 = scalar_lea.vmem %s1, 192
      %v1111 = vld [vmem:[%s1110] sm:$0xf]
      %v1112 = vld [vmem:[%s1110 + $0x4] sm:$0xf]
      %v1113 = vld [vmem:[%s1110 + $0x8] sm:$0xf]
      %v1114 = vld [vmem:[%s1110 + $0xc] sm:$0xf]
      %v1115 = vld [vmem:[%s1110 + $0x10] sm:$0xf]
      %v1116 = vld [vmem:[%s1110 + $0x14] sm:$0xf]
      %v1117 = vld [vmem:[%s1110 + $0x18] sm:$0xf]
      %v1118 = vld [vmem:[%s1110 + $0x1c] sm:$0xf]
      %v1119 = vld [vmem:[%s1110 + $0x20] sm:$0xf]
      %v1120 = vld [vmem:[%s1110 + $0x24] sm:$0xf]
      %v1121 = vld [vmem:[%s1110 + $0x28] sm:$0xf]
      %v1122 = vld [vmem:[%s1110 + $0x2c] sm:$0xf]
      %v1123 = vld [vmem:[%s1110 + $0x30] sm:$0xf]
      %v1124 = vld [vmem:[%s1110 + $0x34] sm:$0xf]
      %v1125 = vld [vmem:[%s1110 + $0x38] sm:$0xf]
      %v1126 = vld [vmem:[%s1110 + $0x3c] sm:$0xf]
      %v1164 = vunpack.c.l.b16 %v1073
      %v1165 = vunpack.c.l.b16 %v1074
      %v1166 = vunpack.c.l.b16 %v1075
      %v1167 = vunpack.c.l.b16 %v1076
      %v1168 = vunpack.c.l.b16 %v1077
      %v1169 = vunpack.c.l.b16 %v1078
      %v1170 = vunpack.c.l.b16 %v1079
      %v1171 = vunpack.c.l.b16 %v1080
      %v1172 = vunpack.c.l.b16 %v1081
      %v1173 = vunpack.c.l.b16 %v1082
      %v1174 = vunpack.c.l.b16 %v1083
      %v1175 = vunpack.c.l.b16 %v1084
      %v1176 = vunpack.c.l.b16 %v1085
      %v1177 = vunpack.c.l.b16 %v1086
      %v1178 = vunpack.c.l.b16 %v1087
      %v1179 = vunpack.c.l.b16 %v1088
      %v1180 = vunpack.c.l.b16 %v1089
      %v1181 = vunpack.c.l.b16 %v1090
      %v1182 = vunpack.c.l.b16 %v1091
      %v1183 = vunpack.c.l.b16 %v1092
      %v1184 = vunpack.c.l.b16 %v1093
      %v1185 = vunpack.c.l.b16 %v1094
      %v1186 = vunpack.c.l.b16 %v1095
      %v1187 = vunpack.c.l.b16 %v1096
      %v1188 = vunpack.c.l.b16 %v1097
      %v1189 = vunpack.c.l.b16 %v1098
      %v1190 = vunpack.c.l.b16 %v1099
      %v1191 = vunpack.c.l.b16 %v1100
      %v1192 = vunpack.c.l.b16 %v1101
      %v1193 = vunpack.c.l.b16 %v1102
      %v1194 = vunpack.c.l.b16 %v1103
      %v1195 = vunpack.c.l.b16 %v1104
      %v1196 = vunpack.c.l.b16 %v1105
      %v1197 = vunpack.c.l.b16 %v1106
      %v1198 = vunpack.c.l.b16 %v1107
      %v1199 = vunpack.c.l.b16 %v1108
      %v1200 = vunpack.c.l.b16 %v1109
      %v1201 = vpack.c.b16 %v1165, %v1164
      %v1202 = vpack.c.b16 %v1167, %v1166
      %v1203 = vpack.c.b16 %v1169, %v1168
      %v1204 = vpack.c.b16 %v1171, %v1170
      %v1205 = vpack.c.b16 %v1173, %v1172
      %v1206 = vpack.c.b16 %v1175, %v1174
      %v1207 = vpack.c.b16 %v1177, %v1176
      %v1208 = vpack.c.b16 %v1179, %v1178
      %v1209 = vpack.c.b16 %v1181, %v1180
      %v1210 = vpack.c.b16 %v1183, %v1182
      %v1211 = vpack.c.b16 %v1185, %v1184
      %v1212 = vpack.c.b16 %v1187, %v1186
      %v1213 = vpack.c.b16 %v1189, %v1188
      %v1214 = vpack.c.b16 %v1191, %v1190
      %v1215 = vpack.c.b16 %v1193, %v1192
      %v1216 = vpack.c.b16 %v1195, %v1194
      %v1217 = vpack.c.b16 %v1197, %v1196
      %v1218 = vpack.c.b16 %v1199, %v1198
      %v1219 = vpack.c.b16 %v1200, %v1200
      %v1220 = vrot.slane %v1201, 1
      %v1221 = vrot.slane %v1202, 1
      %v1222 = vsel %vm834, %v1220, %v1221
      %v1223 = vrot.slane %v1203, 1
      %v1224 = vsel %vm834, %v1221, %v1223
      %v1225 = vrot.slane %v1204, 1
      %v1226 = vsel %vm834, %v1223, %v1225
      %v1227 = vrot.slane %v1205, 1
      %v1228 = vsel %vm834, %v1225, %v1227
      %v1229 = vrot.slane %v1206, 1
      %v1230 = vsel %vm834, %v1227, %v1229
      %v1231 = vrot.slane %v1207, 1
      %v1232 = vsel %vm834, %v1229, %v1231
      %v1233 = vrot.slane %v1208, 1
      %v1234 = vsel %vm834, %v1231, %v1233
      %v1235 = vrot.slane %v1209, 1
      %v1236 = vsel %vm834, %v1233, %v1235
      %v1237 = vrot.slane %v1210, 1
      %v1238 = vsel %vm834, %v1235, %v1237
      %v1239 = vrot.slane %v1211, 1
      %v1240 = vsel %vm834, %v1237, %v1239
      %v1241 = vrot.slane %v1212, 1
      %v1242 = vsel %vm834, %v1239, %v1241
      %v1243 = vrot.slane %v1213, 1
      %v1244 = vsel %vm834, %v1241, %v1243
      %v1245 = vrot.slane %v1214, 1
      %v1246 = vsel %vm834, %v1243, %v1245
      %v1247 = vrot.slane %v1215, 1
      %v1248 = vsel %vm834, %v1245, %v1247
      %v1249 = vrot.slane %v1216, 1
      %v1250 = vsel %vm834, %v1247, %v1249
      %v1251 = vrot.slane %v1217, 1
      %v1252 = vsel %vm834, %v1249, %v1251
      %v1253 = vrot.slane %v1218, 1
      %v1254 = vsel %vm834, %v1251, %v1253
      %v1255 = vrot.slane %v1219, 1
      %v1256 = vsel %vm834, %v1253, %v1255
      %v1291 = vunpack.c.l.b16 %v1111
      %v1292 = vunpack.c.l.b16 %v1112
      %v1293 = vunpack.c.l.b16 %v1113
      %v1294 = vunpack.c.l.b16 %v1114
      %v1295 = vunpack.c.l.b16 %v1115
      %v1296 = vunpack.c.l.b16 %v1116
      %v1297 = vunpack.c.l.b16 %v1117
      %v1298 = vunpack.c.l.b16 %v1118
      %v1299 = vunpack.c.l.b16 %v1119
      %v1300 = vunpack.c.l.b16 %v1120
      %v1301 = vunpack.c.l.b16 %v1121
      %v1302 = vunpack.c.l.b16 %v1122
      %v1303 = vunpack.c.l.b16 %v1123
      %v1304 = vunpack.c.l.b16 %v1124
      %v1305 = vunpack.c.l.b16 %v1125
      %v1306 = vunpack.c.l.b16 %v1126
      %v1307 = vpack.c.b16 %v1292, %v1291
      %v1308 = vpack.c.b16 %v1294, %v1293
      %v1309 = vpack.c.b16 %v1296, %v1295
      %v1310 = vpack.c.b16 %v1298, %v1297
      %v1311 = vpack.c.b16 %v1300, %v1299
      %v1312 = vpack.c.b16 %v1302, %v1301
      %v1313 = vpack.c.b16 %v1304, %v1303
      %v1314 = vpack.c.b16 %v1306, %v1305
      %1323 = vmatpush.bf16.msra.mxu0 %v1314
      %1324 = vmatpush.bf16.msra.mxu0 %v1313
      %1325 = vmatpush.bf16.msra.mxu0 %v1312
      %1326 = vmatpush.bf16.msra.mxu0 %v1311
      %1327 = vmatpush.bf16.msra.mxu0 %v1310
      %1328 = vmatpush.bf16.msra.mxu0 %v1309
      %1329 = vmatpush.bf16.msra.mxu0 %v1308
      %1330 = vmatpush.bf16.msra.mxu0 %v1307
      %1331 = vmatmul.bf16.gmra.mxu0 %v1222
      %v1332 = vpop.f32.mrf.mxu0
      %v1333 = vadd.f32 0.0, %v1332
      %v1334 = vpop.f32.mrf.mxu0
      %v1335 = vadd.f32 0.0, %v1334
      %1336 = vmatmul.bf16.gmra.mxu0 %v1224
      %v1337 = vpop.f32.mrf.mxu0
      %v1338 = vadd.f32 0.0, %v1337
      %v1339 = vpop.f32.mrf.mxu0
      %v1340 = vadd.f32 0.0, %v1339
      %1341 = vmatmul.bf16.gmra.mxu0 %v1226
      %v1342 = vpop.f32.mrf.mxu0
      %v1343 = vadd.f32 0.0, %v1342
      %v1344 = vpop.f32.mrf.mxu0
      %v1345 = vadd.f32 0.0, %v1344
      %1346 = vmatmul.bf16.gmra.mxu0 %v1228
      %v1347 = vpop.f32.mrf.mxu0
      %v1348 = vadd.f32 0.0, %v1347
      %v1349 = vpop.f32.mrf.mxu0
      %v1350 = vadd.f32 0.0, %v1349
      %1351 = vmatmul.bf16.gmra.mxu0 %v1230
      %v1352 = vpop.f32.mrf.mxu0
      %v1353 = vadd.f32 0.0, %v1352
      %v1354 = vpop.f32.mrf.mxu0
      %v1355 = vadd.f32 0.0, %v1354
      %1356 = vmatmul.bf16.gmra.mxu0 %v1232
      %v1357 = vpop.f32.mrf.mxu0
      %v1358 = vadd.f32 0.0, %v1357
      %v1359 = vpop.f32.mrf.mxu0
      %v1360 = vadd.f32 0.0, %v1359
      %1361 = vmatmul.bf16.gmra.mxu0 %v1234
      %v1362 = vpop.f32.mrf.mxu0
      %v1363 = vadd.f32 0.0, %v1362
      %v1364 = vpop.f32.mrf.mxu0
      %v1365 = vadd.f32 0.0, %v1364
      %1366 = vmatmul.bf16.gmra.mxu0 %v1236
      %v1367 = vpop.f32.mrf.mxu0
      %v1368 = vadd.f32 0.0, %v1367
      %v1369 = vpop.f32.mrf.mxu0
      %v1370 = vadd.f32 0.0, %v1369
      %1371 = vmatmul.bf16.gmra.mxu0 %v1238
      %v1372 = vpop.f32.mrf.mxu0
      %v1373 = vadd.f32 0.0, %v1372
      %v1374 = vpop.f32.mrf.mxu0
      %v1375 = vadd.f32 0.0, %v1374
      %1376 = vmatmul.bf16.gmra.mxu0 %v1240
      %v1377 = vpop.f32.mrf.mxu0
      %v1378 = vadd.f32 0.0, %v1377
      %v1379 = vpop.f32.mrf.mxu0
      %v1380 = vadd.f32 0.0, %v1379
      %1381 = vmatmul.bf16.gmra.mxu0 %v1242
      %v1382 = vpop.f32.mrf.mxu0
      %v1383 = vadd.f32 0.0, %v1382
      %v1384 = vpop.f32.mrf.mxu0
      %v1385 = vadd.f32 0.0, %v1384
      %1386 = vmatmul.bf16.gmra.mxu0 %v1244
      %v1387 = vpop.f32.mrf.mxu0
      %v1388 = vadd.f32 0.0, %v1387
      %v1389 = vpop.f32.mrf.mxu0
      %v1390 = vadd.f32 0.0, %v1389
      %1391 = vmatmul.bf16.gmra.mxu0 %v1246
      %v1392 = vpop.f32.mrf.mxu0
      %v1393 = vadd.f32 0.0, %v1392
      %v1394 = vpop.f32.mrf.mxu0
      %v1395 = vadd.f32 0.0, %v1394
      %1396 = vmatmul.bf16.gmra.mxu0 %v1248
      %v1397 = vpop.f32.mrf.mxu0
      %v1398 = vadd.f32 0.0, %v1397
      %v1399 = vpop.f32.mrf.mxu0
      %v1400 = vadd.f32 0.0, %v1399
      %1401 = vmatmul.bf16.gmra.mxu0 %v1250
      %v1402 = vpop.f32.mrf.mxu0
      %v1403 = vadd.f32 0.0, %v1402
      %v1404 = vpop.f32.mrf.mxu0
      %v1405 = vadd.f32 0.0, %v1404
      %1406 = vmatmul.bf16.gmra.mxu0 %v1252
      %v1407 = vpop.f32.mrf.mxu0
      %v1408 = vadd.f32 0.0, %v1407
      %v1409 = vpop.f32.mrf.mxu0
      %v1410 = vadd.f32 0.0, %v1409
      %1411 = vmatmul.bf16.gmra.mxu0 %v1254
      %v1412 = vpop.f32.mrf.mxu0
      %v1413 = vadd.f32 0.0, %v1412
      %v1414 = vpop.f32.mrf.mxu0
      %v1415 = vadd.f32 0.0, %v1414
      %1416 = vmatmul.bf16.gmra.mxu0 %v1256
      %v1417 = vpop.f32.mrf.mxu0
      %v1418 = vadd.f32 0.0, %v1417
      %v1419 = vpop.f32.mrf.mxu0
      %v1420 = vadd.f32 0.0, %v1419
      %1421 = vdwg.mxu0
      %v1422 = vadd.f32 %v1037, %v1333
      %v1423 = vadd.f32 %v1038, %v1335
      %v1424 = vadd.f32 %v1039, %v1338
      %v1425 = vadd.f32 %v1040, %v1340
      %v1426 = vadd.f32 %v1041, %v1343
      %v1427 = vadd.f32 %v1042, %v1345
      %v1428 = vadd.f32 %v1043, %v1348
      %v1429 = vadd.f32 %v1044, %v1350
      %v1430 = vadd.f32 %v1045, %v1353
      %v1431 = vadd.f32 %v1046, %v1355
      %v1432 = vadd.f32 %v1047, %v1358
      %v1433 = vadd.f32 %v1048, %v1360
      %v1434 = vadd.f32 %v1049, %v1363
      %v1435 = vadd.f32 %v1050, %v1365
      %v1436 = vadd.f32 %v1051, %v1368
      %v1437 = vadd.f32 %v1052, %v1370
      %v1438 = vadd.f32 %v1053, %v1373
      %v1439 = vadd.f32 %v1054, %v1375
      %v1440 = vadd.f32 %v1055, %v1378
      %v1441 = vadd.f32 %v1056, %v1380
      %v1442 = vadd.f32 %v1057, %v1383
      %v1443 = vadd.f32 %v1058, %v1385
      %v1444 = vadd.f32 %v1059, %v1388
      %v1445 = vadd.f32 %v1060, %v1390
      %v1446 = vadd.f32 %v1061, %v1393
      %v1447 = vadd.f32 %v1062, %v1395
      %v1448 = vadd.f32 %v1063, %v1398
      %v1449 = vadd.f32 %v1064, %v1400
      %v1450 = vadd.f32 %v1065, %v1403
      %v1451 = vadd.f32 %v1066, %v1405
      %v1452 = vadd.f32 %v1067, %v1408
      %v1453 = vadd.f32 %v1068, %v1410
      %v1454 = vadd.f32 %v1069, %v1413
      %v1455 = vadd.f32 %v1070, %v1415
      %v1456 = vadd.f32 %v1071, %v1418
      %v1457 = vadd.f32 %v1072, %v1420
      %v1458 = vld [vmem:[%s165 + $0x98] sm:$0x3]
      %s1459 = scalar_lea.vmem %s1, 256
      %v1460 = vld [vmem:[%s1459] sm:$0xf]
      %v1461 = vld [vmem:[%s1459 + $0x4] sm:$0xf]
      %v1462 = vld [vmem:[%s1459 + $0x8] sm:$0xf]
      %v1463 = vld [vmem:[%s1459 + $0xc] sm:$0xf]
      %v1464 = vld [vmem:[%s1459 + $0x10] sm:$0xf]
      %v1465 = vld [vmem:[%s1459 + $0x14] sm:$0xf]
      %v1466 = vld [vmem:[%s1459 + $0x18] sm:$0xf]
      %v1467 = vld [vmem:[%s1459 + $0x1c] sm:$0xf]
      %v1468 = vld [vmem:[%s1459 + $0x20] sm:$0xf]
      %v1469 = vld [vmem:[%s1459 + $0x24] sm:$0xf]
      %v1470 = vld [vmem:[%s1459 + $0x28] sm:$0xf]
      %v1471 = vld [vmem:[%s1459 + $0x2c] sm:$0xf]
      %v1472 = vld [vmem:[%s1459 + $0x30] sm:$0xf]
      %v1473 = vld [vmem:[%s1459 + $0x34] sm:$0xf]
      %v1474 = vld [vmem:[%s1459 + $0x38] sm:$0xf]
      %v1475 = vld [vmem:[%s1459 + $0x3c] sm:$0xf]
      %v1477 = vunpack.c.l.b16 %v1458
      %v1478 = vpack.c.b16 %v1477, %v1477
      %vm1479 = vsmask.f32 6400
      %v1481 = vshrl.u32 %v1201, 16
      %v1483 = vrot.slane %v1481, 1
      %v1484 = vshll.u32 %v1201, 16
      %v1486 = vrot.slane %v1484, 2
      %v1487 = vor.u32 %v1483, %v1486
      %v1489 = vshrl.u32 %v1202, 16
      %v1491 = vrot.slane %v1489, 1
      %v1492 = vshll.u32 %v1202, 16
      %v1494 = vrot.slane %v1492, 2
      %v1495 = vor.u32 %v1491, %v1494
      %v1496 = vsel %vm1479, %v1487, %v1495
      %v1498 = vshrl.u32 %v1203, 16
      %v1500 = vrot.slane %v1498, 1
      %v1501 = vshll.u32 %v1203, 16
      %v1503 = vrot.slane %v1501, 2
      %v1504 = vor.u32 %v1500, %v1503
      %v1505 = vsel %vm1479, %v1495, %v1504
      %v1507 = vshrl.u32 %v1204, 16
      %v1509 = vrot.slane %v1507, 1
      %v1510 = vshll.u32 %v1204, 16
      %v1512 = vrot.slane %v1510, 2
      %v1513 = vor.u32 %v1509, %v1512
      %v1514 = vsel %vm1479, %v1504, %v1513
      %v1516 = vshrl.u32 %v1205, 16
      %v1518 = vrot.slane %v1516, 1
      %v1519 = vshll.u32 %v1205, 16
      %v1521 = vrot.slane %v1519, 2
      %v1522 = vor.u32 %v1518, %v1521
      %v1523 = vsel %vm1479, %v1513, %v1522
      %v1525 = vshrl.u32 %v1206, 16
      %v1527 = vrot.slane %v1525, 1
      %v1528 = vshll.u32 %v1206, 16
      %v1530 = vrot.slane %v1528, 2
      %v1531 = vor.u32 %v1527, %v1530
      %v1532 = vsel %vm1479, %v1522, %v1531
      %v1534 = vshrl.u32 %v1207, 16
      %v1536 = vrot.slane %v1534, 1
      %v1537 = vshll.u32 %v1207, 16
      %v1539 = vrot.slane %v1537, 2
      %v1540 = vor.u32 %v1536, %v1539
      %v1541 = vsel %vm1479, %v1531, %v1540
      %v1543 = vshrl.u32 %v1208, 16
      %v1545 = vrot.slane %v1543, 1
      %v1546 = vshll.u32 %v1208, 16
      %v1548 = vrot.slane %v1546, 2
      %v1549 = vor.u32 %v1545, %v1548
      %v1550 = vsel %vm1479, %v1540, %v1549
      %v1552 = vshrl.u32 %v1209, 16
      %v1554 = vrot.slane %v1552, 1
      %v1555 = vshll.u32 %v1209, 16
      %v1557 = vrot.slane %v1555, 2
      %v1558 = vor.u32 %v1554, %v1557
      %v1559 = vsel %vm1479, %v1549, %v1558
      %v1561 = vshrl.u32 %v1210, 16
      %v1563 = vrot.slane %v1561, 1
      %v1564 = vshll.u32 %v1210, 16
      %v1566 = vrot.slane %v1564, 2
      %v1567 = vor.u32 %v1563, %v1566
      %v1568 = vsel %vm1479, %v1558, %v1567
      %v1570 = vshrl.u32 %v1211, 16
      %v1572 = vrot.slane %v1570, 1
      %v1573 = vshll.u32 %v1211, 16
      %v1575 = vrot.slane %v1573, 2
      %v1576 = vor.u32 %v1572, %v1575
      %v1577 = vsel %vm1479, %v1567, %v1576
      %v1579 = vshrl.u32 %v1212, 16
      %v1581 = vrot.slane %v1579, 1
      %v1582 = vshll.u32 %v1212, 16
      %v1584 = vrot.slane %v1582, 2
      %v1585 = vor.u32 %v1581, %v1584
      %v1586 = vsel %vm1479, %v1576, %v1585
      %v1588 = vshrl.u32 %v1213, 16
      %v1590 = vrot.slane %v1588, 1
      %v1591 = vshll.u32 %v1213, 16
      %v1593 = vrot.slane %v1591, 2
      %v1594 = vor.u32 %v1590, %v1593
      %v1595 = vsel %vm1479, %v1585, %v1594
      %v1597 = vshrl.u32 %v1214, 16
      %v1599 = vrot.slane %v1597, 1
      %v1600 = vshll.u32 %v1214, 16
      %v1602 = vrot.slane %v1600, 2
      %v1603 = vor.u32 %v1599, %v1602
      %v1604 = vsel %vm1479, %v1594, %v1603
      %v1606 = vshrl.u32 %v1215, 16
      %v1608 = vrot.slane %v1606, 1
      %v1609 = vshll.u32 %v1215, 16
      %v1611 = vrot.slane %v1609, 2
      %v1612 = vor.u32 %v1608, %v1611
      %v1613 = vsel %vm1479, %v1603, %v1612
      %v1615 = vshrl.u32 %v1216, 16
      %v1617 = vrot.slane %v1615, 1
      %v1618 = vshll.u32 %v1216, 16
      %v1620 = vrot.slane %v1618, 2
      %v1621 = vor.u32 %v1617, %v1620
      %v1622 = vsel %vm1479, %v1612, %v1621
      %v1624 = vshrl.u32 %v1217, 16
      %v1626 = vrot.slane %v1624, 1
      %v1627 = vshll.u32 %v1217, 16
      %v1629 = vrot.slane %v1627, 2
      %v1630 = vor.u32 %v1626, %v1629
      %v1631 = vsel %vm1479, %v1621, %v1630
      %v1633 = vshrl.u32 %v1218, 16
      %v1635 = vrot.slane %v1633, 1
      %v1636 = vshll.u32 %v1218, 16
      %v1638 = vrot.slane %v1636, 2
      %v1639 = vor.u32 %v1635, %v1638
      %v1640 = vsel %vm1479, %v1630, %v1639
      %v1642 = vshrl.u32 %v1478, 16
      %v1644 = vrot.slane %v1642, 1
      %v1645 = vshll.u32 %v1478, 16
      %v1647 = vrot.slane %v1645, 2
      %v1648 = vor.u32 %v1644, %v1647
      %v1649 = vsel %vm1479, %v1639, %v1648
      %v1684 = vunpack.c.l.b16 %v1460
      %v1685 = vunpack.c.l.b16 %v1461
      %v1686 = vunpack.c.l.b16 %v1462
      %v1687 = vunpack.c.l.b16 %v1463
      %v1688 = vunpack.c.l.b16 %v1464
      %v1689 = vunpack.c.l.b16 %v1465
      %v1690 = vunpack.c.l.b16 %v1466
      %v1691 = vunpack.c.l.b16 %v1467
      %v1692 = vunpack.c.l.b16 %v1468
      %v1693 = vunpack.c.l.b16 %v1469
      %v1694 = vunpack.c.l.b16 %v1470
      %v1695 = vunpack.c.l.b16 %v1471
      %v1696 = vunpack.c.l.b16 %v1472
      %v1697 = vunpack.c.l.b16 %v1473
      %v1698 = vunpack.c.l.b16 %v1474
      %v1699 = vunpack.c.l.b16 %v1475
      %v1700 = vpack.c.b16 %v1685, %v1684
      %v1701 = vpack.c.b16 %v1687, %v1686
      %v1702 = vpack.c.b16 %v1689, %v1688
      %v1703 = vpack.c.b16 %v1691, %v1690
      %v1704 = vpack.c.b16 %v1693, %v1692
      %v1705 = vpack.c.b16 %v1695, %v1694
      %v1706 = vpack.c.b16 %v1697, %v1696
      %v1707 = vpack.c.b16 %v1699, %v1698
      %1716 = vmatpush.bf16.msra.mxu0 %v1707
      %1717 = vmatpush.bf16.msra.mxu0 %v1706
      %1718 = vmatpush.bf16.msra.mxu0 %v1705
      %1719 = vmatpush.bf16.msra.mxu0 %v1704
      %1720 = vmatpush.bf16.msra.mxu0 %v1703
      %1721 = vmatpush.bf16.msra.mxu0 %v1702
      %1722 = vmatpush.bf16.msra.mxu0 %v1701
      %1723 = vmatpush.bf16.msra.mxu0 %v1700
      %1724 = vmatmul.bf16.gmra.mxu0 %v1496
      %v1725 = vpop.f32.mrf.mxu0
      %v1726 = vadd.f32 0.0, %v1725
      %v1727 = vpop.f32.mrf.mxu0
      %v1728 = vadd.f32 0.0, %v1727
      %1729 = vmatmul.bf16.gmra.mxu0 %v1505
      %v1730 = vpop.f32.mrf.mxu0
      %v1731 = vadd.f32 0.0, %v1730
      %v1732 = vpop.f32.mrf.mxu0
      %v1733 = vadd.f32 0.0, %v1732
      %1734 = vmatmul.bf16.gmra.mxu0 %v1514
      %v1735 = vpop.f32.mrf.mxu0
      %v1736 = vadd.f32 0.0, %v1735
      %v1737 = vpop.f32.mrf.mxu0
      %v1738 = vadd.f32 0.0, %v1737
      %1739 = vmatmul.bf16.gmra.mxu0 %v1523
      %v1740 = vpop.f32.mrf.mxu0
      %v1741 = vadd.f32 0.0, %v1740
      %v1742 = vpop.f32.mrf.mxu0
      %v1743 = vadd.f32 0.0, %v1742
      %1744 = vmatmul.bf16.gmra.mxu0 %v1532
      %v1745 = vpop.f32.mrf.mxu0
      %v1746 = vadd.f32 0.0, %v1745
      %v1747 = vpop.f32.mrf.mxu0
      %v1748 = vadd.f32 0.0, %v1747
      %1749 = vmatmul.bf16.gmra.mxu0 %v1541
      %v1750 = vpop.f32.mrf.mxu0
      %v1751 = vadd.f32 0.0, %v1750
      %v1752 = vpop.f32.mrf.mxu0
      %v1753 = vadd.f32 0.0, %v1752
      %1754 = vmatmul.bf16.gmra.mxu0 %v1550
      %v1755 = vpop.f32.mrf.mxu0
      %v1756 = vadd.f32 0.0, %v1755
      %v1757 = vpop.f32.mrf.mxu0
      %v1758 = vadd.f32 0.0, %v1757
      %1759 = vmatmul.bf16.gmra.mxu0 %v1559
      %v1760 = vpop.f32.mrf.mxu0
      %v1761 = vadd.f32 0.0, %v1760
      %v1762 = vpop.f32.mrf.mxu0
      %v1763 = vadd.f32 0.0, %v1762
      %1764 = vmatmul.bf16.gmra.mxu0 %v1568
      %v1765 = vpop.f32.mrf.mxu0
      %v1766 = vadd.f32 0.0, %v1765
      %v1767 = vpop.f32.mrf.mxu0
      %v1768 = vadd.f32 0.0, %v1767
      %1769 = vmatmul.bf16.gmra.mxu0 %v1577
      %v1770 = vpop.f32.mrf.mxu0
      %v1771 = vadd.f32 0.0, %v1770
      %v1772 = vpop.f32.mrf.mxu0
      %v1773 = vadd.f32 0.0, %v1772
      %1774 = vmatmul.bf16.gmra.mxu0 %v1586
      %v1775 = vpop.f32.mrf.mxu0
      %v1776 = vadd.f32 0.0, %v1775
      %v1777 = vpop.f32.mrf.mxu0
      %v1778 = vadd.f32 0.0, %v1777
      %1779 = vmatmul.bf16.gmra.mxu0 %v1595
      %v1780 = vpop.f32.mrf.mxu0
      %v1781 = vadd.f32 0.0, %v1780
      %v1782 = vpop.f32.mrf.mxu0
      %v1783 = vadd.f32 0.0, %v1782
      %1784 = vmatmul.bf16.gmra.mxu0 %v1604
      %v1785 = vpop.f32.mrf.mxu0
      %v1786 = vadd.f32 0.0, %v1785
      %v1787 = vpop.f32.mrf.mxu0
      %v1788 = vadd.f32 0.0, %v1787
      %1789 = vmatmul.bf16.gmra.mxu0 %v1613
      %v1790 = vpop.f32.mrf.mxu0
      %v1791 = vadd.f32 0.0, %v1790
      %v1792 = vpop.f32.mrf.mxu0
      %v1793 = vadd.f32 0.0, %v1792
      %1794 = vmatmul.bf16.gmra.mxu0 %v1622
      %v1795 = vpop.f32.mrf.mxu0
      %v1796 = vadd.f32 0.0, %v1795
      %v1797 = vpop.f32.mrf.mxu0
      %v1798 = vadd.f32 0.0, %v1797
      %1799 = vmatmul.bf16.gmra.mxu0 %v1631
      %v1800 = vpop.f32.mrf.mxu0
      %v1801 = vadd.f32 0.0, %v1800
      %v1802 = vpop.f32.mrf.mxu0
      %v1803 = vadd.f32 0.0, %v1802
      %1804 = vmatmul.bf16.gmra.mxu0 %v1640
      %v1805 = vpop.f32.mrf.mxu0
      %v1806 = vadd.f32 0.0, %v1805
      %v1807 = vpop.f32.mrf.mxu0
      %v1808 = vadd.f32 0.0, %v1807
      %1809 = vmatmul.bf16.gmra.mxu0 %v1649
      %v1810 = vpop.f32.mrf.mxu0
      %v1811 = vadd.f32 0.0, %v1810
      %v1812 = vpop.f32.mrf.mxu0
      %v1813 = vadd.f32 0.0, %v1812
      %1814 = vdwg.mxu0
      %v1815 = vadd.f32 %v1422, %v1726
      %v1816 = vadd.f32 %v1423, %v1728
      %v1817 = vadd.f32 %v1424, %v1731
      %v1818 = vadd.f32 %v1425, %v1733
      %v1819 = vadd.f32 %v1426, %v1736
      %v1820 = vadd.f32 %v1427, %v1738
      %v1821 = vadd.f32 %v1428, %v1741
      %v1822 = vadd.f32 %v1429, %v1743
      %v1823 = vadd.f32 %v1430, %v1746
      %v1824 = vadd.f32 %v1431, %v1748
      %v1825 = vadd.f32 %v1432, %v1751
      %v1826 = vadd.f32 %v1433, %v1753
      %v1827 = vadd.f32 %v1434, %v1756
      %v1828 = vadd.f32 %v1435, %v1758
      %v1829 = vadd.f32 %v1436, %v1761
      %v1830 = vadd.f32 %v1437, %v1763
      %v1831 = vadd.f32 %v1438, %v1766
      %v1832 = vadd.f32 %v1439, %v1768
      %v1833 = vadd.f32 %v1440, %v1771
      %v1834 = vadd.f32 %v1441, %v1773
      %v1835 = vadd.f32 %v1442, %v1776
      %v1836 = vadd.f32 %v1443, %v1778
      %v1837 = vadd.f32 %v1444, %v1781
      %v1838 = vadd.f32 %v1445, %v1783
      %v1839 = vadd.f32 %v1446, %v1786
      %v1840 = vadd.f32 %v1447, %v1788
      %v1841 = vadd.f32 %v1448, %v1791
      %v1842 = vadd.f32 %v1449, %v1793
      %v1843 = vadd.f32 %v1450, %v1796
      %v1844 = vadd.f32 %v1451, %v1798
      %v1845 = vadd.f32 %v1452, %v1801
      %v1846 = vadd.f32 %v1453, %v1803
      %v1847 = vadd.f32 %v1454, %v1806
      %v1848 = vadd.f32 %v1455, %v1808
      %v1849 = vadd.f32 %v1456, %v1811
      %v1850 = vadd.f32 %v1457, %v1813
      %v1851 = vld [vmem:[%s165 + $0x8] sm:$0xc]
      %s1852 = scalar_lea.vmem %s1, 320
      %v1853 = vld [vmem:[%s1852] sm:$0xf]
      %v1854 = vld [vmem:[%s1852 + $0x4] sm:$0xf]
      %v1855 = vld [vmem:[%s1852 + $0x8] sm:$0xf]
      %v1856 = vld [vmem:[%s1852 + $0xc] sm:$0xf]
      %v1857 = vld [vmem:[%s1852 + $0x10] sm:$0xf]
      %v1858 = vld [vmem:[%s1852 + $0x14] sm:$0xf]
      %v1859 = vld [vmem:[%s1852 + $0x18] sm:$0xf]
      %v1860 = vld [vmem:[%s1852 + $0x1c] sm:$0xf]
      %v1861 = vld [vmem:[%s1852 + $0x20] sm:$0xf]
      %v1862 = vld [vmem:[%s1852 + $0x24] sm:$0xf]
      %v1863 = vld [vmem:[%s1852 + $0x28] sm:$0xf]
      %v1864 = vld [vmem:[%s1852 + $0x2c] sm:$0xf]
      %v1865 = vld [vmem:[%s1852 + $0x30] sm:$0xf]
      %v1866 = vld [vmem:[%s1852 + $0x34] sm:$0xf]
      %v1867 = vld [vmem:[%s1852 + $0x38] sm:$0xf]
      %v1868 = vld [vmem:[%s1852 + $0x3c] sm:$0xf]
      %v1870 = vunpack.c.l.b16 %v1851
      %v1871 = vpack.c.b16 %v1165, %v1870
      %vm1872 = vcmask 1045504
      %v1873 = vrot.slane %v1871, 2
      %v1874 = vrot.slane %v1202, 2
      %v1875 = vsel %vm1872, %v1873, %v1874
      %v1876 = vrot.slane %v1203, 2
      %v1877 = vsel %vm1872, %v1874, %v1876
      %v1878 = vrot.slane %v1204, 2
      %v1879 = vsel %vm1872, %v1876, %v1878
      %v1880 = vrot.slane %v1205, 2
      %v1881 = vsel %vm1872, %v1878, %v1880
      %v1882 = vrot.slane %v1206, 2
      %v1883 = vsel %vm1872, %v1880, %v1882
      %v1884 = vrot.slane %v1207, 2
      %v1885 = vsel %vm1872, %v1882, %v1884
      %v1886 = vrot.slane %v1208, 2
      %v1887 = vsel %vm1872, %v1884, %v1886
      %v1888 = vrot.slane %v1209, 2
      %v1889 = vsel %vm1872, %v1886, %v1888
      %v1890 = vrot.slane %v1210, 2
      %v1891 = vsel %vm1872, %v1888, %v1890
      %v1892 = vrot.slane %v1211, 2
      %v1893 = vsel %vm1872, %v1890, %v1892
      %v1894 = vrot.slane %v1212, 2
      %v1895 = vsel %vm1872, %v1892, %v1894
      %v1896 = vrot.slane %v1213, 2
      %v1897 = vsel %vm1872, %v1894, %v1896
      %v1898 = vrot.slane %v1214, 2
      %v1899 = vsel %vm1872, %v1896, %v1898
      %v1900 = vrot.slane %v1215, 2
      %v1901 = vsel %vm1872, %v1898, %v1900
      %v1902 = vrot.slane %v1216, 2
      %v1903 = vsel %vm1872, %v1900, %v1902
      %v1904 = vrot.slane %v1217, 2
      %v1905 = vsel %vm1872, %v1902, %v1904
      %v1906 = vrot.slane %v1218, 2
      %v1907 = vsel %vm1872, %v1904, %v1906
      %v1908 = vrot.slane %v1478, 2
      %v1909 = vsel %vm1872, %v1906, %v1908
      %v1944 = vunpack.c.l.b16 %v1853
      %v1945 = vunpack.c.l.b16 %v1854
      %v1946 = vunpack.c.l.b16 %v1855
      %v1947 = vunpack.c.l.b16 %v1856
      %v1948 = vunpack.c.l.b16 %v1857
      %v1949 = vunpack.c.l.b16 %v1858
      %v1950 = vunpack.c.l.b16 %v1859
      %v1951 = vunpack.c.l.b16 %v1860
      %v1952 = vunpack.c.l.b16 %v1861
      %v1953 = vunpack.c.l.b16 %v1862
      %v1954 = vunpack.c.l.b16 %v1863
      %v1955 = vunpack.c.l.b16 %v1864
      %v1956 = vunpack.c.l.b16 %v1865
      %v1957 = vunpack.c.l.b16 %v1866
      %v1958 = vunpack.c.l.b16 %v1867
      %v1959 = vunpack.c.l.b16 %v1868
      %v1960 = vpack.c.b16 %v1945, %v1944
      %v1961 = vpack.c.b16 %v1947, %v1946
      %v1962 = vpack.c.b16 %v1949, %v1948
      %v1963 = vpack.c.b16 %v1951, %v1950
      %v1964 = vpack.c.b16 %v1953, %v1952
      %v1965 = vpack.c.b16 %v1955, %v1954
      %v1966 = vpack.c.b16 %v1957, %v1956
      %v1967 = vpack.c.b16 %v1959, %v1958
      %1976 = vmatpush.bf16.msra.mxu0 %v1967
      %1977 = vmatpush.bf16.msra.mxu0 %v1966
      %1978 = vmatpush.bf16.msra.mxu0 %v1965
      %1979 = vmatpush.bf16.msra.mxu0 %v1964
      %1980 = vmatpush.bf16.msra.mxu0 %v1963
      %1981 = vmatpush.bf16.msra.mxu0 %v1962
      %1982 = vmatpush.bf16.msra.mxu0 %v1961
      %1983 = vmatpush.bf16.msra.mxu0 %v1960
      %1984 = vmatmul.bf16.gmra.mxu0 %v1875
      %v1985 = vpop.f32.mrf.mxu0
      %v1986 = vadd.f32 0.0, %v1985
      %v1987 = vpop.f32.mrf.mxu0
      %v1988 = vadd.f32 0.0, %v1987
      %1989 = vmatmul.bf16.gmra.mxu0 %v1877
      %v1990 = vpop.f32.mrf.mxu0
      %v1991 = vadd.f32 0.0, %v1990
      %v1992 = vpop.f32.mrf.mxu0
      %v1993 = vadd.f32 0.0, %v1992
      %1994 = vmatmul.bf16.gmra.mxu0 %v1879
      %v1995 = vpop.f32.mrf.mxu0
      %v1996 = vadd.f32 0.0, %v1995
      %v1997 = vpop.f32.mrf.mxu0
      %v1998 = vadd.f32 0.0, %v1997
      %1999 = vmatmul.bf16.gmra.mxu0 %v1881
      %v2000 = vpop.f32.mrf.mxu0
      %v2001 = vadd.f32 0.0, %v2000
      %v2002 = vpop.f32.mrf.mxu0
      %v2003 = vadd.f32 0.0, %v2002
      %2004 = vmatmul.bf16.gmra.mxu0 %v1883
      %v2005 = vpop.f32.mrf.mxu0
      %v2006 = vadd.f32 0.0, %v2005
      %v2007 = vpop.f32.mrf.mxu0
      %v2008 = vadd.f32 0.0, %v2007
      %2009 = vmatmul.bf16.gmra.mxu0 %v1885
      %v2010 = vpop.f32.mrf.mxu0
      %v2011 = vadd.f32 0.0, %v2010
      %v2012 = vpop.f32.mrf.mxu0
      %v2013 = vadd.f32 0.0, %v2012
      %2014 = vmatmul.bf16.gmra.mxu0 %v1887
      %v2015 = vpop.f32.mrf.mxu0
      %v2016 = vadd.f32 0.0, %v2015
      %v2017 = vpop.f32.mrf.mxu0
      %v2018 = vadd.f32 0.0, %v2017
      %2019 = vmatmul.bf16.gmra.mxu0 %v1889
      %v2020 = vpop.f32.mrf.mxu0
      %v2021 = vadd.f32 0.0, %v2020
      %v2022 = vpop.f32.mrf.mxu0
      %v2023 = vadd.f32 0.0, %v2022
      %2024 = vmatmul.bf16.gmra.mxu0 %v1891
      %v2025 = vpop.f32.mrf.mxu0
      %v2026 = vadd.f32 0.0, %v2025
      %v2027 = vpop.f32.mrf.mxu0
      %v2028 = vadd.f32 0.0, %v2027
      %2029 = vmatmul.bf16.gmra.mxu0 %v1893
      %v2030 = vpop.f32.mrf.mxu0
      %v2031 = vadd.f32 0.0, %v2030
      %v2032 = vpop.f32.mrf.mxu0
      %v2033 = vadd.f32 0.0, %v2032
      %2034 = vmatmul.bf16.gmra.mxu0 %v1895
      %v2035 = vpop.f32.mrf.mxu0
      %v2036 = vadd.f32 0.0, %v2035
      %v2037 = vpop.f32.mrf.mxu0
      %v2038 = vadd.f32 0.0, %v2037
      %2039 = vmatmul.bf16.gmra.mxu0 %v1897
      %v2040 = vpop.f32.mrf.mxu0
      %v2041 = vadd.f32 0.0, %v2040
      %v2042 = vpop.f32.mrf.mxu0
      %v2043 = vadd.f32 0.0, %v2042
      %2044 = vmatmul.bf16.gmra.mxu0 %v1899
      %v2045 = vpop.f32.mrf.mxu0
      %v2046 = vadd.f32 0.0, %v2045
      %v2047 = vpop.f32.mrf.mxu0
      %v2048 = vadd.f32 0.0, %v2047
      %2049 = vmatmul.bf16.gmra.mxu0 %v1901
      %v2050 = vpop.f32.mrf.mxu0
      %v2051 = vadd.f32 0.0, %v2050
      %v2052 = vpop.f32.mrf.mxu0
      %v2053 = vadd.f32 0.0, %v2052
      %2054 = vmatmul.bf16.gmra.mxu0 %v1903
      %v2055 = vpop.f32.mrf.mxu0
      %v2056 = vadd.f32 0.0, %v2055
      %v2057 = vpop.f32.mrf.mxu0
      %v2058 = vadd.f32 0.0, %v2057
      %2059 = vmatmul.bf16.gmra.mxu0 %v1905
      %v2060 = vpop.f32.mrf.mxu0
      %v2061 = vadd.f32 0.0, %v2060
      %v2062 = vpop.f32.mrf.mxu0
      %v2063 = vadd.f32 0.0, %v2062
      %2064 = vmatmul.bf16.gmra.mxu0 %v1907
      %v2065 = vpop.f32.mrf.mxu0
      %v2066 = vadd.f32 0.0, %v2065
      %v2067 = vpop.f32.mrf.mxu0
      %v2068 = vadd.f32 0.0, %v2067
      %2069 = vmatmul.bf16.gmra.mxu0 %v1909
      %v2070 = vpop.f32.mrf.mxu0
      %v2071 = vadd.f32 0.0, %v2070
      %v2072 = vpop.f32.mrf.mxu0
      %v2073 = vadd.f32 0.0, %v2072
      %2074 = vdwg.mxu0
      %v2075 = vadd.f32 %v1815, %v1986
      %v2076 = vadd.f32 %v1816, %v1988
      %v2077 = vadd.f32 %v1817, %v1991
      %v2078 = vadd.f32 %v1818, %v1993
      %v2079 = vadd.f32 %v1819, %v1996
      %v2080 = vadd.f32 %v1820, %v1998
      %v2081 = vadd.f32 %v1821, %v2001
      %v2082 = vadd.f32 %v1822, %v2003
      %v2083 = vadd.f32 %v1823, %v2006
      %v2084 = vadd.f32 %v1824, %v2008
      %v2085 = vadd.f32 %v1825, %v2011
      %v2086 = vadd.f32 %v1826, %v2013
      %v2087 = vadd.f32 %v1827, %v2016
      %v2088 = vadd.f32 %v1828, %v2018
      %v2089 = vadd.f32 %v1829, %v2021
      %v2090 = vadd.f32 %v1830, %v2023
      %v2091 = vadd.f32 %v1831, %v2026
      %v2092 = vadd.f32 %v1832, %v2028
      %v2093 = vadd.f32 %v1833, %v2031
      %v2094 = vadd.f32 %v1834, %v2033
      %v2095 = vadd.f32 %v1835, %v2036
      %v2096 = vadd.f32 %v1836, %v2038
      %v2097 = vadd.f32 %v1837, %v2041
      %v2098 = vadd.f32 %v1838, %v2043
      %v2099 = vadd.f32 %v1839, %v2046
      %v2100 = vadd.f32 %v1840, %v2048
      %v2101 = vadd.f32 %v1841, %v2051
      %v2102 = vadd.f32 %v1842, %v2053
      %v2103 = vadd.f32 %v1843, %v2056
      %v2104 = vadd.f32 %v1844, %v2058
      %v2105 = vadd.f32 %v1845, %v2061
      %v2106 = vadd.f32 %v1846, %v2063
      %v2107 = vadd.f32 %v1847, %v2066
      %v2108 = vadd.f32 %v1848, %v2068
      %v2109 = vadd.f32 %v1849, %v2071
      %v2110 = vadd.f32 %v1850, %v2073
      %v2111 = vld [vmem:[%s165 + $0x10] sm:$0xc]
      %v2112 = vld [vmem:[%s165 + $0x14] sm:$0xf]
      %v2113 = vld [vmem:[%s165 + $0x18] sm:$0xf]
      %v2114 = vld [vmem:[%s165 + $0x1c] sm:$0xf]
      %v2115 = vld [vmem:[%s165 + $0x20] sm:$0xf]
      %v2116 = vld [vmem:[%s165 + $0x24] sm:$0xf]
      %v2117 = vld [vmem:[%s165 + $0x28] sm:$0xf]
      %v2118 = vld [vmem:[%s165 + $0x2c] sm:$0xf]
      %v2119 = vld [vmem:[%s165 + $0x30] sm:$0xf]
      %v2120 = vld [vmem:[%s165 + $0x34] sm:$0xf]
      %v2121 = vld [vmem:[%s165 + $0x38] sm:$0xf]
      %v2122 = vld [vmem:[%s165 + $0x3c] sm:$0xf]
      %v2123 = vld [vmem:[%s165 + $0x40] sm:$0xf]
      %v2124 = vld [vmem:[%s165 + $0x44] sm:$0xf]
      %v2125 = vld [vmem:[%s165 + $0x48] sm:$0xf]
      %v2126 = vld [vmem:[%s165 + $0x4c] sm:$0xf]
      %v2127 = vld [vmem:[%s165 + $0x50] sm:$0xf]
      %v2128 = vld [vmem:[%s165 + $0x54] sm:$0xf]
      %v2129 = vld [vmem:[%s165 + $0x58] sm:$0xf]
      %v2130 = vld [vmem:[%s165 + $0x5c] sm:$0xf]
      %v2131 = vld [vmem:[%s165 + $0x60] sm:$0xf]
      %v2132 = vld [vmem:[%s165 + $0x64] sm:$0xf]
      %v2133 = vld [vmem:[%s165 + $0x68] sm:$0xf]
      %v2134 = vld [vmem:[%s165 + $0x6c] sm:$0xf]
      %v2135 = vld [vmem:[%s165 + $0x70] sm:$0xf]
      %v2136 = vld [vmem:[%s165 + $0x74] sm:$0xf]
      %v2137 = vld [vmem:[%s165 + $0x78] sm:$0xf]
      %v2138 = vld [vmem:[%s165 + $0x7c] sm:$0xf]
      %v2139 = vld [vmem:[%s165 + $0x80] sm:$0xf]
      %v2140 = vld [vmem:[%s165 + $0x84] sm:$0xf]
      %v2141 = vld [vmem:[%s165 + $0x88] sm:$0xf]
      %v2142 = vld [vmem:[%s165 + $0x8c] sm:$0xf]
      %v2143 = vld [vmem:[%s165 + $0x90] sm:$0xf]
      %v2144 = vld [vmem:[%s165 + $0x94] sm:$0xf]
      %v2145 = vld [vmem:[%s165 + $0x98] sm:$0xf]
      %v2146 = vld [vmem:[%s165 + $0x9c] sm:$0xf]
      %v2147 = vld [vmem:[%s165 + $0xa0] sm:$0x3]
      %s2148 = scalar_lea.vmem %s1, 384
      %v2149 = vld [vmem:[%s2148] sm:$0xf]
      %v2150 = vld [vmem:[%s2148 + $0x4] sm:$0xf]
      %v2151 = vld [vmem:[%s2148 + $0x8] sm:$0xf]
      %v2152 = vld [vmem:[%s2148 + $0xc] sm:$0xf]
      %v2153 = vld [vmem:[%s2148 + $0x10] sm:$0xf]
      %v2154 = vld [vmem:[%s2148 + $0x14] sm:$0xf]
      %v2155 = vld [vmem:[%s2148 + $0x18] sm:$0xf]
      %v2156 = vld [vmem:[%s2148 + $0x1c] sm:$0xf]
      %v2157 = vld [vmem:[%s2148 + $0x20] sm:$0xf]
      %v2158 = vld [vmem:[%s2148 + $0x24] sm:$0xf]
      %v2159 = vld [vmem:[%s2148 + $0x28] sm:$0xf]
      %v2160 = vld [vmem:[%s2148 + $0x2c] sm:$0xf]
      %v2161 = vld [vmem:[%s2148 + $0x30] sm:$0xf]
      %v2162 = vld [vmem:[%s2148 + $0x34] sm:$0xf]
      %v2163 = vld [vmem:[%s2148 + $0x38] sm:$0xf]
      %v2164 = vld [vmem:[%s2148 + $0x3c] sm:$0xf]
      %v2202 = vunpack.c.l.b16 %v2111
      %v2203 = vunpack.c.l.b16 %v2112
      %v2204 = vunpack.c.l.b16 %v2113
      %v2205 = vunpack.c.l.b16 %v2114
      %v2206 = vunpack.c.l.b16 %v2115
      %v2207 = vunpack.c.l.b16 %v2116
      %v2208 = vunpack.c.l.b16 %v2117
      %v2209 = vunpack.c.l.b16 %v2118
      %v2210 = vunpack.c.l.b16 %v2119
      %v2211 = vunpack.c.l.b16 %v2120
      %v2212 = vunpack.c.l.b16 %v2121
      %v2213 = vunpack.c.l.b16 %v2122
      %v2214 = vunpack.c.l.b16 %v2123
      %v2215 = vunpack.c.l.b16 %v2124
      %v2216 = vunpack.c.l.b16 %v2125
      %v2217 = vunpack.c.l.b16 %v2126
      %v2218 = vunpack.c.l.b16 %v2127
      %v2219 = vunpack.c.l.b16 %v2128
      %v2220 = vunpack.c.l.b16 %v2129
      %v2221 = vunpack.c.l.b16 %v2130
      %v2222 = vunpack.c.l.b16 %v2131
      %v2223 = vunpack.c.l.b16 %v2132
      %v2224 = vunpack.c.l.b16 %v2133
      %v2225 = vunpack.c.l.b16 %v2134
      %v2226 = vunpack.c.l.b16 %v2135
      %v2227 = vunpack.c.l.b16 %v2136
      %v2228 = vunpack.c.l.b16 %v2137
      %v2229 = vunpack.c.l.b16 %v2138
      %v2230 = vunpack.c.l.b16 %v2139
      %v2231 = vunpack.c.l.b16 %v2140
      %v2232 = vunpack.c.l.b16 %v2141
      %v2233 = vunpack.c.l.b16 %v2142
      %v2234 = vunpack.c.l.b16 %v2143
      %v2235 = vunpack.c.l.b16 %v2144
      %v2236 = vunpack.c.l.b16 %v2145
      %v2237 = vunpack.c.l.b16 %v2146
      %v2238 = vunpack.c.l.b16 %v2147
      %v2239 = vpack.c.b16 %v2203, %v2202
      %v2240 = vpack.c.b16 %v2205, %v2204
      %v2241 = vpack.c.b16 %v2207, %v2206
      %v2242 = vpack.c.b16 %v2209, %v2208
      %v2243 = vpack.c.b16 %v2211, %v2210
      %v2244 = vpack.c.b16 %v2213, %v2212
      %v2245 = vpack.c.b16 %v2215, %v2214
      %v2246 = vpack.c.b16 %v2217, %v2216
      %v2247 = vpack.c.b16 %v2219, %v2218
      %v2248 = vpack.c.b16 %v2221, %v2220
      %v2249 = vpack.c.b16 %v2223, %v2222
      %v2250 = vpack.c.b16 %v2225, %v2224
      %v2251 = vpack.c.b16 %v2227, %v2226
      %v2252 = vpack.c.b16 %v2229, %v2228
      %v2253 = vpack.c.b16 %v2231, %v2230
      %v2254 = vpack.c.b16 %v2233, %v2232
      %v2255 = vpack.c.b16 %v2235, %v2234
      %v2256 = vpack.c.b16 %v2237, %v2236
      %v2257 = vpack.c.b16 %v2238, %v2238
      %v2258 = vrot.slane %v2239, 2
      %v2259 = vrot.slane %v2240, 2
      %v2260 = vsel %vm1872, %v2258, %v2259
      %v2261 = vrot.slane %v2241, 2
      %v2262 = vsel %vm1872, %v2259, %v2261
      %v2263 = vrot.slane %v2242, 2
      %v2264 = vsel %vm1872, %v2261, %v2263
      %v2265 = vrot.slane %v2243, 2
      %v2266 = vsel %vm1872, %v2263, %v2265
      %v2267 = vrot.slane %v2244, 2
      %v2268 = vsel %vm1872, %v2265, %v2267
      %v2269 = vrot.slane %v2245, 2
      %v2270 = vsel %vm1872, %v2267, %v2269
      %v2271 = vrot.slane %v2246, 2
      %v2272 = vsel %vm1872, %v2269, %v2271
      %v2273 = vrot.slane %v2247, 2
      %v2274 = vsel %vm1872, %v2271, %v2273
      %v2275 = vrot.slane %v2248, 2
      %v2276 = vsel %vm1872, %v2273, %v2275
      %v2277 = vrot.slane %v2249, 2
      %v2278 = vsel %vm1872, %v2275, %v2277
      %v2279 = vrot.slane %v2250, 2
      %v2280 = vsel %vm1872, %v2277, %v2279
      %v2281 = vrot.slane %v2251, 2
      %v2282 = vsel %vm1872, %v2279, %v2281
      %v2283 = vrot.slane %v2252, 2
      %v2284 = vsel %vm1872, %v2281, %v2283
      %v2285 = vrot.slane %v2253, 2
      %v2286 = vsel %vm1872, %v2283, %v2285
      %v2287 = vrot.slane %v2254, 2
      %v2288 = vsel %vm1872, %v2285, %v2287
      %v2289 = vrot.slane %v2255, 2
      %v2290 = vsel %vm1872, %v2287, %v2289
      %v2291 = vrot.slane %v2256, 2
      %v2292 = vsel %vm1872, %v2289, %v2291
      %v2293 = vrot.slane %v2257, 2
      %v2294 = vsel %vm1872, %v2291, %v2293
      %v2329 = vunpack.c.l.b16 %v2149
      %v2330 = vunpack.c.l.b16 %v2150
      %v2331 = vunpack.c.l.b16 %v2151
      %v2332 = vunpack.c.l.b16 %v2152
      %v2333 = vunpack.c.l.b16 %v2153
      %v2334 = vunpack.c.l.b16 %v2154
      %v2335 = vunpack.c.l.b16 %v2155
      %v2336 = vunpack.c.l.b16 %v2156
      %v2337 = vunpack.c.l.b16 %v2157
      %v2338 = vunpack.c.l.b16 %v2158
      %v2339 = vunpack.c.l.b16 %v2159
      %v2340 = vunpack.c.l.b16 %v2160
      %v2341 = vunpack.c.l.b16 %v2161
      %v2342 = vunpack.c.l.b16 %v2162
      %v2343 = vunpack.c.l.b16 %v2163
      %v2344 = vunpack.c.l.b16 %v2164
      %v2345 = vpack.c.b16 %v2330, %v2329
      %v2346 = vpack.c.b16 %v2332, %v2331
      %v2347 = vpack.c.b16 %v2334, %v2333
      %v2348 = vpack.c.b16 %v2336, %v2335
      %v2349 = vpack.c.b16 %v2338, %v2337
      %v2350 = vpack.c.b16 %v2340, %v2339
      %v2351 = vpack.c.b16 %v2342, %v2341
      %v2352 = vpack.c.b16 %v2344, %v2343
      %2361 = vmatpush.bf16.msra.mxu0 %v2352
      %2362 = vmatpush.bf16.msra.mxu0 %v2351
      %2363 = vmatpush.bf16.msra.mxu0 %v2350
      %2364 = vmatpush.bf16.msra.mxu0 %v2349
      %2365 = vmatpush.bf16.msra.mxu0 %v2348
      %2366 = vmatpush.bf16.msra.mxu0 %v2347
      %2367 = vmatpush.bf16.msra.mxu0 %v2346
      %2368 = vmatpush.bf16.msra.mxu0 %v2345
      %2369 = vmatmul.bf16.gmra.mxu0 %v2260
      %v2370 = vpop.f32.mrf.mxu0
      %v2371 = vadd.f32 0.0, %v2370
      %v2372 = vpop.f32.mrf.mxu0
      %v2373 = vadd.f32 0.0, %v2372
      %2374 = vmatmul.bf16.gmra.mxu0 %v2262
      %v2375 = vpop.f32.mrf.mxu0
      %v2376 = vadd.f32 0.0, %v2375
      %v2377 = vpop.f32.mrf.mxu0
      %v2378 = vadd.f32 0.0, %v2377
      %2379 = vmatmul.bf16.gmra.mxu0 %v2264
      %v2380 = vpop.f32.mrf.mxu0
      %v2381 = vadd.f32 0.0, %v2380
      %v2382 = vpop.f32.mrf.mxu0
      %v2383 = vadd.f32 0.0, %v2382
      %2384 = vmatmul.bf16.gmra.mxu0 %v2266
      %v2385 = vpop.f32.mrf.mxu0
      %v2386 = vadd.f32 0.0, %v2385
      %v2387 = vpop.f32.mrf.mxu0
      %v2388 = vadd.f32 0.0, %v2387
      %2389 = vmatmul.bf16.gmra.mxu0 %v2268
      %v2390 = vpop.f32.mrf.mxu0
      %v2391 = vadd.f32 0.0, %v2390
      %v2392 = vpop.f32.mrf.mxu0
      %v2393 = vadd.f32 0.0, %v2392
      %2394 = vmatmul.bf16.gmra.mxu0 %v2270
      %v2395 = vpop.f32.mrf.mxu0
      %v2396 = vadd.f32 0.0, %v2395
      %v2397 = vpop.f32.mrf.mxu0
      %v2398 = vadd.f32 0.0, %v2397
      %2399 = vmatmul.bf16.gmra.mxu0 %v2272
      %v2400 = vpop.f32.mrf.mxu0
      %v2401 = vadd.f32 0.0, %v2400
      %v2402 = vpop.f32.mrf.mxu0
      %v2403 = vadd.f32 0.0, %v2402
      %2404 = vmatmul.bf16.gmra.mxu0 %v2274
      %v2405 = vpop.f32.mrf.mxu0
      %v2406 = vadd.f32 0.0, %v2405
      %v2407 = vpop.f32.mrf.mxu0
      %v2408 = vadd.f32 0.0, %v2407
      %2409 = vmatmul.bf16.gmra.mxu0 %v2276
      %v2410 = vpop.f32.mrf.mxu0
      %v2411 = vadd.f32 0.0, %v2410
      %v2412 = vpop.f32.mrf.mxu0
      %v2413 = vadd.f32 0.0, %v2412
      %2414 = vmatmul.bf16.gmra.mxu0 %v2278
      %v2415 = vpop.f32.mrf.mxu0
      %v2416 = vadd.f32 0.0, %v2415
      %v2417 = vpop.f32.mrf.mxu0
      %v2418 = vadd.f32 0.0, %v2417
      %2419 = vmatmul.bf16.gmra.mxu0 %v2280
      %v2420 = vpop.f32.mrf.mxu0
      %v2421 = vadd.f32 0.0, %v2420
      %v2422 = vpop.f32.mrf.mxu0
      %v2423 = vadd.f32 0.0, %v2422
      %2424 = vmatmul.bf16.gmra.mxu0 %v2282
      %v2425 = vpop.f32.mrf.mxu0
      %v2426 = vadd.f32 0.0, %v2425
      %v2427 = vpop.f32.mrf.mxu0
      %v2428 = vadd.f32 0.0, %v2427
      %2429 = vmatmul.bf16.gmra.mxu0 %v2284
      %v2430 = vpop.f32.mrf.mxu0
      %v2431 = vadd.f32 0.0, %v2430
      %v2432 = vpop.f32.mrf.mxu0
      %v2433 = vadd.f32 0.0, %v2432
      %2434 = vmatmul.bf16.gmra.mxu0 %v2286
      %v2435 = vpop.f32.mrf.mxu0
      %v2436 = vadd.f32 0.0, %v2435
      %v2437 = vpop.f32.mrf.mxu0
      %v2438 = vadd.f32 0.0, %v2437
      %2439 = vmatmul.bf16.gmra.mxu0 %v2288
      %v2440 = vpop.f32.mrf.mxu0
      %v2441 = vadd.f32 0.0, %v2440
      %v2442 = vpop.f32.mrf.mxu0
      %v2443 = vadd.f32 0.0, %v2442
      %2444 = vmatmul.bf16.gmra.mxu0 %v2290
      %v2445 = vpop.f32.mrf.mxu0
      %v2446 = vadd.f32 0.0, %v2445
      %v2447 = vpop.f32.mrf.mxu0
      %v2448 = vadd.f32 0.0, %v2447
      %2449 = vmatmul.bf16.gmra.mxu0 %v2292
      %v2450 = vpop.f32.mrf.mxu0
      %v2451 = vadd.f32 0.0, %v2450
      %v2452 = vpop.f32.mrf.mxu0
      %v2453 = vadd.f32 0.0, %v2452
      %2454 = vmatmul.bf16.gmra.mxu0 %v2294
      %v2455 = vpop.f32.mrf.mxu0
      %v2456 = vadd.f32 0.0, %v2455
      %v2457 = vpop.f32.mrf.mxu0
      %v2458 = vadd.f32 0.0, %v2457
      %2459 = vdwg.mxu0
      %v2460 = vadd.f32 %v2075, %v2371
      %v2461 = vadd.f32 %v2076, %v2373
      %v2462 = vadd.f32 %v2077, %v2376
      %v2463 = vadd.f32 %v2078, %v2378
      %v2464 = vadd.f32 %v2079, %v2381
      %v2465 = vadd.f32 %v2080, %v2383
      %v2466 = vadd.f32 %v2081, %v2386
      %v2467 = vadd.f32 %v2082, %v2388
      %v2468 = vadd.f32 %v2083, %v2391
      %v2469 = vadd.f32 %v2084, %v2393
      %v2470 = vadd.f32 %v2085, %v2396
      %v2471 = vadd.f32 %v2086, %v2398
      %v2472 = vadd.f32 %v2087, %v2401
      %v2473 = vadd.f32 %v2088, %v2403
      %v2474 = vadd.f32 %v2089, %v2406
      %v2475 = vadd.f32 %v2090, %v2408
      %v2476 = vadd.f32 %v2091, %v2411
      %v2477 = vadd.f32 %v2092, %v2413
      %v2478 = vadd.f32 %v2093, %v2416
      %v2479 = vadd.f32 %v2094, %v2418
      %v2480 = vadd.f32 %v2095, %v2421
      %v2481 = vadd.f32 %v2096, %v2423
      %v2482 = vadd.f32 %v2097, %v2426
      %v2483 = vadd.f32 %v2098, %v2428
      %v2484 = vadd.f32 %v2099, %v2431
      %v2485 = vadd.f32 %v2100, %v2433
      %v2486 = vadd.f32 %v2101, %v2436
      %v2487 = vadd.f32 %v2102, %v2438
      %v2488 = vadd.f32 %v2103, %v2441
      %v2489 = vadd.f32 %v2104, %v2443
      %v2490 = vadd.f32 %v2105, %v2446
      %v2491 = vadd.f32 %v2106, %v2448
      %v2492 = vadd.f32 %v2107, %v2451
      %v2493 = vadd.f32 %v2108, %v2453
      %v2494 = vadd.f32 %v2109, %v2456
      %v2495 = vadd.f32 %v2110, %v2458
      %v2496 = vld [vmem:[%s165 + $0xa0] sm:$0x7]
      %s2497 = scalar_lea.vmem %s1, 448
      %v2498 = vld [vmem:[%s2497] sm:$0xf]
      %v2499 = vld [vmem:[%s2497 + $0x4] sm:$0xf]
      %v2500 = vld [vmem:[%s2497 + $0x8] sm:$0xf]
      %v2501 = vld [vmem:[%s2497 + $0xc] sm:$0xf]
      %v2502 = vld [vmem:[%s2497 + $0x10] sm:$0xf]
      %v2503 = vld [vmem:[%s2497 + $0x14] sm:$0xf]
      %v2504 = vld [vmem:[%s2497 + $0x18] sm:$0xf]
      %v2505 = vld [vmem:[%s2497 + $0x1c] sm:$0xf]
      %v2506 = vld [vmem:[%s2497 + $0x20] sm:$0xf]
      %v2507 = vld [vmem:[%s2497 + $0x24] sm:$0xf]
      %v2508 = vld [vmem:[%s2497 + $0x28] sm:$0xf]
      %v2509 = vld [vmem:[%s2497 + $0x2c] sm:$0xf]
      %v2510 = vld [vmem:[%s2497 + $0x30] sm:$0xf]
      %v2511 = vld [vmem:[%s2497 + $0x34] sm:$0xf]
      %v2512 = vld [vmem:[%s2497 + $0x38] sm:$0xf]
      %v2513 = vld [vmem:[%s2497 + $0x3c] sm:$0xf]
      %v2515 = vunpack.c.l.b16 %v2496
      %v2516 = vpack.c.b16 %v2515, %v2515
      %vm2517 = vsmask.f32 5376
      %v2519 = vshrl.u32 %v2239, 16
      %v2521 = vrot.slane %v2519, 2
      %v2522 = vshll.u32 %v2239, 16
      %v2524 = vrot.slane %v2522, 3
      %v2525 = vor.u32 %v2521, %v2524
      %v2527 = vshrl.u32 %v2240, 16
      %v2529 = vrot.slane %v2527, 2
      %v2530 = vshll.u32 %v2240, 16
      %v2532 = vrot.slane %v2530, 3
      %v2533 = vor.u32 %v2529, %v2532
      %v2534 = vsel %vm2517, %v2525, %v2533
      %v2536 = vshrl.u32 %v2241, 16
      %v2538 = vrot.slane %v2536, 2
      %v2539 = vshll.u32 %v2241, 16
      %v2541 = vrot.slane %v2539, 3
      %v2542 = vor.u32 %v2538, %v2541
      %v2543 = vsel %vm2517, %v2533, %v2542
      %v2545 = vshrl.u32 %v2242, 16
      %v2547 = vrot.slane %v2545, 2
      %v2548 = vshll.u32 %v2242, 16
      %v2550 = vrot.slane %v2548, 3
      %v2551 = vor.u32 %v2547, %v2550
      %v2552 = vsel %vm2517, %v2542, %v2551
      %v2554 = vshrl.u32 %v2243, 16
      %v2556 = vrot.slane %v2554, 2
      %v2557 = vshll.u32 %v2243, 16
      %v2559 = vrot.slane %v2557, 3
      %v2560 = vor.u32 %v2556, %v2559
      %v2561 = vsel %vm2517, %v2551, %v2560
      %v2563 = vshrl.u32 %v2244, 16
      %v2565 = vrot.slane %v2563, 2
      %v2566 = vshll.u32 %v2244, 16
      %v2568 = vrot.slane %v2566, 3
      %v2569 = vor.u32 %v2565, %v2568
      %v2570 = vsel %vm2517, %v2560, %v2569
      %v2572 = vshrl.u32 %v2245, 16
      %v2574 = vrot.slane %v2572, 2
      %v2575 = vshll.u32 %v2245, 16
      %v2577 = vrot.slane %v2575, 3
      %v2578 = vor.u32 %v2574, %v2577
      %v2579 = vsel %vm2517, %v2569, %v2578
      %v2581 = vshrl.u32 %v2246, 16
      %v2583 = vrot.slane %v2581, 2
      %v2584 = vshll.u32 %v2246, 16
      %v2586 = vrot.slane %v2584, 3
      %v2587 = vor.u32 %v2583, %v2586
      %v2588 = vsel %vm2517, %v2578, %v2587
      %v2590 = vshrl.u32 %v2247, 16
      %v2592 = vrot.slane %v2590, 2
      %v2593 = vshll.u32 %v2247, 16
      %v2595 = vrot.slane %v2593, 3
      %v2596 = vor.u32 %v2592, %v2595
      %v2597 = vsel %vm2517, %v2587, %v2596
      %v2599 = vshrl.u32 %v2248, 16
      %v2601 = vrot.slane %v2599, 2
      %v2602 = vshll.u32 %v2248, 16
      %v2604 = vrot.slane %v2602, 3
      %v2605 = vor.u32 %v2601, %v2604
      %v2606 = vsel %vm2517, %v2596, %v2605
      %v2608 = vshrl.u32 %v2249, 16
      %v2610 = vrot.slane %v2608, 2
      %v2611 = vshll.u32 %v2249, 16
      %v2613 = vrot.slane %v2611, 3
      %v2614 = vor.u32 %v2610, %v2613
      %v2615 = vsel %vm2517, %v2605, %v2614
      %v2617 = vshrl.u32 %v2250, 16
      %v2619 = vrot.slane %v2617, 2
      %v2620 = vshll.u32 %v2250, 16
      %v2622 = vrot.slane %v2620, 3
      %v2623 = vor.u32 %v2619, %v2622
      %v2624 = vsel %vm2517, %v2614, %v2623
      %v2626 = vshrl.u32 %v2251, 16
      %v2628 = vrot.slane %v2626, 2
      %v2629 = vshll.u32 %v2251, 16
      %v2631 = vrot.slane %v2629, 3
      %v2632 = vor.u32 %v2628, %v2631
      %v2633 = vsel %vm2517, %v2623, %v2632
      %v2635 = vshrl.u32 %v2252, 16
      %v2637 = vrot.slane %v2635, 2
      %v2638 = vshll.u32 %v2252, 16
      %v2640 = vrot.slane %v2638, 3
      %v2641 = vor.u32 %v2637, %v2640
      %v2642 = vsel %vm2517, %v2632, %v2641
      %v2644 = vshrl.u32 %v2253, 16
      %v2646 = vrot.slane %v2644, 2
      %v2647 = vshll.u32 %v2253, 16
      %v2649 = vrot.slane %v2647, 3
      %v2650 = vor.u32 %v2646, %v2649
      %v2651 = vsel %vm2517, %v2641, %v2650
      %v2653 = vshrl.u32 %v2254, 16
      %v2655 = vrot.slane %v2653, 2
      %v2656 = vshll.u32 %v2254, 16
      %v2658 = vrot.slane %v2656, 3
      %v2659 = vor.u32 %v2655, %v2658
      %v2660 = vsel %vm2517, %v2650, %v2659
      %v2662 = vshrl.u32 %v2255, 16
      %v2664 = vrot.slane %v2662, 2
      %v2665 = vshll.u32 %v2255, 16
      %v2667 = vrot.slane %v2665, 3
      %v2668 = vor.u32 %v2664, %v2667
      %v2669 = vsel %vm2517, %v2659, %v2668
      %v2671 = vshrl.u32 %v2256, 16
      %v2673 = vrot.slane %v2671, 2
      %v2674 = vshll.u32 %v2256, 16
      %v2676 = vrot.slane %v2674, 3
      %v2677 = vor.u32 %v2673, %v2676
      %v2678 = vsel %vm2517, %v2668, %v2677
      %v2680 = vshrl.u32 %v2516, 16
      %v2682 = vrot.slane %v2680, 2
      %v2683 = vshll.u32 %v2516, 16
      %v2685 = vrot.slane %v2683, 3
      %v2686 = vor.u32 %v2682, %v2685
      %v2687 = vsel %vm2517, %v2677, %v2686
      %v2722 = vunpack.c.l.b16 %v2498
      %v2723 = vunpack.c.l.b16 %v2499
      %v2724 = vunpack.c.l.b16 %v2500
      %v2725 = vunpack.c.l.b16 %v2501
      %v2726 = vunpack.c.l.b16 %v2502
      %v2727 = vunpack.c.l.b16 %v2503
      %v2728 = vunpack.c.l.b16 %v2504
      %v2729 = vunpack.c.l.b16 %v2505
      %v2730 = vunpack.c.l.b16 %v2506
      %v2731 = vunpack.c.l.b16 %v2507
      %v2732 = vunpack.c.l.b16 %v2508
      %v2733 = vunpack.c.l.b16 %v2509
      %v2734 = vunpack.c.l.b16 %v2510
      %v2735 = vunpack.c.l.b16 %v2511
      %v2736 = vunpack.c.l.b16 %v2512
      %v2737 = vunpack.c.l.b16 %v2513
      %v2738 = vpack.c.b16 %v2723, %v2722
      %v2739 = vpack.c.b16 %v2725, %v2724
      %v2740 = vpack.c.b16 %v2727, %v2726
      %v2741 = vpack.c.b16 %v2729, %v2728
      %v2742 = vpack.c.b16 %v2731, %v2730
      %v2743 = vpack.c.b16 %v2733, %v2732
      %v2744 = vpack.c.b16 %v2735, %v2734
      %v2745 = vpack.c.b16 %v2737, %v2736
      %2754 = vmatpush.bf16.msra.mxu0 %v2745
      %2755 = vmatpush.bf16.msra.mxu0 %v2744
      %2756 = vmatpush.bf16.msra.mxu0 %v2743
      %2757 = vmatpush.bf16.msra.mxu0 %v2742
      %2758 = vmatpush.bf16.msra.mxu0 %v2741
      %2759 = vmatpush.bf16.msra.mxu0 %v2740
      %2760 = vmatpush.bf16.msra.mxu0 %v2739
      %2761 = vmatpush.bf16.msra.mxu0 %v2738
      %2762 = vmatmul.bf16.gmra.mxu0 %v2534
      %v2763 = vpop.f32.mrf.mxu0
      %v2764 = vadd.f32 0.0, %v2763
      %v2765 = vpop.f32.mrf.mxu0
      %v2766 = vadd.f32 0.0, %v2765
      %2767 = vmatmul.bf16.gmra.mxu0 %v2543
      %v2768 = vpop.f32.mrf.mxu0
      %v2769 = vadd.f32 0.0, %v2768
      %v2770 = vpop.f32.mrf.mxu0
      %v2771 = vadd.f32 0.0, %v2770
      %2772 = vmatmul.bf16.gmra.mxu0 %v2552
      %v2773 = vpop.f32.mrf.mxu0
      %v2774 = vadd.f32 0.0, %v2773
      %v2775 = vpop.f32.mrf.mxu0
      %v2776 = vadd.f32 0.0, %v2775
      %2777 = vmatmul.bf16.gmra.mxu0 %v2561
      %v2778 = vpop.f32.mrf.mxu0
      %v2779 = vadd.f32 0.0, %v2778
      %v2780 = vpop.f32.mrf.mxu0
      %v2781 = vadd.f32 0.0, %v2780
      %2782 = vmatmul.bf16.gmra.mxu0 %v2570
      %v2783 = vpop.f32.mrf.mxu0
      %v2784 = vadd.f32 0.0, %v2783
      %v2785 = vpop.f32.mrf.mxu0
      %v2786 = vadd.f32 0.0, %v2785
      %2787 = vmatmul.bf16.gmra.mxu0 %v2579
      %v2788 = vpop.f32.mrf.mxu0
      %v2789 = vadd.f32 0.0, %v2788
      %v2790 = vpop.f32.mrf.mxu0
      %v2791 = vadd.f32 0.0, %v2790
      %2792 = vmatmul.bf16.gmra.mxu0 %v2588
      %v2793 = vpop.f32.mrf.mxu0
      %v2794 = vadd.f32 0.0, %v2793
      %v2795 = vpop.f32.mrf.mxu0
      %v2796 = vadd.f32 0.0, %v2795
      %2797 = vmatmul.bf16.gmra.mxu0 %v2597
      %v2798 = vpop.f32.mrf.mxu0
      %v2799 = vadd.f32 0.0, %v2798
      %v2800 = vpop.f32.mrf.mxu0
      %v2801 = vadd.f32 0.0, %v2800
      %2802 = vmatmul.bf16.gmra.mxu0 %v2606
      %v2803 = vpop.f32.mrf.mxu0
      %v2804 = vadd.f32 0.0, %v2803
      %v2805 = vpop.f32.mrf.mxu0
      %v2806 = vadd.f32 0.0, %v2805
      %2807 = vmatmul.bf16.gmra.mxu0 %v2615
      %v2808 = vpop.f32.mrf.mxu0
      %v2809 = vadd.f32 0.0, %v2808
      %v2810 = vpop.f32.mrf.mxu0
      %v2811 = vadd.f32 0.0, %v2810
      %2812 = vmatmul.bf16.gmra.mxu0 %v2624
      %v2813 = vpop.f32.mrf.mxu0
      %v2814 = vadd.f32 0.0, %v2813
      %v2815 = vpop.f32.mrf.mxu0
      %v2816 = vadd.f32 0.0, %v2815
      %2817 = vmatmul.bf16.gmra.mxu0 %v2633
      %v2818 = vpop.f32.mrf.mxu0
      %v2819 = vadd.f32 0.0, %v2818
      %v2820 = vpop.f32.mrf.mxu0
      %v2821 = vadd.f32 0.0, %v2820
      %2822 = vmatmul.bf16.gmra.mxu0 %v2642
      %v2823 = vpop.f32.mrf.mxu0
      %v2824 = vadd.f32 0.0, %v2823
      %v2825 = vpop.f32.mrf.mxu0
      %v2826 = vadd.f32 0.0, %v2825
      %2827 = vmatmul.bf16.gmra.mxu0 %v2651
      %v2828 = vpop.f32.mrf.mxu0
      %v2829 = vadd.f32 0.0, %v2828
      %v2830 = vpop.f32.mrf.mxu0
      %v2831 = vadd.f32 0.0, %v2830
      %2832 = vmatmul.bf16.gmra.mxu0 %v2660
      %v2833 = vpop.f32.mrf.mxu0
      %v2834 = vadd.f32 0.0, %v2833
      %v2835 = vpop.f32.mrf.mxu0
      %v2836 = vadd.f32 0.0, %v2835
      %2837 = vmatmul.bf16.gmra.mxu0 %v2669
      %v2838 = vpop.f32.mrf.mxu0
      %v2839 = vadd.f32 0.0, %v2838
      %v2840 = vpop.f32.mrf.mxu0
      %v2841 = vadd.f32 0.0, %v2840
      %2842 = vmatmul.bf16.gmra.mxu0 %v2678
      %v2843 = vpop.f32.mrf.mxu0
      %v2844 = vadd.f32 0.0, %v2843
      %v2845 = vpop.f32.mrf.mxu0
      %v2846 = vadd.f32 0.0, %v2845
      %2847 = vmatmul.bf16.gmra.mxu0 %v2687
      %v2848 = vpop.f32.mrf.mxu0
      %v2849 = vadd.f32 0.0, %v2848
      %v2850 = vpop.f32.mrf.mxu0
      %v2851 = vadd.f32 0.0, %v2850
      %2852 = vdwg.mxu0
      %v2853 = vadd.f32 %v2460, %v2764
      %v2854 = vadd.f32 %v2461, %v2766
      %v2855 = vadd.f32 %v2462, %v2769
      %v2856 = vadd.f32 %v2463, %v2771
      %v2857 = vadd.f32 %v2464, %v2774
      %v2858 = vadd.f32 %v2465, %v2776
      %v2859 = vadd.f32 %v2466, %v2779
      %v2860 = vadd.f32 %v2467, %v2781
      %v2861 = vadd.f32 %v2468, %v2784
      %v2862 = vadd.f32 %v2469, %v2786
      %v2863 = vadd.f32 %v2470, %v2789
      %v2864 = vadd.f32 %v2471, %v2791
      %v2865 = vadd.f32 %v2472, %v2794
      %v2866 = vadd.f32 %v2473, %v2796
      %v2867 = vadd.f32 %v2474, %v2799
      %v2868 = vadd.f32 %v2475, %v2801
      %v2869 = vadd.f32 %v2476, %v2804
      %v2870 = vadd.f32 %v2477, %v2806
      %v2871 = vadd.f32 %v2478, %v2809
      %v2872 = vadd.f32 %v2479, %v2811
      %v2873 = vadd.f32 %v2480, %v2814
      %v2874 = vadd.f32 %v2481, %v2816
      %v2875 = vadd.f32 %v2482, %v2819
      %v2876 = vadd.f32 %v2483, %v2821
      %v2877 = vadd.f32 %v2484, %v2824
      %v2878 = vadd.f32 %v2485, %v2826
      %v2879 = vadd.f32 %v2486, %v2829
      %v2880 = vadd.f32 %v2487, %v2831
      %v2881 = vadd.f32 %v2488, %v2834
      %v2882 = vadd.f32 %v2489, %v2836
      %v2883 = vadd.f32 %v2490, %v2839
      %v2884 = vadd.f32 %v2491, %v2841
      %v2885 = vadd.f32 %v2492, %v2844
      %v2886 = vadd.f32 %v2493, %v2846
      %v2887 = vadd.f32 %v2494, %v2849
      %v2888 = vadd.f32 %v2495, %v2851
      %v2889 = vld [vmem:[%s165 + $0x10] sm:$0x8]
      %s2890 = scalar_lea.vmem %s1, 512
      %v2891 = vld [vmem:[%s2890] sm:$0xf]
      %v2892 = vld [vmem:[%s2890 + $0x4] sm:$0xf]
      %v2893 = vld [vmem:[%s2890 + $0x8] sm:$0xf]
      %v2894 = vld [vmem:[%s2890 + $0xc] sm:$0xf]
      %v2895 = vld [vmem:[%s2890 + $0x10] sm:$0xf]
      %v2896 = vld [vmem:[%s2890 + $0x14] sm:$0xf]
      %v2897 = vld [vmem:[%s2890 + $0x18] sm:$0xf]
      %v2898 = vld [vmem:[%s2890 + $0x1c] sm:$0xf]
      %v2899 = vld [vmem:[%s2890 + $0x20] sm:$0xf]
      %v2900 = vld [vmem:[%s2890 + $0x24] sm:$0xf]
      %v2901 = vld [vmem:[%s2890 + $0x28] sm:$0xf]
      %v2902 = vld [vmem:[%s2890 + $0x2c] sm:$0xf]
      %v2903 = vld [vmem:[%s2890 + $0x30] sm:$0xf]
      %v2904 = vld [vmem:[%s2890 + $0x34] sm:$0xf]
      %v2905 = vld [vmem:[%s2890 + $0x38] sm:$0xf]
      %v2906 = vld [vmem:[%s2890 + $0x3c] sm:$0xf]
      %v2908 = vunpack.c.l.b16 %v2889
      %v2909 = vpack.c.b16 %v2203, %v2908
      %vm2910 = vcmask 1044480
      %v2911 = vrot.slane %v2909, 3
      %v2912 = vrot.slane %v2240, 3
      %v2913 = vsel %vm2910, %v2911, %v2912
      %v2914 = vrot.slane %v2241, 3
      %v2915 = vsel %vm2910, %v2912, %v2914
      %v2916 = vrot.slane %v2242, 3
      %v2917 = vsel %vm2910, %v2914, %v2916
      %v2918 = vrot.slane %v2243, 3
      %v2919 = vsel %vm2910, %v2916, %v2918
      %v2920 = vrot.slane %v2244, 3
      %v2921 = vsel %vm2910, %v2918, %v2920
      %v2922 = vrot.slane %v2245, 3
      %v2923 = vsel %vm2910, %v2920, %v2922
      %v2924 = vrot.slane %v2246, 3
      %v2925 = vsel %vm2910, %v2922, %v2924
      %v2926 = vrot.slane %v2247, 3
      %v2927 = vsel %vm2910, %v2924, %v2926
      %v2928 = vrot.slane %v2248, 3
      %v2929 = vsel %vm2910, %v2926, %v2928
      %v2930 = vrot.slane %v2249, 3
      %v2931 = vsel %vm2910, %v2928, %v2930
      %v2932 = vrot.slane %v2250, 3
      %v2933 = vsel %vm2910, %v2930, %v2932
      %v2934 = vrot.slane %v2251, 3
      %v2935 = vsel %vm2910, %v2932, %v2934
      %v2936 = vrot.slane %v2252, 3
      %v2937 = vsel %vm2910, %v2934, %v2936
      %v2938 = vrot.slane %v2253, 3
      %v2939 = vsel %vm2910, %v2936, %v2938
      %v2940 = vrot.slane %v2254, 3
      %v2941 = vsel %vm2910, %v2938, %v2940
      %v2942 = vrot.slane %v2255, 3
      %v2943 = vsel %vm2910, %v2940, %v2942
      %v2944 = vrot.slane %v2256, 3
      %v2945 = vsel %vm2910, %v2942, %v2944
      %v2946 = vrot.slane %v2516, 3
      %v2947 = vsel %vm2910, %v2944, %v2946
      %v2982 = vunpack.c.l.b16 %v2891
      %v2983 = vunpack.c.l.b16 %v2892
      %v2984 = vunpack.c.l.b16 %v2893
      %v2985 = vunpack.c.l.b16 %v2894
      %v2986 = vunpack.c.l.b16 %v2895
      %v2987 = vunpack.c.l.b16 %v2896
      %v2988 = vunpack.c.l.b16 %v2897
      %v2989 = vunpack.c.l.b16 %v2898
      %v2990 = vunpack.c.l.b16 %v2899
      %v2991 = vunpack.c.l.b16 %v2900
      %v2992 = vunpack.c.l.b16 %v2901
      %v2993 = vunpack.c.l.b16 %v2902
      %v2994 = vunpack.c.l.b16 %v2903
      %v2995 = vunpack.c.l.b16 %v2904
      %v2996 = vunpack.c.l.b16 %v2905
      %v2997 = vunpack.c.l.b16 %v2906
      %v2998 = vpack.c.b16 %v2983, %v2982
      %v2999 = vpack.c.b16 %v2985, %v2984
      %v3000 = vpack.c.b16 %v2987, %v2986
      %v3001 = vpack.c.b16 %v2989, %v2988
      %v3002 = vpack.c.b16 %v2991, %v2990
      %v3003 = vpack.c.b16 %v2993, %v2992
      %v3004 = vpack.c.b16 %v2995, %v2994
      %v3005 = vpack.c.b16 %v2997, %v2996
      %3014 = vmatpush.bf16.msra.mxu0 %v3005
      %3015 = vmatpush.bf16.msra.mxu0 %v3004
      %3016 = vmatpush.bf16.msra.mxu0 %v3003
      %3017 = vmatpush.bf16.msra.mxu0 %v3002
      %3018 = vmatpush.bf16.msra.mxu0 %v3001
      %3019 = vmatpush.bf16.msra.mxu0 %v3000
      %3020 = vmatpush.bf16.msra.mxu0 %v2999
      %3021 = vmatpush.bf16.msra.mxu0 %v2998
      %3022 = vmatmul.bf16.gmra.mxu0 %v2913
      %v3023 = vpop.f32.mrf.mxu0
      %v3024 = vadd.f32 0.0, %v3023
      %v3025 = vpop.f32.mrf.mxu0
      %v3026 = vadd.f32 0.0, %v3025
      %3027 = vmatmul.bf16.gmra.mxu0 %v2915
      %v3028 = vpop.f32.mrf.mxu0
      %v3029 = vadd.f32 0.0, %v3028
      %v3030 = vpop.f32.mrf.mxu0
      %v3031 = vadd.f32 0.0, %v3030
      %3032 = vmatmul.bf16.gmra.mxu0 %v2917
      %v3033 = vpop.f32.mrf.mxu0
      %v3034 = vadd.f32 0.0, %v3033
      %v3035 = vpop.f32.mrf.mxu0
      %v3036 = vadd.f32 0.0, %v3035
      %3037 = vmatmul.bf16.gmra.mxu0 %v2919
      %v3038 = vpop.f32.mrf.mxu0
      %v3039 = vadd.f32 0.0, %v3038
      %v3040 = vpop.f32.mrf.mxu0
      %v3041 = vadd.f32 0.0, %v3040
      %3042 = vmatmul.bf16.gmra.mxu0 %v2921
      %v3043 = vpop.f32.mrf.mxu0
      %v3044 = vadd.f32 0.0, %v3043
      %v3045 = vpop.f32.mrf.mxu0
      %v3046 = vadd.f32 0.0, %v3045
      %3047 = vmatmul.bf16.gmra.mxu0 %v2923
      %v3048 = vpop.f32.mrf.mxu0
      %v3049 = vadd.f32 0.0, %v3048
      %v3050 = vpop.f32.mrf.mxu0
      %v3051 = vadd.f32 0.0, %v3050
      %3052 = vmatmul.bf16.gmra.mxu0 %v2925
      %v3053 = vpop.f32.mrf.mxu0
      %v3054 = vadd.f32 0.0, %v3053
      %v3055 = vpop.f32.mrf.mxu0
      %v3056 = vadd.f32 0.0, %v3055
      %3057 = vmatmul.bf16.gmra.mxu0 %v2927
      %v3058 = vpop.f32.mrf.mxu0
      %v3059 = vadd.f32 0.0, %v3058
      %v3060 = vpop.f32.mrf.mxu0
      %v3061 = vadd.f32 0.0, %v3060
      %3062 = vmatmul.bf16.gmra.mxu0 %v2929
      %v3063 = vpop.f32.mrf.mxu0
      %v3064 = vadd.f32 0.0, %v3063
      %v3065 = vpop.f32.mrf.mxu0
      %v3066 = vadd.f32 0.0, %v3065
      %3067 = vmatmul.bf16.gmra.mxu0 %v2931
      %v3068 = vpop.f32.mrf.mxu0
      %v3069 = vadd.f32 0.0, %v3068
      %v3070 = vpop.f32.mrf.mxu0
      %v3071 = vadd.f32 0.0, %v3070
      %3072 = vmatmul.bf16.gmra.mxu0 %v2933
      %v3073 = vpop.f32.mrf.mxu0
      %v3074 = vadd.f32 0.0, %v3073
      %v3075 = vpop.f32.mrf.mxu0
      %v3076 = vadd.f32 0.0, %v3075
      %3077 = vmatmul.bf16.gmra.mxu0 %v2935
      %v3078 = vpop.f32.mrf.mxu0
      %v3079 = vadd.f32 0.0, %v3078
      %v3080 = vpop.f32.mrf.mxu0
      %v3081 = vadd.f32 0.0, %v3080
      %3082 = vmatmul.bf16.gmra.mxu0 %v2937
      %v3083 = vpop.f32.mrf.mxu0
      %v3084 = vadd.f32 0.0, %v3083
      %v3085 = vpop.f32.mrf.mxu0
      %v3086 = vadd.f32 0.0, %v3085
      %3087 = vmatmul.bf16.gmra.mxu0 %v2939
      %v3088 = vpop.f32.mrf.mxu0
      %v3089 = vadd.f32 0.0, %v3088
      %v3090 = vpop.f32.mrf.mxu0
      %v3091 = vadd.f32 0.0, %v3090
      %3092 = vmatmul.bf16.gmra.mxu0 %v2941
      %v3093 = vpop.f32.mrf.mxu0
      %v3094 = vadd.f32 0.0, %v3093
      %v3095 = vpop.f32.mrf.mxu0
      %v3096 = vadd.f32 0.0, %v3095
      %3097 = vmatmul.bf16.gmra.mxu0 %v2943
      %v3098 = vpop.f32.mrf.mxu0
      %v3099 = vadd.f32 0.0, %v3098
      %v3100 = vpop.f32.mrf.mxu0
      %v3101 = vadd.f32 0.0, %v3100
      %3102 = vmatmul.bf16.gmra.mxu0 %v2945
      %v3103 = vpop.f32.mrf.mxu0
      %v3104 = vadd.f32 0.0, %v3103
      %v3105 = vpop.f32.mrf.mxu0
      %v3106 = vadd.f32 0.0, %v3105
      %3107 = vmatmul.bf16.gmra.mxu0 %v2947
      %v3108 = vpop.f32.mrf.mxu0
      %v3109 = vadd.f32 0.0, %v3108
      %v3110 = vpop.f32.mrf.mxu0
      %v3111 = vadd.f32 0.0, %v3110
      %3112 = vdwg.mxu0
      %v3113 = vadd.f32 %v2853, %v3024
      %v3114 = vadd.f32 %v2854, %v3026
      %v3115 = vadd.f32 %v2855, %v3029
      %v3116 = vadd.f32 %v2856, %v3031
      %v3117 = vadd.f32 %v2857, %v3034
      %v3118 = vadd.f32 %v2858, %v3036
      %v3119 = vadd.f32 %v2859, %v3039
      %v3120 = vadd.f32 %v2860, %v3041
      %v3121 = vadd.f32 %v2861, %v3044
      %v3122 = vadd.f32 %v2862, %v3046
      %v3123 = vadd.f32 %v2863, %v3049
      %v3124 = vadd.f32 %v2864, %v3051
      %v3125 = vadd.f32 %v2865, %v3054
      %v3126 = vadd.f32 %v2866, %v3056
      %v3127 = vadd.f32 %v2867, %v3059
      %v3128 = vadd.f32 %v2868, %v3061
      %v3129 = vadd.f32 %v2869, %v3064
      %v3130 = vadd.f32 %v2870, %v3066
      %v3131 = vadd.f32 %v2871, %v3069
      %v3132 = vadd.f32 %v2872, %v3071
      %v3133 = vadd.f32 %v2873, %v3074
      %v3134 = vadd.f32 %v2874, %v3076
      %v3135 = vadd.f32 %v2875, %v3079
      %v3136 = vadd.f32 %v2876, %v3081
      %v3137 = vadd.f32 %v2877, %v3084
      %v3138 = vadd.f32 %v2878, %v3086
      %v3139 = vadd.f32 %v2879, %v3089
      %v3140 = vadd.f32 %v2880, %v3091
      %v3141 = vadd.f32 %v2881, %v3094
      %v3142 = vadd.f32 %v2882, %v3096
      %v3143 = vadd.f32 %v2883, %v3099
      %v3144 = vadd.f32 %v2884, %v3101
      %v3145 = vadd.f32 %v2885, %v3104
      %v3146 = vadd.f32 %v2886, %v3106
      %v3147 = vadd.f32 %v2887, %v3109
      %v3148 = vadd.f32 %v2888, %v3111
      %v3149 = vld [vmem:[%s2] sm:$0x1]
      %v3151 = vperm.slane %v3149, 0
      %v3153 = vadd.f32 %v3113, %v3151
      %v3154 = vadd.f32 %v3114, %v3151
      %v3155 = vadd.f32 %v3115, %v3151
      %v3156 = vadd.f32 %v3116, %v3151
      %v3157 = vadd.f32 %v3117, %v3151
      %v3158 = vadd.f32 %v3118, %v3151
      %v3159 = vadd.f32 %v3119, %v3151
      %v3160 = vadd.f32 %v3120, %v3151
      %v3161 = vadd.f32 %v3121, %v3151
      %v3162 = vadd.f32 %v3122, %v3151
      %v3163 = vadd.f32 %v3123, %v3151
      %v3164 = vadd.f32 %v3124, %v3151
      %v3165 = vadd.f32 %v3125, %v3151
      %v3166 = vadd.f32 %v3126, %v3151
      %v3167 = vadd.f32 %v3127, %v3151
      %v3168 = vadd.f32 %v3128, %v3151
      %v3169 = vadd.f32 %v3129, %v3151
      %v3170 = vadd.f32 %v3130, %v3151
      %v3171 = vadd.f32 %v3131, %v3151
      %v3172 = vadd.f32 %v3132, %v3151
      %v3173 = vadd.f32 %v3133, %v3151
      %v3174 = vadd.f32 %v3134, %v3151
      %v3175 = vadd.f32 %v3135, %v3151
      %v3176 = vadd.f32 %v3136, %v3151
      %v3177 = vadd.f32 %v3137, %v3151
      %v3178 = vadd.f32 %v3138, %v3151
      %v3179 = vadd.f32 %v3139, %v3151
      %v3180 = vadd.f32 %v3140, %v3151
      %v3181 = vadd.f32 %v3141, %v3151
      %v3182 = vadd.f32 %v3142, %v3151
      %v3183 = vadd.f32 %v3143, %v3151
      %v3184 = vadd.f32 %v3144, %v3151
      %v3185 = vadd.f32 %v3145, %v3151
      %v3186 = vadd.f32 %v3146, %v3151
      %v3187 = vadd.f32 %v3147, %v3151
      %v3188 = vadd.f32 %v3148, %v3151
      %v3189 = vmax.f32 %v3153, 0.0
      %v3190 = vmax.f32 %v3154, 0.0
      %v3191 = vmax.f32 %v3155, 0.0
      %v3192 = vmax.f32 %v3156, 0.0
      %v3193 = vmax.f32 %v3157, 0.0
      %v3194 = vmax.f32 %v3158, 0.0
      %v3195 = vmax.f32 %v3159, 0.0
      %v3196 = vmax.f32 %v3160, 0.0
      %v3197 = vmax.f32 %v3161, 0.0
      %v3198 = vmax.f32 %v3162, 0.0
      %v3199 = vmax.f32 %v3163, 0.0
      %v3200 = vmax.f32 %v3164, 0.0
      %v3201 = vmax.f32 %v3165, 0.0
      %v3202 = vmax.f32 %v3166, 0.0
      %v3203 = vmax.f32 %v3167, 0.0
      %v3204 = vmax.f32 %v3168, 0.0
      %v3205 = vmax.f32 %v3169, 0.0
      %v3206 = vmax.f32 %v3170, 0.0
      %v3207 = vmax.f32 %v3171, 0.0
      %v3208 = vmax.f32 %v3172, 0.0
      %v3209 = vmax.f32 %v3173, 0.0
      %v3210 = vmax.f32 %v3174, 0.0
      %v3211 = vmax.f32 %v3175, 0.0
      %v3212 = vmax.f32 %v3176, 0.0
      %v3213 = vmax.f32 %v3177, 0.0
      %v3214 = vmax.f32 %v3178, 0.0
      %v3215 = vmax.f32 %v3179, 0.0
      %v3216 = vmax.f32 %v3180, 0.0
      %v3217 = vmax.f32 %v3181, 0.0
      %v3218 = vmax.f32 %v3182, 0.0
      %v3219 = vmax.f32 %v3183, 0.0
      %v3220 = vmax.f32 %v3184, 0.0
      %v3221 = vmax.f32 %v3185, 0.0
      %v3222 = vmax.f32 %v3186, 0.0
      %v3223 = vmax.f32 %v3187, 0.0
      %v3224 = vmax.f32 %v3188, 0.0
      %v3225 = vpack.c.bf16 %v3189, %v3189
      %v3226 = vpack.c.bf16 %v3190, %v3190
      %v3227 = vpack.c.bf16 %v3191, %v3191
      %v3228 = vpack.c.bf16 %v3192, %v3192
      %v3229 = vpack.c.bf16 %v3193, %v3193
      %v3230 = vpack.c.bf16 %v3194, %v3194
      %v3231 = vpack.c.bf16 %v3195, %v3195
      %v3232 = vpack.c.bf16 %v3196, %v3196
      %v3233 = vpack.c.bf16 %v3197, %v3197
      %v3234 = vpack.c.bf16 %v3198, %v3198
      %v3235 = vpack.c.bf16 %v3199, %v3199
      %v3236 = vpack.c.bf16 %v3200, %v3200
      %v3237 = vpack.c.bf16 %v3201, %v3201
      %v3238 = vpack.c.bf16 %v3202, %v3202
      %v3239 = vpack.c.bf16 %v3203, %v3203
      %v3240 = vpack.c.bf16 %v3204, %v3204
      %v3241 = vpack.c.bf16 %v3205, %v3205
      %v3242 = vpack.c.bf16 %v3206, %v3206
      %v3243 = vpack.c.bf16 %v3207, %v3207
      %v3244 = vpack.c.bf16 %v3208, %v3208
      %v3245 = vpack.c.bf16 %v3209, %v3209
      %v3246 = vpack.c.bf16 %v3210, %v3210
      %v3247 = vpack.c.bf16 %v3211, %v3211
      %v3248 = vpack.c.bf16 %v3212, %v3212
      %v3249 = vpack.c.bf16 %v3213, %v3213
      %v3250 = vpack.c.bf16 %v3214, %v3214
      %v3251 = vpack.c.bf16 %v3215, %v3215
      %v3252 = vpack.c.bf16 %v3216, %v3216
      %v3253 = vpack.c.bf16 %v3217, %v3217
      %v3254 = vpack.c.bf16 %v3218, %v3218
      %v3255 = vpack.c.bf16 %v3219, %v3219
      %v3256 = vpack.c.bf16 %v3220, %v3220
      %v3257 = vpack.c.bf16 %v3221, %v3221
      %v3258 = vpack.c.bf16 %v3222, %v3222
      %v3259 = vpack.c.bf16 %v3223, %v3223
      %v3260 = vpack.c.bf16 %v3224, %v3224
      %3261 = vst [vmem:[%s170] sm:$0xf] %v3225
      %3262 = vst [vmem:[%s170 + $0x4] sm:$0xf] %v3226
      %3263 = vst [vmem:[%s170 + $0x8] sm:$0xf] %v3227
      %3264 = vst [vmem:[%s170 + $0xc] sm:$0xf] %v3228
      %3265 = vst [vmem:[%s170 + $0x10] sm:$0xf] %v3229
      %3266 = vst [vmem:[%s170 + $0x14] sm:$0xf] %v3230
      %3267 = vst [vmem:[%s170 + $0x18] sm:$0xf] %v3231
      %3268 = vst [vmem:[%s170 + $0x1c] sm:$0xf] %v3232
      %3269 = vst [vmem:[%s170 + $0x20] sm:$0xf] %v3233
      %3270 = vst [vmem:[%s170 + $0x24] sm:$0xf] %v3234
      %3271 = vst [vmem:[%s170 + $0x28] sm:$0xf] %v3235
      %3272 = vst [vmem:[%s170 + $0x2c] sm:$0xf] %v3236
      %3273 = vst [vmem:[%s170 + $0x30] sm:$0xf] %v3237
      %3274 = vst [vmem:[%s170 + $0x34] sm:$0xf] %v3238
      %3275 = vst [vmem:[%s170 + $0x38] sm:$0xf] %v3239
      %3276 = vst [vmem:[%s170 + $0x3c] sm:$0xf] %v3240
      %3277 = vst [vmem:[%s170 + $0x40] sm:$0xf] %v3241
      %3278 = vst [vmem:[%s170 + $0x44] sm:$0xf] %v3242
      %3279 = vst [vmem:[%s170 + $0x48] sm:$0xf] %v3243
      %3280 = vst [vmem:[%s170 + $0x4c] sm:$0xf] %v3244
      %3281 = vst [vmem:[%s170 + $0x50] sm:$0xf] %v3245
      %3282 = vst [vmem:[%s170 + $0x54] sm:$0xf] %v3246
      %3283 = vst [vmem:[%s170 + $0x58] sm:$0xf] %v3247
      %3284 = vst [vmem:[%s170 + $0x5c] sm:$0xf] %v3248
      %3285 = vst [vmem:[%s170 + $0x60] sm:$0xf] %v3249
      %3286 = vst [vmem:[%s170 + $0x64] sm:$0xf] %v3250
      %3287 = vst [vmem:[%s170 + $0x68] sm:$0xf] %v3251
      %3288 = vst [vmem:[%s170 + $0x6c] sm:$0xf] %v3252
      %3289 = vst [vmem:[%s170 + $0x70] sm:$0xf] %v3253
      %3290 = vst [vmem:[%s170 + $0x74] sm:$0xf] %v3254
      %3291 = vst [vmem:[%s170 + $0x78] sm:$0xf] %v3255
      %3292 = vst [vmem:[%s170 + $0x7c] sm:$0xf] %v3256
      %3293 = vst [vmem:[%s170 + $0x80] sm:$0xf] %v3257
      %3294 = vst [vmem:[%s170 + $0x84] sm:$0xf] %v3258
      %3295 = vst [vmem:[%s170 + $0x88] sm:$0xf] %v3259
      %3296 = vst [vmem:[%s170 + $0x8c] sm:$0xf] %v3260
      %p3297 = scmp.lt.s32.totalorder %s14, 1
      %s3298 = scalar_select %p3297, %s14, 1
      %s3299 = smul.addr %s3298, 36
      %s3300 = smul.addr %s3299, 4
      %s3301 = scalar_lea.vmem %s3, %s3300
      // Predicated region
      $region33: #{inception_b_forward.6} parent=31 // pred_check
        %p3302 = pneg %p100
      $region34: #{inception_b_forward.6} parent=31 // pred_check_branch
        %3304 = sbr.rel (%p3302) target = $region36
      $region35: #{inception_b_forward.6} parent=31 // pred_region
        _
      $region36: #{inception_b_forward.6} parent=31 // pred_fallthru
        _
    $region32: #{inception_b_forward.6} parent=5 // pred_fallthru
      _
    %p3305 = scmp.le.s32.totalorder 2, %s9
    // Predicated region
    $region37: #{inception_b_forward.6} parent=5 // pred_check
      %p3306 = pneg %p3305
    $region38: #{inception_b_forward.6} parent=5 // pred_check_branch
      %3308 = sbr.rel (%p3306) target = $region40
    $region39: #{inception_b_forward.6} parent=5 // pred_region
      %s3309 = ssub.s32 %s9, 2
      // Predicated region
      $region41: #{inception_b_forward.6} parent=39 // pred_check
        %p3310 = pneg %p106
      $region42: #{inception_b_forward.6} parent=39 // pred_check_branch
        %3312 = sbr.rel (%p3310) target = $region44
      $region43: #{inception_b_forward.6} parent=39 // pred_region
        %p3313 = scmp.lt.s32.totalorder %s15, 1
        %s3314 = scalar_select %p3313, %s15, 1
        %s3315 = smul.addr %s3314, 36
        %s3316 = smul.addr %s3315, 4
        %s3317 = scalar_lea.vmem %s3, %s3316
      $region44: #{inception_b_forward.6} parent=39 // pred_fallthru
        _
    $region40: #{inception_b_forward.6} parent=5 // pred_fallthru
      _
  $region6: #{inception_b_forward.6} parent=0 // loop_footer
    %s13 = sadd.s32 1, %s9
  $region7: #{inception_b_forward.6} parent=0 // loop_footer_branch
    %8 = sbr.rel target = $region3
  $region8: #{inception_b_forward.6} parent=0 // loop_exit
    _

// kernel: inception_b_forward.7
$region0: #{inception_b_forward.7}
  #allocation0 [shape = 'u32[]', space=smem, size = 0x4, offset = 0x4, fixed_abs, tag = 'smem constant byte address 0x4 - core index']
  #allocation1 [shape = 'u32[72,128]{1,0:T(1,128)}', space=vmem, size = 0x9000, scoped, tag = 'internal scratch']
  %s0 = inlined_call_operand.vmem [shape: bf16[2,4,88,128], index: 0, kind: input, shape index: {}]
  %s1 = inlined_call_operand.vmem [shape: bf16[9,128,128], index: 1, kind: input, shape index: {}]
  %s2 = inlined_call_operand.vmem [shape: f32[1,128], index: 2, kind: input, shape index: {}]
  %s3 = inlined_call_operand.vmem [shape: f32[2,72,128], index: 3, kind: output, shape index: {}]
  %s4 = sld [smem:[#allocation0]]
  $region45: #{inception_b_forward.7} parent=0
    _
  %s6 = ssub.s32 1, %s4
  %s7 = scalar_select 0, %s6, %s4
  loop: start=0, step=1, limit=4
  $region2: #{inception_b_forward.7} parent=0 // loop_pre_header
    _
  $region3: #{inception_b_forward.7} parent=0 // loop_header
    %s9 = sphi 0, %s13
    %p10 = scmp.ge.s32.totalorder %s9, 4
    %s19 = sphi 0, %s21
    %s22 = sphi 0, %s19
    %s23 = sphi 0, %s22
    %s39 = sphi 0, %s23
    %s43 = sphi 0, %s43
    %s45 = sphi 0, %s43
    %s46 = sphi 0, %s45
    %s60 = sphi 0, %s46
    %s64 = sphi 0, %s64
    %s66 = sphi 0, %s64
    %s67 = sphi 0, %s66
    %s81 = sphi 0, %s67
    %s87 = sphi 0, %s89
    %s90 = sphi 0, %s87
    %s91 = sphi 0, %s90
    %s107 = sphi 0, %s91
  $region4: #{inception_b_forward.7} parent=0 // loop_header_branch
    %12 = sbr.rel (%p10) target = $region8
  $region5: #{inception_b_forward.7} parent=0 // loop_body
    %s14 = ssub.s32 %s9, 1
    %s15 = ssub.s32 %s9, 2
    %s16 = sadd.s32 %s9, 1
    %s17 = ssub.s32 %s9, %s16
    %p18 = scmp.eq.s32.totalorder %s17, 0
    %s20 = sadd.s32 %s19, 1
    %s21 = scalar_select %p18, %s19, %s20
    %p24 = pneg %p18
    %p25 = scmp.eq.s32.totalorder %s9, 1
    %p26 = por %p24, %p25
    %p27 = scmp.ne.s32.totalorder %s19, %s22
    %p28 = scmp.eq.s32.totalorder %s9, 0
    %p29 = por %p27, %p28
    %p30 = scmp.ne.s32.totalorder %s19, %s22
    %p31 = scmp.eq.s32.totalorder %s14, 1
    %p32 = por %p30, %p31
    %p33 = scmp.ne.s32.totalorder %s22, %s23
    %p34 = scmp.eq.s32.totalorder %s14, 0
    %p35 = por %p33, %p34
    %p36 = scmp.ne.s32.totalorder %s22, %s23
    %p37 = scmp.eq.s32.totalorder %s15, 1
    %p38 = por %p36, %p37
    %p40 = scmp.ne.s32.totalorder %s23, %s39
    %p41 = scmp.eq.s32.totalorder %s15, 0
    %p42 = por %p40, %p41
    %s44 = sadd.s32 %s43, 1
    %p47 = scmp.eq.s32.totalorder %s9, 1
    %p48 = scmp.ne.s32.totalorder %s43, %s45
    %p49 = scmp.eq.s32.totalorder %s9, 0
    %p50 = por %p48, %p49
    %p51 = scmp.ne.s32.totalorder %s43, %s45
    %p52 = scmp.eq.s32.totalorder %s14, 1
    %p53 = por %p51, %p52
    %p54 = scmp.ne.s32.totalorder %s45, %s46
    %p55 = scmp.eq.s32.totalorder %s14, 0
    %p56 = por %p54, %p55
    %p57 = scmp.ne.s32.totalorder %s45, %s46
    %p58 = scmp.eq.s32.totalorder %s15, 1
    %p59 = por %p57, %p58
    %p61 = scmp.ne.s32.totalorder %s46, %s60
    %p62 = scmp.eq.s32.totalorder %s15, 0
    %p63 = por %p61, %p62
    %s65 = sadd.s32 %s64, 1
    %p68 = scmp.eq.s32.totalorder %s9, 1
    %p69 = scmp.ne.s32.totalorder %s64, %s66
    %p70 = scmp.eq.s32.totalorder %s9, 0
    %p71 = por %p69, %p70
    %p72 = scmp.ne.s32.totalorder %s64, %s66
    %p73 = scmp.eq.s32.totalorder %s14, 1
    %p74 = por %p72, %p73
    %p75 = scmp.ne.s32.totalorder %s66, %s67
    %p76 = scmp.eq.s32.totalorder %s14, 0
    %p77 = por %p75, %p76
    %p78 = scmp.ne.s32.totalorder %s66, %s67
    %p79 = scmp.eq.s32.totalorder %s15, 1
    %p80 = por %p78, %p79
    %p82 = scmp.ne.s32.totalorder %s67, %s81
    %p83 = scmp.eq.s32.totalorder %s15, 0
    %p84 = por %p82, %p83
    %s85 = ssub.s32 %s9, %s16
    %p86 = scmp.eq.s32.totalorder %s85, 0
    %s88 = sadd.s32 %s87, 1
    %s89 = scalar_select %p86, %s87, %s88
    %p92 = pneg %p86
    %p93 = scmp.eq.s32.totalorder %s9, 1
    %p94 = por %p92, %p93
    %p95 = scmp.ne.s32.totalorder %s87, %s90
    %p96 = scmp.eq.s32.totalorder %s9, 0
    %p97 = por %p95, %p96
    %p98 = scmp.ne.s32.totalorder %s87, %s90
    %p99 = scmp.eq.s32.totalorder %s14, 1
    %p100 = por %p98, %p99
    %p101 = scmp.ne.s32.totalorder %s90, %s91
    %p102 = scmp.eq.s32.totalorder %s14, 0
    %p103 = por %p101, %p102
    %p104 = scmp.ne.s32.totalorder %s90, %s91
    %p105 = scmp.eq.s32.totalorder %s15, 1
    %p106 = por %p104, %p105
    %p108 = scmp.ne.s32.totalorder %s91, %s107
    %p109 = scmp.eq.s32.totalorder %s15, 0
    %p110 = por %p108, %p109
    %p111 = scmp.le.s32.totalorder 1, %s9
    %p112 = scmp.lt.s32.totalorder %s9, 3
    %p113 = pnand %p111, %p112
    %p114 = pneg %p113
    // Predicated region
    $region9: #{inception_b_forward.7} parent=5 // pred_check
      _
    $region10: #{inception_b_forward.7} parent=5 // pred_check_branch
      %116 = sbr.rel (%p113) target = $region12
    $region11: #{inception_b_forward.7} parent=5 // pred_region
      %s117 = ssub.s32 %s9, 1
      // Predicated region
      $region13: #{inception_b_forward.7} parent=11 // pred_check
        %p118 = pneg %p56
      $region14: #{inception_b_forward.7} parent=11 // pred_check_branch
        %120 = sbr.rel (%p118) target = $region16
      $region15: #{inception_b_forward.7} parent=11 // pred_region
        _
      $region16: #{inception_b_forward.7} parent=11 // pred_fallthru
        _
      // Predicated region
      $region17: #{inception_b_forward.7} parent=11 // pred_check
        %p121 = pneg %p77
      $region18: #{inception_b_forward.7} parent=11 // pred_check_branch
        %123 = sbr.rel (%p121) target = $region20
      $region19: #{inception_b_forward.7} parent=11 // pred_region
        _
      $region20: #{inception_b_forward.7} parent=11 // pred_fallthru
        _
    $region12: #{inception_b_forward.7} parent=5 // pred_fallthru
      _
    %p124 = scmp.lt.s32.totalorder %s9, 2
    // Predicated region
    $region21: #{inception_b_forward.7} parent=5 // pred_check
      %p125 = pneg %p124
    $region22: #{inception_b_forward.7} parent=5 // pred_check_branch
      %127 = sbr.rel (%p125) target = $region24
    $region23: #{inception_b_forward.7} parent=5 // pred_region
      // Predicated region
      $region25: #{inception_b_forward.7} parent=23 // pred_check
        %p128 = pneg %p29
      $region26: #{inception_b_forward.7} parent=23 // pred_check_branch
        %130 = sbr.rel (%p128) target = $region28
      $region27: #{inception_b_forward.7} parent=23 // pred_region
        %p131 = scmp.lt.s32.totalorder %s9, 1
        %s132 = scalar_select %p131, %s9, 1
        %s133 = smul.addr %s132, 44
        %s134 = smul.addr %s133, 4
        %s135 = scalar_lea.vmem %s0, %s134
      $region28: #{inception_b_forward.7} parent=23 // pred_fallthru
        _
    $region24: #{inception_b_forward.7} parent=5 // pred_fallthru
      _
    %p136 = scmp.le.s32.totalorder 1, %s9
    %p137 = scmp.lt.s32.totalorder %s9, 3
    %p138 = pnand %p136, %p137
    %p139 = pneg %p138
    // Predicated region
    $region29: #{inception_b_forward.7} parent=5 // pred_check
      _
    $region30: #{inception_b_forward.7} parent=5 // pred_check_branch
      %141 = sbr.rel (%p138) target = $region32
    $region31: #{inception_b_forward.7} parent=5 // pred_region
      %s142 = ssub.s32 %s9, 1
      %p143 = scmp.lt.s32.totalorder %s14, 1
      %s144 = scalar_select %p143, %s14, 1
      %s145 = smul.addr %s144, 44
      %s146 = smul.addr %s145, 4
      %s147 = scalar_lea.vmem %s0, %s146
      %p148 = pneg %p35
      %p149 = pneg %p32
      %p150 = pneg %p56
      %p151 = pneg %p53
      %p152 = pneg %p77
      %p153 = pneg %p74
      %p154 = pneg %p103
      %p155 = pneg %p100
      %p156 = scmp.lt.s32.totalorder %s14, 1
      %s157 = scalar_select %p156, %s14, 1
      %s158 = smul.addr %s157, 9
      %s159 = smul.addr %s158, 8
      %s160 = scalar_lea.vmem %s3, %s159
      %p161 = scmp.lt.s32.totalorder %s14, 1
      %s162 = scalar_select %p161, %s14, 1
      %s163 = smul.addr %s162, 44
      %s164 = smul.addr %s163, 4
      %s165 = scalar_lea.vmem %s0, %s164
      %p166 = scmp.lt.s32.totalorder %s14, 1
      %s167 = scalar_select %p166, %s14, 1
      %s168 = smul.addr %s167, 9
      %s169 = smul.addr %s168, 8
      %s170 = scalar_lea.vmem %s3, %s169
      %v171 = vld [vmem:[%s165] sm:$0xf]
      %v172 = vld [vmem:[%s165 + $0x4] sm:$0xf]
      %v173 = vld [vmem:[%s165 + $0x8] sm:$0xf]
      %v174 = vld [vmem:[%s165 + $0xc] sm:$0xf]
      %v175 = vld [vmem:[%s165 + $0x10] sm:$0xf]
      %v176 = vld [vmem:[%s165 + $0x14] sm:$0xf]
      %v177 = vld [vmem:[%s165 + $0x18] sm:$0xf]
      %v178 = vld [vmem:[%s165 + $0x1c] sm:$0xf]
      %v179 = vld [vmem:[%s165 + $0x20] sm:$0xf]
      %v180 = vld [vmem:[%s1] sm:$0xf]
      %v181 = vld [vmem:[%s1 + $0x4] sm:$0xf]
      %v182 = vld [vmem:[%s1 + $0x8] sm:$0xf]
      %v183 = vld [vmem:[%s1 + $0xc] sm:$0xf]
      %v184 = vld [vmem:[%s1 + $0x10] sm:$0xf]
      %v185 = vld [vmem:[%s1 + $0x14] sm:$0xf]
      %v186 = vld [vmem:[%s1 + $0x18] sm:$0xf]
      %v187 = vld [vmem:[%s1 + $0x1c] sm:$0xf]
      %v188 = vld [vmem:[%s1 + $0x20] sm:$0xf]
      %v189 = vld [vmem:[%s1 + $0x24] sm:$0xf]
      %v190 = vld [vmem:[%s1 + $0x28] sm:$0xf]
      %v191 = vld [vmem:[%s1 + $0x2c] sm:$0xf]
      %v192 = vld [vmem:[%s1 + $0x30] sm:$0xf]
      %v193 = vld [vmem:[%s1 + $0x34] sm:$0xf]
      %v194 = vld [vmem:[%s1 + $0x38] sm:$0xf]
      %v195 = vld [vmem:[%s1 + $0x3c] sm:$0xf]
      %s196 = scalar_lea.vmem %s165, 44
      %v197 = vld [vmem:[%s196] sm:$0xf]
      %v198 = vld [vmem:[%s196 + $0x4] sm:$0xf]
      %v199 = vld [vmem:[%s196 + $0x8] sm:$0xf]
      %v200 = vld [vmem:[%s196 + $0xc] sm:$0xf]
      %v201 = vld [vmem:[%s196 + $0x10] sm:$0xf]
      %v202 = vld [vmem:[%s196 + $0x14] sm:$0xf]
      %v203 = vld [vmem:[%s196 + $0x18] sm:$0xf]
      %v204 = vld [vmem:[%s196 + $0x1c] sm:$0xf]
      %v205 = vld [vmem:[%s196 + $0x20] sm:$0xf]
      %s206 = scalar_lea.vmem %s1, 64
      %v207 = vld [vmem:[%s206] sm:$0xf]
      %v208 = vld [vmem:[%s206 + $0x4] sm:$0xf]
      %v209 = vld [vmem:[%s206 + $0x8] sm:$0xf]
      %v210 = vld [vmem:[%s206 + $0xc] sm:$0xf]
      %v211 = vld [vmem:[%s206 + $0x10] sm:$0xf]
      %v212 = vld [vmem:[%s206 + $0x14] sm:$0xf]
      %v213 = vld [vmem:[%s206 + $0x18] sm:$0xf]
      %v214 = vld [vmem:[%s206 + $0x1c] sm:$0xf]
      %v215 = vld [vmem:[%s206 + $0x20] sm:$0xf]
      %v216 = vld [vmem:[%s206 + $0x24] sm:$0xf]
      %v217 = vld [vmem:[%s206 + $0x28] sm:$0xf]
      %v218 = vld [vmem:[%s206 + $0x2c] sm:$0xf]
      %v219 = vld [vmem:[%s206 + $0x30] sm:$0xf]
      %v220 = vld [vmem:[%s206 + $0x34] sm:$0xf]
      %v221 = vld [vmem:[%s206 + $0x38] sm:$0xf]
      %v222 = vld [vmem:[%s206 + $0x3c] sm:$0xf]
      %v232 = vunpack.c.l.b16 %v197
      %v233 = vunpack.c.l.b16 %v198
      %v234 = vunpack.c.l.b16 %v199
      %v235 = vunpack.c.l.b16 %v200
      %v236 = vunpack.c.l.b16 %v201
      %v237 = vunpack.c.l.b16 %v202
      %v238 = vunpack.c.l.b16 %v203
      %v239 = vunpack.c.l.b16 %v204
      %v240 = vunpack.c.l.b16 %v205
      %v241 = vpack.c.b16 %v233, %v232
      %v242 = vpack.c.b16 %v235, %v234
      %v243 = vpack.c.b16 %v237, %v236
      %v244 = vpack.c.b16 %v239, %v238
      %v245 = vpack.c.b16 %v240, %v240
      %v267 = vunpack.c.l.b16 %v207
      %v268 = vunpack.c.l.b16 %v208
      %v269 = vunpack.c.l.b16 %v209
      %v270 = vunpack.c.l.b16 %v210
      %v271 = vunpack.c.l.b16 %v211
      %v272 = vunpack.c.l.b16 %v212
      %v273 = vunpack.c.l.b16 %v213
      %v274 = vunpack.c.l.b16 %v214
      %v275 = vunpack.c.l.b16 %v215
      %v276 = vunpack.c.l.b16 %v216
      %v277 = vunpack.c.l.b16 %v217
      %v278 = vunpack.c.l.b16 %v218
      %v279 = vunpack.c.l.b16 %v219
      %v280 = vunpack.c.l.b16 %v220
      %v281 = vunpack.c.l.b16 %v221
      %v282 = vunpack.c.l.b16 %v222
      %v283 = vpack.c.b16 %v268, %v267
      %v284 = vpack.c.b16 %v270, %v269
      %v285 = vpack.c.b16 %v272, %v271
      %v286 = vpack.c.b16 %v274, %v273
      %v287 = vpack.c.b16 %v276, %v275
      %v288 = vpack.c.b16 %v278, %v277
      %v289 = vpack.c.b16 %v280, %v279
      %v290 = vpack.c.b16 %v282, %v281
      %299 = vmatpush.bf16.msra.mxu0 %v290
      %300 = vmatpush.bf16.msra.mxu0 %v289
      %301 = vmatpush.bf16.msra.mxu0 %v288
      %302 = vmatpush.bf16.msra.mxu0 %v287
      %303 = vmatpush.bf16.msra.mxu0 %v286
      %304 = vmatpush.bf16.msra.mxu0 %v285
      %305 = vmatpush.bf16.msra.mxu0 %v284
      %306 = vmatpush.bf16.msra.mxu0 %v283
      %307 = vmatmul.bf16.gmra.mxu0 %v241
      %v308 = vpop.f32.mrf.mxu0
      %v309 = vadd.f32 0.0, %v308
      %v310 = vpop.f32.mrf.mxu0
      %v311 = vadd.f32 0.0, %v310
      %312 = vmatmul.bf16.gmra.mxu0 %v242
      %v313 = vpop.f32.mrf.mxu0
      %v314 = vadd.f32 0.0, %v313
      %v315 = vpop.f32.mrf.mxu0
      %v316 = vadd.f32 0.0, %v315
      %317 = vmatmul.bf16.gmra.mxu0 %v243
      %v318 = vpop.f32.mrf.mxu0
      %v319 = vadd.f32 0.0, %v318
      %v320 = vpop.f32.mrf.mxu0
      %v321 = vadd.f32 0.0, %v320
      %322 = vmatmul.bf16.gmra.mxu0 %v244
      %v323 = vpop.f32.mrf.mxu0
      %v324 = vadd.f32 0.0, %v323
      %v325 = vpop.f32.mrf.mxu0
      %v326 = vadd.f32 0.0, %v325
      %327 = vmatmul.bf16.gmra.mxu0 %v245
      %v328 = vpop.f32.mrf.mxu0
      %v329 = vadd.f32 0.0, %v328
      %v330 = vpop.f32.mrf.mxu0
      %331 = vdwg.mxu0
      %v341 = vunpack.c.l.b16 %v171
      %v342 = vunpack.c.l.b16 %v172
      %v343 = vunpack.c.l.b16 %v173
      %v344 = vunpack.c.l.b16 %v174
      %v345 = vunpack.c.l.b16 %v175
      %v346 = vunpack.c.l.b16 %v176
      %v347 = vunpack.c.l.b16 %v177
      %v348 = vunpack.c.l.b16 %v178
      %v349 = vunpack.c.l.b16 %v179
      %v350 = vpack.c.b16 %v342, %v341
      %v351 = vpack.c.b16 %v344, %v343
      %v352 = vpack.c.b16 %v346, %v345
      %v353 = vpack.c.b16 %v348, %v347
      %v354 = vpack.c.b16 %v349, %v349
      %v376 = vunpack.c.l.b16 %v180
      %v377 = vunpack.c.l.b16 %v181
      %v378 = vunpack.c.l.b16 %v182
      %v379 = vunpack.c.l.b16 %v183
      %v380 = vunpack.c.l.b16 %v184
      %v381 = vunpack.c.l.b16 %v185
      %v382 = vunpack.c.l.b16 %v186
      %v383 = vunpack.c.l.b16 %v187
      %v384 = vunpack.c.l.b16 %v188
      %v385 = vunpack.c.l.b16 %v189
      %v386 = vunpack.c.l.b16 %v190
      %v387 = vunpack.c.l.b16 %v191
      %v388 = vunpack.c.l.b16 %v192
      %v389 = vunpack.c.l.b16 %v193
      %v390 = vunpack.c.l.b16 %v194
      %v391 = vunpack.c.l.b16 %v195
      %v392 = vpack.c.b16 %v377, %v376
      %v393 = vpack.c.b16 %v379, %v378
      %v394 = vpack.c.b16 %v381, %v380
      %v395 = vpack.c.b16 %v383, %v382
      %v396 = vpack.c.b16 %v385, %v384
      %v397 = vpack.c.b16 %v387, %v386
      %v398 = vpack.c.b16 %v389, %v388
      %v399 = vpack.c.b16 %v391, %v390
      %408 = vmatpush.bf16.msra.mxu0 %v399
      %409 = vmatpush.bf16.msra.mxu0 %v398
      %410 = vmatpush.bf16.msra.mxu0 %v397
      %411 = vmatpush.bf16.msra.mxu0 %v396
      %412 = vmatpush.bf16.msra.mxu0 %v395
      %413 = vmatpush.bf16.msra.mxu0 %v394
      %414 = vmatpush.bf16.msra.mxu0 %v393
      %415 = vmatpush.bf16.msra.mxu0 %v392
      %416 = vmatmul.bf16.gmra.mxu0 %v350
      %v417 = vpop.f32.mrf.mxu0
      %v418 = vadd.f32 %v309, %v417
      %v419 = vpop.f32.mrf.mxu0
      %v420 = vadd.f32 %v311, %v419
      %421 = vmatmul.bf16.gmra.mxu0 %v351
      %v422 = vpop.f32.mrf.mxu0
      %v423 = vadd.f32 %v314, %v422
      %v424 = vpop.f32.mrf.mxu0
      %v425 = vadd.f32 %v316, %v424
      %426 = vmatmul.bf16.gmra.mxu0 %v352
      %v427 = vpop.f32.mrf.mxu0
      %v428 = vadd.f32 %v319, %v427
      %v429 = vpop.f32.mrf.mxu0
      %v430 = vadd.f32 %v321, %v429
      %431 = vmatmul.bf16.gmra.mxu0 %v353
      %v432 = vpop.f32.mrf.mxu0
      %v433 = vadd.f32 %v324, %v432
      %v434 = vpop.f32.mrf.mxu0
      %v435 = vadd.f32 %v326, %v434
      %436 = vmatmul.bf16.gmra.mxu0 %v354
      %v437 = vpop.f32.mrf.mxu0
      %v438 = vadd.f32 %v329, %v437
      %v439 = vpop.f32.mrf.mxu0
      %440 = vdwg.mxu0
      %v441 = vld [vmem:[%s165] sm:$0xf]
      %v442 = vld [vmem:[%s165 + $0x4] sm:$0xf]
      %v443 = vld [vmem:[%s165 + $0x8] sm:$0xf]
      %v444 = vld [vmem:[%s165 + $0xc] sm:$0xf]
      %v445 = vld [vmem:[%s165 + $0x10] sm:$0xf]
      %v446 = vld [vmem:[%s165 + $0x14] sm:$0xf]
      %v447 = vld [vmem:[%s165 + $0x18] sm:$0xf]
      %v448 = vld [vmem:[%s165 + $0x1c] sm:$0xf]
      %v449 = vld [vmem:[%s165 + $0x20] sm:$0xf]
      %v450 = vld [vmem:[%s165 + $0x24] sm:$0x1]
      %s451 = scalar_lea.vmem %s1, 128
      %v452 = vld [vmem:[%s451] sm:$0xf]
      %v453 = vld [vmem:[%s451 + $0x4] sm:$0xf]
      %v454 = vld [vmem:[%s451 + $0x8] sm:$0xf]
      %v455 = vld [vmem:[%s451 + $0xc] sm:$0xf]
      %v456 = vld [vmem:[%s451 + $0x10] sm:$0xf]
      %v457 = vld [vmem:[%s451 + $0x14] sm:$0xf]
      %v458 = vld [vmem:[%s451 + $0x18] sm:$0xf]
      %v459 = vld [vmem:[%s451 + $0x1c] sm:$0xf]
      %v460 = vld [vmem:[%s451 + $0x20] sm:$0xf]
      %v461 = vld [vmem:[%s451 + $0x24] sm:$0xf]
      %v462 = vld [vmem:[%s451 + $0x28] sm:$0xf]
      %v463 = vld [vmem:[%s451 + $0x2c] sm:$0xf]
      %v464 = vld [vmem:[%s451 + $0x30] sm:$0xf]
      %v465 = vld [vmem:[%s451 + $0x34] sm:$0xf]
      %v466 = vld [vmem:[%s451 + $0x38] sm:$0xf]
      %v467 = vld [vmem:[%s451 + $0x3c] sm:$0xf]
      %v478 = vunpack.c.l.b16 %v441
      %v479 = vunpack.c.l.b16 %v442
      %v480 = vunpack.c.l.b16 %v443
      %v481 = vunpack.c.l.b16 %v444
      %v482 = vunpack.c.l.b16 %v445
      %v483 = vunpack.c.l.b16 %v446
      %v484 = vunpack.c.l.b16 %v447
      %v485 = vunpack.c.l.b16 %v448
      %v486 = vunpack.c.l.b16 %v449
      %v487 = vunpack.c.l.b16 %v450
      %v488 = vpack.c.b16 %v479, %v478
      %v489 = vpack.c.b16 %v481, %v480
      %v490 = vpack.c.b16 %v483, %v482
      %v491 = vpack.c.b16 %v485, %v484
      %v492 = vpack.c.b16 %v487, %v486
      %vm493 = vsmask.f32 7424
      %v495 = vshrl.u32 %v488, 16
      %v497 = vshll.u32 %v488, 16
      %v499 = vrot.slane %v497, 1
      %v500 = vor.u32 %v495, %v499
      %v502 = vshll.u32 %v489, 16
      %v504 = vrot.slane %v502, 1
      %v505 = vsel %vm493, %v500, %v504
      %v506 = vshrl.u32 %v489, 16
      %v508 = vor.u32 %v506, %v504
      %v510 = vshll.u32 %v490, 16
      %v512 = vrot.slane %v510, 1
      %v513 = vsel %vm493, %v508, %v512
      %v514 = vshrl.u32 %v490, 16
      %v516 = vor.u32 %v514, %v512
      %v518 = vshll.u32 %v491, 16
      %v520 = vrot.slane %v518, 1
      %v521 = vsel %vm493, %v516, %v520
      %v522 = vshrl.u32 %v491, 16
      %v524 = vor.u32 %v522, %v520
      %v526 = vshll.u32 %v492, 16
      %v528 = vrot.slane %v526, 1
      %v529 = vsel %vm493, %v524, %v528
      %v530 = vshrl.u32 %v492, 16
      %v532 = vor.u32 %v530, %v528
      %v554 = vunpack.c.l.b16 %v452
      %v555 = vunpack.c.l.b16 %v453
      %v556 = vunpack.c.l.b16 %v454
      %v557 = vunpack.c.l.b16 %v455
      %v558 = vunpack.c.l.b16 %v456
      %v559 = vunpack.c.l.b16 %v457
      %v560 = vunpack.c.l.b16 %v458
      %v561 = vunpack.c.l.b16 %v459
      %v562 = vunpack.c.l.b16 %v460
      %v563 = vunpack.c.l.b16 %v461
      %v564 = vunpack.c.l.b16 %v462
      %v565 = vunpack.c.l.b16 %v463
      %v566 = vunpack.c.l.b16 %v464
      %v567 = vunpack.c.l.b16 %v465
      %v568 = vunpack.c.l.b16 %v466
      %v569 = vunpack.c.l.b16 %v467
      %v570 = vpack.c.b16 %v555, %v554
      %v571 = vpack.c.b16 %v557, %v556
      %v572 = vpack.c.b16 %v559, %v558
      %v573 = vpack.c.b16 %v561, %v560
      %v574 = vpack.c.b16 %v563, %v562
      %v575 = vpack.c.b16 %v565, %v564
      %v576 = vpack.c.b16 %v567, %v566
      %v577 = vpack.c.b16 %v569, %v568
      %586 = vmatpush.bf16.msra.mxu0 %v577
      %587 = vmatpush.bf16.msra.mxu0 %v576
      %588 = vmatpush.bf16.msra.mxu0 %v575
      %589 = vmatpush.bf16.msra.mxu0 %v574
      %590 = vmatpush.bf16.msra.mxu0 %v573
      %591 = vmatpush.bf16.msra.mxu0 %v572
      %592 = vmatpush.bf16.msra.mxu0 %v571
      %593 = vmatpush.bf16.msra.mxu0 %v570
      %594 = vmatmul.bf16.gmra.mxu0 %v505
      %v595 = vpop.f32.mrf.mxu0
      %v596 = vadd.f32 0.0, %v595
      %v597 = vpop.f32.mrf.mxu0
      %v598 = vadd.f32 0.0, %v597
      %599 = vmatmul.bf16.gmra.mxu0 %v513
      %v600 = vpop.f32.mrf.mxu0
      %v601 = vadd.f32 0.0, %v600
      %v602 = vpop.f32.mrf.mxu0
      %v603 = vadd.f32 0.0, %v602
      %604 = vmatmul.bf16.gmra.mxu0 %v521
      %v605 = vpop.f32.mrf.mxu0
      %v606 = vadd.f32 0.0, %v605
      %v607 = vpop.f32.mrf.mxu0
      %v608 = vadd.f32 0.0, %v607
      %609 = vmatmul.bf16.gmra.mxu0 %v529
      %v610 = vpop.f32.mrf.mxu0
      %v611 = vadd.f32 0.0, %v610
      %v612 = vpop.f32.mrf.mxu0
      %v613 = vadd.f32 0.0, %v612
      %614 = vmatmul.bf16.gmra.mxu0 %v532
      %v615 = vpop.f32.mrf.mxu0
      %v616 = vadd.f32 0.0, %v615
      %v617 = vpop.f32.mrf.mxu0
      %618 = vdwg.mxu0
      %v619 = vadd.f32 %v418, %v596
      %v620 = vadd.f32 %v420, %v598
      %v621 = vadd.f32 %v423, %v601
      %v622 = vadd.f32 %v425, %v603
      %v623 = vadd.f32 %v428, %v606
      %v624 = vadd.f32 %v430, %v608
      %v625 = vadd.f32 %v433, %v611
      %v626 = vadd.f32 %v435, %v613
      %v627 = vadd.f32 %v438, %v616
      %s628 = scalar_lea.vmem %s165, 88
      %v629 = vld [vmem:[%s628] sm:$0xf]
      %v630 = vld [vmem:[%s628 + $0x4] sm:$0xf]
      %v631 = vld [vmem:[%s628 + $0x8] sm:$0xf]
      %v632 = vld [vmem:[%s628 + $0xc] sm:$0xf]
      %v633 = vld [vmem:[%s628 + $0x10] sm:$0xf]
      %v634 = vld [vmem:[%s628 + $0x14] sm:$0xf]
      %v635 = vld [vmem:[%s628 + $0x18] sm:$0xf]
      %v636 = vld [vmem:[%s628 + $0x1c] sm:$0xf]
      %v637 = vld [vmem:[%s628 + $0x20] sm:$0xf]
      %s638 = scalar_lea.vmem %s1, 192
      %v639 = vld [vmem:[%s638] sm:$0xf]
      %v640 = vld [vmem:[%s638 + $0x4] sm:$0xf]
      %v641 = vld [vmem:[%s638 + $0x8] sm:$0xf]
      %v642 = vld [vmem:[%s638 + $0xc] sm:$0xf]
      %v643 = vld [vmem:[%s638 + $0x10] sm:$0xf]
      %v644 = vld [vmem:[%s638 + $0x14] sm:$0xf]
      %v645 = vld [vmem:[%s638 + $0x18] sm:$0xf]
      %v646 = vld [vmem:[%s638 + $0x1c] sm:$0xf]
      %v647 = vld [vmem:[%s638 + $0x20] sm:$0xf]
      %v648 = vld [vmem:[%s638 + $0x24] sm:$0xf]
      %v649 = vld [vmem:[%s638 + $0x28] sm:$0xf]
      %v650 = vld [vmem:[%s638 + $0x2c] sm:$0xf]
      %v651 = vld [vmem:[%s638 + $0x30] sm:$0xf]
      %v652 = vld [vmem:[%s638 + $0x34] sm:$0xf]
      %v653 = vld [vmem:[%s638 + $0x38] sm:$0xf]
      %v654 = vld [vmem:[%s638 + $0x3c] sm:$0xf]
      %v664 = vunpack.c.l.b16 %v629
      %v665 = vunpack.c.l.b16 %v630
      %v666 = vunpack.c.l.b16 %v631
      %v667 = vunpack.c.l.b16 %v632
      %v668 = vunpack.c.l.b16 %v633
      %v669 = vunpack.c.l.b16 %v634
      %v670 = vunpack.c.l.b16 %v635
      %v671 = vunpack.c.l.b16 %v636
      %v672 = vunpack.c.l.b16 %v637
      %v673 = vpack.c.b16 %v665, %v664
      %v674 = vpack.c.b16 %v667, %v666
      %v675 = vpack.c.b16 %v669, %v668
      %v676 = vpack.c.b16 %v671, %v670
      %v677 = vpack.c.b16 %v672, %v672
      %v699 = vunpack.c.l.b16 %v639
      %v700 = vunpack.c.l.b16 %v640
      %v701 = vunpack.c.l.b16 %v641
      %v702 = vunpack.c.l.b16 %v642
      %v703 = vunpack.c.l.b16 %v643
      %v704 = vunpack.c.l.b16 %v644
      %v705 = vunpack.c.l.b16 %v645
      %v706 = vunpack.c.l.b16 %v646
      %v707 = vunpack.c.l.b16 %v647
      %v708 = vunpack.c.l.b16 %v648
      %v709 = vunpack.c.l.b16 %v649
      %v710 = vunpack.c.l.b16 %v650
      %v711 = vunpack.c.l.b16 %v651
      %v712 = vunpack.c.l.b16 %v652
      %v713 = vunpack.c.l.b16 %v653
      %v714 = vunpack.c.l.b16 %v654
      %v715 = vpack.c.b16 %v700, %v699
      %v716 = vpack.c.b16 %v702, %v701
      %v717 = vpack.c.b16 %v704, %v703
      %v718 = vpack.c.b16 %v706, %v705
      %v719 = vpack.c.b16 %v708, %v707
      %v720 = vpack.c.b16 %v710, %v709
      %v721 = vpack.c.b16 %v712, %v711
      %v722 = vpack.c.b16 %v714, %v713
      %731 = vmatpush.bf16.msra.mxu0 %v722
      %732 = vmatpush.bf16.msra.mxu0 %v721
      %733 = vmatpush.bf16.msra.mxu0 %v720
      %734 = vmatpush.bf16.msra.mxu0 %v719
      %735 = vmatpush.bf16.msra.mxu0 %v718
      %736 = vmatpush.bf16.msra.mxu0 %v717
      %737 = vmatpush.bf16.msra.mxu0 %v716
      %738 = vmatpush.bf16.msra.mxu0 %v715
      %739 = vmatmul.bf16.gmra.mxu0 %v673
      %v740 = vpop.f32.mrf.mxu0
      %v741 = vadd.f32 0.0, %v740
      %v742 = vpop.f32.mrf.mxu0
      %v743 = vadd.f32 0.0, %v742
      %744 = vmatmul.bf16.gmra.mxu0 %v674
      %v745 = vpop.f32.mrf.mxu0
      %v746 = vadd.f32 0.0, %v745
      %v747 = vpop.f32.mrf.mxu0
      %v748 = vadd.f32 0.0, %v747
      %749 = vmatmul.bf16.gmra.mxu0 %v675
      %v750 = vpop.f32.mrf.mxu0
      %v751 = vadd.f32 0.0, %v750
      %v752 = vpop.f32.mrf.mxu0
      %v753 = vadd.f32 0.0, %v752
      %754 = vmatmul.bf16.gmra.mxu0 %v676
      %v755 = vpop.f32.mrf.mxu0
      %v756 = vadd.f32 0.0, %v755
      %v757 = vpop.f32.mrf.mxu0
      %v758 = vadd.f32 0.0, %v757
      %759 = vmatmul.bf16.gmra.mxu0 %v677
      %v760 = vpop.f32.mrf.mxu0
      %v761 = vadd.f32 0.0, %v760
      %v762 = vpop.f32.mrf.mxu0
      %763 = vdwg.mxu0
      %v764 = vadd.f32 %v619, %v741
      %v765 = vadd.f32 %v620, %v743
      %v766 = vadd.f32 %v621, %v746
      %v767 = vadd.f32 %v622, %v748
      %v768 = vadd.f32 %v623, %v751
      %v769 = vadd.f32 %v624, %v753
      %v770 = vadd.f32 %v625, %v756
      %v771 = vadd.f32 %v626, %v758
      %v772 = vadd.f32 %v627, %v761
      %s773 = scalar_lea.vmem %s165, 132
      %v774 = vld [vmem:[%s773] sm:$0xf]
      %v775 = vld [vmem:[%s773 + $0x4] sm:$0xf]
      %v776 = vld [vmem:[%s773 + $0x8] sm:$0xf]
      %v777 = vld [vmem:[%s773 + $0xc] sm:$0xf]
      %v778 = vld [vmem:[%s773 + $0x10] sm:$0xf]
      %v779 = vld [vmem:[%s773 + $0x14] sm:$0xf]
      %v780 = vld [vmem:[%s773 + $0x18] sm:$0xf]
      %v781 = vld [vmem:[%s773 + $0x1c] sm:$0xf]
      %v782 = vld [vmem:[%s773 + $0x20] sm:$0xf]
      %s783 = scalar_lea.vmem %s1, 256
      %v784 = vld [vmem:[%s783] sm:$0xf]
      %v785 = vld [vmem:[%s783 + $0x4] sm:$0xf]
      %v786 = vld [vmem:[%s783 + $0x8] sm:$0xf]
      %v787 = vld [vmem:[%s783 + $0xc] sm:$0xf]
      %v788 = vld [vmem:[%s783 + $0x10] sm:$0xf]
      %v789 = vld [vmem:[%s783 + $0x14] sm:$0xf]
      %v790 = vld [vmem:[%s783 + $0x18] sm:$0xf]
      %v791 = vld [vmem:[%s783 + $0x1c] sm:$0xf]
      %v792 = vld [vmem:[%s783 + $0x20] sm:$0xf]
      %v793 = vld [vmem:[%s783 + $0x24] sm:$0xf]
      %v794 = vld [vmem:[%s783 + $0x28] sm:$0xf]
      %v795 = vld [vmem:[%s783 + $0x2c] sm:$0xf]
      %v796 = vld [vmem:[%s783 + $0x30] sm:$0xf]
      %v797 = vld [vmem:[%s783 + $0x34] sm:$0xf]
      %v798 = vld [vmem:[%s783 + $0x38] sm:$0xf]
      %v799 = vld [vmem:[%s783 + $0x3c] sm:$0xf]
      %v809 = vunpack.c.l.b16 %v774
      %v810 = vunpack.c.l.b16 %v775
      %v811 = vunpack.c.l.b16 %v776
      %v812 = vunpack.c.l.b16 %v777
      %v813 = vunpack.c.l.b16 %v778
      %v814 = vunpack.c.l.b16 %v779
      %v815 = vunpack.c.l.b16 %v780
      %v816 = vunpack.c.l.b16 %v781
      %v817 = vunpack.c.l.b16 %v782
      %v818 = vpack.c.b16 %v810, %v809
      %v819 = vpack.c.b16 %v812, %v811
      %v820 = vpack.c.b16 %v814, %v813
      %v821 = vpack.c.b16 %v816, %v815
      %v822 = vpack.c.b16 %v817, %v817
      %v844 = vunpack.c.l.b16 %v784
      %v845 = vunpack.c.l.b16 %v785
      %v846 = vunpack.c.l.b16 %v786
      %v847 = vunpack.c.l.b16 %v787
      %v848 = vunpack.c.l.b16 %v788
      %v849 = vunpack.c.l.b16 %v789
      %v850 = vunpack.c.l.b16 %v790
      %v851 = vunpack.c.l.b16 %v791
      %v852 = vunpack.c.l.b16 %v792
      %v853 = vunpack.c.l.b16 %v793
      %v854 = vunpack.c.l.b16 %v794
      %v855 = vunpack.c.l.b16 %v795
      %v856 = vunpack.c.l.b16 %v796
      %v857 = vunpack.c.l.b16 %v797
      %v858 = vunpack.c.l.b16 %v798
      %v859 = vunpack.c.l.b16 %v799
      %v860 = vpack.c.b16 %v845, %v844
      %v861 = vpack.c.b16 %v847, %v846
      %v862 = vpack.c.b16 %v849, %v848
      %v863 = vpack.c.b16 %v851, %v850
      %v864 = vpack.c.b16 %v853, %v852
      %v865 = vpack.c.b16 %v855, %v854
      %v866 = vpack.c.b16 %v857, %v856
      %v867 = vpack.c.b16 %v859, %v858
      %876 = vmatpush.bf16.msra.mxu0 %v867
      %877 = vmatpush.bf16.msra.mxu0 %v866
      %878 = vmatpush.bf16.msra.mxu0 %v865
      %879 = vmatpush.bf16.msra.mxu0 %v864
      %880 = vmatpush.bf16.msra.mxu0 %v863
      %881 = vmatpush.bf16.msra.mxu0 %v862
      %882 = vmatpush.bf16.msra.mxu0 %v861
      %883 = vmatpush.bf16.msra.mxu0 %v860
      %884 = vmatmul.bf16.gmra.mxu0 %v818
      %v885 = vpop.f32.mrf.mxu0
      %v886 = vadd.f32 0.0, %v885
      %v887 = vpop.f32.mrf.mxu0
      %v888 = vadd.f32 0.0, %v887
      %889 = vmatmul.bf16.gmra.mxu0 %v819
      %v890 = vpop.f32.mrf.mxu0
      %v891 = vadd.f32 0.0, %v890
      %v892 = vpop.f32.mrf.mxu0
      %v893 = vadd.f32 0.0, %v892
      %894 = vmatmul.bf16.gmra.mxu0 %v820
      %v895 = vpop.f32.mrf.mxu0
      %v896 = vadd.f32 0.0, %v895
      %v897 = vpop.f32.mrf.mxu0
      %v898 = vadd.f32 0.0, %v897
      %899 = vmatmul.bf16.gmra.mxu0 %v821
      %v900 = vpop.f32.mrf.mxu0
      %v901 = vadd.f32 0.0, %v900
      %v902 = vpop.f32.mrf.mxu0
      %v903 = vadd.f32 0.0, %v902
      %904 = vmatmul.bf16.gmra.mxu0 %v822
      %v905 = vpop.f32.mrf.mxu0
      %v906 = vadd.f32 0.0, %v905
      %v907 = vpop.f32.mrf.mxu0
      %908 = vdwg.mxu0
      %v909 = vadd.f32 %v764, %v886
      %v910 = vadd.f32 %v765, %v888
      %v911 = vadd.f32 %v766, %v891
      %v912 = vadd.f32 %v767, %v893
      %v913 = vadd.f32 %v768, %v896
      %v914 = vadd.f32 %v769, %v898
      %v915 = vadd.f32 %v770, %v901
      %v916 = vadd.f32 %v771, %v903
      %v917 = vadd.f32 %v772, %v906
      %v918 = vld [vmem:[%s628] sm:$0xf]
      %v919 = vld [vmem:[%s628 + $0x4] sm:$0xf]
      %v920 = vld [vmem:[%s628 + $0x8] sm:$0xf]
      %v921 = vld [vmem:[%s628 + $0xc] sm:$0xf]
      %v922 = vld [vmem:[%s628 + $0x10] sm:$0xf]
      %v923 = vld [vmem:[%s628 + $0x14] sm:$0xf]
      %v924 = vld [vmem:[%s628 + $0x18] sm:$0xf]
      %v925 = vld [vmem:[%s628 + $0x1c] sm:$0xf]
      %v926 = vld [vmem:[%s628 + $0x20] sm:$0xf]
      %v927 = vld [vmem:[%s628 + $0x24] sm:$0x1]
      %s928 = scalar_lea.vmem %s1, 320
      %v929 = vld [vmem:[%s928] sm:$0xf]
      %v930 = vld [vmem:[%s928 + $0x4] sm:$0xf]
      %v931 = vld [vmem:[%s928 + $0x8] sm:$0xf]
      %v932 = vld [vmem:[%s928 + $0xc] sm:$0xf]
      %v933 = vld [vmem:[%s928 + $0x10] sm:$0xf]
      %v934 = vld [vmem:[%s928 + $0x14] sm:$0xf]
      %v935 = vld [vmem:[%s928 + $0x18] sm:$0xf]
      %v936 = vld [vmem:[%s928 + $0x1c] sm:$0xf]
      %v937 = vld [vmem:[%s928 + $0x20] sm:$0xf]
      %v938 = vld [vmem:[%s928 + $0x24] sm:$0xf]
      %v939 = vld [vmem:[%s928 + $0x28] sm:$0xf]
      %v940 = vld [vmem:[%s928 + $0x2c] sm:$0xf]
      %v941 = vld [vmem:[%s928 + $0x30] sm:$0xf]
      %v942 = vld [vmem:[%s928 + $0x34] sm:$0xf]
      %v943 = vld [vmem:[%s928 + $0x38] sm:$0xf]
      %v944 = vld [vmem:[%s928 + $0x3c] sm:$0xf]
      %v955 = vunpack.c.l.b16 %v918
      %v956 = vunpack.c.l.b16 %v919
      %v957 = vunpack.c.l.b16 %v920
      %v958 = vunpack.c.l.b16 %v921
      %v959 = vunpack.c.l.b16 %v922
      %v960 = vunpack.c.l.b16 %v923
      %v961 = vunpack.c.l.b16 %v924
      %v962 = vunpack.c.l.b16 %v925
      %v963 = vunpack.c.l.b16 %v926
      %v964 = vunpack.c.l.b16 %v927
      %v965 = vpack.c.b16 %v956, %v955
      %v966 = vpack.c.b16 %v958, %v957
      %v967 = vpack.c.b16 %v960, %v959
      %v968 = vpack.c.b16 %v962, %v961
      %v969 = vpack.c.b16 %v964, %v963
      %v971 = vshrl.u32 %v965, 16
      %v973 = vshll.u32 %v965, 16
      %v975 = vrot.slane %v973, 1
      %v976 = vor.u32 %v971, %v975
      %v978 = vshll.u32 %v966, 16
      %v980 = vrot.slane %v978, 1
      %v981 = vsel %vm493, %v976, %v980
      %v982 = vshrl.u32 %v966, 16
      %v984 = vor.u32 %v982, %v980
      %v986 = vshll.u32 %v967, 16
      %v988 = vrot.slane %v986, 1
      %v989 = vsel %vm493, %v984, %v988
      %v990 = vshrl.u32 %v967, 16
      %v992 = vor.u32 %v990, %v988
      %v994 = vshll.u32 %v968, 16
      %v996 = vrot.slane %v994, 1
      %v997 = vsel %vm493, %v992, %v996
      %v998 = vshrl.u32 %v968, 16
      %v1000 = vor.u32 %v998, %v996
      %v1002 = vshll.u32 %v969, 16
      %v1004 = vrot.slane %v1002, 1
      %v1005 = vsel %vm493, %v1000, %v1004
      %v1006 = vshrl.u32 %v969, 16
      %v1008 = vor.u32 %v1006, %v1004
      %v1030 = vunpack.c.l.b16 %v929
      %v1031 = vunpack.c.l.b16 %v930
      %v1032 = vunpack.c.l.b16 %v931
      %v1033 = vunpack.c.l.b16 %v932
      %v1034 = vunpack.c.l.b16 %v933
      %v1035 = vunpack.c.l.b16 %v934
      %v1036 = vunpack.c.l.b16 %v935
      %v1037 = vunpack.c.l.b16 %v936
      %v1038 = vunpack.c.l.b16 %v937
      %v1039 = vunpack.c.l.b16 %v938
      %v1040 = vunpack.c.l.b16 %v939
      %v1041 = vunpack.c.l.b16 %v940
      %v1042 = vunpack.c.l.b16 %v941
      %v1043 = vunpack.c.l.b16 %v942
      %v1044 = vunpack.c.l.b16 %v943
      %v1045 = vunpack.c.l.b16 %v944
      %v1046 = vpack.c.b16 %v1031, %v1030
      %v1047 = vpack.c.b16 %v1033, %v1032
      %v1048 = vpack.c.b16 %v1035, %v1034
      %v1049 = vpack.c.b16 %v1037, %v1036
      %v1050 = vpack.c.b16 %v1039, %v1038
      %v1051 = vpack.c.b16 %v1041, %v1040
      %v1052 = vpack.c.b16 %v1043, %v1042
      %v1053 = vpack.c.b16 %v1045, %v1044
      %1062 = vmatpush.bf16.msra.mxu0 %v1053
      %1063 = vmatpush.bf16.msra.mxu0 %v1052
      %1064 = vmatpush.bf16.msra.mxu0 %v1051
      %1065 = vmatpush.bf16.msra.mxu0 %v1050
      %1066 = vmatpush.bf16.msra.mxu0 %v1049
      %1067 = vmatpush.bf16.msra.mxu0 %v1048
      %1068 = vmatpush.bf16.msra.mxu0 %v1047
      %1069 = vmatpush.bf16.msra.mxu0 %v1046
      %1070 = vmatmul.bf16.gmra.mxu0 %v981
      %v1071 = vpop.f32.mrf.mxu0
      %v1072 = vadd.f32 0.0, %v1071
      %v1073 = vpop.f32.mrf.mxu0
      %v1074 = vadd.f32 0.0, %v1073
      %1075 = vmatmul.bf16.gmra.mxu0 %v989
      %v1076 = vpop.f32.mrf.mxu0
      %v1077 = vadd.f32 0.0, %v1076
      %v1078 = vpop.f32.mrf.mxu0
      %v1079 = vadd.f32 0.0, %v1078
      %1080 = vmatmul.bf16.gmra.mxu0 %v997
      %v1081 = vpop.f32.mrf.mxu0
      %v1082 = vadd.f32 0.0, %v1081
      %v1083 = vpop.f32.mrf.mxu0
      %v1084 = vadd.f32 0.0, %v1083
      %1085 = vmatmul.bf16.gmra.mxu0 %v1005
      %v1086 = vpop.f32.mrf.mxu0
      %v1087 = vadd.f32 0.0, %v1086
      %v1088 = vpop.f32.mrf.mxu0
      %v1089 = vadd.f32 0.0, %v1088
      %1090 = vmatmul.bf16.gmra.mxu0 %v1008
      %v1091 = vpop.f32.mrf.mxu0
      %v1092 = vadd.f32 0.0, %v1091
      %v1093 = vpop.f32.mrf.mxu0
      %1094 = vdwg.mxu0
      %v1095 = vadd.f32 %v909, %v1072
      %v1096 = vadd.f32 %v910, %v1074
      %v1097 = vadd.f32 %v911, %v1077
      %v1098 = vadd.f32 %v912, %v1079
      %v1099 = vadd.f32 %v913, %v1082
      %v1100 = vadd.f32 %v914, %v1084
      %v1101 = vadd.f32 %v915, %v1087
      %v1102 = vadd.f32 %v916, %v1089
      %v1103 = vadd.f32 %v917, %v1092
      %v1104 = vld [vmem:[%s165 + $0x4] sm:$0xf]
      %v1105 = vld [vmem:[%s165 + $0x8] sm:$0xf]
      %v1106 = vld [vmem:[%s165 + $0xc] sm:$0xf]
      %v1107 = vld [vmem:[%s165 + $0x10] sm:$0xf]
      %v1108 = vld [vmem:[%s165 + $0x14] sm:$0xf]
      %v1109 = vld [vmem:[%s165 + $0x18] sm:$0xf]
      %v1110 = vld [vmem:[%s165 + $0x1c] sm:$0xf]
      %v1111 = vld [vmem:[%s165 + $0x20] sm:$0xf]
      %v1112 = vld [vmem:[%s165 + $0x24] sm:$0xf]
      %v1113 = vld [vmem:[%s165 + $0x28] sm:$0x1]
      %s1114 = scalar_lea.vmem %s1, 384
      %v1115 = vld [vmem:[%s1114] sm:$0xf]
      %v1116 = vld [vmem:[%s1114 + $0x4] sm:$0xf]
      %v1117 = vld [vmem:[%s1114 + $0x8] sm:$0xf]
      %v1118 = vld [vmem:[%s1114 + $0xc] sm:$0xf]
      %v1119 = vld [vmem:[%s1114 + $0x10] sm:$0xf]
      %v1120 = vld [vmem:[%s1114 + $0x14] sm:$0xf]
      %v1121 = vld [vmem:[%s1114 + $0x18] sm:$0xf]
      %v1122 = vld [vmem:[%s1114 + $0x1c] sm:$0xf]
      %v1123 = vld [vmem:[%s1114 + $0x20] sm:$0xf]
      %v1124 = vld [vmem:[%s1114 + $0x24] sm:$0xf]
      %v1125 = vld [vmem:[%s1114 + $0x28] sm:$0xf]
      %v1126 = vld [vmem:[%s1114 + $0x2c] sm:$0xf]
      %v1127 = vld [vmem:[%s1114 + $0x30] sm:$0xf]
      %v1128 = vld [vmem:[%s1114 + $0x34] sm:$0xf]
      %v1129 = vld [vmem:[%s1114 + $0x38] sm:$0xf]
      %v1130 = vld [vmem:[%s1114 + $0x3c] sm:$0xf]
      %v1141 = vunpack.c.l.b16 %v1104
      %v1142 = vunpack.c.l.b16 %v1105
      %v1143 = vunpack.c.l.b16 %v1106
      %v1144 = vunpack.c.l.b16 %v1107
      %v1145 = vunpack.c.l.b16 %v1108
      %v1146 = vunpack.c.l.b16 %v1109
      %v1147 = vunpack.c.l.b16 %v1110
      %v1148 = vunpack.c.l.b16 %v1111
      %v1149 = vunpack.c.l.b16 %v1112
      %v1150 = vunpack.c.l.b16 %v1113
      %v1151 = vpack.c.b16 %v1142, %v1141
      %v1152 = vpack.c.b16 %v1144, %v1143
      %v1153 = vpack.c.b16 %v1146, %v1145
      %v1154 = vpack.c.b16 %v1148, %v1147
      %v1155 = vpack.c.b16 %v1150, %v1149
      %v1157 = vshrl.u32 %v1151, 16
      %v1159 = vshll.u32 %v1151, 16
      %v1161 = vrot.slane %v1159, 1
      %v1162 = vor.u32 %v1157, %v1161
      %v1164 = vshll.u32 %v1152, 16
      %v1166 = vrot.slane %v1164, 1
      %v1167 = vsel %vm493, %v1162, %v1166
      %v1168 = vshrl.u32 %v1152, 16
      %v1170 = vor.u32 %v1168, %v1166
      %v1172 = vshll.u32 %v1153, 16
      %v1174 = vrot.slane %v1172, 1
      %v1175 = vsel %vm493, %v1170, %v1174
      %v1176 = vshrl.u32 %v1153, 16
      %v1178 = vor.u32 %v1176, %v1174
      %v1180 = vshll.u32 %v1154, 16
      %v1182 = vrot.slane %v1180, 1
      %v1183 = vsel %vm493, %v1178, %v1182
      %v1184 = vshrl.u32 %v1154, 16
      %v1186 = vor.u32 %v1184, %v1182
      %v1188 = vshll.u32 %v1155, 16
      %v1190 = vrot.slane %v1188, 1
      %v1191 = vsel %vm493, %v1186, %v1190
      %v1192 = vshrl.u32 %v1155, 16
      %v1194 = vor.u32 %v1192, %v1190
      %v1216 = vunpack.c.l.b16 %v1115
      %v1217 = vunpack.c.l.b16 %v1116
      %v1218 = vunpack.c.l.b16 %v1117
      %v1219 = vunpack.c.l.b16 %v1118
      %v1220 = vunpack.c.l.b16 %v1119
      %v1221 = vunpack.c.l.b16 %v1120
      %v1222 = vunpack.c.l.b16 %v1121
      %v1223 = vunpack.c.l.b16 %v1122
      %v1224 = vunpack.c.l.b16 %v1123
      %v1225 = vunpack.c.l.b16 %v1124
      %v1226 = vunpack.c.l.b16 %v1125
      %v1227 = vunpack.c.l.b16 %v1126
      %v1228 = vunpack.c.l.b16 %v1127
      %v1229 = vunpack.c.l.b16 %v1128
      %v1230 = vunpack.c.l.b16 %v1129
      %v1231 = vunpack.c.l.b16 %v1130
      %v1232 = vpack.c.b16 %v1217, %v1216
      %v1233 = vpack.c.b16 %v1219, %v1218
      %v1234 = vpack.c.b16 %v1221, %v1220
      %v1235 = vpack.c.b16 %v1223, %v1222
      %v1236 = vpack.c.b16 %v1225, %v1224
      %v1237 = vpack.c.b16 %v1227, %v1226
      %v1238 = vpack.c.b16 %v1229, %v1228
      %v1239 = vpack.c.b16 %v1231, %v1230
      %1248 = vmatpush.bf16.msra.mxu0 %v1239
      %1249 = vmatpush.bf16.msra.mxu0 %v1238
      %1250 = vmatpush.bf16.msra.mxu0 %v1237
      %1251 = vmatpush.bf16.msra.mxu0 %v1236
      %1252 = vmatpush.bf16.msra.mxu0 %v1235
      %1253 = vmatpush.bf16.msra.mxu0 %v1234
      %1254 = vmatpush.bf16.msra.mxu0 %v1233
      %1255 = vmatpush.bf16.msra.mxu0 %v1232
      %1256 = vmatmul.bf16.gmra.mxu0 %v1167
      %v1257 = vpop.f32.mrf.mxu0
      %v1258 = vadd.f32 0.0, %v1257
      %v1259 = vpop.f32.mrf.mxu0
      %v1260 = vadd.f32 0.0, %v1259
      %1261 = vmatmul.bf16.gmra.mxu0 %v1175
      %v1262 = vpop.f32.mrf.mxu0
      %v1263 = vadd.f32 0.0, %v1262
      %v1264 = vpop.f32.mrf.mxu0
      %v1265 = vadd.f32 0.0, %v1264
      %1266 = vmatmul.bf16.gmra.mxu0 %v1183
      %v1267 = vpop.f32.mrf.mxu0
      %v1268 = vadd.f32 0.0, %v1267
      %v1269 = vpop.f32.mrf.mxu0
      %v1270 = vadd.f32 0.0, %v1269
      %1271 = vmatmul.bf16.gmra.mxu0 %v1191
      %v1272 = vpop.f32.mrf.mxu0
      %v1273 = vadd.f32 0.0, %v1272
      %v1274 = vpop.f32.mrf.mxu0
      %v1275 = vadd.f32 0.0, %v1274
      %1276 = vmatmul.bf16.gmra.mxu0 %v1194
      %v1277 = vpop.f32.mrf.mxu0
      %v1278 = vadd.f32 0.0, %v1277
      %v1279 = vpop.f32.mrf.mxu0
      %1280 = vdwg.mxu0
      %v1281 = vadd.f32 %v1095, %v1258
      %v1282 = vadd.f32 %v1096, %v1260
      %v1283 = vadd.f32 %v1097, %v1263
      %v1284 = vadd.f32 %v1098, %v1265
      %v1285 = vadd.f32 %v1099, %v1268
      %v1286 = vadd.f32 %v1100, %v1270
      %v1287 = vadd.f32 %v1101, %v1273
      %v1288 = vadd.f32 %v1102, %v1275
      %v1289 = vadd.f32 %v1103, %v1278
      %v1290 = vld [vmem:[%s196 + $0x4] sm:$0xf]
      %v1291 = vld [vmem:[%s196 + $0x8] sm:$0xf]
      %v1292 = vld [vmem:[%s196 + $0xc] sm:$0xf]
      %v1293 = vld [vmem:[%s196 + $0x10] sm:$0xf]
      %v1294 = vld [vmem:[%s196 + $0x14] sm:$0xf]
      %v1295 = vld [vmem:[%s196 + $0x18] sm:$0xf]
      %v1296 = vld [vmem:[%s196 + $0x1c] sm:$0xf]
      %v1297 = vld [vmem:[%s196 + $0x20] sm:$0xf]
      %v1298 = vld [vmem:[%s196 + $0x24] sm:$0xf]
      %v1299 = vld [vmem:[%s196 + $0x28] sm:$0x1]
      %s1300 = scalar_lea.vmem %s1, 448
      %v1301 = vld [vmem:[%s1300] sm:$0xf]
      %v1302 = vld [vmem:[%s1300 + $0x4] sm:$0xf]
      %v1303 = vld [vmem:[%s1300 + $0x8] sm:$0xf]
      %v1304 = vld [vmem:[%s1300 + $0xc] sm:$0xf]
      %v1305 = vld [vmem:[%s1300 + $0x10] sm:$0xf]
      %v1306 = vld [vmem:[%s1300 + $0x14] sm:$0xf]
      %v1307 = vld [vmem:[%s1300 + $0x18] sm:$0xf]
      %v1308 = vld [vmem:[%s1300 + $0x1c] sm:$0xf]
      %v1309 = vld [vmem:[%s1300 + $0x20] sm:$0xf]
      %v1310 = vld [vmem:[%s1300 + $0x24] sm:$0xf]
      %v1311 = vld [vmem:[%s1300 + $0x28] sm:$0xf]
      %v1312 = vld [vmem:[%s1300 + $0x2c] sm:$0xf]
      %v1313 = vld [vmem:[%s1300 + $0x30] sm:$0xf]
      %v1314 = vld [vmem:[%s1300 + $0x34] sm:$0xf]
      %v1315 = vld [vmem:[%s1300 + $0x38] sm:$0xf]
      %v1316 = vld [vmem:[%s1300 + $0x3c] sm:$0xf]
      %v1327 = vunpack.c.l.b16 %v1290
      %v1328 = vunpack.c.l.b16 %v1291
      %v1329 = vunpack.c.l.b16 %v1292
      %v1330 = vunpack.c.l.b16 %v1293
      %v1331 = vunpack.c.l.b16 %v1294
      %v1332 = vunpack.c.l.b16 %v1295
      %v1333 = vunpack.c.l.b16 %v1296
      %v1334 = vunpack.c.l.b16 %v1297
      %v1335 = vunpack.c.l.b16 %v1298
      %v1336 = vunpack.c.l.b16 %v1299
      %v1337 = vpack.c.b16 %v1328, %v1327
      %v1338 = vpack.c.b16 %v1330, %v1329
      %v1339 = vpack.c.b16 %v1332, %v1331
      %v1340 = vpack.c.b16 %v1334, %v1333
      %v1341 = vpack.c.b16 %v1336, %v1335
      %v1343 = vshrl.u32 %v1337, 16
      %v1345 = vshll.u32 %v1337, 16
      %v1347 = vrot.slane %v1345, 1
      %v1348 = vor.u32 %v1343, %v1347
      %v1350 = vshll.u32 %v1338, 16
      %v1352 = vrot.slane %v1350, 1
      %v1353 = vsel %vm493, %v1348, %v1352
      %v1354 = vshrl.u32 %v1338, 16
      %v1356 = vor.u32 %v1354, %v1352
      %v1358 = vshll.u32 %v1339, 16
      %v1360 = vrot.slane %v1358, 1
      %v1361 = vsel %vm493, %v1356, %v1360
      %v1362 = vshrl.u32 %v1339, 16
      %v1364 = vor.u32 %v1362, %v1360
      %v1366 = vshll.u32 %v1340, 16
      %v1368 = vrot.slane %v1366, 1
      %v1369 = vsel %vm493, %v1364, %v1368
      %v1370 = vshrl.u32 %v1340, 16
      %v1372 = vor.u32 %v1370, %v1368
      %v1374 = vshll.u32 %v1341, 16
      %v1376 = vrot.slane %v1374, 1
      %v1377 = vsel %vm493, %v1372, %v1376
      %v1378 = vshrl.u32 %v1341, 16
      %v1380 = vor.u32 %v1378, %v1376
      %v1402 = vunpack.c.l.b16 %v1301
      %v1403 = vunpack.c.l.b16 %v1302
      %v1404 = vunpack.c.l.b16 %v1303
      %v1405 = vunpack.c.l.b16 %v1304
      %v1406 = vunpack.c.l.b16 %v1305
      %v1407 = vunpack.c.l.b16 %v1306
      %v1408 = vunpack.c.l.b16 %v1307
      %v1409 = vunpack.c.l.b16 %v1308
      %v1410 = vunpack.c.l.b16 %v1309
      %v1411 = vunpack.c.l.b16 %v1310
      %v1412 = vunpack.c.l.b16 %v1311
      %v1413 = vunpack.c.l.b16 %v1312
      %v1414 = vunpack.c.l.b16 %v1313
      %v1415 = vunpack.c.l.b16 %v1314
      %v1416 = vunpack.c.l.b16 %v1315
      %v1417 = vunpack.c.l.b16 %v1316
      %v1418 = vpack.c.b16 %v1403, %v1402
      %v1419 = vpack.c.b16 %v1405, %v1404
      %v1420 = vpack.c.b16 %v1407, %v1406
      %v1421 = vpack.c.b16 %v1409, %v1408
      %v1422 = vpack.c.b16 %v1411, %v1410
      %v1423 = vpack.c.b16 %v1413, %v1412
      %v1424 = vpack.c.b16 %v1415, %v1414
      %v1425 = vpack.c.b16 %v1417, %v1416
      %1434 = vmatpush.bf16.msra.mxu0 %v1425
      %1435 = vmatpush.bf16.msra.mxu0 %v1424
      %1436 = vmatpush.bf16.msra.mxu0 %v1423
      %1437 = vmatpush.bf16.msra.mxu0 %v1422
      %1438 = vmatpush.bf16.msra.mxu0 %v1421
      %1439 = vmatpush.bf16.msra.mxu0 %v1420
      %1440 = vmatpush.bf16.msra.mxu0 %v1419
      %1441 = vmatpush.bf16.msra.mxu0 %v1418
      %1442 = vmatmul.bf16.gmra.mxu0 %v1353
      %v1443 = vpop.f32.mrf.mxu0
      %v1444 = vadd.f32 0.0, %v1443
      %v1445 = vpop.f32.mrf.mxu0
      %v1446 = vadd.f32 0.0, %v1445
      %1447 = vmatmul.bf16.gmra.mxu0 %v1361
      %v1448 = vpop.f32.mrf.mxu0
      %v1449 = vadd.f32 0.0, %v1448
      %v1450 = vpop.f32.mrf.mxu0
      %v1451 = vadd.f32 0.0, %v1450
      %1452 = vmatmul.bf16.gmra.mxu0 %v1369
      %v1453 = vpop.f32.mrf.mxu0
      %v1454 = vadd.f32 0.0, %v1453
      %v1455 = vpop.f32.mrf.mxu0
      %v1456 = vadd.f32 0.0, %v1455
      %1457 = vmatmul.bf16.gmra.mxu0 %v1377
      %v1458 = vpop.f32.mrf.mxu0
      %v1459 = vadd.f32 0.0, %v1458
      %v1460 = vpop.f32.mrf.mxu0
      %v1461 = vadd.f32 0.0, %v1460
      %1462 = vmatmul.bf16.gmra.mxu0 %v1380
      %v1463 = vpop.f32.mrf.mxu0
      %v1464 = vadd.f32 0.0, %v1463
      %v1465 = vpop.f32.mrf.mxu0
      %1466 = vdwg.mxu0
      %v1467 = vadd.f32 %v1281, %v1444
      %v1468 = vadd.f32 %v1282, %v1446
      %v1469 = vadd.f32 %v1283, %v1449
      %v1470 = vadd.f32 %v1284, %v1451
      %v1471 = vadd.f32 %v1285, %v1454
      %v1472 = vadd.f32 %v1286, %v1456
      %v1473 = vadd.f32 %v1287, %v1459
      %v1474 = vadd.f32 %v1288, %v1461
      %v1475 = vadd.f32 %v1289, %v1464
      %v1476 = vld [vmem:[%s165 + $0x4] sm:$0xe]
      %s1477 = scalar_lea.vmem %s1, 512
      %v1478 = vld [vmem:[%s1477] sm:$0xf]
      %v1479 = vld [vmem:[%s1477 + $0x4] sm:$0xf]
      %v1480 = vld [vmem:[%s1477 + $0x8] sm:$0xf]
      %v1481 = vld [vmem:[%s1477 + $0xc] sm:$0xf]
      %v1482 = vld [vmem:[%s1477 + $0x10] sm:$0xf]
      %v1483 = vld [vmem:[%s1477 + $0x14] sm:$0xf]
      %v1484 = vld [vmem:[%s1477 + $0x18] sm:$0xf]
      %v1485 = vld [vmem:[%s1477 + $0x1c] sm:$0xf]
      %v1486 = vld [vmem:[%s1477 + $0x20] sm:$0xf]
      %v1487 = vld [vmem:[%s1477 + $0x24] sm:$0xf]
      %v1488 = vld [vmem:[%s1477 + $0x28] sm:$0xf]
      %v1489 = vld [vmem:[%s1477 + $0x2c] sm:$0xf]
      %v1490 = vld [vmem:[%s1477 + $0x30] sm:$0xf]
      %v1491 = vld [vmem:[%s1477 + $0x34] sm:$0xf]
      %v1492 = vld [vmem:[%s1477 + $0x38] sm:$0xf]
      %v1493 = vld [vmem:[%s1477 + $0x3c] sm:$0xf]
      %v1495 = vunpack.c.l.b16 %v1476
      %v1496 = vpack.c.b16 %v1142, %v1495
      %vm1497 = vcmask 1046528
      %v1498 = vrot.slane %v1496, 1
      %v1499 = vrot.slane %v1152, 1
      %v1500 = vsel %vm1497, %v1498, %v1499
      %v1501 = vrot.slane %v1153, 1
      %v1502 = vsel %vm1497, %v1499, %v1501
      %v1503 = vrot.slane %v1154, 1
      %v1504 = vsel %vm1497, %v1501, %v1503
      %v1505 = vrot.slane %v1155, 1
      %v1506 = vsel %vm1497, %v1503, %v1505
      %v1528 = vunpack.c.l.b16 %v1478
      %v1529 = vunpack.c.l.b16 %v1479
      %v1530 = vunpack.c.l.b16 %v1480
      %v1531 = vunpack.c.l.b16 %v1481
      %v1532 = vunpack.c.l.b16 %v1482
      %v1533 = vunpack.c.l.b16 %v1483
      %v1534 = vunpack.c.l.b16 %v1484
      %v1535 = vunpack.c.l.b16 %v1485
      %v1536 = vunpack.c.l.b16 %v1486
      %v1537 = vunpack.c.l.b16 %v1487
      %v1538 = vunpack.c.l.b16 %v1488
      %v1539 = vunpack.c.l.b16 %v1489
      %v1540 = vunpack.c.l.b16 %v1490
      %v1541 = vunpack.c.l.b16 %v1491
      %v1542 = vunpack.c.l.b16 %v1492
      %v1543 = vunpack.c.l.b16 %v1493
      %v1544 = vpack.c.b16 %v1529, %v1528
      %v1545 = vpack.c.b16 %v1531, %v1530
      %v1546 = vpack.c.b16 %v1533, %v1532
      %v1547 = vpack.c.b16 %v1535, %v1534
      %v1548 = vpack.c.b16 %v1537, %v1536
      %v1549 = vpack.c.b16 %v1539, %v1538
      %v1550 = vpack.c.b16 %v1541, %v1540
      %v1551 = vpack.c.b16 %v1543, %v1542
      %1560 = vmatpush.bf16.msra.mxu0 %v1551
      %1561 = vmatpush.bf16.msra.mxu0 %v1550
      %1562 = vmatpush.bf16.msra.mxu0 %v1549
      %1563 = vmatpush.bf16.msra.mxu0 %v1548
      %1564 = vmatpush.bf16.msra.mxu0 %v1547
      %1565 = vmatpush.bf16.msra.mxu0 %v1546
      %1566 = vmatpush.bf16.msra.mxu0 %v1545
      %1567 = vmatpush.bf16.msra.mxu0 %v1544
      %1568 = vmatmul.bf16.gmra.mxu0 %v1500
      %v1569 = vpop.f32.mrf.mxu0
      %v1570 = vadd.f32 0.0, %v1569
      %v1571 = vpop.f32.mrf.mxu0
      %v1572 = vadd.f32 0.0, %v1571
      %1573 = vmatmul.bf16.gmra.mxu0 %v1502
      %v1574 = vpop.f32.mrf.mxu0
      %v1575 = vadd.f32 0.0, %v1574
      %v1576 = vpop.f32.mrf.mxu0
      %v1577 = vadd.f32 0.0, %v1576
      %1578 = vmatmul.bf16.gmra.mxu0 %v1504
      %v1579 = vpop.f32.mrf.mxu0
      %v1580 = vadd.f32 0.0, %v1579
      %v1581 = vpop.f32.mrf.mxu0
      %v1582 = vadd.f32 0.0, %v1581
      %1583 = vmatmul.bf16.gmra.mxu0 %v1506
      %v1584 = vpop.f32.mrf.mxu0
      %v1585 = vadd.f32 0.0, %v1584
      %v1586 = vpop.f32.mrf.mxu0
      %v1587 = vadd.f32 0.0, %v1586
      %1588 = vmatmul.bf16.gmra.mxu0 %v1505
      %v1589 = vpop.f32.mrf.mxu0
      %v1590 = vadd.f32 0.0, %v1589
      %v1591 = vpop.f32.mrf.mxu0
      %1592 = vdwg.mxu0
      %v1593 = vadd.f32 %v1467, %v1570
      %v1594 = vadd.f32 %v1468, %v1572
      %v1595 = vadd.f32 %v1469, %v1575
      %v1596 = vadd.f32 %v1470, %v1577
      %v1597 = vadd.f32 %v1471, %v1580
      %v1598 = vadd.f32 %v1472, %v1582
      %v1599 = vadd.f32 %v1473, %v1585
      %v1600 = vadd.f32 %v1474, %v1587
      %v1601 = vadd.f32 %v1475, %v1590
      %v1602 = vld [vmem:[%s2] sm:$0x1]
      %v1604 = vperm.slane %v1602, 0
      %v1606 = vadd.f32 %v1593, %v1604
      %v1607 = vadd.f32 %v1594, %v1604
      %v1608 = vadd.f32 %v1595, %v1604
      %v1609 = vadd.f32 %v1596, %v1604
      %v1610 = vadd.f32 %v1597, %v1604
      %v1611 = vadd.f32 %v1598, %v1604
      %v1612 = vadd.f32 %v1599, %v1604
      %v1613 = vadd.f32 %v1600, %v1604
      %v1614 = vadd.f32 %v1601, %v1604
      %v1615 = vmax.f32 %v1606, 0.0
      %v1616 = vmax.f32 %v1607, 0.0
      %v1617 = vmax.f32 %v1608, 0.0
      %v1618 = vmax.f32 %v1609, 0.0
      %v1619 = vmax.f32 %v1610, 0.0
      %v1620 = vmax.f32 %v1611, 0.0
      %v1621 = vmax.f32 %v1612, 0.0
      %v1622 = vmax.f32 %v1613, 0.0
      %v1623 = vmax.f32 %v1614, 0.0
      %1624 = vst [vmem:[%s170] sm:$0xff] %v1615
      %1625 = vst [vmem:[%s170 + $0x8] sm:$0xff] %v1616
      %1626 = vst [vmem:[%s170 + $0x10] sm:$0xff] %v1617
      %1627 = vst [vmem:[%s170 + $0x18] sm:$0xff] %v1618
      %1628 = vst [vmem:[%s170 + $0x20] sm:$0xff] %v1619
      %1629 = vst [vmem:[%s170 + $0x28] sm:$0xff] %v1620
      %1630 = vst [vmem:[%s170 + $0x30] sm:$0xff] %v1621
      %1631 = vst [vmem:[%s170 + $0x38] sm:$0xff] %v1622
      %1632 = vst [vmem:[%s170 + $0x40] sm:$0xff] %v1623
      %p1633 = scmp.lt.s32.totalorder %s14, 1
      %s1634 = scalar_select %p1633, %s14, 1
      %s1635 = smul.addr %s1634, 9
      %s1636 = smul.addr %s1635, 8
      %s1637 = scalar_lea.vmem %s3, %s1636
      // Predicated region
      $region33: #{inception_b_forward.7} parent=31 // pred_check
        %p1638 = pneg %p100
      $region34: #{inception_b_forward.7} parent=31 // pred_check_branch
        %1640 = sbr.rel (%p1638) target = $region36
      $region35: #{inception_b_forward.7} parent=31 // pred_region
        _
      $region36: #{inception_b_forward.7} parent=31 // pred_fallthru
        _
    $region32: #{inception_b_forward.7} parent=5 // pred_fallthru
      _
    %p1641 = scmp.le.s32.totalorder 2, %s9
    // Predicated region
    $region37: #{inception_b_forward.7} parent=5 // pred_check
      %p1642 = pneg %p1641
    $region38: #{inception_b_forward.7} parent=5 // pred_check_branch
      %1644 = sbr.rel (%p1642) target = $region40
    $region39: #{inception_b_forward.7} parent=5 // pred_region
      %s1645 = ssub.s32 %s9, 2
      // Predicated region
      $region41: #{inception_b_forward.7} parent=39 // pred_check
        %p1646 = pneg %p106
      $region42: #{inception_b_forward.7} parent=39 // pred_check_branch
        %1648 = sbr.rel (%p1646) target = $region44
      $region43: #{inception_b_forward.7} parent=39 // pred_region
        %p1649 = scmp.lt.s32.totalorder %s15, 1
        %s1650 = scalar_select %p1649, %s15, 1
        %s1651 = smul.addr %s1650, 9
        %s1652 = smul.addr %s1651, 8
        %s1653 = scalar_lea.vmem %s3, %s1652
      $region44: #{inception_b_forward.7} parent=39 // pred_fallthru
        _
    $region40: #{inception_b_forward.7} parent=5 // pred_fallthru
      _
  $region6: #{inception_b_forward.7} parent=0 // loop_footer
    %s13 = sadd.s32 1, %s9
  $region7: #{inception_b_forward.7} parent=0 // loop_footer_branch
    %8 = sbr.rel target = $region3
  $region8: #{inception_b_forward.7} parent=0 // loop_exit
    _

// kernel: inception_b_forward.4
$region0: #{inception_b_forward.4}
  #allocation0 [shape = 'u32[]', space=smem, size = 0x4, offset = 0x4, fixed_abs, tag = 'smem constant byte address 0x4 - core index']
  #allocation1 [shape = 'u32[72,128]{1,0:T(1,128)}', space=vmem, size = 0x9000, scoped, tag = 'internal scratch']
  %s0 = inlined_call_operand.vmem [shape: bf16[2,4,88,4], index: 0, kind: input, shape index: {}]
  %s1 = inlined_call_operand.vmem [shape: bf16[9,4,384], index: 1, kind: input, shape index: {}]
  %s2 = inlined_call_operand.vmem [shape: f32[1,384], index: 2, kind: input, shape index: {}]
  %s3 = inlined_call_operand.vmem [shape: f32[2,72,384], index: 3, kind: output, shape index: {0}]
  %s4 = inlined_call_operand.vmem [shape: f32[2,72,4], index: 4, kind: output, shape index: {1}]
  %5 = xla_tuple %s3, %s4
  %s6 = sld [smem:[#allocation0]]
  $region53: #{inception_b_forward.4} parent=0
    _
  %s8 = ssub.s32 1, %s6
  %s9 = scalar_select 0, %s8, %s6
  loop: start=0, step=1, limit=4
  $region2: #{inception_b_forward.4} parent=0 // loop_pre_header
    _
  $region3: #{inception_b_forward.4} parent=0 // loop_header
    %s11 = sphi 0, %s15
    %p12 = scmp.ge.s32.totalorder %s11, 4
    %s21 = sphi 0, %s23
    %s24 = sphi 0, %s21
    %s25 = sphi 0, %s24
    %s41 = sphi 0, %s25
    %s45 = sphi 0, %s45
    %s47 = sphi 0, %s45
    %s48 = sphi 0, %s47
    %s62 = sphi 0, %s48
    %s66 = sphi 0, %s66
    %s68 = sphi 0, %s66
    %s69 = sphi 0, %s68
    %s83 = sphi 0, %s69
    %s89 = sphi 0, %s91
    %s92 = sphi 0, %s89
    %s93 = sphi 0, %s92
    %s109 = sphi 0, %s93
    %s115 = sphi 0, %s117
    %s118 = sphi 0, %s115
    %s119 = sphi 0, %s118
    %s135 = sphi 0, %s119
  $region4: #{inception_b_forward.4} parent=0 // loop_header_branch
    %14 = sbr.rel (%p12) target = $region8
  $region5: #{inception_b_forward.4} parent=0 // loop_body
    %s16 = ssub.s32 %s11, 1
    %s17 = ssub.s32 %s11, 2
    %s18 = sadd.s32 %s11, 1
    %s19 = ssub.s32 %s11, %s18
    %p20 = scmp.eq.s32.totalorder %s19, 0
    %s22 = sadd.s32 %s21, 1
    %s23 = scalar_select %p20, %s21, %s22
    %p26 = pneg %p20
    %p27 = scmp.eq.s32.totalorder %s11, 1
    %p28 = por %p26, %p27
    %p29 = scmp.ne.s32.totalorder %s21, %s24
    %p30 = scmp.eq.s32.totalorder %s11, 0
    %p31 = por %p29, %p30
    %p32 = scmp.ne.s32.totalorder %s21, %s24
    %p33 = scmp.eq.s32.totalorder %s16, 1
    %p34 = por %p32, %p33
    %p35 = scmp.ne.s32.totalorder %s24, %s25
    %p36 = scmp.eq.s32.totalorder %s16, 0
    %p37 = por %p35, %p36
    %p38 = scmp.ne.s32.totalorder %s24, %s25
    %p39 = scmp.eq.s32.totalorder %s17, 1
    %p40 = por %p38, %p39
    %p42 = scmp.ne.s32.totalorder %s25, %s41
    %p43 = scmp.eq.s32.totalorder %s17, 0
    %p44 = por %p42, %p43
    %s46 = sadd.s32 %s45, 1
    %p49 = scmp.eq.s32.totalorder %s11, 1
    %p50 = scmp.ne.s32.totalorder %s45, %s47
    %p51 = scmp.eq.s32.totalorder %s11, 0
    %p52 = por %p50, %p51
    %p53 = scmp.ne.s32.totalorder %s45, %s47
    %p54 = scmp.eq.s32.totalorder %s16, 1
    %p55 = por %p53, %p54
    %p56 = scmp.ne.s32.totalorder %s47, %s48
    %p57 = scmp.eq.s32.totalorder %s16, 0
    %p58 = por %p56, %p57
    %p59 = scmp.ne.s32.totalorder %s47, %s48
    %p60 = scmp.eq.s32.totalorder %s17, 1
    %p61 = por %p59, %p60
    %p63 = scmp.ne.s32.totalorder %s48, %s62
    %p64 = scmp.eq.s32.totalorder %s17, 0
    %p65 = por %p63, %p64
    %s67 = sadd.s32 %s66, 1
    %p70 = scmp.eq.s32.totalorder %s11, 1
    %p71 = scmp.ne.s32.totalorder %s66, %s68
    %p72 = scmp.eq.s32.totalorder %s11, 0
    %p73 = por %p71, %p72
    %p74 = scmp.ne.s32.totalorder %s66, %s68
    %p75 = scmp.eq.s32.totalorder %s16, 1
    %p76 = por %p74, %p75
    %p77 = scmp.ne.s32.totalorder %s68, %s69
    %p78 = scmp.eq.s32.totalorder %s16, 0
    %p79 = por %p77, %p78
    %p80 = scmp.ne.s32.totalorder %s68, %s69
    %p81 = scmp.eq.s32.totalorder %s17, 1
    %p82 = por %p80, %p81
    %p84 = scmp.ne.s32.totalorder %s69, %s83
    %p85 = scmp.eq.s32.totalorder %s17, 0
    %p86 = por %p84, %p85
    %s87 = ssub.s32 %s11, %s18
    %p88 = scmp.eq.s32.totalorder %s87, 0
    %s90 = sadd.s32 %s89, 1
    %s91 = scalar_select %p88, %s89, %s90
    %p94 = pneg %p88
    %p95 = scmp.eq.s32.totalorder %s11, 1
    %p96 = por %p94, %p95
    %p97 = scmp.ne.s32.totalorder %s89, %s92
    %p98 = scmp.eq.s32.totalorder %s11, 0
    %p99 = por %p97, %p98
    %p100 = scmp.ne.s32.totalorder %s89, %s92
    %p101 = scmp.eq.s32.totalorder %s16, 1
    %p102 = por %p100, %p101
    %p103 = scmp.ne.s32.totalorder %s92, %s93
    %p104 = scmp.eq.s32.totalorder %s16, 0
    %p105 = por %p103, %p104
    %p106 = scmp.ne.s32.totalorder %s92, %s93
    %p107 = scmp.eq.s32.totalorder %s17, 1
    %p108 = por %p106, %p107
    %p110 = scmp.ne.s32.totalorder %s93, %s109
    %p111 = scmp.eq.s32.totalorder %s17, 0
    %p112 = por %p110, %p111
    %s113 = ssub.s32 %s11, %s18
    %p114 = scmp.eq.s32.totalorder %s113, 0
    %s116 = sadd.s32 %s115, 1
    %s117 = scalar_select %p114, %s115, %s116
    %p120 = pneg %p114
    %p121 = scmp.eq.s32.totalorder %s11, 1
    %p122 = por %p120, %p121
    %p123 = scmp.ne.s32.totalorder %s115, %s118
    %p124 = scmp.eq.s32.totalorder %s11, 0
    %p125 = por %p123, %p124
    %p126 = scmp.ne.s32.totalorder %s115, %s118
    %p127 = scmp.eq.s32.totalorder %s16, 1
    %p128 = por %p126, %p127
    %p129 = scmp.ne.s32.totalorder %s118, %s119
    %p130 = scmp.eq.s32.totalorder %s16, 0
    %p131 = por %p129, %p130
    %p132 = scmp.ne.s32.totalorder %s118, %s119
    %p133 = scmp.eq.s32.totalorder %s17, 1
    %p134 = por %p132, %p133
    %p136 = scmp.ne.s32.totalorder %s119, %s135
    %p137 = scmp.eq.s32.totalorder %s17, 0
    %p138 = por %p136, %p137
    %p139 = scmp.le.s32.totalorder 1, %s11
    %p140 = scmp.lt.s32.totalorder %s11, 3
    %p141 = pnand %p139, %p140
    %p142 = pneg %p141
    // Predicated region
    $region9: #{inception_b_forward.4} parent=5 // pred_check
      _
    $region10: #{inception_b_forward.4} parent=5 // pred_check_branch
      %144 = sbr.rel (%p141) target = $region12
    $region11: #{inception_b_forward.4} parent=5 // pred_region
      %s145 = ssub.s32 %s11, 1
      // Predicated region
      $region13: #{inception_b_forward.4} parent=11 // pred_check
        %p146 = pneg %p58
      $region14: #{inception_b_forward.4} parent=11 // pred_check_branch
        %148 = sbr.rel (%p146) target = $region16
      $region15: #{inception_b_forward.4} parent=11 // pred_region
        _
      $region16: #{inception_b_forward.4} parent=11 // pred_fallthru
        _
      // Predicated region
      $region17: #{inception_b_forward.4} parent=11 // pred_check
        %p149 = pneg %p79
      $region18: #{inception_b_forward.4} parent=11 // pred_check_branch
        %151 = sbr.rel (%p149) target = $region20
      $region19: #{inception_b_forward.4} parent=11 // pred_region
        _
      $region20: #{inception_b_forward.4} parent=11 // pred_fallthru
        _
    $region12: #{inception_b_forward.4} parent=5 // pred_fallthru
      _
    %p152 = scmp.lt.s32.totalorder %s11, 2
    // Predicated region
    $region21: #{inception_b_forward.4} parent=5 // pred_check
      %p153 = pneg %p152
    $region22: #{inception_b_forward.4} parent=5 // pred_check_branch
      %155 = sbr.rel (%p153) target = $region24
    $region23: #{inception_b_forward.4} parent=5 // pred_region
      // Predicated region
      $region25: #{inception_b_forward.4} parent=23 // pred_check
        %p156 = pneg %p31
      $region26: #{inception_b_forward.4} parent=23 // pred_check_branch
        %158 = sbr.rel (%p156) target = $region28
      $region27: #{inception_b_forward.4} parent=23 // pred_region
        %p159 = scmp.lt.s32.totalorder %s11, 1
        %s160 = scalar_select %p159, %s11, 1
        %s161 = smul.addr %s160, 44
        %s162 = smul.addr %s161, 4
        %s163 = scalar_lea.vmem %s0, %s162
      $region28: #{inception_b_forward.4} parent=23 // pred_fallthru
        _
    $region24: #{inception_b_forward.4} parent=5 // pred_fallthru
      _
    %p164 = scmp.le.s32.totalorder 1, %s11
    %p165 = scmp.lt.s32.totalorder %s11, 3
    %p166 = pnand %p164, %p165
    %p167 = pneg %p166
    // Predicated region
    $region29: #{inception_b_forward.4} parent=5 // pred_check
      _
    $region30: #{inception_b_forward.4} parent=5 // pred_check_branch
      %169 = sbr.rel (%p166) target = $region32
    $region31: #{inception_b_forward.4} parent=5 // pred_region
      %s170 = ssub.s32 %s11, 1
      %p171 = scmp.lt.s32.totalorder %s16, 1
      %s172 = scalar_select %p171, %s16, 1
      %s173 = smul.addr %s172, 44
      %s174 = smul.addr %s173, 4
      %s175 = scalar_lea.vmem %s0, %s174
      %p176 = pneg %p37
      %p177 = pneg %p34
      %p178 = pneg %p58
      %p179 = pneg %p55
      %p180 = pneg %p79
      %p181 = pneg %p76
      %p182 = pneg %p105
      %p183 = pneg %p102
      %p184 = scmp.lt.s32.totalorder %s16, 1
      %s185 = scalar_select %p184, %s16, 1
      %s186 = smul.addr %s185, 27
      %s187 = smul.addr %s186, 8
      %s188 = scalar_lea.vmem %s3, %s187
      %p189 = pneg %p131
      %p190 = pneg %p128
      %p191 = scmp.lt.s32.totalorder %s16, 1
      %s192 = scalar_select %p191, %s16, 1
      %s193 = smul.addr %s192, 9
      %s194 = smul.addr %s193, 8
      %s195 = scalar_lea.vmem %s4, %s194
      %p196 = scmp.lt.s32.totalorder %s16, 1
      %s197 = scalar_select %p196, %s16, 1
      %s198 = smul.addr %s197, 44
      %s199 = smul.addr %s198, 4
      %s200 = scalar_lea.vmem %s0, %s199
      %p201 = scmp.lt.s32.totalorder %s16, 1
      %s202 = scalar_select %p201, %s16, 1
      %s203 = smul.addr %s202, 27
      %s204 = smul.addr %s203, 8
      %s205 = scalar_lea.vmem %s3, %s204
      %p206 = scmp.lt.s32.totalorder %s16, 1
      %s207 = scalar_select %p206, %s16, 1
      %s208 = smul.addr %s207, 9
      %s209 = smul.addr %s208, 8
      %s210 = scalar_lea.vmem %s4, %s209
      %v212 = vld [vmem:[%s200] sm:$0xf]
      %v213 = vld [vmem:[%s200 + $0x4] sm:$0xf]
      %v214 = vld [vmem:[%s200 + $0x8] sm:$0xf]
      %v215 = vld [vmem:[%s200 + $0xc] sm:$0xf]
      %v216 = vld [vmem:[%s200 + $0x10] sm:$0xf]
      %v217 = vld [vmem:[%s200 + $0x14] sm:$0xf]
      %v218 = vld [vmem:[%s200 + $0x18] sm:$0xf]
      %v219 = vld [vmem:[%s200 + $0x1c] sm:$0xf]
      %v220 = vld [vmem:[%s200 + $0x20] sm:$0xf]
      %v221 = vld [vmem:[%s1] sm:$0x3f]
      %s222 = scalar_lea.vmem %s200, 44
      %v223 = vld [vmem:[%s222] sm:$0xf]
      %v224 = vld [vmem:[%s222 + $0x4] sm:$0xf]
      %v225 = vld [vmem:[%s222 + $0x8] sm:$0xf]
      %v226 = vld [vmem:[%s222 + $0xc] sm:$0xf]
      %v227 = vld [vmem:[%s222 + $0x10] sm:$0xf]
      %v228 = vld [vmem:[%s222 + $0x14] sm:$0xf]
      %v229 = vld [vmem:[%s222 + $0x18] sm:$0xf]
      %v230 = vld [vmem:[%s222 + $0x1c] sm:$0xf]
      %v231 = vld [vmem:[%s222 + $0x20] sm:$0xf]
      %s232 = scalar_lea.vmem %s1, 6
      %v233 = vld [vmem:[%s232] sm:$0x3f]
      %v243 = vunpack.c.l.b16 %v223
      %v244 = vunpack.c.l.b16 %v224
      %v245 = vunpack.c.l.b16 %v225
      %v246 = vunpack.c.l.b16 %v226
      %v247 = vunpack.c.l.b16 %v227
      %v248 = vunpack.c.l.b16 %v228
      %v249 = vunpack.c.l.b16 %v229
      %v250 = vunpack.c.l.b16 %v230
      %v251 = vunpack.c.l.b16 %v231
      %v252 = vpack.c.b16 %v244, %v243
      %v253 = vpack.c.b16 %v246, %v245
      %v254 = vpack.c.b16 %v248, %v247
      %v255 = vpack.c.b16 %v250, %v249
      %v256 = vpack.c.b16 %v251, %v251
      %258 = vst [vmem:[#allocation1] ss:$4 sm:$0xff] %v233
      %v259 = vld.sshfl [vmem:[#allocation1] sm:$0xff pattern:$0x73625140]
      %v260 = vld.sshfl [vmem:[#allocation1 + $0x8] sm:$0xff pattern:$0x73625140]
      %v261 = vld.sshfl [vmem:[#allocation1 + $0x10] sm:$0xff pattern:$0x73625140]
      %vm262 = vcmask 31744
      %v264 = vsel %vm262, %v252, 0
      %v267 = vsel %vm262, %v253, 0
      %v270 = vsel %vm262, %v254, 0
      %v273 = vsel %vm262, %v255, 0
      %v276 = vsel %vm262, %v256, 0
      %vm278 = vcmask 1041408
      %v279 = vsel %vm278, %v259, 0
      %v281 = vsel %vm278, %v260, 0
      %v283 = vsel %vm278, %v261, 0
      %285 = vmatpush.bf16.msra.mxu0 0
      %286 = vmatpush.bf16.msra.mxu0 0
      %287 = vmatpush.bf16.msra.mxu0 0
      %288 = vmatpush.bf16.msra.mxu0 0
      %289 = vmatpush.bf16.msra.mxu0 0
      %290 = vmatpush.bf16.msra.mxu0 0
      %291 = vmatpush.bf16.msra.mxu0 0
      %292 = vmatpush.bf16.msra.mxu0 %v279
      %293 = vmatmul.bf16.gmra.mxu0 %v264
      %v294 = vpop.f32.mrf.mxu0
      %v295 = vadd.f32 0.0, %v294
      %v296 = vpop.f32.mrf.mxu0
      %v297 = vadd.f32 0.0, %v296
      %298 = vmatmul.bf16.gmra.mxu0 %v267
      %v299 = vpop.f32.mrf.mxu0
      %v300 = vadd.f32 0.0, %v299
      %v301 = vpop.f32.mrf.mxu0
      %v302 = vadd.f32 0.0, %v301
      %303 = vmatmul.bf16.gmra.mxu0 %v270
      %v304 = vpop.f32.mrf.mxu0
      %v305 = vadd.f32 0.0, %v304
      %v306 = vpop.f32.mrf.mxu0
      %v307 = vadd.f32 0.0, %v306
      %308 = vmatmul.bf16.gmra.mxu0 %v273
      %v309 = vpop.f32.mrf.mxu0
      %v310 = vadd.f32 0.0, %v309
      %v311 = vpop.f32.mrf.mxu0
      %v312 = vadd.f32 0.0, %v311
      %313 = vmatmul.bf16.gmra.mxu0 %v276
      %v314 = vpop.f32.mrf.mxu0
      %v315 = vadd.f32 0.0, %v314
      %v316 = vpop.f32.mrf.mxu0
      %317 = vdwg.mxu0
      %318 = vmatpush.bf16.msra.mxu0 0
      %319 = vmatpush.bf16.msra.mxu0 0
      %320 = vmatpush.bf16.msra.mxu0 0
      %321 = vmatpush.bf16.msra.mxu0 0
      %322 = vmatpush.bf16.msra.mxu0 0
      %323 = vmatpush.bf16.msra.mxu0 0
      %324 = vmatpush.bf16.msra.mxu0 0
      %325 = vmatpush.bf16.msra.mxu0 %v281
      %326 = vmatmul.bf16.gmra.mxu0 %v264
      %v327 = vpop.f32.mrf.mxu0
      %v328 = vadd.f32 0.0, %v327
      %v329 = vpop.f32.mrf.mxu0
      %v330 = vadd.f32 0.0, %v329
      %331 = vmatmul.bf16.gmra.mxu0 %v267
      %v332 = vpop.f32.mrf.mxu0
      %v333 = vadd.f32 0.0, %v332
      %v334 = vpop.f32.mrf.mxu0
      %v335 = vadd.f32 0.0, %v334
      %336 = vmatmul.bf16.gmra.mxu0 %v270
      %v337 = vpop.f32.mrf.mxu0
      %v338 = vadd.f32 0.0, %v337
      %v339 = vpop.f32.mrf.mxu0
      %v340 = vadd.f32 0.0, %v339
      %341 = vmatmul.bf16.gmra.mxu0 %v273
      %v342 = vpop.f32.mrf.mxu0
      %v343 = vadd.f32 0.0, %v342
      %v344 = vpop.f32.mrf.mxu0
      %v345 = vadd.f32 0.0, %v344
      %346 = vmatmul.bf16.gmra.mxu0 %v276
      %v347 = vpop.f32.mrf.mxu0
      %v348 = vadd.f32 0.0, %v347
      %v349 = vpop.f32.mrf.mxu0
      %350 = vdwg.mxu0
      %351 = vmatpush.bf16.msra.mxu0 0
      %352 = vmatpush.bf16.msra.mxu0 0
      %353 = vmatpush.bf16.msra.mxu0 0
      %354 = vmatpush.bf16.msra.mxu0 0
      %355 = vmatpush.bf16.msra.mxu0 0
      %356 = vmatpush.bf16.msra.mxu0 0
      %357 = vmatpush.bf16.msra.mxu0 0
      %358 = vmatpush.bf16.msra.mxu0 %v283
      %359 = vmatmul.bf16.gmra.mxu0 %v264
      %v360 = vpop.f32.mrf.mxu0
      %v361 = vadd.f32 0.0, %v360
      %v362 = vpop.f32.mrf.mxu0
      %v363 = vadd.f32 0.0, %v362
      %364 = vmatmul.bf16.gmra.mxu0 %v267
      %v365 = vpop.f32.mrf.mxu0
      %v366 = vadd.f32 0.0, %v365
      %v367 = vpop.f32.mrf.mxu0
      %v368 = vadd.f32 0.0, %v367
      %369 = vmatmul.bf16.gmra.mxu0 %v270
      %v370 = vpop.f32.mrf.mxu0
      %v371 = vadd.f32 0.0, %v370
      %v372 = vpop.f32.mrf.mxu0
      %v373 = vadd.f32 0.0, %v372
      %374 = vmatmul.bf16.gmra.mxu0 %v273
      %v375 = vpop.f32.mrf.mxu0
      %v376 = vadd.f32 0.0, %v375
      %v377 = vpop.f32.mrf.mxu0
      %v378 = vadd.f32 0.0, %v377
      %379 = vmatmul.bf16.gmra.mxu0 %v276
      %v380 = vpop.f32.mrf.mxu0
      %v381 = vadd.f32 0.0, %v380
      %v382 = vpop.f32.mrf.mxu0
      %383 = vdwg.mxu0
      %v393 = vunpack.c.l.b16 %v212
      %v394 = vunpack.c.l.b16 %v213
      %v395 = vunpack.c.l.b16 %v214
      %v396 = vunpack.c.l.b16 %v215
      %v397 = vunpack.c.l.b16 %v216
      %v398 = vunpack.c.l.b16 %v217
      %v399 = vunpack.c.l.b16 %v218
      %v400 = vunpack.c.l.b16 %v219
      %v401 = vunpack.c.l.b16 %v220
      %v402 = vpack.c.b16 %v394, %v393
      %v403 = vpack.c.b16 %v396, %v395
      %v404 = vpack.c.b16 %v398, %v397
      %v405 = vpack.c.b16 %v400, %v399
      %v406 = vpack.c.b16 %v401, %v401
      %408 = vst [vmem:[#allocation1] ss:$4 sm:$0xff] %v221
      %v409 = vld.sshfl [vmem:[#allocation1] sm:$0xff pattern:$0x73625140]
      %v410 = vld.sshfl [vmem:[#allocation1 + $0x8] sm:$0xff pattern:$0x73625140]
      %v411 = vld.sshfl [vmem:[#allocation1 + $0x10] sm:$0xff pattern:$0x73625140]
      %v413 = vsel %vm262, %v402, 0
      %v416 = vsel %vm262, %v403, 0
      %v419 = vsel %vm262, %v404, 0
      %v422 = vsel %vm262, %v405, 0
      %v425 = vsel %vm262, %v406, 0
      %v427 = vsel %vm278, %v409, 0
      %v429 = vsel %vm278, %v410, 0
      %v431 = vsel %vm278, %v411, 0
      %433 = vmatpush.bf16.msra.mxu0 0
      %434 = vmatpush.bf16.msra.mxu0 0
      %435 = vmatpush.bf16.msra.mxu0 0
      %436 = vmatpush.bf16.msra.mxu0 0
      %437 = vmatpush.bf16.msra.mxu0 0
      %438 = vmatpush.bf16.msra.mxu0 0
      %439 = vmatpush.bf16.msra.mxu0 0
      %440 = vmatpush.bf16.msra.mxu0 %v427
      %441 = vmatmul.bf16.gmra.mxu0 %v413
      %v442 = vpop.f32.mrf.mxu0
      %v443 = vadd.f32 %v295, %v442
      %v444 = vpop.f32.mrf.mxu0
      %v445 = vadd.f32 %v297, %v444
      %446 = vmatmul.bf16.gmra.mxu0 %v416
      %v447 = vpop.f32.mrf.mxu0
      %v448 = vadd.f32 %v300, %v447
      %v449 = vpop.f32.mrf.mxu0
      %v450 = vadd.f32 %v302, %v449
      %451 = vmatmul.bf16.gmra.mxu0 %v419
      %v452 = vpop.f32.mrf.mxu0
      %v453 = vadd.f32 %v305, %v452
      %v454 = vpop.f32.mrf.mxu0
      %v455 = vadd.f32 %v307, %v454
      %456 = vmatmul.bf16.gmra.mxu0 %v422
      %v457 = vpop.f32.mrf.mxu0
      %v458 = vadd.f32 %v310, %v457
      %v459 = vpop.f32.mrf.mxu0
      %v460 = vadd.f32 %v312, %v459
      %461 = vmatmul.bf16.gmra.mxu0 %v425
      %v462 = vpop.f32.mrf.mxu0
      %v463 = vadd.f32 %v315, %v462
      %v464 = vpop.f32.mrf.mxu0
      %465 = vdwg.mxu0
      %466 = vmatpush.bf16.msra.mxu0 0
      %467 = vmatpush.bf16.msra.mxu0 0
      %468 = vmatpush.bf16.msra.mxu0 0
      %469 = vmatpush.bf16.msra.mxu0 0
      %470 = vmatpush.bf16.msra.mxu0 0
      %471 = vmatpush.bf16.msra.mxu0 0
      %472 = vmatpush.bf16.msra.mxu0 0
      %473 = vmatpush.bf16.msra.mxu0 %v429
      %474 = vmatmul.bf16.gmra.mxu0 %v413
      %v475 = vpop.f32.mrf.mxu0
      %v476 = vadd.f32 %v328, %v475
      %v477 = vpop.f32.mrf.mxu0
      %v478 = vadd.f32 %v330, %v477
      %479 = vmatmul.bf16.gmra.mxu0 %v416
      %v480 = vpop.f32.mrf.mxu0
      %v481 = vadd.f32 %v333, %v480
      %v482 = vpop.f32.mrf.mxu0
      %v483 = vadd.f32 %v335, %v482
      %484 = vmatmul.bf16.gmra.mxu0 %v419
      %v485 = vpop.f32.mrf.mxu0
      %v486 = vadd.f32 %v338, %v485
      %v487 = vpop.f32.mrf.mxu0
      %v488 = vadd.f32 %v340, %v487
      %489 = vmatmul.bf16.gmra.mxu0 %v422
      %v490 = vpop.f32.mrf.mxu0
      %v491 = vadd.f32 %v343, %v490
      %v492 = vpop.f32.mrf.mxu0
      %v493 = vadd.f32 %v345, %v492
      %494 = vmatmul.bf16.gmra.mxu0 %v425
      %v495 = vpop.f32.mrf.mxu0
      %v496 = vadd.f32 %v348, %v495
      %v497 = vpop.f32.mrf.mxu0
      %498 = vdwg.mxu0
      %499 = vmatpush.bf16.msra.mxu0 0
      %500 = vmatpush.bf16.msra.mxu0 0
      %501 = vmatpush.bf16.msra.mxu0 0
      %502 = vmatpush.bf16.msra.mxu0 0
      %503 = vmatpush.bf16.msra.mxu0 0
      %504 = vmatpush.bf16.msra.mxu0 0
      %505 = vmatpush.bf16.msra.mxu0 0
      %506 = vmatpush.bf16.msra.mxu0 %v431
      %507 = vmatmul.bf16.gmra.mxu0 %v413
      %v508 = vpop.f32.mrf.mxu0
      %v509 = vadd.f32 %v361, %v508
      %v510 = vpop.f32.mrf.mxu0
      %v511 = vadd.f32 %v363, %v510
      %512 = vmatmul.bf16.gmra.mxu0 %v416
      %v513 = vpop.f32.mrf.mxu0
      %v514 = vadd.f32 %v366, %v513
      %v515 = vpop.f32.mrf.mxu0
      %v516 = vadd.f32 %v368, %v515
      %517 = vmatmul.bf16.gmra.mxu0 %v419
      %v518 = vpop.f32.mrf.mxu0
      %v519 = vadd.f32 %v371, %v518
      %v520 = vpop.f32.mrf.mxu0
      %v521 = vadd.f32 %v373, %v520
      %522 = vmatmul.bf16.gmra.mxu0 %v422
      %v523 = vpop.f32.mrf.mxu0
      %v524 = vadd.f32 %v376, %v523
      %v525 = vpop.f32.mrf.mxu0
      %v526 = vadd.f32 %v378, %v525
      %527 = vmatmul.bf16.gmra.mxu0 %v425
      %v528 = vpop.f32.mrf.mxu0
      %v529 = vadd.f32 %v381, %v528
      %v530 = vpop.f32.mrf.mxu0
      %531 = vdwg.mxu0
      %v532 = vunpack.c.l.bf16 %v212
      %v533 = vunpack.c.l.bf16 %v213
      %v534 = vunpack.c.l.bf16 %v214
      %v535 = vunpack.c.l.bf16 %v215
      %v536 = vunpack.c.l.bf16 %v216
      %v537 = vunpack.c.l.bf16 %v217
      %v538 = vunpack.c.l.bf16 %v218
      %v539 = vunpack.c.l.bf16 %v219
      %v540 = vunpack.c.l.bf16 %v220
      %v541 = vunpack.c.l.bf16 %v223
      %v542 = vunpack.c.l.bf16 %v224
      %v543 = vunpack.c.l.bf16 %v225
      %v544 = vunpack.c.l.bf16 %v226
      %v545 = vunpack.c.l.bf16 %v227
      %v546 = vunpack.c.l.bf16 %v228
      %v547 = vunpack.c.l.bf16 %v229
      %v548 = vunpack.c.l.bf16 %v230
      %v549 = vunpack.c.l.bf16 %v231
      %v550 = vmax.f32 %v532, %v541
      %v551 = vmax.f32 %v533, %v542
      %v552 = vmax.f32 %v534, %v543
      %v553 = vmax.f32 %v535, %v544
      %v554 = vmax.f32 %v536, %v545
      %v555 = vmax.f32 %v537, %v546
      %v556 = vmax.f32 %v538, %v547
      %v557 = vmax.f32 %v539, %v548
      %v558 = vmax.f32 %v540, %v549
      %v559 = vpack.c.bf16 %v550, %v550
      %v560 = vpack.c.bf16 %v551, %v551
      %v561 = vpack.c.bf16 %v552, %v552
      %v562 = vpack.c.bf16 %v553, %v553
      %v563 = vpack.c.bf16 %v554, %v554
      %v564 = vpack.c.bf16 %v555, %v555
      %v565 = vpack.c.bf16 %v556, %v556
      %v566 = vpack.c.bf16 %v557, %v557
      %v567 = vpack.c.bf16 %v558, %v558
      %v568 = vld [vmem:[%s200] sm:$0xf]
      %v569 = vld [vmem:[%s200 + $0x4] sm:$0xf]
      %v570 = vld [vmem:[%s200 + $0x8] sm:$0xf]
      %v571 = vld [vmem:[%s200 + $0xc] sm:$0xf]
      %v572 = vld [vmem:[%s200 + $0x10] sm:$0xf]
      %v573 = vld [vmem:[%s200 + $0x14] sm:$0xf]
      %v574 = vld [vmem:[%s200 + $0x18] sm:$0xf]
      %v575 = vld [vmem:[%s200 + $0x1c] sm:$0xf]
      %v576 = vld [vmem:[%s200 + $0x20] sm:$0xf]
      %v577 = vld [vmem:[%s200 + $0x24] sm:$0x1]
      %s578 = scalar_lea.vmem %s1, 12
      %v579 = vld [vmem:[%s578] sm:$0x3f]
      %v590 = vunpack.c.l.b16 %v568
      %v591 = vunpack.c.l.b16 %v569
      %v592 = vunpack.c.l.b16 %v570
      %v593 = vunpack.c.l.b16 %v571
      %v594 = vunpack.c.l.b16 %v572
      %v595 = vunpack.c.l.b16 %v573
      %v596 = vunpack.c.l.b16 %v574
      %v597 = vunpack.c.l.b16 %v575
      %v598 = vunpack.c.l.b16 %v576
      %v599 = vunpack.c.l.b16 %v577
      %v600 = vpack.c.b16 %v591, %v590
      %v601 = vpack.c.b16 %v593, %v592
      %v602 = vpack.c.b16 %v595, %v594
      %v603 = vpack.c.b16 %v597, %v596
      %v604 = vpack.c.b16 %v599, %v598
      %vm605 = vsmask.f32 7424
      %v607 = vshrl.u32 %v600, 16
      %v609 = vshll.u32 %v600, 16
      %v611 = vrot.slane %v609, 1
      %v612 = vor.u32 %v607, %v611
      %v614 = vshll.u32 %v601, 16
      %v616 = vrot.slane %v614, 1
      %v617 = vsel %vm605, %v612, %v616
      %v618 = vshrl.u32 %v601, 16
      %v620 = vor.u32 %v618, %v616
      %v622 = vshll.u32 %v602, 16
      %v624 = vrot.slane %v622, 1
      %v625 = vsel %vm605, %v620, %v624
      %v626 = vshrl.u32 %v602, 16
      %v628 = vor.u32 %v626, %v624
      %v630 = vshll.u32 %v603, 16
      %v632 = vrot.slane %v630, 1
      %v633 = vsel %vm605, %v628, %v632
      %v634 = vshrl.u32 %v603, 16
      %v636 = vor.u32 %v634, %v632
      %v638 = vshll.u32 %v604, 16
      %v640 = vrot.slane %v638, 1
      %v641 = vsel %vm605, %v636, %v640
      %v642 = vshrl.u32 %v604, 16
      %v644 = vor.u32 %v642, %v640
      %646 = vst [vmem:[#allocation1] ss:$4 sm:$0xff] %v579
      %v647 = vld.sshfl [vmem:[#allocation1] sm:$0xff pattern:$0x73625140]
      %v648 = vld.sshfl [vmem:[#allocation1 + $0x8] sm:$0xff pattern:$0x73625140]
      %v649 = vld.sshfl [vmem:[#allocation1 + $0x10] sm:$0xff pattern:$0x73625140]
      %v651 = vsel %vm262, %v617, 0
      %v654 = vsel %vm262, %v625, 0
      %v657 = vsel %vm262, %v633, 0
      %v660 = vsel %vm262, %v641, 0
      %v663 = vsel %vm262, %v644, 0
      %v665 = vsel %vm278, %v647, 0
      %v667 = vsel %vm278, %v648, 0
      %v669 = vsel %vm278, %v649, 0
      %671 = vmatpush.bf16.msra.mxu0 0
      %672 = vmatpush.bf16.msra.mxu0 0
      %673 = vmatpush.bf16.msra.mxu0 0
      %674 = vmatpush.bf16.msra.mxu0 0
      %675 = vmatpush.bf16.msra.mxu0 0
      %676 = vmatpush.bf16.msra.mxu0 0
      %677 = vmatpush.bf16.msra.mxu0 0
      %678 = vmatpush.bf16.msra.mxu0 %v665
      %679 = vmatmul.bf16.gmra.mxu0 %v651
      %v680 = vpop.f32.mrf.mxu0
      %v681 = vadd.f32 0.0, %v680
      %v682 = vpop.f32.mrf.mxu0
      %v683 = vadd.f32 0.0, %v682
      %684 = vmatmul.bf16.gmra.mxu0 %v654
      %v685 = vpop.f32.mrf.mxu0
      %v686 = vadd.f32 0.0, %v685
      %v687 = vpop.f32.mrf.mxu0
      %v688 = vadd.f32 0.0, %v687
      %689 = vmatmul.bf16.gmra.mxu0 %v657
      %v690 = vpop.f32.mrf.mxu0
      %v691 = vadd.f32 0.0, %v690
      %v692 = vpop.f32.mrf.mxu0
      %v693 = vadd.f32 0.0, %v692
      %694 = vmatmul.bf16.gmra.mxu0 %v660
      %v695 = vpop.f32.mrf.mxu0
      %v696 = vadd.f32 0.0, %v695
      %v697 = vpop.f32.mrf.mxu0
      %v698 = vadd.f32 0.0, %v697
      %699 = vmatmul.bf16.gmra.mxu0 %v663
      %v700 = vpop.f32.mrf.mxu0
      %v701 = vadd.f32 0.0, %v700
      %v702 = vpop.f32.mrf.mxu0
      %703 = vdwg.mxu0
      %704 = vmatpush.bf16.msra.mxu0 0
      %705 = vmatpush.bf16.msra.mxu0 0
      %706 = vmatpush.bf16.msra.mxu0 0
      %707 = vmatpush.bf16.msra.mxu0 0
      %708 = vmatpush.bf16.msra.mxu0 0
      %709 = vmatpush.bf16.msra.mxu0 0
      %710 = vmatpush.bf16.msra.mxu0 0
      %711 = vmatpush.bf16.msra.mxu0 %v667
      %712 = vmatmul.bf16.gmra.mxu0 %v651
      %v713 = vpop.f32.mrf.mxu0
      %v714 = vadd.f32 0.0, %v713
      %v715 = vpop.f32.mrf.mxu0
      %v716 = vadd.f32 0.0, %v715
      %717 = vmatmul.bf16.gmra.mxu0 %v654
      %v718 = vpop.f32.mrf.mxu0
      %v719 = vadd.f32 0.0, %v718
      %v720 = vpop.f32.mrf.mxu0
      %v721 = vadd.f32 0.0, %v720
      %722 = vmatmul.bf16.gmra.mxu0 %v657
      %v723 = vpop.f32.mrf.mxu0
      %v724 = vadd.f32 0.0, %v723
      %v725 = vpop.f32.mrf.mxu0
      %v726 = vadd.f32 0.0, %v725
      %727 = vmatmul.bf16.gmra.mxu0 %v660
      %v728 = vpop.f32.mrf.mxu0
      %v729 = vadd.f32 0.0, %v728
      %v730 = vpop.f32.mrf.mxu0
      %v731 = vadd.f32 0.0, %v730
      %732 = vmatmul.bf16.gmra.mxu0 %v663
      %v733 = vpop.f32.mrf.mxu0
      %v734 = vadd.f32 0.0, %v733
      %v735 = vpop.f32.mrf.mxu0
      %736 = vdwg.mxu0
      %737 = vmatpush.bf16.msra.mxu0 0
      %738 = vmatpush.bf16.msra.mxu0 0
      %739 = vmatpush.bf16.msra.mxu0 0
      %740 = vmatpush.bf16.msra.mxu0 0
      %741 = vmatpush.bf16.msra.mxu0 0
      %742 = vmatpush.bf16.msra.mxu0 0
      %743 = vmatpush.bf16.msra.mxu0 0
      %744 = vmatpush.bf16.msra.mxu0 %v669
      %745 = vmatmul.bf16.gmra.mxu0 %v651
      %v746 = vpop.f32.mrf.mxu0
      %v747 = vadd.f32 0.0, %v746
      %v748 = vpop.f32.mrf.mxu0
      %v749 = vadd.f32 0.0, %v748
      %750 = vmatmul.bf16.gmra.mxu0 %v654
      %v751 = vpop.f32.mrf.mxu0
      %v752 = vadd.f32 0.0, %v751
      %v753 = vpop.f32.mrf.mxu0
      %v754 = vadd.f32 0.0, %v753
      %755 = vmatmul.bf16.gmra.mxu0 %v657
      %v756 = vpop.f32.mrf.mxu0
      %v757 = vadd.f32 0.0, %v756
      %v758 = vpop.f32.mrf.mxu0
      %v759 = vadd.f32 0.0, %v758
      %760 = vmatmul.bf16.gmra.mxu0 %v660
      %v761 = vpop.f32.mrf.mxu0
      %v762 = vadd.f32 0.0, %v761
      %v763 = vpop.f32.mrf.mxu0
      %v764 = vadd.f32 0.0, %v763
      %765 = vmatmul.bf16.gmra.mxu0 %v663
      %v766 = vpop.f32.mrf.mxu0
      %v767 = vadd.f32 0.0, %v766
      %v768 = vpop.f32.mrf.mxu0
      %769 = vdwg.mxu0
      %v770 = vadd.f32 %v443, %v681
      %v771 = vadd.f32 %v476, %v714
      %v772 = vadd.f32 %v509, %v747
      %v773 = vadd.f32 %v445, %v683
      %v774 = vadd.f32 %v478, %v716
      %v775 = vadd.f32 %v511, %v749
      %v776 = vadd.f32 %v448, %v686
      %v777 = vadd.f32 %v481, %v719
      %v778 = vadd.f32 %v514, %v752
      %v779 = vadd.f32 %v450, %v688
      %v780 = vadd.f32 %v483, %v721
      %v781 = vadd.f32 %v516, %v754
      %v782 = vadd.f32 %v453, %v691
      %v783 = vadd.f32 %v486, %v724
      %v784 = vadd.f32 %v519, %v757
      %v785 = vadd.f32 %v455, %v693
      %v786 = vadd.f32 %v488, %v726
      %v787 = vadd.f32 %v521, %v759
      %v788 = vadd.f32 %v458, %v696
      %v789 = vadd.f32 %v491, %v729
      %v790 = vadd.f32 %v524, %v762
      %v791 = vadd.f32 %v460, %v698
      %v792 = vadd.f32 %v493, %v731
      %v793 = vadd.f32 %v526, %v764
      %v794 = vadd.f32 %v463, %v701
      %v795 = vadd.f32 %v496, %v734
      %v796 = vadd.f32 %v529, %v767
      %v797 = vunpack.c.l.bf16 %v559
      %v798 = vunpack.c.l.bf16 %v560
      %v799 = vunpack.c.l.bf16 %v561
      %v800 = vunpack.c.l.bf16 %v562
      %v801 = vunpack.c.l.bf16 %v563
      %v802 = vunpack.c.l.bf16 %v564
      %v803 = vunpack.c.l.bf16 %v565
      %v804 = vunpack.c.l.bf16 %v566
      %v805 = vunpack.c.l.bf16 %v567
      %v806 = vunpack.c.l.bf16 %v568
      %v807 = vunpack.c.l.bf16 %v569
      %v808 = vunpack.c.l.bf16 %v570
      %v809 = vunpack.c.l.bf16 %v571
      %v810 = vunpack.c.l.bf16 %v572
      %v811 = vunpack.c.l.bf16 %v573
      %v812 = vunpack.c.l.bf16 %v574
      %v813 = vunpack.c.l.bf16 %v575
      %v814 = vunpack.c.l.bf16 %v576
      %v815 = vunpack.c.l.bf16 %v577
      %vm826 = vcmask 1046528
      %v827 = vrot.slane %v806, 1
      %v828 = vrot.slane %v807, 1
      %v829 = vsel %vm826, %v827, %v828
      %v830 = vrot.slane %v808, 1
      %v831 = vsel %vm826, %v828, %v830
      %v832 = vrot.slane %v809, 1
      %v833 = vsel %vm826, %v830, %v832
      %v834 = vrot.slane %v810, 1
      %v835 = vsel %vm826, %v832, %v834
      %v836 = vrot.slane %v811, 1
      %v837 = vsel %vm826, %v834, %v836
      %v838 = vrot.slane %v812, 1
      %v839 = vsel %vm826, %v836, %v838
      %v840 = vrot.slane %v813, 1
      %v841 = vsel %vm826, %v838, %v840
      %v842 = vrot.slane %v814, 1
      %v843 = vsel %vm826, %v840, %v842
      %v844 = vrot.slane %v815, 1
      %v845 = vsel %vm826, %v842, %v844
      %v855 = vmax.f32 %v797, %v829
      %v856 = vmax.f32 %v798, %v831
      %v857 = vmax.f32 %v799, %v833
      %v858 = vmax.f32 %v800, %v835
      %v859 = vmax.f32 %v801, %v837
      %v860 = vmax.f32 %v802, %v839
      %v861 = vmax.f32 %v803, %v841
      %v862 = vmax.f32 %v804, %v843
      %v863 = vmax.f32 %v805, %v845
      %v864 = vpack.c.bf16 %v855, %v855
      %v865 = vpack.c.bf16 %v856, %v856
      %v866 = vpack.c.bf16 %v857, %v857
      %v867 = vpack.c.bf16 %v858, %v858
      %v868 = vpack.c.bf16 %v859, %v859
      %v869 = vpack.c.bf16 %v860, %v860
      %v870 = vpack.c.bf16 %v861, %v861
      %v871 = vpack.c.bf16 %v862, %v862
      %v872 = vpack.c.bf16 %v863, %v863
      %s873 = scalar_lea.vmem %s200, 88
      %v874 = vld [vmem:[%s873] sm:$0xf]
      %v875 = vld [vmem:[%s873 + $0x4] sm:$0xf]
      %v876 = vld [vmem:[%s873 + $0x8] sm:$0xf]
      %v877 = vld [vmem:[%s873 + $0xc] sm:$0xf]
      %v878 = vld [vmem:[%s873 + $0x10] sm:$0xf]
      %v879 = vld [vmem:[%s873 + $0x14] sm:$0xf]
      %v880 = vld [vmem:[%s873 + $0x18] sm:$0xf]
      %v881 = vld [vmem:[%s873 + $0x1c] sm:$0xf]
      %v882 = vld [vmem:[%s873 + $0x20] sm:$0xf]
      %s883 = scalar_lea.vmem %s1, 18
      %v884 = vld [vmem:[%s883] sm:$0x3f]
      %v894 = vunpack.c.l.b16 %v874
      %v895 = vunpack.c.l.b16 %v875
      %v896 = vunpack.c.l.b16 %v876
      %v897 = vunpack.c.l.b16 %v877
      %v898 = vunpack.c.l.b16 %v878
      %v899 = vunpack.c.l.b16 %v879
      %v900 = vunpack.c.l.b16 %v880
      %v901 = vunpack.c.l.b16 %v881
      %v902 = vunpack.c.l.b16 %v882
      %v903 = vpack.c.b16 %v895, %v894
      %v904 = vpack.c.b16 %v897, %v896
      %v905 = vpack.c.b16 %v899, %v898
      %v906 = vpack.c.b16 %v901, %v900
      %v907 = vpack.c.b16 %v902, %v902
      %909 = vst [vmem:[#allocation1] ss:$4 sm:$0xff] %v884
      %v910 = vld.sshfl [vmem:[#allocation1] sm:$0xff pattern:$0x73625140]
      %v911 = vld.sshfl [vmem:[#allocation1 + $0x8] sm:$0xff pattern:$0x73625140]
      %v912 = vld.sshfl [vmem:[#allocation1 + $0x10] sm:$0xff pattern:$0x73625140]
      %v914 = vsel %vm262, %v903, 0
      %v917 = vsel %vm262, %v904, 0
      %v920 = vsel %vm262, %v905, 0
      %v923 = vsel %vm262, %v906, 0
      %v926 = vsel %vm262, %v907, 0
      %v928 = vsel %vm278, %v910, 0
      %v930 = vsel %vm278, %v911, 0
      %v932 = vsel %vm278, %v912, 0
      %934 = vmatpush.bf16.msra.mxu0 0
      %935 = vmatpush.bf16.msra.mxu0 0
      %936 = vmatpush.bf16.msra.mxu0 0
      %937 = vmatpush.bf16.msra.mxu0 0
      %938 = vmatpush.bf16.msra.mxu0 0
      %939 = vmatpush.bf16.msra.mxu0 0
      %940 = vmatpush.bf16.msra.mxu0 0
      %941 = vmatpush.bf16.msra.mxu0 %v928
      %942 = vmatmul.bf16.gmra.mxu0 %v914
      %v943 = vpop.f32.mrf.mxu0
      %v944 = vadd.f32 0.0, %v943
      %v945 = vpop.f32.mrf.mxu0
      %v946 = vadd.f32 0.0, %v945
      %947 = vmatmul.bf16.gmra.mxu0 %v917
      %v948 = vpop.f32.mrf.mxu0
      %v949 = vadd.f32 0.0, %v948
      %v950 = vpop.f32.mrf.mxu0
      %v951 = vadd.f32 0.0, %v950
      %952 = vmatmul.bf16.gmra.mxu0 %v920
      %v953 = vpop.f32.mrf.mxu0
      %v954 = vadd.f32 0.0, %v953
      %v955 = vpop.f32.mrf.mxu0
      %v956 = vadd.f32 0.0, %v955
      %957 = vmatmul.bf16.gmra.mxu0 %v923
      %v958 = vpop.f32.mrf.mxu0
      %v959 = vadd.f32 0.0, %v958
      %v960 = vpop.f32.mrf.mxu0
      %v961 = vadd.f32 0.0, %v960
      %962 = vmatmul.bf16.gmra.mxu0 %v926
      %v963 = vpop.f32.mrf.mxu0
      %v964 = vadd.f32 0.0, %v963
      %v965 = vpop.f32.mrf.mxu0
      %966 = vdwg.mxu0
      %967 = vmatpush.bf16.msra.mxu0 0
      %968 = vmatpush.bf16.msra.mxu0 0
      %969 = vmatpush.bf16.msra.mxu0 0
      %970 = vmatpush.bf16.msra.mxu0 0
      %971 = vmatpush.bf16.msra.mxu0 0
      %972 = vmatpush.bf16.msra.mxu0 0
      %973 = vmatpush.bf16.msra.mxu0 0
      %974 = vmatpush.bf16.msra.mxu0 %v930
      %975 = vmatmul.bf16.gmra.mxu0 %v914
      %v976 = vpop.f32.mrf.mxu0
      %v977 = vadd.f32 0.0, %v976
      %v978 = vpop.f32.mrf.mxu0
      %v979 = vadd.f32 0.0, %v978
      %980 = vmatmul.bf16.gmra.mxu0 %v917
      %v981 = vpop.f32.mrf.mxu0
      %v982 = vadd.f32 0.0, %v981
      %v983 = vpop.f32.mrf.mxu0
      %v984 = vadd.f32 0.0, %v983
      %985 = vmatmul.bf16.gmra.mxu0 %v920
      %v986 = vpop.f32.mrf.mxu0
      %v987 = vadd.f32 0.0, %v986
      %v988 = vpop.f32.mrf.mxu0
      %v989 = vadd.f32 0.0, %v988
      %990 = vmatmul.bf16.gmra.mxu0 %v923
      %v991 = vpop.f32.mrf.mxu0
      %v992 = vadd.f32 0.0, %v991
      %v993 = vpop.f32.mrf.mxu0
      %v994 = vadd.f32 0.0, %v993
      %995 = vmatmul.bf16.gmra.mxu0 %v926
      %v996 = vpop.f32.mrf.mxu0
      %v997 = vadd.f32 0.0, %v996
      %v998 = vpop.f32.mrf.mxu0
      %999 = vdwg.mxu0
      %1000 = vmatpush.bf16.msra.mxu0 0
      %1001 = vmatpush.bf16.msra.mxu0 0
      %1002 = vmatpush.bf16.msra.mxu0 0
      %1003 = vmatpush.bf16.msra.mxu0 0
      %1004 = vmatpush.bf16.msra.mxu0 0
      %1005 = vmatpush.bf16.msra.mxu0 0
      %1006 = vmatpush.bf16.msra.mxu0 0
      %1007 = vmatpush.bf16.msra.mxu0 %v932
      %1008 = vmatmul.bf16.gmra.mxu0 %v914
      %v1009 = vpop.f32.mrf.mxu0
      %v1010 = vadd.f32 0.0, %v1009
      %v1011 = vpop.f32.mrf.mxu0
      %v1012 = vadd.f32 0.0, %v1011
      %1013 = vmatmul.bf16.gmra.mxu0 %v917
      %v1014 = vpop.f32.mrf.mxu0
      %v1015 = vadd.f32 0.0, %v1014
      %v1016 = vpop.f32.mrf.mxu0
      %v1017 = vadd.f32 0.0, %v1016
      %1018 = vmatmul.bf16.gmra.mxu0 %v920
      %v1019 = vpop.f32.mrf.mxu0
      %v1020 = vadd.f32 0.0, %v1019
      %v1021 = vpop.f32.mrf.mxu0
      %v1022 = vadd.f32 0.0, %v1021
      %1023 = vmatmul.bf16.gmra.mxu0 %v923
      %v1024 = vpop.f32.mrf.mxu0
      %v1025 = vadd.f32 0.0, %v1024
      %v1026 = vpop.f32.mrf.mxu0
      %v1027 = vadd.f32 0.0, %v1026
      %1028 = vmatmul.bf16.gmra.mxu0 %v926
      %v1029 = vpop.f32.mrf.mxu0
      %v1030 = vadd.f32 0.0, %v1029
      %v1031 = vpop.f32.mrf.mxu0
      %1032 = vdwg.mxu0
      %v1033 = vadd.f32 %v770, %v944
      %v1034 = vadd.f32 %v771, %v977
      %v1035 = vadd.f32 %v772, %v1010
      %v1036 = vadd.f32 %v773, %v946
      %v1037 = vadd.f32 %v774, %v979
      %v1038 = vadd.f32 %v775, %v1012
      %v1039 = vadd.f32 %v776, %v949
      %v1040 = vadd.f32 %v777, %v982
      %v1041 = vadd.f32 %v778, %v1015
      %v1042 = vadd.f32 %v779, %v951
      %v1043 = vadd.f32 %v780, %v984
      %v1044 = vadd.f32 %v781, %v1017
      %v1045 = vadd.f32 %v782, %v954
      %v1046 = vadd.f32 %v783, %v987
      %v1047 = vadd.f32 %v784, %v1020
      %v1048 = vadd.f32 %v785, %v956
      %v1049 = vadd.f32 %v786, %v989
      %v1050 = vadd.f32 %v787, %v1022
      %v1051 = vadd.f32 %v788, %v959
      %v1052 = vadd.f32 %v789, %v992
      %v1053 = vadd.f32 %v790, %v1025
      %v1054 = vadd.f32 %v791, %v961
      %v1055 = vadd.f32 %v792, %v994
      %v1056 = vadd.f32 %v793, %v1027
      %v1057 = vadd.f32 %v794, %v964
      %v1058 = vadd.f32 %v795, %v997
      %v1059 = vadd.f32 %v796, %v1030
      %v1060 = vunpack.c.l.bf16 %v864
      %v1061 = vunpack.c.l.bf16 %v865
      %v1062 = vunpack.c.l.bf16 %v866
      %v1063 = vunpack.c.l.bf16 %v867
      %v1064 = vunpack.c.l.bf16 %v868
      %v1065 = vunpack.c.l.bf16 %v869
      %v1066 = vunpack.c.l.bf16 %v870
      %v1067 = vunpack.c.l.bf16 %v871
      %v1068 = vunpack.c.l.bf16 %v872
      %v1069 = vunpack.c.l.bf16 %v874
      %v1070 = vunpack.c.l.bf16 %v875
      %v1071 = vunpack.c.l.bf16 %v876
      %v1072 = vunpack.c.l.bf16 %v877
      %v1073 = vunpack.c.l.bf16 %v878
      %v1074 = vunpack.c.l.bf16 %v879
      %v1075 = vunpack.c.l.bf16 %v880
      %v1076 = vunpack.c.l.bf16 %v881
      %v1077 = vunpack.c.l.bf16 %v882
      %v1078 = vmax.f32 %v1060, %v1069
      %v1079 = vmax.f32 %v1061, %v1070
      %v1080 = vmax.f32 %v1062, %v1071
      %v1081 = vmax.f32 %v1063, %v1072
      %v1082 = vmax.f32 %v1064, %v1073
      %v1083 = vmax.f32 %v1065, %v1074
      %v1084 = vmax.f32 %v1066, %v1075
      %v1085 = vmax.f32 %v1067, %v1076
      %v1086 = vmax.f32 %v1068, %v1077
      %v1087 = vpack.c.bf16 %v1078, %v1078
      %v1088 = vpack.c.bf16 %v1079, %v1079
      %v1089 = vpack.c.bf16 %v1080, %v1080
      %v1090 = vpack.c.bf16 %v1081, %v1081
      %v1091 = vpack.c.bf16 %v1082, %v1082
      %v1092 = vpack.c.bf16 %v1083, %v1083
      %v1093 = vpack.c.bf16 %v1084, %v1084
      %v1094 = vpack.c.bf16 %v1085, %v1085
      %v1095 = vpack.c.bf16 %v1086, %v1086
      %s1096 = scalar_lea.vmem %s200, 132
      %v1097 = vld [vmem:[%s1096] sm:$0xf]
      %v1098 = vld [vmem:[%s1096 + $0x4] sm:$0xf]
      %v1099 = vld [vmem:[%s1096 + $0x8] sm:$0xf]
      %v1100 = vld [vmem:[%s1096 + $0xc] sm:$0xf]
      %v1101 = vld [vmem:[%s1096 + $0x10] sm:$0xf]
      %v1102 = vld [vmem:[%s1096 + $0x14] sm:$0xf]
      %v1103 = vld [vmem:[%s1096 + $0x18] sm:$0xf]
      %v1104 = vld [vmem:[%s1096 + $0x1c] sm:$0xf]
      %v1105 = vld [vmem:[%s1096 + $0x20] sm:$0xf]
      %s1106 = scalar_lea.vmem %s1, 24
      %v1107 = vld [vmem:[%s1106] sm:$0x3f]
      %v1117 = vunpack.c.l.b16 %v1097
      %v1118 = vunpack.c.l.b16 %v1098
      %v1119 = vunpack.c.l.b16 %v1099
      %v1120 = vunpack.c.l.b16 %v1100
      %v1121 = vunpack.c.l.b16 %v1101
      %v1122 = vunpack.c.l.b16 %v1102
      %v1123 = vunpack.c.l.b16 %v1103
      %v1124 = vunpack.c.l.b16 %v1104
      %v1125 = vunpack.c.l.b16 %v1105
      %v1126 = vpack.c.b16 %v1118, %v1117
      %v1127 = vpack.c.b16 %v1120, %v1119
      %v1128 = vpack.c.b16 %v1122, %v1121
      %v1129 = vpack.c.b16 %v1124, %v1123
      %v1130 = vpack.c.b16 %v1125, %v1125
      %1132 = vst [vmem:[#allocation1] ss:$4 sm:$0xff] %v1107
      %v1133 = vld.sshfl [vmem:[#allocation1] sm:$0xff pattern:$0x73625140]
      %v1134 = vld.sshfl [vmem:[#allocation1 + $0x8] sm:$0xff pattern:$0x73625140]
      %v1135 = vld.sshfl [vmem:[#allocation1 + $0x10] sm:$0xff pattern:$0x73625140]
      %v1137 = vsel %vm262, %v1126, 0
      %v1140 = vsel %vm262, %v1127, 0
      %v1143 = vsel %vm262, %v1128, 0
      %v1146 = vsel %vm262, %v1129, 0
      %v1149 = vsel %vm262, %v1130, 0
      %v1151 = vsel %vm278, %v1133, 0
      %v1153 = vsel %vm278, %v1134, 0
      %v1155 = vsel %vm278, %v1135, 0
      %1157 = vmatpush.bf16.msra.mxu0 0
      %1158 = vmatpush.bf16.msra.mxu0 0
      %1159 = vmatpush.bf16.msra.mxu0 0
      %1160 = vmatpush.bf16.msra.mxu0 0
      %1161 = vmatpush.bf16.msra.mxu0 0
      %1162 = vmatpush.bf16.msra.mxu0 0
      %1163 = vmatpush.bf16.msra.mxu0 0
      %1164 = vmatpush.bf16.msra.mxu0 %v1151
      %1165 = vmatmul.bf16.gmra.mxu0 %v1137
      %v1166 = vpop.f32.mrf.mxu0
      %v1167 = vadd.f32 0.0, %v1166
      %v1168 = vpop.f32.mrf.mxu0
      %v1169 = vadd.f32 0.0, %v1168
      %1170 = vmatmul.bf16.gmra.mxu0 %v1140
      %v1171 = vpop.f32.mrf.mxu0
      %v1172 = vadd.f32 0.0, %v1171
      %v1173 = vpop.f32.mrf.mxu0
      %v1174 = vadd.f32 0.0, %v1173
      %1175 = vmatmul.bf16.gmra.mxu0 %v1143
      %v1176 = vpop.f32.mrf.mxu0
      %v1177 = vadd.f32 0.0, %v1176
      %v1178 = vpop.f32.mrf.mxu0
      %v1179 = vadd.f32 0.0, %v1178
      %1180 = vmatmul.bf16.gmra.mxu0 %v1146
      %v1181 = vpop.f32.mrf.mxu0
      %v1182 = vadd.f32 0.0, %v1181
      %v1183 = vpop.f32.mrf.mxu0
      %v1184 = vadd.f32 0.0, %v1183
      %1185 = vmatmul.bf16.gmra.mxu0 %v1149
      %v1186 = vpop.f32.mrf.mxu0
      %v1187 = vadd.f32 0.0, %v1186
      %v1188 = vpop.f32.mrf.mxu0
      %1189 = vdwg.mxu0
      %1190 = vmatpush.bf16.msra.mxu0 0
      %1191 = vmatpush.bf16.msra.mxu0 0
      %1192 = vmatpush.bf16.msra.mxu0 0
      %1193 = vmatpush.bf16.msra.mxu0 0
      %1194 = vmatpush.bf16.msra.mxu0 0
      %1195 = vmatpush.bf16.msra.mxu0 0
      %1196 = vmatpush.bf16.msra.mxu0 0
      %1197 = vmatpush.bf16.msra.mxu0 %v1153
      %1198 = vmatmul.bf16.gmra.mxu0 %v1137
      %v1199 = vpop.f32.mrf.mxu0
      %v1200 = vadd.f32 0.0, %v1199
      %v1201 = vpop.f32.mrf.mxu0
      %v1202 = vadd.f32 0.0, %v1201
      %1203 = vmatmul.bf16.gmra.mxu0 %v1140
      %v1204 = vpop.f32.mrf.mxu0
      %v1205 = vadd.f32 0.0, %v1204
      %v1206 = vpop.f32.mrf.mxu0
      %v1207 = vadd.f32 0.0, %v1206
      %1208 = vmatmul.bf16.gmra.mxu0 %v1143
      %v1209 = vpop.f32.mrf.mxu0
      %v1210 = vadd.f32 0.0, %v1209
      %v1211 = vpop.f32.mrf.mxu0
      %v1212 = vadd.f32 0.0, %v1211
      %1213 = vmatmul.bf16.gmra.mxu0 %v1146
      %v1214 = vpop.f32.mrf.mxu0
      %v1215 = vadd.f32 0.0, %v1214
      %v1216 = vpop.f32.mrf.mxu0
      %v1217 = vadd.f32 0.0, %v1216
      %1218 = vmatmul.bf16.gmra.mxu0 %v1149
      %v1219 = vpop.f32.mrf.mxu0
      %v1220 = vadd.f32 0.0, %v1219
      %v1221 = vpop.f32.mrf.mxu0
      %1222 = vdwg.mxu0
      %1223 = vmatpush.bf16.msra.mxu0 0
      %1224 = vmatpush.bf16.msra.mxu0 0
      %1225 = vmatpush.bf16.msra.mxu0 0
      %1226 = vmatpush.bf16.msra.mxu0 0
      %1227 = vmatpush.bf16.msra.mxu0 0
      %1228 = vmatpush.bf16.msra.mxu0 0
      %1229 = vmatpush.bf16.msra.mxu0 0
      %1230 = vmatpush.bf16.msra.mxu0 %v1155
      %1231 = vmatmul.bf16.gmra.mxu0 %v1137
      %v1232 = vpop.f32.mrf.mxu0
      %v1233 = vadd.f32 0.0, %v1232
      %v1234 = vpop.f32.mrf.mxu0
      %v1235 = vadd.f32 0.0, %v1234
      %1236 = vmatmul.bf16.gmra.mxu0 %v1140
      %v1237 = vpop.f32.mrf.mxu0
      %v1238 = vadd.f32 0.0, %v1237
      %v1239 = vpop.f32.mrf.mxu0
      %v1240 = vadd.f32 0.0, %v1239
      %1241 = vmatmul.bf16.gmra.mxu0 %v1143
      %v1242 = vpop.f32.mrf.mxu0
      %v1243 = vadd.f32 0.0, %v1242
      %v1244 = vpop.f32.mrf.mxu0
      %v1245 = vadd.f32 0.0, %v1244
      %1246 = vmatmul.bf16.gmra.mxu0 %v1146
      %v1247 = vpop.f32.mrf.mxu0
      %v1248 = vadd.f32 0.0, %v1247
      %v1249 = vpop.f32.mrf.mxu0
      %v1250 = vadd.f32 0.0, %v1249
      %1251 = vmatmul.bf16.gmra.mxu0 %v1149
      %v1252 = vpop.f32.mrf.mxu0
      %v1253 = vadd.f32 0.0, %v1252
      %v1254 = vpop.f32.mrf.mxu0
      %1255 = vdwg.mxu0
      %v1256 = vadd.f32 %v1033, %v1167
      %v1257 = vadd.f32 %v1034, %v1200
      %v1258 = vadd.f32 %v1035, %v1233
      %v1259 = vadd.f32 %v1036, %v1169
      %v1260 = vadd.f32 %v1037, %v1202
      %v1261 = vadd.f32 %v1038, %v1235
      %v1262 = vadd.f32 %v1039, %v1172
      %v1263 = vadd.f32 %v1040, %v1205
      %v1264 = vadd.f32 %v1041, %v1238
      %v1265 = vadd.f32 %v1042, %v1174
      %v1266 = vadd.f32 %v1043, %v1207
      %v1267 = vadd.f32 %v1044, %v1240
      %v1268 = vadd.f32 %v1045, %v1177
      %v1269 = vadd.f32 %v1046, %v1210
      %v1270 = vadd.f32 %v1047, %v1243
      %v1271 = vadd.f32 %v1048, %v1179
      %v1272 = vadd.f32 %v1049, %v1212
      %v1273 = vadd.f32 %v1050, %v1245
      %v1274 = vadd.f32 %v1051, %v1182
      %v1275 = vadd.f32 %v1052, %v1215
      %v1276 = vadd.f32 %v1053, %v1248
      %v1277 = vadd.f32 %v1054, %v1184
      %v1278 = vadd.f32 %v1055, %v1217
      %v1279 = vadd.f32 %v1056, %v1250
      %v1280 = vadd.f32 %v1057, %v1187
      %v1281 = vadd.f32 %v1058, %v1220
      %v1282 = vadd.f32 %v1059, %v1253
      %v1283 = vunpack.c.l.bf16 %v1087
      %v1284 = vunpack.c.l.bf16 %v1088
      %v1285 = vunpack.c.l.bf16 %v1089
      %v1286 = vunpack.c.l.bf16 %v1090
      %v1287 = vunpack.c.l.bf16 %v1091
      %v1288 = vunpack.c.l.bf16 %v1092
      %v1289 = vunpack.c.l.bf16 %v1093
      %v1290 = vunpack.c.l.bf16 %v1094
      %v1291 = vunpack.c.l.bf16 %v1095
      %v1292 = vunpack.c.l.bf16 %v1097
      %v1293 = vunpack.c.l.bf16 %v1098
      %v1294 = vunpack.c.l.bf16 %v1099
      %v1295 = vunpack.c.l.bf16 %v1100
      %v1296 = vunpack.c.l.bf16 %v1101
      %v1297 = vunpack.c.l.bf16 %v1102
      %v1298 = vunpack.c.l.bf16 %v1103
      %v1299 = vunpack.c.l.bf16 %v1104
      %v1300 = vunpack.c.l.bf16 %v1105
      %v1301 = vmax.f32 %v1283, %v1292
      %v1302 = vmax.f32 %v1284, %v1293
      %v1303 = vmax.f32 %v1285, %v1294
      %v1304 = vmax.f32 %v1286, %v1295
      %v1305 = vmax.f32 %v1287, %v1296
      %v1306 = vmax.f32 %v1288, %v1297
      %v1307 = vmax.f32 %v1289, %v1298
      %v1308 = vmax.f32 %v1290, %v1299
      %v1309 = vmax.f32 %v1291, %v1300
      %v1310 = vpack.c.bf16 %v1301, %v1301
      %v1311 = vpack.c.bf16 %v1302, %v1302
      %v1312 = vpack.c.bf16 %v1303, %v1303
      %v1313 = vpack.c.bf16 %v1304, %v1304
      %v1314 = vpack.c.bf16 %v1305, %v1305
      %v1315 = vpack.c.bf16 %v1306, %v1306
      %v1316 = vpack.c.bf16 %v1307, %v1307
      %v1317 = vpack.c.bf16 %v1308, %v1308
      %v1318 = vpack.c.bf16 %v1309, %v1309
      %v1319 = vld [vmem:[%s873] sm:$0xf]
      %v1320 = vld [vmem:[%s873 + $0x4] sm:$0xf]
      %v1321 = vld [vmem:[%s873 + $0x8] sm:$0xf]
      %v1322 = vld [vmem:[%s873 + $0xc] sm:$0xf]
      %v1323 = vld [vmem:[%s873 + $0x10] sm:$0xf]
      %v1324 = vld [vmem:[%s873 + $0x14] sm:$0xf]
      %v1325 = vld [vmem:[%s873 + $0x18] sm:$0xf]
      %v1326 = vld [vmem:[%s873 + $0x1c] sm:$0xf]
      %v1327 = vld [vmem:[%s873 + $0x20] sm:$0xf]
      %v1328 = vld [vmem:[%s873 + $0x24] sm:$0x1]
      %s1329 = scalar_lea.vmem %s1, 30
      %v1330 = vld [vmem:[%s1329] sm:$0x3f]
      %v1341 = vunpack.c.l.b16 %v1319
      %v1342 = vunpack.c.l.b16 %v1320
      %v1343 = vunpack.c.l.b16 %v1321
      %v1344 = vunpack.c.l.b16 %v1322
      %v1345 = vunpack.c.l.b16 %v1323
      %v1346 = vunpack.c.l.b16 %v1324
      %v1347 = vunpack.c.l.b16 %v1325
      %v1348 = vunpack.c.l.b16 %v1326
      %v1349 = vunpack.c.l.b16 %v1327
      %v1350 = vunpack.c.l.b16 %v1328
      %v1351 = vpack.c.b16 %v1342, %v1341
      %v1352 = vpack.c.b16 %v1344, %v1343
      %v1353 = vpack.c.b16 %v1346, %v1345
      %v1354 = vpack.c.b16 %v1348, %v1347
      %v1355 = vpack.c.b16 %v1350, %v1349
      %v1357 = vshrl.u32 %v1351, 16
      %v1359 = vshll.u32 %v1351, 16
      %v1361 = vrot.slane %v1359, 1
      %v1362 = vor.u32 %v1357, %v1361
      %v1364 = vshll.u32 %v1352, 16
      %v1366 = vrot.slane %v1364, 1
      %v1367 = vsel %vm605, %v1362, %v1366
      %v1368 = vshrl.u32 %v1352, 16
      %v1370 = vor.u32 %v1368, %v1366
      %v1372 = vshll.u32 %v1353, 16
      %v1374 = vrot.slane %v1372, 1
      %v1375 = vsel %vm605, %v1370, %v1374
      %v1376 = vshrl.u32 %v1353, 16
      %v1378 = vor.u32 %v1376, %v1374
      %v1380 = vshll.u32 %v1354, 16
      %v1382 = vrot.slane %v1380, 1
      %v1383 = vsel %vm605, %v1378, %v1382
      %v1384 = vshrl.u32 %v1354, 16
      %v1386 = vor.u32 %v1384, %v1382
      %v1388 = vshll.u32 %v1355, 16
      %v1390 = vrot.slane %v1388, 1
      %v1391 = vsel %vm605, %v1386, %v1390
      %v1392 = vshrl.u32 %v1355, 16
      %v1394 = vor.u32 %v1392, %v1390
      %1396 = vst [vmem:[#allocation1] ss:$4 sm:$0xff] %v1330
      %v1397 = vld.sshfl [vmem:[#allocation1] sm:$0xff pattern:$0x73625140]
      %v1398 = vld.sshfl [vmem:[#allocation1 + $0x8] sm:$0xff pattern:$0x73625140]
      %v1399 = vld.sshfl [vmem:[#allocation1 + $0x10] sm:$0xff pattern:$0x73625140]
      %v1401 = vsel %vm262, %v1367, 0
      %v1404 = vsel %vm262, %v1375, 0
      %v1407 = vsel %vm262, %v1383, 0
      %v1410 = vsel %vm262, %v1391, 0
      %v1413 = vsel %vm262, %v1394, 0
      %v1415 = vsel %vm278, %v1397, 0
      %v1417 = vsel %vm278, %v1398, 0
      %v1419 = vsel %vm278, %v1399, 0
      %1421 = vmatpush.bf16.msra.mxu0 0
      %1422 = vmatpush.bf16.msra.mxu0 0
      %1423 = vmatpush.bf16.msra.mxu0 0
      %1424 = vmatpush.bf16.msra.mxu0 0
      %1425 = vmatpush.bf16.msra.mxu0 0
      %1426 = vmatpush.bf16.msra.mxu0 0
      %1427 = vmatpush.bf16.msra.mxu0 0
      %1428 = vmatpush.bf16.msra.mxu0 %v1415
      %1429 = vmatmul.bf16.gmra.mxu0 %v1401
      %v1430 = vpop.f32.mrf.mxu0
      %v1431 = vadd.f32 0.0, %v1430
      %v1432 = vpop.f32.mrf.mxu0
      %v1433 = vadd.f32 0.0, %v1432
      %1434 = vmatmul.bf16.gmra.mxu0 %v1404
      %v1435 = vpop.f32.mrf.mxu0
      %v1436 = vadd.f32 0.0, %v1435
      %v1437 = vpop.f32.mrf.mxu0
      %v1438 = vadd.f32 0.0, %v1437
      %1439 = vmatmul.bf16.gmra.mxu0 %v1407
      %v1440 = vpop.f32.mrf.mxu0
      %v1441 = vadd.f32 0.0, %v1440
      %v1442 = vpop.f32.mrf.mxu0
      %v1443 = vadd.f32 0.0, %v1442
      %1444 = vmatmul.bf16.gmra.mxu0 %v1410
      %v1445 = vpop.f32.mrf.mxu0
      %v1446 = vadd.f32 0.0, %v1445
      %v1447 = vpop.f32.mrf.mxu0
      %v1448 = vadd.f32 0.0, %v1447
      %1449 = vmatmul.bf16.gmra.mxu0 %v1413
      %v1450 = vpop.f32.mrf.mxu0
      %v1451 = vadd.f32 0.0, %v1450
      %v1452 = vpop.f32.mrf.mxu0
      %1453 = vdwg.mxu0
      %1454 = vmatpush.bf16.msra.mxu0 0
      %1455 = vmatpush.bf16.msra.mxu0 0
      %1456 = vmatpush.bf16.msra.mxu0 0
      %1457 = vmatpush.bf16.msra.mxu0 0
      %1458 = vmatpush.bf16.msra.mxu0 0
      %1459 = vmatpush.bf16.msra.mxu0 0
      %1460 = vmatpush.bf16.msra.mxu0 0
      %1461 = vmatpush.bf16.msra.mxu0 %v1417
      %1462 = vmatmul.bf16.gmra.mxu0 %v1401
      %v1463 = vpop.f32.mrf.mxu0
      %v1464 = vadd.f32 0.0, %v1463
      %v1465 = vpop.f32.mrf.mxu0
      %v1466 = vadd.f32 0.0, %v1465
      %1467 = vmatmul.bf16.gmra.mxu0 %v1404
      %v1468 = vpop.f32.mrf.mxu0
      %v1469 = vadd.f32 0.0, %v1468
      %v1470 = vpop.f32.mrf.mxu0
      %v1471 = vadd.f32 0.0, %v1470
      %1472 = vmatmul.bf16.gmra.mxu0 %v1407
      %v1473 = vpop.f32.mrf.mxu0
      %v1474 = vadd.f32 0.0, %v1473
      %v1475 = vpop.f32.mrf.mxu0
      %v1476 = vadd.f32 0.0, %v1475
      %1477 = vmatmul.bf16.gmra.mxu0 %v1410
      %v1478 = vpop.f32.mrf.mxu0
      %v1479 = vadd.f32 0.0, %v1478
      %v1480 = vpop.f32.mrf.mxu0
      %v1481 = vadd.f32 0.0, %v1480
      %1482 = vmatmul.bf16.gmra.mxu0 %v1413
      %v1483 = vpop.f32.mrf.mxu0
      %v1484 = vadd.f32 0.0, %v1483
      %v1485 = vpop.f32.mrf.mxu0
      %1486 = vdwg.mxu0
      %1487 = vmatpush.bf16.msra.mxu0 0
      %1488 = vmatpush.bf16.msra.mxu0 0
      %1489 = vmatpush.bf16.msra.mxu0 0
      %1490 = vmatpush.bf16.msra.mxu0 0
      %1491 = vmatpush.bf16.msra.mxu0 0
      %1492 = vmatpush.bf16.msra.mxu0 0
      %1493 = vmatpush.bf16.msra.mxu0 0
      %1494 = vmatpush.bf16.msra.mxu0 %v1419
      %1495 = vmatmul.bf16.gmra.mxu0 %v1401
      %v1496 = vpop.f32.mrf.mxu0
      %v1497 = vadd.f32 0.0, %v1496
      %v1498 = vpop.f32.mrf.mxu0
      %v1499 = vadd.f32 0.0, %v1498
      %1500 = vmatmul.bf16.gmra.mxu0 %v1404
      %v1501 = vpop.f32.mrf.mxu0
      %v1502 = vadd.f32 0.0, %v1501
      %v1503 = vpop.f32.mrf.mxu0
      %v1504 = vadd.f32 0.0, %v1503
      %1505 = vmatmul.bf16.gmra.mxu0 %v1407
      %v1506 = vpop.f32.mrf.mxu0
      %v1507 = vadd.f32 0.0, %v1506
      %v1508 = vpop.f32.mrf.mxu0
      %v1509 = vadd.f32 0.0, %v1508
      %1510 = vmatmul.bf16.gmra.mxu0 %v1410
      %v1511 = vpop.f32.mrf.mxu0
      %v1512 = vadd.f32 0.0, %v1511
      %v1513 = vpop.f32.mrf.mxu0
      %v1514 = vadd.f32 0.0, %v1513
      %1515 = vmatmul.bf16.gmra.mxu0 %v1413
      %v1516 = vpop.f32.mrf.mxu0
      %v1517 = vadd.f32 0.0, %v1516
      %v1518 = vpop.f32.mrf.mxu0
      %1519 = vdwg.mxu0
      %v1520 = vadd.f32 %v1256, %v1431
      %v1521 = vadd.f32 %v1257, %v1464
      %v1522 = vadd.f32 %v1258, %v1497
      %v1523 = vadd.f32 %v1259, %v1433
      %v1524 = vadd.f32 %v1260, %v1466
      %v1525 = vadd.f32 %v1261, %v1499
      %v1526 = vadd.f32 %v1262, %v1436
      %v1527 = vadd.f32 %v1263, %v1469
      %v1528 = vadd.f32 %v1264, %v1502
      %v1529 = vadd.f32 %v1265, %v1438
      %v1530 = vadd.f32 %v1266, %v1471
      %v1531 = vadd.f32 %v1267, %v1504
      %v1532 = vadd.f32 %v1268, %v1441
      %v1533 = vadd.f32 %v1269, %v1474
      %v1534 = vadd.f32 %v1270, %v1507
      %v1535 = vadd.f32 %v1271, %v1443
      %v1536 = vadd.f32 %v1272, %v1476
      %v1537 = vadd.f32 %v1273, %v1509
      %v1538 = vadd.f32 %v1274, %v1446
      %v1539 = vadd.f32 %v1275, %v1479
      %v1540 = vadd.f32 %v1276, %v1512
      %v1541 = vadd.f32 %v1277, %v1448
      %v1542 = vadd.f32 %v1278, %v1481
      %v1543 = vadd.f32 %v1279, %v1514
      %v1544 = vadd.f32 %v1280, %v1451
      %v1545 = vadd.f32 %v1281, %v1484
      %v1546 = vadd.f32 %v1282, %v1517
      %v1547 = vunpack.c.l.bf16 %v1310
      %v1548 = vunpack.c.l.bf16 %v1311
      %v1549 = vunpack.c.l.bf16 %v1312
      %v1550 = vunpack.c.l.bf16 %v1313
      %v1551 = vunpack.c.l.bf16 %v1314
      %v1552 = vunpack.c.l.bf16 %v1315
      %v1553 = vunpack.c.l.bf16 %v1316
      %v1554 = vunpack.c.l.bf16 %v1317
      %v1555 = vunpack.c.l.bf16 %v1318
      %v1556 = vunpack.c.l.bf16 %v1319
      %v1557 = vunpack.c.l.bf16 %v1320
      %v1558 = vunpack.c.l.bf16 %v1321
      %v1559 = vunpack.c.l.bf16 %v1322
      %v1560 = vunpack.c.l.bf16 %v1323
      %v1561 = vunpack.c.l.bf16 %v1324
      %v1562 = vunpack.c.l.bf16 %v1325
      %v1563 = vunpack.c.l.bf16 %v1326
      %v1564 = vunpack.c.l.bf16 %v1327
      %v1565 = vunpack.c.l.bf16 %v1328
      %v1576 = vrot.slane %v1556, 1
      %v1577 = vrot.slane %v1557, 1
      %v1578 = vsel %vm826, %v1576, %v1577
      %v1579 = vrot.slane %v1558, 1
      %v1580 = vsel %vm826, %v1577, %v1579
      %v1581 = vrot.slane %v1559, 1
      %v1582 = vsel %vm826, %v1579, %v1581
      %v1583 = vrot.slane %v1560, 1
      %v1584 = vsel %vm826, %v1581, %v1583
      %v1585 = vrot.slane %v1561, 1
      %v1586 = vsel %vm826, %v1583, %v1585
      %v1587 = vrot.slane %v1562, 1
      %v1588 = vsel %vm826, %v1585, %v1587
      %v1589 = vrot.slane %v1563, 1
      %v1590 = vsel %vm826, %v1587, %v1589
      %v1591 = vrot.slane %v1564, 1
      %v1592 = vsel %vm826, %v1589, %v1591
      %v1593 = vrot.slane %v1565, 1
      %v1594 = vsel %vm826, %v1591, %v1593
      %v1604 = vmax.f32 %v1547, %v1578
      %v1605 = vmax.f32 %v1548, %v1580
      %v1606 = vmax.f32 %v1549, %v1582
      %v1607 = vmax.f32 %v1550, %v1584
      %v1608 = vmax.f32 %v1551, %v1586
      %v1609 = vmax.f32 %v1552, %v1588
      %v1610 = vmax.f32 %v1553, %v1590
      %v1611 = vmax.f32 %v1554, %v1592
      %v1612 = vmax.f32 %v1555, %v1594
      %v1613 = vpack.c.bf16 %v1604, %v1604
      %v1614 = vpack.c.bf16 %v1605, %v1605
      %v1615 = vpack.c.bf16 %v1606, %v1606
      %v1616 = vpack.c.bf16 %v1607, %v1607
      %v1617 = vpack.c.bf16 %v1608, %v1608
      %v1618 = vpack.c.bf16 %v1609, %v1609
      %v1619 = vpack.c.bf16 %v1610, %v1610
      %v1620 = vpack.c.bf16 %v1611, %v1611
      %v1621 = vpack.c.bf16 %v1612, %v1612
      %v1622 = vld [vmem:[%s200 + $0x4] sm:$0xf]
      %v1623 = vld [vmem:[%s200 + $0x8] sm:$0xf]
      %v1624 = vld [vmem:[%s200 + $0xc] sm:$0xf]
      %v1625 = vld [vmem:[%s200 + $0x10] sm:$0xf]
      %v1626 = vld [vmem:[%s200 + $0x14] sm:$0xf]
      %v1627 = vld [vmem:[%s200 + $0x18] sm:$0xf]
      %v1628 = vld [vmem:[%s200 + $0x1c] sm:$0xf]
      %v1629 = vld [vmem:[%s200 + $0x20] sm:$0xf]
      %v1630 = vld [vmem:[%s200 + $0x24] sm:$0xf]
      %v1631 = vld [vmem:[%s200 + $0x28] sm:$0x1]
      %s1632 = scalar_lea.vmem %s1, 36
      %v1633 = vld [vmem:[%s1632] sm:$0x3f]
      %v1644 = vunpack.c.l.b16 %v1622
      %v1645 = vunpack.c.l.b16 %v1623
      %v1646 = vunpack.c.l.b16 %v1624
      %v1647 = vunpack.c.l.b16 %v1625
      %v1648 = vunpack.c.l.b16 %v1626
      %v1649 = vunpack.c.l.b16 %v1627
      %v1650 = vunpack.c.l.b16 %v1628
      %v1651 = vunpack.c.l.b16 %v1629
      %v1652 = vunpack.c.l.b16 %v1630
      %v1653 = vunpack.c.l.b16 %v1631
      %v1654 = vpack.c.b16 %v1645, %v1644
      %v1655 = vpack.c.b16 %v1647, %v1646
      %v1656 = vpack.c.b16 %v1649, %v1648
      %v1657 = vpack.c.b16 %v1651, %v1650
      %v1658 = vpack.c.b16 %v1653, %v1652
      %v1660 = vshrl.u32 %v1654, 16
      %v1662 = vshll.u32 %v1654, 16
      %v1664 = vrot.slane %v1662, 1
      %v1665 = vor.u32 %v1660, %v1664
      %v1667 = vshll.u32 %v1655, 16
      %v1669 = vrot.slane %v1667, 1
      %v1670 = vsel %vm605, %v1665, %v1669
      %v1671 = vshrl.u32 %v1655, 16
      %v1673 = vor.u32 %v1671, %v1669
      %v1675 = vshll.u32 %v1656, 16
      %v1677 = vrot.slane %v1675, 1
      %v1678 = vsel %vm605, %v1673, %v1677
      %v1679 = vshrl.u32 %v1656, 16
      %v1681 = vor.u32 %v1679, %v1677
      %v1683 = vshll.u32 %v1657, 16
      %v1685 = vrot.slane %v1683, 1
      %v1686 = vsel %vm605, %v1681, %v1685
      %v1687 = vshrl.u32 %v1657, 16
      %v1689 = vor.u32 %v1687, %v1685
      %v1691 = vshll.u32 %v1658, 16
      %v1693 = vrot.slane %v1691, 1
      %v1694 = vsel %vm605, %v1689, %v1693
      %v1695 = vshrl.u32 %v1658, 16
      %v1697 = vor.u32 %v1695, %v1693
      %1699 = vst [vmem:[#allocation1] ss:$4 sm:$0xff] %v1633
      %v1700 = vld.sshfl [vmem:[#allocation1] sm:$0xff pattern:$0x73625140]
      %v1701 = vld.sshfl [vmem:[#allocation1 + $0x8] sm:$0xff pattern:$0x73625140]
      %v1702 = vld.sshfl [vmem:[#allocation1 + $0x10] sm:$0xff pattern:$0x73625140]
      %v1704 = vsel %vm262, %v1670, 0
      %v1707 = vsel %vm262, %v1678, 0
      %v1710 = vsel %vm262, %v1686, 0
      %v1713 = vsel %vm262, %v1694, 0
      %v1716 = vsel %vm262, %v1697, 0
      %v1718 = vsel %vm278, %v1700, 0
      %v1720 = vsel %vm278, %v1701, 0
      %v1722 = vsel %vm278, %v1702, 0
      %1724 = vmatpush.bf16.msra.mxu0 0
      %1725 = vmatpush.bf16.msra.mxu0 0
      %1726 = vmatpush.bf16.msra.mxu0 0
      %1727 = vmatpush.bf16.msra.mxu0 0
      %1728 = vmatpush.bf16.msra.mxu0 0
      %1729 = vmatpush.bf16.msra.mxu0 0
      %1730 = vmatpush.bf16.msra.mxu0 0
      %1731 = vmatpush.bf16.msra.mxu0 %v1718
      %1732 = vmatmul.bf16.gmra.mxu0 %v1704
      %v1733 = vpop.f32.mrf.mxu0
      %v1734 = vadd.f32 0.0, %v1733
      %v1735 = vpop.f32.mrf.mxu0
      %v1736 = vadd.f32 0.0, %v1735
      %1737 = vmatmul.bf16.gmra.mxu0 %v1707
      %v1738 = vpop.f32.mrf.mxu0
      %v1739 = vadd.f32 0.0, %v1738
      %v1740 = vpop.f32.mrf.mxu0
      %v1741 = vadd.f32 0.0, %v1740
      %1742 = vmatmul.bf16.gmra.mxu0 %v1710
      %v1743 = vpop.f32.mrf.mxu0
      %v1744 = vadd.f32 0.0, %v1743
      %v1745 = vpop.f32.mrf.mxu0
      %v1746 = vadd.f32 0.0, %v1745
      %1747 = vmatmul.bf16.gmra.mxu0 %v1713
      %v1748 = vpop.f32.mrf.mxu0
      %v1749 = vadd.f32 0.0, %v1748
      %v1750 = vpop.f32.mrf.mxu0
      %v1751 = vadd.f32 0.0, %v1750
      %1752 = vmatmul.bf16.gmra.mxu0 %v1716
      %v1753 = vpop.f32.mrf.mxu0
      %v1754 = vadd.f32 0.0, %v1753
      %v1755 = vpop.f32.mrf.mxu0
      %1756 = vdwg.mxu0
      %1757 = vmatpush.bf16.msra.mxu0 0
      %1758 = vmatpush.bf16.msra.mxu0 0
      %1759 = vmatpush.bf16.msra.mxu0 0
      %1760 = vmatpush.bf16.msra.mxu0 0
      %1761 = vmatpush.bf16.msra.mxu0 0
      %1762 = vmatpush.bf16.msra.mxu0 0
      %1763 = vmatpush.bf16.msra.mxu0 0
      %1764 = vmatpush.bf16.msra.mxu0 %v1720
      %1765 = vmatmul.bf16.gmra.mxu0 %v1704
      %v1766 = vpop.f32.mrf.mxu0
      %v1767 = vadd.f32 0.0, %v1766
      %v1768 = vpop.f32.mrf.mxu0
      %v1769 = vadd.f32 0.0, %v1768
      %1770 = vmatmul.bf16.gmra.mxu0 %v1707
      %v1771 = vpop.f32.mrf.mxu0
      %v1772 = vadd.f32 0.0, %v1771
      %v1773 = vpop.f32.mrf.mxu0
      %v1774 = vadd.f32 0.0, %v1773
      %1775 = vmatmul.bf16.gmra.mxu0 %v1710
      %v1776 = vpop.f32.mrf.mxu0
      %v1777 = vadd.f32 0.0, %v1776
      %v1778 = vpop.f32.mrf.mxu0
      %v1779 = vadd.f32 0.0, %v1778
      %1780 = vmatmul.bf16.gmra.mxu0 %v1713
      %v1781 = vpop.f32.mrf.mxu0
      %v1782 = vadd.f32 0.0, %v1781
      %v1783 = vpop.f32.mrf.mxu0
      %v1784 = vadd.f32 0.0, %v1783
      %1785 = vmatmul.bf16.gmra.mxu0 %v1716
      %v1786 = vpop.f32.mrf.mxu0
      %v1787 = vadd.f32 0.0, %v1786
      %v1788 = vpop.f32.mrf.mxu0
      %1789 = vdwg.mxu0
      %1790 = vmatpush.bf16.msra.mxu0 0
      %1791 = vmatpush.bf16.msra.mxu0 0
      %1792 = vmatpush.bf16.msra.mxu0 0
      %1793 = vmatpush.bf16.msra.mxu0 0
      %1794 = vmatpush.bf16.msra.mxu0 0
      %1795 = vmatpush.bf16.msra.mxu0 0
      %1796 = vmatpush.bf16.msra.mxu0 0
      %1797 = vmatpush.bf16.msra.mxu0 %v1722
      %1798 = vmatmul.bf16.gmra.mxu0 %v1704
      %v1799 = vpop.f32.mrf.mxu0
      %v1800 = vadd.f32 0.0, %v1799
      %v1801 = vpop.f32.mrf.mxu0
      %v1802 = vadd.f32 0.0, %v1801
      %1803 = vmatmul.bf16.gmra.mxu0 %v1707
      %v1804 = vpop.f32.mrf.mxu0
      %v1805 = vadd.f32 0.0, %v1804
      %v1806 = vpop.f32.mrf.mxu0
      %v1807 = vadd.f32 0.0, %v1806
      %1808 = vmatmul.bf16.gmra.mxu0 %v1710
      %v1809 = vpop.f32.mrf.mxu0
      %v1810 = vadd.f32 0.0, %v1809
      %v1811 = vpop.f32.mrf.mxu0
      %v1812 = vadd.f32 0.0, %v1811
      %1813 = vmatmul.bf16.gmra.mxu0 %v1713
      %v1814 = vpop.f32.mrf.mxu0
      %v1815 = vadd.f32 0.0, %v1814
      %v1816 = vpop.f32.mrf.mxu0
      %v1817 = vadd.f32 0.0, %v1816
      %1818 = vmatmul.bf16.gmra.mxu0 %v1716
      %v1819 = vpop.f32.mrf.mxu0
      %v1820 = vadd.f32 0.0, %v1819
      %v1821 = vpop.f32.mrf.mxu0
      %1822 = vdwg.mxu0
      %v1823 = vadd.f32 %v1520, %v1734
      %v1824 = vadd.f32 %v1521, %v1767
      %v1825 = vadd.f32 %v1522, %v1800
      %v1826 = vadd.f32 %v1523, %v1736
      %v1827 = vadd.f32 %v1524, %v1769
      %v1828 = vadd.f32 %v1525, %v1802
      %v1829 = vadd.f32 %v1526, %v1739
      %v1830 = vadd.f32 %v1527, %v1772
      %v1831 = vadd.f32 %v1528, %v1805
      %v1832 = vadd.f32 %v1529, %v1741
      %v1833 = vadd.f32 %v1530, %v1774
      %v1834 = vadd.f32 %v1531, %v1807
      %v1835 = vadd.f32 %v1532, %v1744
      %v1836 = vadd.f32 %v1533, %v1777
      %v1837 = vadd.f32 %v1534, %v1810
      %v1838 = vadd.f32 %v1535, %v1746
      %v1839 = vadd.f32 %v1536, %v1779
      %v1840 = vadd.f32 %v1537, %v1812
      %v1841 = vadd.f32 %v1538, %v1749
      %v1842 = vadd.f32 %v1539, %v1782
      %v1843 = vadd.f32 %v1540, %v1815
      %v1844 = vadd.f32 %v1541, %v1751
      %v1845 = vadd.f32 %v1542, %v1784
      %v1846 = vadd.f32 %v1543, %v1817
      %v1847 = vadd.f32 %v1544, %v1754
      %v1848 = vadd.f32 %v1545, %v1787
      %v1849 = vadd.f32 %v1546, %v1820
      %v1850 = vunpack.c.l.bf16 %v1613
      %v1851 = vunpack.c.l.bf16 %v1614
      %v1852 = vunpack.c.l.bf16 %v1615
      %v1853 = vunpack.c.l.bf16 %v1616
      %v1854 = vunpack.c.l.bf16 %v1617
      %v1855 = vunpack.c.l.bf16 %v1618
      %v1856 = vunpack.c.l.bf16 %v1619
      %v1857 = vunpack.c.l.bf16 %v1620
      %v1858 = vunpack.c.l.bf16 %v1621
      %v1859 = vunpack.c.l.bf16 %v1622
      %v1860 = vunpack.c.l.bf16 %v1623
      %v1861 = vunpack.c.l.bf16 %v1624
      %v1862 = vunpack.c.l.bf16 %v1625
      %v1863 = vunpack.c.l.bf16 %v1626
      %v1864 = vunpack.c.l.bf16 %v1627
      %v1865 = vunpack.c.l.bf16 %v1628
      %v1866 = vunpack.c.l.bf16 %v1629
      %v1867 = vunpack.c.l.bf16 %v1630
      %v1868 = vunpack.c.l.bf16 %v1631
      %v1879 = vrot.slane %v1859, 1
      %v1880 = vrot.slane %v1860, 1
      %v1881 = vsel %vm826, %v1879, %v1880
      %v1882 = vrot.slane %v1861, 1
      %v1883 = vsel %vm826, %v1880, %v1882
      %v1884 = vrot.slane %v1862, 1
      %v1885 = vsel %vm826, %v1882, %v1884
      %v1886 = vrot.slane %v1863, 1
      %v1887 = vsel %vm826, %v1884, %v1886
      %v1888 = vrot.slane %v1864, 1
      %v1889 = vsel %vm826, %v1886, %v1888
      %v1890 = vrot.slane %v1865, 1
      %v1891 = vsel %vm826, %v1888, %v1890
      %v1892 = vrot.slane %v1866, 1
      %v1893 = vsel %vm826, %v1890, %v1892
      %v1894 = vrot.slane %v1867, 1
      %v1895 = vsel %vm826, %v1892, %v1894
      %v1896 = vrot.slane %v1868, 1
      %v1897 = vsel %vm826, %v1894, %v1896
      %v1907 = vmax.f32 %v1850, %v1881
      %v1908 = vmax.f32 %v1851, %v1883
      %v1909 = vmax.f32 %v1852, %v1885
      %v1910 = vmax.f32 %v1853, %v1887
      %v1911 = vmax.f32 %v1854, %v1889
      %v1912 = vmax.f32 %v1855, %v1891
      %v1913 = vmax.f32 %v1856, %v1893
      %v1914 = vmax.f32 %v1857, %v1895
      %v1915 = vmax.f32 %v1858, %v1897
      %v1916 = vpack.c.bf16 %v1907, %v1907
      %v1917 = vpack.c.bf16 %v1908, %v1908
      %v1918 = vpack.c.bf16 %v1909, %v1909
      %v1919 = vpack.c.bf16 %v1910, %v1910
      %v1920 = vpack.c.bf16 %v1911, %v1911
      %v1921 = vpack.c.bf16 %v1912, %v1912
      %v1922 = vpack.c.bf16 %v1913, %v1913
      %v1923 = vpack.c.bf16 %v1914, %v1914
      %v1924 = vpack.c.bf16 %v1915, %v1915
      %v1925 = vld [vmem:[%s222 + $0x4] sm:$0xf]
      %v1926 = vld [vmem:[%s222 + $0x8] sm:$0xf]
      %v1927 = vld [vmem:[%s222 + $0xc] sm:$0xf]
      %v1928 = vld [vmem:[%s222 + $0x10] sm:$0xf]
      %v1929 = vld [vmem:[%s222 + $0x14] sm:$0xf]
      %v1930 = vld [vmem:[%s222 + $0x18] sm:$0xf]
      %v1931 = vld [vmem:[%s222 + $0x1c] sm:$0xf]
      %v1932 = vld [vmem:[%s222 + $0x20] sm:$0xf]
      %v1933 = vld [vmem:[%s222 + $0x24] sm:$0xf]
      %v1934 = vld [vmem:[%s222 + $0x28] sm:$0x1]
      %s1935 = scalar_lea.vmem %s1, 42
      %v1936 = vld [vmem:[%s1935] sm:$0x3f]
      %v1947 = vunpack.c.l.b16 %v1925
      %v1948 = vunpack.c.l.b16 %v1926
      %v1949 = vunpack.c.l.b16 %v1927
      %v1950 = vunpack.c.l.b16 %v1928
      %v1951 = vunpack.c.l.b16 %v1929
      %v1952 = vunpack.c.l.b16 %v1930
      %v1953 = vunpack.c.l.b16 %v1931
      %v1954 = vunpack.c.l.b16 %v1932
      %v1955 = vunpack.c.l.b16 %v1933
      %v1956 = vunpack.c.l.b16 %v1934
      %v1957 = vpack.c.b16 %v1948, %v1947
      %v1958 = vpack.c.b16 %v1950, %v1949
      %v1959 = vpack.c.b16 %v1952, %v1951
      %v1960 = vpack.c.b16 %v1954, %v1953
      %v1961 = vpack.c.b16 %v1956, %v1955
      %v1963 = vshrl.u32 %v1957, 16
      %v1965 = vshll.u32 %v1957, 16
      %v1967 = vrot.slane %v1965, 1
      %v1968 = vor.u32 %v1963, %v1967
      %v1970 = vshll.u32 %v1958, 16
      %v1972 = vrot.slane %v1970, 1
      %v1973 = vsel %vm605, %v1968, %v1972
      %v1974 = vshrl.u32 %v1958, 16
      %v1976 = vor.u32 %v1974, %v1972
      %v1978 = vshll.u32 %v1959, 16
      %v1980 = vrot.slane %v1978, 1
      %v1981 = vsel %vm605, %v1976, %v1980
      %v1982 = vshrl.u32 %v1959, 16
      %v1984 = vor.u32 %v1982, %v1980
      %v1986 = vshll.u32 %v1960, 16
      %v1988 = vrot.slane %v1986, 1
      %v1989 = vsel %vm605, %v1984, %v1988
      %v1990 = vshrl.u32 %v1960, 16
      %v1992 = vor.u32 %v1990, %v1988
      %v1994 = vshll.u32 %v1961, 16
      %v1996 = vrot.slane %v1994, 1
      %v1997 = vsel %vm605, %v1992, %v1996
      %v1998 = vshrl.u32 %v1961, 16
      %v2000 = vor.u32 %v1998, %v1996
      %2002 = vst [vmem:[#allocation1] ss:$4 sm:$0xff] %v1936
      %v2003 = vld.sshfl [vmem:[#allocation1] sm:$0xff pattern:$0x73625140]
      %v2004 = vld.sshfl [vmem:[#allocation1 + $0x8] sm:$0xff pattern:$0x73625140]
      %v2005 = vld.sshfl [vmem:[#allocation1 + $0x10] sm:$0xff pattern:$0x73625140]
      %v2007 = vsel %vm262, %v1973, 0
      %v2010 = vsel %vm262, %v1981, 0
      %v2013 = vsel %vm262, %v1989, 0
      %v2016 = vsel %vm262, %v1997, 0
      %v2019 = vsel %vm262, %v2000, 0
      %v2021 = vsel %vm278, %v2003, 0
      %v2023 = vsel %vm278, %v2004, 0
      %v2025 = vsel %vm278, %v2005, 0
      %2027 = vmatpush.bf16.msra.mxu0 0
      %2028 = vmatpush.bf16.msra.mxu0 0
      %2029 = vmatpush.bf16.msra.mxu0 0
      %2030 = vmatpush.bf16.msra.mxu0 0
      %2031 = vmatpush.bf16.msra.mxu0 0
      %2032 = vmatpush.bf16.msra.mxu0 0
      %2033 = vmatpush.bf16.msra.mxu0 0
      %2034 = vmatpush.bf16.msra.mxu0 %v2021
      %2035 = vmatmul.bf16.gmra.mxu0 %v2007
      %v2036 = vpop.f32.mrf.mxu0
      %v2037 = vadd.f32 0.0, %v2036
      %v2038 = vpop.f32.mrf.mxu0
      %v2039 = vadd.f32 0.0, %v2038
      %2040 = vmatmul.bf16.gmra.mxu0 %v2010
      %v2041 = vpop.f32.mrf.mxu0
      %v2042 = vadd.f32 0.0, %v2041
      %v2043 = vpop.f32.mrf.mxu0
      %v2044 = vadd.f32 0.0, %v2043
      %2045 = vmatmul.bf16.gmra.mxu0 %v2013
      %v2046 = vpop.f32.mrf.mxu0
      %v2047 = vadd.f32 0.0, %v2046
      %v2048 = vpop.f32.mrf.mxu0
      %v2049 = vadd.f32 0.0, %v2048
      %2050 = vmatmul.bf16.gmra.mxu0 %v2016
      %v2051 = vpop.f32.mrf.mxu0
      %v2052 = vadd.f32 0.0, %v2051
      %v2053 = vpop.f32.mrf.mxu0
      %v2054 = vadd.f32 0.0, %v2053
      %2055 = vmatmul.bf16.gmra.mxu0 %v2019
      %v2056 = vpop.f32.mrf.mxu0
      %v2057 = vadd.f32 0.0, %v2056
      %v2058 = vpop.f32.mrf.mxu0
      %2059 = vdwg.mxu0
      %2060 = vmatpush.bf16.msra.mxu0 0
      %2061 = vmatpush.bf16.msra.mxu0 0
      %2062 = vmatpush.bf16.msra.mxu0 0
      %2063 = vmatpush.bf16.msra.mxu0 0
      %2064 = vmatpush.bf16.msra.mxu0 0
      %2065 = vmatpush.bf16.msra.mxu0 0
      %2066 = vmatpush.bf16.msra.mxu0 0
      %2067 = vmatpush.bf16.msra.mxu0 %v2023
      %2068 = vmatmul.bf16.gmra.mxu0 %v2007
      %v2069 = vpop.f32.mrf.mxu0
      %v2070 = vadd.f32 0.0, %v2069
      %v2071 = vpop.f32.mrf.mxu0
      %v2072 = vadd.f32 0.0, %v2071
      %2073 = vmatmul.bf16.gmra.mxu0 %v2010
      %v2074 = vpop.f32.mrf.mxu0
      %v2075 = vadd.f32 0.0, %v2074
      %v2076 = vpop.f32.mrf.mxu0
      %v2077 = vadd.f32 0.0, %v2076
      %2078 = vmatmul.bf16.gmra.mxu0 %v2013
      %v2079 = vpop.f32.mrf.mxu0
      %v2080 = vadd.f32 0.0, %v2079
      %v2081 = vpop.f32.mrf.mxu0
      %v2082 = vadd.f32 0.0, %v2081
      %2083 = vmatmul.bf16.gmra.mxu0 %v2016
      %v2084 = vpop.f32.mrf.mxu0
      %v2085 = vadd.f32 0.0, %v2084
      %v2086 = vpop.f32.mrf.mxu0
      %v2087 = vadd.f32 0.0, %v2086
      %2088 = vmatmul.bf16.gmra.mxu0 %v2019
      %v2089 = vpop.f32.mrf.mxu0
      %v2090 = vadd.f32 0.0, %v2089
      %v2091 = vpop.f32.mrf.mxu0
      %2092 = vdwg.mxu0
      %2093 = vmatpush.bf16.msra.mxu0 0
      %2094 = vmatpush.bf16.msra.mxu0 0
      %2095 = vmatpush.bf16.msra.mxu0 0
      %2096 = vmatpush.bf16.msra.mxu0 0
      %2097 = vmatpush.bf16.msra.mxu0 0
      %2098 = vmatpush.bf16.msra.mxu0 0
      %2099 = vmatpush.bf16.msra.mxu0 0
      %2100 = vmatpush.bf16.msra.mxu0 %v2025
      %2101 = vmatmul.bf16.gmra.mxu0 %v2007
      %v2102 = vpop.f32.mrf.mxu0
      %v2103 = vadd.f32 0.0, %v2102
      %v2104 = vpop.f32.mrf.mxu0
      %v2105 = vadd.f32 0.0, %v2104
      %2106 = vmatmul.bf16.gmra.mxu0 %v2010
      %v2107 = vpop.f32.mrf.mxu0
      %v2108 = vadd.f32 0.0, %v2107
      %v2109 = vpop.f32.mrf.mxu0
      %v2110 = vadd.f32 0.0, %v2109
      %2111 = vmatmul.bf16.gmra.mxu0 %v2013
      %v2112 = vpop.f32.mrf.mxu0
      %v2113 = vadd.f32 0.0, %v2112
      %v2114 = vpop.f32.mrf.mxu0
      %v2115 = vadd.f32 0.0, %v2114
      %2116 = vmatmul.bf16.gmra.mxu0 %v2016
      %v2117 = vpop.f32.mrf.mxu0
      %v2118 = vadd.f32 0.0, %v2117
      %v2119 = vpop.f32.mrf.mxu0
      %v2120 = vadd.f32 0.0, %v2119
      %2121 = vmatmul.bf16.gmra.mxu0 %v2019
      %v2122 = vpop.f32.mrf.mxu0
      %v2123 = vadd.f32 0.0, %v2122
      %v2124 = vpop.f32.mrf.mxu0
      %2125 = vdwg.mxu0
      %v2126 = vadd.f32 %v1823, %v2037
      %v2127 = vadd.f32 %v1824, %v2070
      %v2128 = vadd.f32 %v1825, %v2103
      %v2129 = vadd.f32 %v1826, %v2039
      %v2130 = vadd.f32 %v1827, %v2072
      %v2131 = vadd.f32 %v1828, %v2105
      %v2132 = vadd.f32 %v1829, %v2042
      %v2133 = vadd.f32 %v1830, %v2075
      %v2134 = vadd.f32 %v1831, %v2108
      %v2135 = vadd.f32 %v1832, %v2044
      %v2136 = vadd.f32 %v1833, %v2077
      %v2137 = vadd.f32 %v1834, %v2110
      %v2138 = vadd.f32 %v1835, %v2047
      %v2139 = vadd.f32 %v1836, %v2080
      %v2140 = vadd.f32 %v1837, %v2113
      %v2141 = vadd.f32 %v1838, %v2049
      %v2142 = vadd.f32 %v1839, %v2082
      %v2143 = vadd.f32 %v1840, %v2115
      %v2144 = vadd.f32 %v1841, %v2052
      %v2145 = vadd.f32 %v1842, %v2085
      %v2146 = vadd.f32 %v1843, %v2118
      %v2147 = vadd.f32 %v1844, %v2054
      %v2148 = vadd.f32 %v1845, %v2087
      %v2149 = vadd.f32 %v1846, %v2120
      %v2150 = vadd.f32 %v1847, %v2057
      %v2151 = vadd.f32 %v1848, %v2090
      %v2152 = vadd.f32 %v1849, %v2123
      %v2153 = vunpack.c.l.bf16 %v1916
      %v2154 = vunpack.c.l.bf16 %v1917
      %v2155 = vunpack.c.l.bf16 %v1918
      %v2156 = vunpack.c.l.bf16 %v1919
      %v2157 = vunpack.c.l.bf16 %v1920
      %v2158 = vunpack.c.l.bf16 %v1921
      %v2159 = vunpack.c.l.bf16 %v1922
      %v2160 = vunpack.c.l.bf16 %v1923
      %v2161 = vunpack.c.l.bf16 %v1924
      %v2162 = vunpack.c.l.bf16 %v1925
      %v2163 = vunpack.c.l.bf16 %v1926
      %v2164 = vunpack.c.l.bf16 %v1927
      %v2165 = vunpack.c.l.bf16 %v1928
      %v2166 = vunpack.c.l.bf16 %v1929
      %v2167 = vunpack.c.l.bf16 %v1930
      %v2168 = vunpack.c.l.bf16 %v1931
      %v2169 = vunpack.c.l.bf16 %v1932
      %v2170 = vunpack.c.l.bf16 %v1933
      %v2171 = vunpack.c.l.bf16 %v1934
      %v2182 = vrot.slane %v2162, 1
      %v2183 = vrot.slane %v2163, 1
      %v2184 = vsel %vm826, %v2182, %v2183
      %v2185 = vrot.slane %v2164, 1
      %v2186 = vsel %vm826, %v2183, %v2185
      %v2187 = vrot.slane %v2165, 1
      %v2188 = vsel %vm826, %v2185, %v2187
      %v2189 = vrot.slane %v2166, 1
      %v2190 = vsel %vm826, %v2187, %v2189
      %v2191 = vrot.slane %v2167, 1
      %v2192 = vsel %vm826, %v2189, %v2191
      %v2193 = vrot.slane %v2168, 1
      %v2194 = vsel %vm826, %v2191, %v2193
      %v2195 = vrot.slane %v2169, 1
      %v2196 = vsel %vm826, %v2193, %v2195
      %v2197 = vrot.slane %v2170, 1
      %v2198 = vsel %vm826, %v2195, %v2197
      %v2199 = vrot.slane %v2171, 1
      %v2200 = vsel %vm826, %v2197, %v2199
      %v2210 = vmax.f32 %v2153, %v2184
      %v2211 = vmax.f32 %v2154, %v2186
      %v2212 = vmax.f32 %v2155, %v2188
      %v2213 = vmax.f32 %v2156, %v2190
      %v2214 = vmax.f32 %v2157, %v2192
      %v2215 = vmax.f32 %v2158, %v2194
      %v2216 = vmax.f32 %v2159, %v2196
      %v2217 = vmax.f32 %v2160, %v2198
      %v2218 = vmax.f32 %v2161, %v2200
      %v2219 = vpack.c.bf16 %v2210, %v2210
      %v2220 = vpack.c.bf16 %v2211, %v2211
      %v2221 = vpack.c.bf16 %v2212, %v2212
      %v2222 = vpack.c.bf16 %v2213, %v2213
      %v2223 = vpack.c.bf16 %v2214, %v2214
      %v2224 = vpack.c.bf16 %v2215, %v2215
      %v2225 = vpack.c.bf16 %v2216, %v2216
      %v2226 = vpack.c.bf16 %v2217, %v2217
      %v2227 = vpack.c.bf16 %v2218, %v2218
      %v2228 = vld [vmem:[%s200 + $0x4] sm:$0xe]
      %v2229 = vld [vmem:[%s200 + $0x8] sm:$0xf]
      %v2230 = vld [vmem:[%s200 + $0xc] sm:$0xf]
      %v2231 = vld [vmem:[%s200 + $0x10] sm:$0xf]
      %v2232 = vld [vmem:[%s200 + $0x14] sm:$0xf]
      %v2233 = vld [vmem:[%s200 + $0x18] sm:$0xf]
      %v2234 = vld [vmem:[%s200 + $0x1c] sm:$0xf]
      %v2235 = vld [vmem:[%s200 + $0x20] sm:$0xf]
      %v2236 = vld [vmem:[%s200 + $0x24] sm:$0xf]
      %v2237 = vld [vmem:[%s200 + $0x28] sm:$0x1]
      %s2238 = scalar_lea.vmem %s1, 48
      %v2239 = vld [vmem:[%s2238] sm:$0x3f]
      %v2250 = vunpack.c.l.b16 %v2228
      %v2251 = vunpack.c.l.b16 %v2229
      %v2252 = vunpack.c.l.b16 %v2230
      %v2253 = vunpack.c.l.b16 %v2231
      %v2254 = vunpack.c.l.b16 %v2232
      %v2255 = vunpack.c.l.b16 %v2233
      %v2256 = vunpack.c.l.b16 %v2234
      %v2257 = vunpack.c.l.b16 %v2235
      %v2258 = vunpack.c.l.b16 %v2236
      %v2259 = vunpack.c.l.b16 %v2237
      %v2260 = vpack.c.b16 %v2251, %v2250
      %v2261 = vpack.c.b16 %v2253, %v2252
      %v2262 = vpack.c.b16 %v2255, %v2254
      %v2263 = vpack.c.b16 %v2257, %v2256
      %v2264 = vpack.c.b16 %v2259, %v2258
      %vm2265 = vcmask 1046528
      %v2266 = vrot.slane %v2260, 1
      %v2267 = vrot.slane %v2261, 1
      %v2268 = vsel %vm2265, %v2266, %v2267
      %v2269 = vrot.slane %v2262, 1
      %v2270 = vsel %vm2265, %v2267, %v2269
      %v2271 = vrot.slane %v2263, 1
      %v2272 = vsel %vm2265, %v2269, %v2271
      %v2273 = vrot.slane %v2264, 1
      %v2274 = vsel %vm2265, %v2271, %v2273
      %2276 = vst [vmem:[#allocation1] ss:$4 sm:$0xff] %v2239
      %v2277 = vld.sshfl [vmem:[#allocation1] sm:$0xff pattern:$0x73625140]
      %v2278 = vld.sshfl [vmem:[#allocation1 + $0x8] sm:$0xff pattern:$0x73625140]
      %v2279 = vld.sshfl [vmem:[#allocation1 + $0x10] sm:$0xff pattern:$0x73625140]
      %v2281 = vsel %vm262, %v2268, 0
      %v2284 = vsel %vm262, %v2270, 0
      %v2287 = vsel %vm262, %v2272, 0
      %v2290 = vsel %vm262, %v2274, 0
      %v2293 = vsel %vm262, %v2273, 0
      %v2295 = vsel %vm278, %v2277, 0
      %v2297 = vsel %vm278, %v2278, 0
      %v2299 = vsel %vm278, %v2279, 0
      %2301 = vmatpush.bf16.msra.mxu0 0
      %2302 = vmatpush.bf16.msra.mxu0 0
      %2303 = vmatpush.bf16.msra.mxu0 0
      %2304 = vmatpush.bf16.msra.mxu0 0
      %2305 = vmatpush.bf16.msra.mxu0 0
      %2306 = vmatpush.bf16.msra.mxu0 0
      %2307 = vmatpush.bf16.msra.mxu0 0
      %2308 = vmatpush.bf16.msra.mxu0 %v2295
      %2309 = vmatmul.bf16.gmra.mxu0 %v2281
      %v2310 = vpop.f32.mrf.mxu0
      %v2311 = vadd.f32 0.0, %v2310
      %v2312 = vpop.f32.mrf.mxu0
      %v2313 = vadd.f32 0.0, %v2312
      %2314 = vmatmul.bf16.gmra.mxu0 %v2284
      %v2315 = vpop.f32.mrf.mxu0
      %v2316 = vadd.f32 0.0, %v2315
      %v2317 = vpop.f32.mrf.mxu0
      %v2318 = vadd.f32 0.0, %v2317
      %2319 = vmatmul.bf16.gmra.mxu0 %v2287
      %v2320 = vpop.f32.mrf.mxu0
      %v2321 = vadd.f32 0.0, %v2320
      %v2322 = vpop.f32.mrf.mxu0
      %v2323 = vadd.f32 0.0, %v2322
      %2324 = vmatmul.bf16.gmra.mxu0 %v2290
      %v2325 = vpop.f32.mrf.mxu0
      %v2326 = vadd.f32 0.0, %v2325
      %v2327 = vpop.f32.mrf.mxu0
      %v2328 = vadd.f32 0.0, %v2327
      %2329 = vmatmul.bf16.gmra.mxu0 %v2293
      %v2330 = vpop.f32.mrf.mxu0
      %v2331 = vadd.f32 0.0, %v2330
      %v2332 = vpop.f32.mrf.mxu0
      %2333 = vdwg.mxu0
      %2334 = vmatpush.bf16.msra.mxu0 0
      %2335 = vmatpush.bf16.msra.mxu0 0
      %2336 = vmatpush.bf16.msra.mxu0 0
      %2337 = vmatpush.bf16.msra.mxu0 0
      %2338 = vmatpush.bf16.msra.mxu0 0
      %2339 = vmatpush.bf16.msra.mxu0 0
      %2340 = vmatpush.bf16.msra.mxu0 0
      %2341 = vmatpush.bf16.msra.mxu0 %v2297
      %2342 = vmatmul.bf16.gmra.mxu0 %v2281
      %v2343 = vpop.f32.mrf.mxu0
      %v2344 = vadd.f32 0.0, %v2343
      %v2345 = vpop.f32.mrf.mxu0
      %v2346 = vadd.f32 0.0, %v2345
      %2347 = vmatmul.bf16.gmra.mxu0 %v2284
      %v2348 = vpop.f32.mrf.mxu0
      %v2349 = vadd.f32 0.0, %v2348
      %v2350 = vpop.f32.mrf.mxu0
      %v2351 = vadd.f32 0.0, %v2350
      %2352 = vmatmul.bf16.gmra.mxu0 %v2287
      %v2353 = vpop.f32.mrf.mxu0
      %v2354 = vadd.f32 0.0, %v2353
      %v2355 = vpop.f32.mrf.mxu0
      %v2356 = vadd.f32 0.0, %v2355
      %2357 = vmatmul.bf16.gmra.mxu0 %v2290
      %v2358 = vpop.f32.mrf.mxu0
      %v2359 = vadd.f32 0.0, %v2358
      %v2360 = vpop.f32.mrf.mxu0
      %v2361 = vadd.f32 0.0, %v2360
      %2362 = vmatmul.bf16.gmra.mxu0 %v2293
      %v2363 = vpop.f32.mrf.mxu0
      %v2364 = vadd.f32 0.0, %v2363
      %v2365 = vpop.f32.mrf.mxu0
      %2366 = vdwg.mxu0
      %2367 = vmatpush.bf16.msra.mxu0 0
      %2368 = vmatpush.bf16.msra.mxu0 0
      %2369 = vmatpush.bf16.msra.mxu0 0
      %2370 = vmatpush.bf16.msra.mxu0 0
      %2371 = vmatpush.bf16.msra.mxu0 0
      %2372 = vmatpush.bf16.msra.mxu0 0
      %2373 = vmatpush.bf16.msra.mxu0 0
      %2374 = vmatpush.bf16.msra.mxu0 %v2299
      %2375 = vmatmul.bf16.gmra.mxu0 %v2281
      %v2376 = vpop.f32.mrf.mxu0
      %v2377 = vadd.f32 0.0, %v2376
      %v2378 = vpop.f32.mrf.mxu0
      %v2379 = vadd.f32 0.0, %v2378
      %2380 = vmatmul.bf16.gmra.mxu0 %v2284
      %v2381 = vpop.f32.mrf.mxu0
      %v2382 = vadd.f32 0.0, %v2381
      %v2383 = vpop.f32.mrf.mxu0
      %v2384 = vadd.f32 0.0, %v2383
      %2385 = vmatmul.bf16.gmra.mxu0 %v2287
      %v2386 = vpop.f32.mrf.mxu0
      %v2387 = vadd.f32 0.0, %v2386
      %v2388 = vpop.f32.mrf.mxu0
      %v2389 = vadd.f32 0.0, %v2388
      %2390 = vmatmul.bf16.gmra.mxu0 %v2290
      %v2391 = vpop.f32.mrf.mxu0
      %v2392 = vadd.f32 0.0, %v2391
      %v2393 = vpop.f32.mrf.mxu0
      %v2394 = vadd.f32 0.0, %v2393
      %2395 = vmatmul.bf16.gmra.mxu0 %v2293
      %v2396 = vpop.f32.mrf.mxu0
      %v2397 = vadd.f32 0.0, %v2396
      %v2398 = vpop.f32.mrf.mxu0
      %2399 = vdwg.mxu0
      %v2400 = vadd.f32 %v2126, %v2311
      %v2401 = vadd.f32 %v2127, %v2344
      %v2402 = vadd.f32 %v2128, %v2377
      %v2403 = vadd.f32 %v2129, %v2313
      %v2404 = vadd.f32 %v2130, %v2346
      %v2405 = vadd.f32 %v2131, %v2379
      %v2406 = vadd.f32 %v2132, %v2316
      %v2407 = vadd.f32 %v2133, %v2349
      %v2408 = vadd.f32 %v2134, %v2382
      %v2409 = vadd.f32 %v2135, %v2318
      %v2410 = vadd.f32 %v2136, %v2351
      %v2411 = vadd.f32 %v2137, %v2384
      %v2412 = vadd.f32 %v2138, %v2321
      %v2413 = vadd.f32 %v2139, %v2354
      %v2414 = vadd.f32 %v2140, %v2387
      %v2415 = vadd.f32 %v2141, %v2323
      %v2416 = vadd.f32 %v2142, %v2356
      %v2417 = vadd.f32 %v2143, %v2389
      %v2418 = vadd.f32 %v2144, %v2326
      %v2419 = vadd.f32 %v2145, %v2359
      %v2420 = vadd.f32 %v2146, %v2392
      %v2421 = vadd.f32 %v2147, %v2328
      %v2422 = vadd.f32 %v2148, %v2361
      %v2423 = vadd.f32 %v2149, %v2394
      %v2424 = vadd.f32 %v2150, %v2331
      %v2425 = vadd.f32 %v2151, %v2364
      %v2426 = vadd.f32 %v2152, %v2397
      %v2427 = vunpack.c.l.bf16 %v2219
      %v2428 = vunpack.c.l.bf16 %v2220
      %v2429 = vunpack.c.l.bf16 %v2221
      %v2430 = vunpack.c.l.bf16 %v2222
      %v2431 = vunpack.c.l.bf16 %v2223
      %v2432 = vunpack.c.l.bf16 %v2224
      %v2433 = vunpack.c.l.bf16 %v2225
      %v2434 = vunpack.c.l.bf16 %v2226
      %v2435 = vunpack.c.l.bf16 %v2227
      %v2436 = vunpack.c.l.bf16 %v2228
      %v2437 = vunpack.c.l.bf16 %v2229
      %v2438 = vunpack.c.l.bf16 %v2230
      %v2439 = vunpack.c.l.bf16 %v2231
      %v2440 = vunpack.c.l.bf16 %v2232
      %v2441 = vunpack.c.l.bf16 %v2233
      %v2442 = vunpack.c.l.bf16 %v2234
      %v2443 = vunpack.c.l.bf16 %v2235
      %v2444 = vunpack.c.l.bf16 %v2236
      %v2445 = vunpack.c.l.bf16 %v2237
      %vm2456 = vcmask 1045504
      %v2457 = vrot.slane %v2436, 2
      %v2458 = vrot.slane %v2437, 2
      %v2459 = vsel %vm2456, %v2457, %v2458
      %v2460 = vrot.slane %v2438, 2
      %v2461 = vsel %vm2456, %v2458, %v2460
      %v2462 = vrot.slane %v2439, 2
      %v2463 = vsel %vm2456, %v2460, %v2462
      %v2464 = vrot.slane %v2440, 2
      %v2465 = vsel %vm2456, %v2462, %v2464
      %v2466 = vrot.slane %v2441, 2
      %v2467 = vsel %vm2456, %v2464, %v2466
      %v2468 = vrot.slane %v2442, 2
      %v2469 = vsel %vm2456, %v2466, %v2468
      %v2470 = vrot.slane %v2443, 2
      %v2471 = vsel %vm2456, %v2468, %v2470
      %v2472 = vrot.slane %v2444, 2
      %v2473 = vsel %vm2456, %v2470, %v2472
      %v2474 = vrot.slane %v2445, 2
      %v2475 = vsel %vm2456, %v2472, %v2474
      %v2485 = vmax.f32 %v2427, %v2459
      %v2486 = vmax.f32 %v2428, %v2461
      %v2487 = vmax.f32 %v2429, %v2463
      %v2488 = vmax.f32 %v2430, %v2465
      %v2489 = vmax.f32 %v2431, %v2467
      %v2490 = vmax.f32 %v2432, %v2469
      %v2491 = vmax.f32 %v2433, %v2471
      %v2492 = vmax.f32 %v2434, %v2473
      %v2493 = vmax.f32 %v2435, %v2475
      %v2494 = vpack.c.bf16 %v2485, %v2485
      %v2495 = vpack.c.bf16 %v2486, %v2486
      %v2496 = vpack.c.bf16 %v2487, %v2487
      %v2497 = vpack.c.bf16 %v2488, %v2488
      %v2498 = vpack.c.bf16 %v2489, %v2489
      %v2499 = vpack.c.bf16 %v2490, %v2490
      %v2500 = vpack.c.bf16 %v2491, %v2491
      %v2501 = vpack.c.bf16 %v2492, %v2492
      %v2502 = vpack.c.bf16 %v2493, %v2493
      %v2503 = vld [vmem:[%s2] sm:$0x7]
      %v2505 = vperm.slane %v2503, 0
      %v2506 = vperm.slane %v2503, 1
      %v2507 = vperm.slane %v2503, 2
      %v2511 = vadd.f32 %v2400, %v2505
      %v2512 = vadd.f32 %v2401, %v2506
      %v2513 = vadd.f32 %v2402, %v2507
      %v2514 = vadd.f32 %v2403, %v2505
      %v2515 = vadd.f32 %v2404, %v2506
      %v2516 = vadd.f32 %v2405, %v2507
      %v2517 = vadd.f32 %v2406, %v2505
      %v2518 = vadd.f32 %v2407, %v2506
      %v2519 = vadd.f32 %v2408, %v2507
      %v2520 = vadd.f32 %v2409, %v2505
      %v2521 = vadd.f32 %v2410, %v2506
      %v2522 = vadd.f32 %v2411, %v2507
      %v2523 = vadd.f32 %v2412, %v2505
      %v2524 = vadd.f32 %v2413, %v2506
      %v2525 = vadd.f32 %v2414, %v2507
      %v2526 = vadd.f32 %v2415, %v2505
      %v2527 = vadd.f32 %v2416, %v2506
      %v2528 = vadd.f32 %v2417, %v2507
      %v2529 = vadd.f32 %v2418, %v2505
      %v2530 = vadd.f32 %v2419, %v2506
      %v2531 = vadd.f32 %v2420, %v2507
      %v2532 = vadd.f32 %v2421, %v2505
      %v2533 = vadd.f32 %v2422, %v2506
      %v2534 = vadd.f32 %v2423, %v2507
      %v2535 = vadd.f32 %v2424, %v2505
      %v2536 = vadd.f32 %v2425, %v2506
      %v2537 = vadd.f32 %v2426, %v2507
      %v2538 = vmax.f32 %v2511, 0.0
      %v2539 = vmax.f32 %v2512, 0.0
      %v2540 = vmax.f32 %v2513, 0.0
      %v2541 = vmax.f32 %v2514, 0.0
      %v2542 = vmax.f32 %v2515, 0.0
      %v2543 = vmax.f32 %v2516, 0.0
      %v2544 = vmax.f32 %v2517, 0.0
      %v2545 = vmax.f32 %v2518, 0.0
      %v2546 = vmax.f32 %v2519, 0.0
      %v2547 = vmax.f32 %v2520, 0.0
      %v2548 = vmax.f32 %v2521, 0.0
      %v2549 = vmax.f32 %v2522, 0.0
      %v2550 = vmax.f32 %v2523, 0.0
      %v2551 = vmax.f32 %v2524, 0.0
      %v2552 = vmax.f32 %v2525, 0.0
      %v2553 = vmax.f32 %v2526, 0.0
      %v2554 = vmax.f32 %v2527, 0.0
      %v2555 = vmax.f32 %v2528, 0.0
      %v2556 = vmax.f32 %v2529, 0.0
      %v2557 = vmax.f32 %v2530, 0.0
      %v2558 = vmax.f32 %v2531, 0.0
      %v2559 = vmax.f32 %v2532, 0.0
      %v2560 = vmax.f32 %v2533, 0.0
      %v2561 = vmax.f32 %v2534, 0.0
      %v2562 = vmax.f32 %v2535, 0.0
      %v2563 = vmax.f32 %v2536, 0.0
      %v2564 = vmax.f32 %v2537, 0.0
      %2565 = vst [vmem:[%s205] sm:$0xff] %v2538
      %2566 = vst [vmem:[%s205 + $0x8] sm:$0xff] %v2539
      %2567 = vst [vmem:[%s205 + $0x10] sm:$0xff] %v2540
      %2568 = vst [vmem:[%s205 + $0x18] sm:$0xff] %v2541
      %2569 = vst [vmem:[%s205 + $0x20] sm:$0xff] %v2542
      %2570 = vst [vmem:[%s205 + $0x28] sm:$0xff] %v2543
      %2571 = vst [vmem:[%s205 + $0x30] sm:$0xff] %v2544
      %2572 = vst [vmem:[%s205 + $0x38] sm:$0xff] %v2545
      %2573 = vst [vmem:[%s205 + $0x40] sm:$0xff] %v2546
      %2574 = vst [vmem:[%s205 + $0x48] sm:$0xff] %v2547
      %2575 = vst [vmem:[%s205 + $0x50] sm:$0xff] %v2548
      %2576 = vst [vmem:[%s205 + $0x58] sm:$0xff] %v2549
      %2577 = vst [vmem:[%s205 + $0x60] sm:$0xff] %v2550
      %2578 = vst [vmem:[%s205 + $0x68] sm:$0xff] %v2551
      %2579 = vst [vmem:[%s205 + $0x70] sm:$0xff] %v2552
      %2580 = vst [vmem:[%s205 + $0x78] sm:$0xff] %v2553
      %2581 = vst [vmem:[%s205 + $0x80] sm:$0xff] %v2554
      %2582 = vst [vmem:[%s205 + $0x88] sm:$0xff] %v2555
      %2583 = vst [vmem:[%s205 + $0x90] sm:$0xff] %v2556
      %2584 = vst [vmem:[%s205 + $0x98] sm:$0xff] %v2557
      %2585 = vst [vmem:[%s205 + $0xa0] sm:$0xff] %v2558
      %2586 = vst [vmem:[%s205 + $0xa8] sm:$0xff] %v2559
      %2587 = vst [vmem:[%s205 + $0xb0] sm:$0xff] %v2560
      %2588 = vst [vmem:[%s205 + $0xb8] sm:$0xff] %v2561
      %2589 = vst [vmem:[%s205 + $0xc0] sm:$0xff] %v2562
      %2590 = vst [vmem:[%s205 + $0xc8] sm:$0xff] %v2563
      %2591 = vst [vmem:[%s205 + $0xd0] sm:$0xff] %v2564
      %v2592 = vunpack.c.l.bf16 %v2494
      %v2593 = vunpack.c.l.bf16 %v2495
      %v2594 = vunpack.c.l.bf16 %v2496
      %v2595 = vunpack.c.l.bf16 %v2497
      %v2596 = vunpack.c.l.bf16 %v2498
      %v2597 = vunpack.c.l.bf16 %v2499
      %v2598 = vunpack.c.l.bf16 %v2500
      %v2599 = vunpack.c.l.bf16 %v2501
      %v2600 = vunpack.c.l.bf16 %v2502
      %2601 = vst.msk [vmem:[%s210] sm:$0xff] %vm262, %v2592
      %2602 = vst.msk [vmem:[%s210 + $0x8] sm:$0xff] %vm262, %v2593
      %2603 = vst.msk [vmem:[%s210 + $0x10] sm:$0xff] %vm262, %v2594
      %2604 = vst.msk [vmem:[%s210 + $0x18] sm:$0xff] %vm262, %v2595
      %2605 = vst.msk [vmem:[%s210 + $0x20] sm:$0xff] %vm262, %v2596
      %2606 = vst.msk [vmem:[%s210 + $0x28] sm:$0xff] %vm262, %v2597
      %2607 = vst.msk [vmem:[%s210 + $0x30] sm:$0xff] %vm262, %v2598
      %2608 = vst.msk [vmem:[%s210 + $0x38] sm:$0xff] %vm262, %v2599
      %2609 = vst.msk [vmem:[%s210 + $0x40] sm:$0xff] %vm262, %v2600
      %p2610 = scmp.lt.s32.totalorder %s16, 1
      %s2611 = scalar_select %p2610, %s16, 1
      %s2612 = smul.addr %s2611, 27
      %s2613 = smul.addr %s2612, 8
      %s2614 = scalar_lea.vmem %s3, %s2613
      %p2615 = scmp.lt.s32.totalorder %s16, 1
      %s2616 = scalar_select %p2615, %s16, 1
      %s2617 = smul.addr %s2616, 9
      %s2618 = smul.addr %s2617, 8
      %s2619 = scalar_lea.vmem %s4, %s2618
      // Predicated region
      $region33: #{inception_b_forward.4} parent=31 // pred_check
        %p2620 = pneg %p102
      $region34: #{inception_b_forward.4} parent=31 // pred_check_branch
        %2622 = sbr.rel (%p2620) target = $region36
      $region35: #{inception_b_forward.4} parent=31 // pred_region
        _
      $region36: #{inception_b_forward.4} parent=31 // pred_fallthru
        _
      // Predicated region
      $region37: #{inception_b_forward.4} parent=31 // pred_check
        %p2623 = pneg %p128
      $region38: #{inception_b_forward.4} parent=31 // pred_check_branch
        %2625 = sbr.rel (%p2623) target = $region40
      $region39: #{inception_b_forward.4} parent=31 // pred_region
        _
      $region40: #{inception_b_forward.4} parent=31 // pred_fallthru
        _
    $region32: #{inception_b_forward.4} parent=5 // pred_fallthru
      _
    %p2626 = scmp.le.s32.totalorder 2, %s11
    // Predicated region
    $region41: #{inception_b_forward.4} parent=5 // pred_check
      %p2627 = pneg %p2626
    $region42: #{inception_b_forward.4} parent=5 // pred_check_branch
      %2629 = sbr.rel (%p2627) target = $region44
    $region43: #{inception_b_forward.4} parent=5 // pred_region
      %s2630 = ssub.s32 %s11, 2
      // Predicated region
      $region45: #{inception_b_forward.4} parent=43 // pred_check
        %p2631 = pneg %p108
      $region46: #{inception_b_forward.4} parent=43 // pred_check_branch
        %2633 = sbr.rel (%p2631) target = $region48
      $region47: #{inception_b_forward.4} parent=43 // pred_region
        %p2634 = scmp.lt.s32.totalorder %s17, 1
        %s2635 = scalar_select %p2634, %s17, 1
        %s2636 = smul.addr %s2635, 27
        %s2637 = smul.addr %s2636, 8
        %s2638 = scalar_lea.vmem %s3, %s2637
      $region48: #{inception_b_forward.4} parent=43 // pred_fallthru
        _
      // Predicated region
      $region49: #{inception_b_forward.4} parent=43 // pred_check
        %p2639 = pneg %p134
      $region50: #{inception_b_forward.4} parent=43 // pred_check_branch
        %2641 = sbr.rel (%p2639) target = $region52
      $region51: #{inception_b_forward.4} parent=43 // pred_region
        %p2642 = scmp.lt.s32.totalorder %s17, 1
        %s2643 = scalar_select %p2642, %s17, 1
        %s2644 = smul.addr %s2643, 9
        %s2645 = smul.addr %s2644, 8
        %s2646 = scalar_lea.vmem %s4, %s2645
      $region52: #{inception_b_forward.4} parent=43 // pred_fallthru
        _
    $region44: #{inception_b_forward.4} parent=5 // pred_fallthru
      _
  $region6: #{inception_b_forward.4} parent=0 // loop_footer
    %s15 = sadd.s32 1, %s11
  $region7: #{inception_b_forward.4} parent=0 // loop_footer_branch
    %10 = sbr.rel target = $region3
  $region8: #{inception_b_forward.4} parent=0 // loop_exit
    _

</llo_original>
